<compile_context>
chip_gen: v5e
topology: v5e:2x2
jax: 0.10.0
libtpu: 0.0.40
codegen_flags: <defaults>
</compile_context>

<pallas_src>
import jax
import jax.numpy as jnp
from jax.experimental import pallas as pl
from jax.experimental.pallas import tpu as pltpu

ENCODED_SPACE_DIM = 8
BN_EPS = 1e-5

# Padded layer widths (lane-aligned).
L1_IN = 128            # 32*2*2  (already 128)
L1_OUT = 512           # pad(16*5*5 = 400)
L2_OUT = 1152          # 8*12*12 (= 9*128)
L3_OUT_TRUE = 576      # 1*24*24
L3_OUT = 640           # pad(576)


def _round_up(n, m):
    return ((n + m - 1) // m) * m


# ------------------------- one-time weight preparation -----------------------

def _convT_dense_map(wt, h_in, w_in, stride, padding, output_padding):
    """Exact dense linear map of ConvTranspose2d: (Cin*H*W, Cout*Ho*Wo)."""
    cin, cout, k, _ = wt.shape
    basis = jnp.eye(cin * h_in * w_in, dtype=jnp.float32).reshape(-1, cin, h_in, w_in)
    w_conv = jnp.flip(wt, axis=(2, 3)).transpose(1, 0, 2, 3)      # (Cout,Cin,k,k)
    pad_lo = k - 1 - padding
    pad_hi = k - 1 - padding + output_padding
    out = jax.lax.conv_general_dilated(
        basis, w_conv, window_strides=(1, 1),
        padding=[(pad_lo, pad_hi), (pad_lo, pad_hi)],
        lhs_dilation=(stride, stride),
        dimension_numbers=("NCHW", "OIHW", "NCHW"),
        precision=jax.lax.Precision.HIGHEST)
    ho, wo = out.shape[2], out.shape[3]
    return out.reshape(cin * h_in * w_in, cout * ho * wo), ho, wo


def _fold_layer(wt, bias, h_in, w_in, stride, padding, output_padding, bn,
                rows_pad, cols_pad):
    """Dense ConvT map with BatchNorm(eval) folded in, zero-padded to
    (rows_pad, cols_pad). Bias returned as (1, cols_pad)."""
    m, ho, wo = _convT_dense_map(wt, h_in, w_in, stride, padding, output_padding)
    cout = wt.shape[1]
    if bn is not None:
        gamma, beta, mean, var = bn
        scale = gamma / jnp.sqrt(var + BN_EPS)
        shift = beta + (bias - mean) * scale
    else:
        scale = jnp.ones((cout,), jnp.float32)
        shift = bias
    w_fold = m * jnp.repeat(scale, ho * wo)[None, :]
    b_fold = jnp.repeat(shift, ho * wo)
    w_fold = jnp.pad(w_fold, ((0, rows_pad - w_fold.shape[0]),
                              (0, cols_pad - w_fold.shape[1])))
    b_fold = jnp.pad(b_fold, (0, cols_pad - b_fold.shape[0]))
    return w_fold, b_fold[None, :], ho, wo


def prepare_decoder_params(p):
    """One-time prep (run eagerly, outside jit): dense maps + BN fold + padding.

    Folded conv matrices stored in bf16 (HBM-DMA halving); biases stay f32.
    """
    wc1, bc1, h1, w1 = _fold_layer(p["ct1_w"], p["ct1_b"], 2, 2, 2, 0, 0,
                                   p["bn1"], L1_IN, L1_OUT)
    wc2, bc2, h2, w2 = _fold_layer(p["ct2_w"], p["ct2_b"], h1, w1, 2, 0, 1,
                                   p["bn2"], L1_OUT, L2_OUT)
    wc3, bc3, h3, w3 = _fold_layer(p["ct3_w"], p["ct3_b"], h2, w2, 2, 1, 1,
                                   None, L2_OUT, L3_OUT)
    assert (h1, w1, h2, w2, h3, w3) == (5, 5, 12, 12, 24, 24)
    return {"w1": p["w1"], "b1": p["b1"][None, :],
            "w2": p["w2"], "b2": p["b2"][None, :],
            "wc1": wc1.astype(jnp.bfloat16), "bc1": bc1,
            "wc2": wc2.astype(jnp.bfloat16), "bc2": bc2,
            "wc3": wc3.astype(jnp.bfloat16), "bc3": bc3}


# ------------------------------ fused Pallas kernel ---------------------------

def _decoder_kernel(x_ref, w1_ref, b1_ref, w2_ref, b2_ref,
                    wc1_ref, bc1_ref, wc2_ref, bc2_ref, wc3_ref, bc3_ref,
                    o_ref):
    def dot(a, b):
        return jnp.dot(a, b, preferred_element_type=jnp.float32)

    # decoder_lin: Linear(D,32) -> ReLU -> Dropout(id) -> Linear(32,128) -> ReLU
    h = jnp.maximum(dot(x_ref[...], w1_ref[...]) + b1_ref[...], 0.0)
    h = jnp.maximum(dot(h, w2_ref[...]) + b2_ref[...], 0.0)
    # ConvT1 + BN1 + ReLU  (bf16 MXU, f32 accumulate; 128 -> 512 lanes)
    h = jnp.maximum(dot(h.astype(jnp.bfloat16), wc1_ref[...]) + bc1_ref[...], 0.0)
    # ConvT2 + BN2 + ReLU  (512 -> 1152 lanes)
    h = jnp.maximum(dot(h.astype(jnp.bfloat16), wc2_ref[...]) + bc2_ref[...], 0.0)
    # ConvT3 (no BN / no ReLU), lane-dense padded output (1152 -> 640 lanes)
    o_ref[...] = dot(h.astype(jnp.bfloat16), wc3_ref[...]) + bc3_ref[...]


def _resident_spec(a, weight_buffers):
    """Whole-array VMEM-resident weight block (constant index_map)."""
    idx = lambda i: (0,) * a.ndim
    if weight_buffers == 1:
        try:
            # Constant block across the grid -> single buffer is enough.
            return pl.BlockSpec(a.shape, idx, pipeline_mode=pl.Buffered(1))
        except Exception:
            pass
    return pl.BlockSpec(a.shape, idx)


def _fused_decoder(x_pad, prep, tile_m, weight_buffers):
    m_pad = x_pad.shape[0]
    weights = (prep["w1"], prep["b1"], prep["w2"], prep["b2"],
               prep["wc1"], prep["bc1"], prep["wc2"], prep["bc2"],
               prep["wc3"], prep["bc3"])

    in_specs = [pl.BlockSpec((tile_m, x_pad.shape[1]), lambda i: (i, 0))]
    in_specs += [_resident_spec(a, weight_buffers) for a in weights]

    flops_per_row = 2 * (ENCODED_SPACE_DIM * 32 + 32 * 128 + 128 * L1_OUT
                         + L1_OUT * L2_OUT + L2_OUT * L3_OUT)
    weight_bytes = sum(int(a.size) * a.dtype.itemsize for a in weights)
    cost = pl.CostEstimate(
        flops=int(m_pad) * flops_per_row,
        transcendentals=0,
        bytes_accessed=weight_bytes + int(m_pad) * (ENCODED_SPACE_DIM + L3_OUT) * 4)

    return pl.pallas_call(
        _decoder_kernel,
        grid=(m_pad // tile_m,),
        out_shape=jax.ShapeDtypeStruct((m_pad, L3_OUT), jnp.float32),
        in_specs=in_specs,
        out_specs=pl.BlockSpec((tile_m, L3_OUT), lambda i: (i, 0)),
        compiler_params=pltpu.CompilerParams(
            dimension_semantics=("parallel",),
            vmem_limit_bytes=32 * 1024 * 1024),
        cost_estimate=cost,
    )(x_pad, *weights)


def _choose_tile_m(batch):
    if batch < 16:
        # Tiny batch: the kernel is weight-DMA bound; padding M wastes MXU/DMA.
        return max(8, _round_up(batch, 8))
    # >= 2 grid steps so the "parallel" axis shards across both v7x TCs;
    # cap 512 rows/step so per-step MXU work dwarfs the ~0.35us step overhead.
    return min(512, _round_up(-(-batch // 2), 8))


def decoder_conv_forward(x, prep, weight_buffers=1):
    batch = x.shape[0]
    tile_m = _choose_tile_m(batch)
    m_pad = _round_up(batch, tile_m)
    x_pad = jnp.pad(x, ((0, m_pad - batch), (0, 0)))
    out = _fused_decoder(x_pad, prep, tile_m, weight_buffers)
    out = out[:batch, :L3_OUT_TRUE]
    return out.reshape(batch, 1, 24, 24)   # NCHW flatten -> (N,1,24,24)


# ------------------------------ pure-JAX reference ----------------------------

def _ref_convT(x, wt, bias, stride, padding, output_padding):
    k = wt.shape[2]
    w_conv = jnp.flip(wt, axis=(2, 3)).transpose(1, 0, 2, 3)   # (Cout,Cin,k,k)
    pad_lo = k - 1 - padding
    pad_hi = k - 1 - padding + output_padding
    out = jax.lax.conv_general_dilated(
        x, w_conv, window_strides=(1, 1),
        padding=[(pad_lo, pad_hi), (pad_lo, pad_hi)],
        lhs_dilation=(stride, stride),
        dimension_numbers=("NCHW", "OIHW", "NCHW"))
    return out + bias[None, :, None, None]


def _ref_bn(x, bn):
    gamma, beta, mean, var = bn
    inv = gamma / jnp.sqrt(var + BN_EPS)
    return (x - mean[None, :, None, None]) * inv[None, :, None, None] \
        + beta[None, :, None, None]


def decoder_conv_reference(x, p):
    h = jnp.maximum(x @ p["w1"] + p["b1"], 0.0)
    h = jnp.maximum(h @ p["w2"] + p["b2"], 0.0)
    h = h.reshape(h.shape[0], 32, 2, 2)
    h = jnp.maximum(_ref_bn(_ref_convT(h, p["ct1_w"], p["ct1_b"], 2, 0, 0), p["bn1"]), 0.0)
    h = jnp.maximum(_ref_bn(_ref_convT(h, p["ct2_w"], p["ct2_b"], 2, 0, 1), p["bn2"]), 0.0)
    h = _ref_convT(h, p["ct3_w"], p["ct3_b"], 2, 1, 1)
    return h


# -------------------------------- parameter init ------------------------------

def init_params(key):
    ks = jax.random.split(key, 20)
    u = lambda k, s, b: jax.random.uniform(k, s, jnp.float32, -b, b)
    d = ENCODED_SPACE_DIM
    params = {
        "w1": u(ks[0], (d, 32), 1.0 / jnp.sqrt(d)),
        "b1": u(ks[1], (32,), 1.0 / jnp.sqrt(d)),
        "w2": u(ks[2], (32, 128), 1.0 / jnp.sqrt(32.0)),
        "b2": u(ks[3], (128,), 1.0 / jnp.sqrt(32.0)),
        # ConvTranspose2d weights in PyTorch layout (Cin, Cout, k, k)
        "ct1_w": u(ks[4], (32, 16, 3, 3), 1.0 / jnp.sqrt(32.0 * 9)),
        "ct1_b": u(ks[5], (16,), 1.0 / jnp.sqrt(32.0 * 9)),
        "ct2_w": u(ks[6], (16, 8, 3, 3), 1.0 / jnp.sqrt(16.0 * 9)),
        "ct2_b": u(ks[7], (8,), 1.0 / jnp.sqrt(16.0 * 9)),
        "ct3_w": u(ks[8], (8, 1, 3, 3), 1.0 / jnp.sqrt(8.0 * 9)),
        "ct3_b": u(ks[9], (1,), 1.0 / jnp.sqrt(8.0 * 9)),
        # BatchNorm2d eval params: (gamma, beta, running_mean, running_var)
        "bn1": (1.0 + 0.1 * jax.random.normal(ks[10], (16,)),
                0.1 * jax.random.normal(ks[11], (16,)),
                0.1 * jax.random.normal(ks[12], (16,)),
                jax.random.uniform(ks[13], (16,), jnp.float32, 0.5, 1.5)),
        "bn2": (1.0 + 0.1 * jax.random.normal(ks[14], (8,)),
                0.1 * jax.random.normal(ks[15], (8,)),
                0.1 * jax.random.normal(ks[16], (8,)),
                jax.random.uniform(ks[17], (8,), jnp.float32, 0.5, 1.5)),
    }
    return jax.tree_util.tree_map(lambda a: a.astype(jnp.float32), params)


if __name__ == "__main__":
    key = jax.random.PRNGKey(0)
    pkey, xkey = jax.random.split(key)
    params = init_params(pkey)
    prep = prepare_decoder_params(params)          # one-time weight prep (eager)

    batch = 4
    x = jax.random.normal(xkey, (batch, ENCODED_SPACE_DIM), jnp.float32)

    fwd = jax.jit(decoder_conv_forward, static_argnames=("weight_buffers",))
    try:
        out = jax.block_until_ready(fwd(x, prep, weight_buffers=1))
    except Exception:
        # Fallback: Pallas build without single-buffer support -> default buffering.
        out = jax.block_until_ready(fwd(x, prep, weight_buffers=2))

    ref = decoder_conv_reference(x, params)
    assert out.shape == (batch, 1, 24, 24), out.shape
    assert bool(jnp.all(jnp.isfinite(out)))
    max_err = float(jnp.max(jnp.abs(out - ref)))
    # bf16 conv weights/activations (f32 accumulate): ~0.4% relative error.
    assert jnp.allclose(out, ref, atol=2e-2, rtol=2e-2), f"max_err={max_err}"

    print("KERNEL_OK")
</pallas_src>

<mosaic_0001>
module attributes {stable_mosaic.version = 11 : i64} {
  func.func @_decoder_kernel(%arg0: i32, %arg1: memref<8x8xf32, #tpu.memory_space<vmem>>, %arg2: memref<8x32xf32, #tpu.memory_space<vmem>>, %arg3: memref<1x32xf32, #tpu.memory_space<vmem>>, %arg4: memref<32x128xf32, #tpu.memory_space<vmem>>, %arg5: memref<1x128xf32, #tpu.memory_space<vmem>>, %arg6: memref<128x512xbf16, #tpu.memory_space<vmem>>, %arg7: memref<1x512xf32, #tpu.memory_space<vmem>>, %arg8: memref<512x1152xbf16, #tpu.memory_space<vmem>>, %arg9: memref<1x1152xf32, #tpu.memory_space<vmem>>, %arg10: memref<1152x640xbf16, #tpu.memory_space<vmem>>, %arg11: memref<1x640xf32, #tpu.memory_space<vmem>>, %arg12: memref<8x640xf32, #tpu.memory_space<vmem>>) attributes {dimension_semantics = [#tpu.dimension_semantics<parallel>], iteration_bounds = array<i64: 1>, scalar_prefetch = 0 : i64, scratch_operands = 0 : i64, tpu.core_type = #tpu.core_type<tc>, window_params = [{transform_indices = @transform_0, window_bounds = array<i64: 8, 8>}, {pipeline_mode = #tpu.pipeline_mode<synchronous>, transform_indices = @transform_1, window_bounds = array<i64: 8, 32>}, {pipeline_mode = #tpu.pipeline_mode<synchronous>, transform_indices = @transform_2, window_bounds = array<i64: 1, 32>}, {pipeline_mode = #tpu.pipeline_mode<synchronous>, transform_indices = @transform_3, window_bounds = array<i64: 32, 128>}, {pipeline_mode = #tpu.pipeline_mode<synchronous>, transform_indices = @transform_4, window_bounds = array<i64: 1, 128>}, {pipeline_mode = #tpu.pipeline_mode<synchronous>, transform_indices = @transform_5, window_bounds = array<i64: 128, 512>}, {pipeline_mode = #tpu.pipeline_mode<synchronous>, transform_indices = @transform_6, window_bounds = array<i64: 1, 512>}, {pipeline_mode = #tpu.pipeline_mode<synchronous>, transform_indices = @transform_7, window_bounds = array<i64: 512, 1152>}, {pipeline_mode = #tpu.pipeline_mode<synchronous>, transform_indices = @transform_8, window_bounds = array<i64: 1, 1152>}, {pipeline_mode = #tpu.pipeline_mode<synchronous>, transform_indices = @transform_9, window_bounds = array<i64: 1152, 640>}, {pipeline_mode = #tpu.pipeline_mode<synchronous>, transform_indices = @transform_10, window_bounds = array<i64: 1, 640>}, {transform_indices = @transform_11, window_bounds = array<i64: 8, 640>}]} {
    %c0 = arith.constant 0 : index
    %c0_0 = arith.constant 0 : index
    %0 = vector.load %arg1[%c0, %c0_0] : memref<8x8xf32, #tpu.memory_space<vmem>>, vector<8x8xf32>
    %c0_1 = arith.constant 0 : index
    %c0_2 = arith.constant 0 : index
    %1 = vector.load %arg2[%c0_1, %c0_2] : memref<8x32xf32, #tpu.memory_space<vmem>>, vector<8x32xf32>
    %cst = arith.constant dense<0.000000e+00> : vector<8x32xf32>
    %2 = tpu.matmul %0, %1, %cst {dimension_numbers = #tpu.dot_dimension_numbers<[1], [0], [0], [1], [0, 0, 1, 1], [], []>} : vector<8x8xf32>, vector<8x32xf32>, vector<8x32xf32> -> vector<8x32xf32>
    %c0_3 = arith.constant 0 : index
    %c0_4 = arith.constant 0 : index
    %3 = vector.load %arg3[%c0_3, %c0_4] : memref<1x32xf32, #tpu.memory_space<vmem>>, vector<1x32xf32>
    %4 = vector.broadcast %3 : vector<1x32xf32> to vector<8x32xf32>
    %5 = arith.addf %2, %4 : vector<8x32xf32>
    %cst_5 = arith.constant 0.000000e+00 : f32
    %6 = vector.broadcast %cst_5 : f32 to vector<8x32xf32>
    %7 = arith.maximumf %5, %6 : vector<8x32xf32>
    %c0_6 = arith.constant 0 : index
    %c0_7 = arith.constant 0 : index
    %8 = vector.load %arg4[%c0_6, %c0_7] : memref<32x128xf32, #tpu.memory_space<vmem>>, vector<32x128xf32>
    %cst_8 = arith.constant dense<0.000000e+00> : vector<8x128xf32>
    %9 = tpu.matmul %7, %8, %cst_8 {dimension_numbers = #tpu.dot_dimension_numbers<[1], [0], [0], [1], [0, 0, 1, 1], [], []>} : vector<8x32xf32>, vector<32x128xf32>, vector<8x128xf32> -> vector<8x128xf32>
    %c0_9 = arith.constant 0 : index
    %c0_10 = arith.constant 0 : index
    %10 = vector.load %arg5[%c0_9, %c0_10] : memref<1x128xf32, #tpu.memory_space<vmem>>, vector<1x128xf32>
    %11 = vector.broadcast %10 : vector<1x128xf32> to vector<8x128xf32>
    %12 = arith.addf %9, %11 : vector<8x128xf32>
    %cst_11 = arith.constant 0.000000e+00 : f32
    %13 = vector.broadcast %cst_11 : f32 to vector<8x128xf32>
    %14 = arith.maximumf %12, %13 : vector<8x128xf32>
    %15 = arith.truncf %14 : vector<8x128xf32> to vector<8x128xbf16>
    %c0_12 = arith.constant 0 : index
    %c0_13 = arith.constant 0 : index
    %16 = vector.load %arg6[%c0_12, %c0_13] : memref<128x512xbf16, #tpu.memory_space<vmem>>, vector<128x512xbf16>
    %cst_14 = arith.constant dense<0.000000e+00> : vector<8x512xf32>
    %17 = tpu.matmul %15, %16, %cst_14 {dimension_numbers = #tpu.dot_dimension_numbers<[1], [0], [0], [1], [0, 0, 1, 1], [], []>} : vector<8x128xbf16>, vector<128x512xbf16>, vector<8x512xf32> -> vector<8x512xf32>
    %c0_15 = arith.constant 0 : index
    %c0_16 = arith.constant 0 : index
    %18 = vector.load %arg7[%c0_15, %c0_16] : memref<1x512xf32, #tpu.memory_space<vmem>>, vector<1x512xf32>
    %19 = vector.broadcast %18 : vector<1x512xf32> to vector<8x512xf32>
    %20 = arith.addf %17, %19 : vector<8x512xf32>
    %cst_17 = arith.constant 0.000000e+00 : f32
    %21 = vector.broadcast %cst_17 : f32 to vector<8x512xf32>
    %22 = arith.maximumf %20, %21 : vector<8x512xf32>
    %23 = arith.truncf %22 : vector<8x512xf32> to vector<8x512xbf16>
    %c0_18 = arith.constant 0 : index
    %c0_19 = arith.constant 0 : index
    %24 = vector.load %arg8[%c0_18, %c0_19] : memref<512x1152xbf16, #tpu.memory_space<vmem>>, vector<512x1152xbf16>
    %cst_20 = arith.constant dense<0.000000e+00> : vector<8x1152xf32>
    %25 = tpu.matmul %23, %24, %cst_20 {dimension_numbers = #tpu.dot_dimension_numbers<[1], [0], [0], [1], [0, 0, 1, 1], [], []>} : vector<8x512xbf16>, vector<512x1152xbf16>, vector<8x1152xf32> -> vector<8x1152xf32>
    %c0_21 = arith.constant 0 : index
    %c0_22 = arith.constant 0 : index
    %26 = vector.load %arg9[%c0_21, %c0_22] : memref<1x1152xf32, #tpu.memory_space<vmem>>, vector<1x1152xf32>
    %27 = vector.broadcast %26 : vector<1x1152xf32> to vector<8x1152xf32>
    %28 = arith.addf %25, %27 : vector<8x1152xf32>
    %cst_23 = arith.constant 0.000000e+00 : f32
    %29 = vector.broadcast %cst_23 : f32 to vector<8x1152xf32>
    %30 = arith.maximumf %28, %29 : vector<8x1152xf32>
    %31 = arith.truncf %30 : vector<8x1152xf32> to vector<8x1152xbf16>
    %c0_24 = arith.constant 0 : index
    %c0_25 = arith.constant 0 : index
    %32 = vector.load %arg10[%c0_24, %c0_25] : memref<1152x640xbf16, #tpu.memory_space<vmem>>, vector<1152x640xbf16>
    %cst_26 = arith.constant dense<0.000000e+00> : vector<8x640xf32>
    %33 = tpu.matmul %31, %32, %cst_26 {dimension_numbers = #tpu.dot_dimension_numbers<[1], [0], [0], [1], [0, 0, 1, 1], [], []>} : vector<8x1152xbf16>, vector<1152x640xbf16>, vector<8x640xf32> -> vector<8x640xf32>
    %c0_27 = arith.constant 0 : index
    %c0_28 = arith.constant 0 : index
    %34 = vector.load %arg11[%c0_27, %c0_28] : memref<1x640xf32, #tpu.memory_space<vmem>>, vector<1x640xf32>
    %35 = vector.broadcast %34 : vector<1x640xf32> to vector<8x640xf32>
    %36 = arith.addf %33, %35 : vector<8x640xf32>
    %c0_29 = arith.constant 0 : index
    %c0_30 = arith.constant 0 : index
    %37 = vector.load %arg12[%c0_29, %c0_30] : memref<8x640xf32, #tpu.memory_space<vmem>>, vector<8x640xf32>
    tpu.vector_store %arg12[%c0_29, %c0_30], %36 {strides = array<i32>} : memref<8x640xf32, #tpu.memory_space<vmem>>, vector<8x640xf32>,
    return
  }
  func.func @transform_0(%arg0: i32) -> (i32, i32) {
    %c0_i32 = arith.constant 0 : i32
    %c0_i32_0 = arith.constant 0 : i32
    return %arg0, %c0_i32 : i32, i32
  }
  func.func @transform_1(%arg0: i32) -> (i32, i32) {
    %c0_i32 = arith.constant 0 : i32
    %c0_i32_0 = arith.constant 0 : i32
    %c0_i32_1 = arith.constant 0 : i32
    return %c0_i32, %c0_i32_0 : i32, i32
  }
  func.func @transform_2(%arg0: i32) -> (i32, i32) {
    %c0_i32 = arith.constant 0 : i32
    %c0_i32_0 = arith.constant 0 : i32
    %c0_i32_1 = arith.constant 0 : i32
    return %c0_i32, %c0_i32_0 : i32, i32
  }
  func.func @transform_3(%arg0: i32) -> (i32, i32) {
    %c0_i32 = arith.constant 0 : i32
    %c0_i32_0 = arith.constant 0 : i32
    %c0_i32_1 = arith.constant 0 : i32
    return %c0_i32, %c0_i32_0 : i32, i32
  }
  func.func @transform_4(%arg0: i32) -> (i32, i32) {
    %c0_i32 = arith.constant 0 : i32
    %c0_i32_0 = arith.constant 0 : i32
    %c0_i32_1 = arith.constant 0 : i32
    return %c0_i32, %c0_i32_0 : i32, i32
  }
  func.func @transform_5(%arg0: i32) -> (i32, i32) {
    %c0_i32 = arith.constant 0 : i32
    %c0_i32_0 = arith.constant 0 : i32
    %c0_i32_1 = arith.constant 0 : i32
    return %c0_i32, %c0_i32_0 : i32, i32
  }
  func.func @transform_6(%arg0: i32) -> (i32, i32) {
    %c0_i32 = arith.constant 0 : i32
    %c0_i32_0 = arith.constant 0 : i32
    %c0_i32_1 = arith.constant 0 : i32
    return %c0_i32, %c0_i32_0 : i32, i32
  }
  func.func @transform_7(%arg0: i32) -> (i32, i32) {
    %c0_i32 = arith.constant 0 : i32
    %c0_i32_0 = arith.constant 0 : i32
    %c0_i32_1 = arith.constant 0 : i32
    return %c0_i32, %c0_i32_0 : i32, i32
  }
  func.func @transform_8(%arg0: i32) -> (i32, i32) {
    %c0_i32 = arith.constant 0 : i32
    %c0_i32_0 = arith.constant 0 : i32
    %c0_i32_1 = arith.constant 0 : i32
    return %c0_i32, %c0_i32_0 : i32, i32
  }
  func.func @transform_9(%arg0: i32) -> (i32, i32) {
    %c0_i32 = arith.constant 0 : i32
    %c0_i32_0 = arith.constant 0 : i32
    %c0_i32_1 = arith.constant 0 : i32
    return %c0_i32, %c0_i32_0 : i32, i32
  }
  func.func @transform_10(%arg0: i32) -> (i32, i32) {
    %c0_i32 = arith.constant 0 : i32
    %c0_i32_0 = arith.constant 0 : i32
    %c0_i32_1 = arith.constant 0 : i32
    return %c0_i32, %c0_i32_0 : i32, i32
  }
  func.func @transform_11(%arg0: i32) -> (i32, i32) {
    %c0_i32 = arith.constant 0 : i32
    %c0_i32_0 = arith.constant 0 : i32
    return %arg0, %c0_i32 : i32, i32
  }
}

module attributes {stable_mosaic.version = 11 : i64} {
  func.func @_decoder_kernel(%arg0: i32, %arg1: memref<8x8xf32, #tpu.memory_space<vmem>>, %arg2: memref<8x32xf32, #tpu.memory_space<vmem>>, %arg3: memref<1x32xf32, #tpu.memory_space<vmem>>, %arg4: memref<32x128xf32, #tpu.memory_space<vmem>>, %arg5: memref<1x128xf32, #tpu.memory_space<vmem>>, %arg6: memref<128x512xbf16, #tpu.memory_space<vmem>>, %arg7: memref<1x512xf32, #tpu.memory_space<vmem>>, %arg8: memref<512x1152xbf16, #tpu.memory_space<vmem>>, %arg9: memref<1x1152xf32, #tpu.memory_space<vmem>>, %arg10: memref<1152x640xbf16, #tpu.memory_space<vmem>>, %arg11: memref<1x640xf32, #tpu.memory_space<vmem>>, %arg12: memref<8x640xf32, #tpu.memory_space<vmem>>) attributes {dimension_semantics = [#tpu.dimension_semantics<parallel>], iteration_bounds = array<i64: 1>, scalar_prefetch = 0 : i64, scratch_operands = 0 : i64, tpu.core_type = #tpu.core_type<tc>, window_params = [{transform_indices = @transform_0, window_bounds = array<i64: 8, 8>}, {pipeline_mode = #tpu.pipeline_mode<synchronous>, transform_indices = @transform_1, window_bounds = array<i64: 8, 32>}, {pipeline_mode = #tpu.pipeline_mode<synchronous>, transform_indices = @transform_2, window_bounds = array<i64: 1, 32>}, {pipeline_mode = #tpu.pipeline_mode<synchronous>, transform_indices = @transform_3, window_bounds = array<i64: 32, 128>}, {pipeline_mode = #tpu.pipeline_mode<synchronous>, transform_indices = @transform_4, window_bounds = array<i64: 1, 128>}, {pipeline_mode = #tpu.pipeline_mode<synchronous>, transform_indices = @transform_5, window_bounds = array<i64: 128, 512>}, {pipeline_mode = #tpu.pipeline_mode<synchronous>, transform_indices = @transform_6, window_bounds = array<i64: 1, 512>}, {pipeline_mode = #tpu.pipeline_mode<synchronous>, transform_indices = @transform_7, window_bounds = array<i64: 512, 1152>}, {pipeline_mode = #tpu.pipeline_mode<synchronous>, transform_indices = @transform_8, window_bounds = array<i64: 1, 1152>}, {pipeline_mode = #tpu.pipeline_mode<synchronous>, transform_indices = @transform_9, window_bounds = array<i64: 1152, 640>}, {pipeline_mode = #tpu.pipeline_mode<synchronous>, transform_indices = @transform_10, window_bounds = array<i64: 1, 640>}, {transform_indices = @transform_11, window_bounds = array<i64: 8, 640>}]} {
    %c0 = arith.constant 0 : index
    %c0_0 = arith.constant 0 : index
    %0 = vector.load %arg1[%c0, %c0_0] : memref<8x8xf32, #tpu.memory_space<vmem>>, vector<8x8xf32>
    %c0_1 = arith.constant 0 : index
    %c0_2 = arith.constant 0 : index
    %1 = vector.load %arg2[%c0_1, %c0_2] : memref<8x32xf32, #tpu.memory_space<vmem>>, vector<8x32xf32>
    %cst = arith.constant dense<0.000000e+00> : vector<8x32xf32>
    %2 = tpu.matmul %0, %1, %cst {dimension_numbers = #tpu.dot_dimension_numbers<[1], [0], [0], [1], [0, 0, 1, 1], [], []>} : vector<8x8xf32>, vector<8x32xf32>, vector<8x32xf32> -> vector<8x32xf32>
    %c0_3 = arith.constant 0 : index
    %c0_4 = arith.constant 0 : index
    %3 = vector.load %arg3[%c0_3, %c0_4] : memref<1x32xf32, #tpu.memory_space<vmem>>, vector<1x32xf32>
    %4 = vector.broadcast %3 : vector<1x32xf32> to vector<8x32xf32>
    %5 = arith.addf %2, %4 : vector<8x32xf32>
    %cst_5 = arith.constant 0.000000e+00 : f32
    %6 = vector.broadcast %cst_5 : f32 to vector<8x32xf32>
    %7 = arith.maximumf %5, %6 : vector<8x32xf32>
    %c0_6 = arith.constant 0 : index
    %c0_7 = arith.constant 0 : index
    %8 = vector.load %arg4[%c0_6, %c0_7] : memref<32x128xf32, #tpu.memory_space<vmem>>, vector<32x128xf32>
    %cst_8 = arith.constant dense<0.000000e+00> : vector<8x128xf32>
    %9 = tpu.matmul %7, %8, %cst_8 {dimension_numbers = #tpu.dot_dimension_numbers<[1], [0], [0], [1], [0, 0, 1, 1], [], []>} : vector<8x32xf32>, vector<32x128xf32>, vector<8x128xf32> -> vector<8x128xf32>
    %c0_9 = arith.constant 0 : index
    %c0_10 = arith.constant 0 : index
    %10 = vector.load %arg5[%c0_9, %c0_10] : memref<1x128xf32, #tpu.memory_space<vmem>>, vector<1x128xf32>
    %11 = vector.broadcast %10 : vector<1x128xf32> to vector<8x128xf32>
    %12 = arith.addf %9, %11 : vector<8x128xf32>
    %cst_11 = arith.constant 0.000000e+00 : f32
    %13 = vector.broadcast %cst_11 : f32 to vector<8x128xf32>
    %14 = arith.maximumf %12, %13 : vector<8x128xf32>
    %15 = arith.truncf %14 : vector<8x128xf32> to vector<8x128xbf16>
    %c0_12 = arith.constant 0 : index
    %c0_13 = arith.constant 0 : index
    %16 = vector.load %arg6[%c0_12, %c0_13] : memref<128x512xbf16, #tpu.memory_space<vmem>>, vector<128x512xbf16>
    %cst_14 = arith.constant dense<0.000000e+00> : vector<8x512xf32>
    %17 = tpu.matmul %15, %16, %cst_14 {dimension_numbers = #tpu.dot_dimension_numbers<[1], [0], [0], [1], [0, 0, 1, 1], [], []>} : vector<8x128xbf16>, vector<128x512xbf16>, vector<8x512xf32> -> vector<8x512xf32>
    %c0_15 = arith.constant 0 : index
    %c0_16 = arith.constant 0 : index
    %18 = vector.load %arg7[%c0_15, %c0_16] : memref<1x512xf32, #tpu.memory_space<vmem>>, vector<1x512xf32>
    %19 = vector.broadcast %18 : vector<1x512xf32> to vector<8x512xf32>
    %20 = arith.addf %17, %19 : vector<8x512xf32>
    %cst_17 = arith.constant 0.000000e+00 : f32
    %21 = vector.broadcast %cst_17 : f32 to vector<8x512xf32>
    %22 = arith.maximumf %20, %21 : vector<8x512xf32>
    %23 = arith.truncf %22 : vector<8x512xf32> to vector<8x512xbf16>
    %c0_18 = arith.constant 0 : index
    %c0_19 = arith.constant 0 : index
    %24 = vector.load %arg8[%c0_18, %c0_19] : memref<512x1152xbf16, #tpu.memory_space<vmem>>, vector<512x1152xbf16>
    %cst_20 = arith.constant dense<0.000000e+00> : vector<8x1152xf32>
    %25 = tpu.matmul %23, %24, %cst_20 {dimension_numbers = #tpu.dot_dimension_numbers<[1], [0], [0], [1], [0, 0, 1, 1], [], []>} : vector<8x512xbf16>, vector<512x1152xbf16>, vector<8x1152xf32> -> vector<8x1152xf32>
    %c0_21 = arith.constant 0 : index
    %c0_22 = arith.constant 0 : index
    %26 = vector.load %arg9[%c0_21, %c0_22] : memref<1x1152xf32, #tpu.memory_space<vmem>>, vector<1x1152xf32>
    %27 = vector.broadcast %26 : vector<1x1152xf32> to vector<8x1152xf32>
    %28 = arith.addf %25, %27 : vector<8x1152xf32>
    %cst_23 = arith.constant 0.000000e+00 : f32
    %29 = vector.broadcast %cst_23 : f32 to vector<8x1152xf32>
    %30 = arith.maximumf %28, %29 : vector<8x1152xf32>
    %31 = arith.truncf %30 : vector<8x1152xf32> to vector<8x1152xbf16>
    %c0_24 = arith.constant 0 : index
    %c0_25 = arith.constant 0 : index
    %32 = vector.load %arg10[%c0_24, %c0_25] : memref<1152x640xbf16, #tpu.memory_space<vmem>>, vector<1152x640xbf16>
    %cst_26 = arith.constant dense<0.000000e+00> : vector<8x640xf32>
    %33 = tpu.matmul %31, %32, %cst_26 {dimension_numbers = #tpu.dot_dimension_numbers<[1], [0], [0], [1], [0, 0, 1, 1], [], []>} : vector<8x1152xbf16>, vector<1152x640xbf16>, vector<8x640xf32> -> vector<8x640xf32>
    %c0_27 = arith.constant 0 : index
    %c0_28 = arith.constant 0 : index
    %34 = vector.load %arg11[%c0_27, %c0_28] : memref<1x640xf32, #tpu.memory_space<vmem>>, vector<1x640xf32>
    %35 = vector.broadcast %34 : vector<1x640xf32> to vector<8x640xf32>
    %36 = arith.addf %33, %35 : vector<8x640xf32>
    %c0_29 = arith.constant 0 : index
    %c0_30 = arith.constant 0 : index
    %37 = vector.load %arg12[%c0_29, %c0_30] : memref<8x640xf32, #tpu.memory_space<vmem>>, vector<8x640xf32>
    tpu.vector_store %arg12[%c0_29, %c0_30], %36 {strides = array<i32>} : memref<8x640xf32, #tpu.memory_space<vmem>>, vector<8x640xf32>,
    return
  }
  func.func @transform_0(%arg0: i32) -> (i32, i32) {
    %c0_i32 = arith.constant 0 : i32
    %c0_i32_0 = arith.constant 0 : i32
    return %arg0, %c0_i32 : i32, i32
  }
  func.func @transform_1(%arg0: i32) -> (i32, i32) {
    %c0_i32 = arith.constant 0 : i32
    %c0_i32_0 = arith.constant 0 : i32
    %c0_i32_1 = arith.constant 0 : i32
    return %c0_i32, %c0_i32_0 : i32, i32
  }
  func.func @transform_2(%arg0: i32) -> (i32, i32) {
    %c0_i32 = arith.constant 0 : i32
    %c0_i32_0 = arith.constant 0 : i32
    %c0_i32_1 = arith.constant 0 : i32
    return %c0_i32, %c0_i32_0 : i32, i32
  }
  func.func @transform_3(%arg0: i32) -> (i32, i32) {
    %c0_i32 = arith.constant 0 : i32
    %c0_i32_0 = arith.constant 0 : i32
    %c0_i32_1 = arith.constant 0 : i32
    return %c0_i32, %c0_i32_0 : i32, i32
  }
  func.func @transform_4(%arg0: i32) -> (i32, i32) {
    %c0_i32 = arith.constant 0 : i32
    %c0_i32_0 = arith.constant 0 : i32
    %c0_i32_1 = arith.constant 0 : i32
    return %c0_i32, %c0_i32_0 : i32, i32
  }
  func.func @transform_5(%arg0: i32) -> (i32, i32) {
    %c0_i32 = arith.constant 0 : i32
    %c0_i32_0 = arith.constant 0 : i32
    %c0_i32_1 = arith.constant 0 : i32
    return %c0_i32, %c0_i32_0 : i32, i32
  }
  func.func @transform_6(%arg0: i32) -> (i32, i32) {
    %c0_i32 = arith.constant 0 : i32
    %c0_i32_0 = arith.constant 0 : i32
    %c0_i32_1 = arith.constant 0 : i32
    return %c0_i32, %c0_i32_0 : i32, i32
  }
  func.func @transform_7(%arg0: i32) -> (i32, i32) {
    %c0_i32 = arith.constant 0 : i32
    %c0_i32_0 = arith.constant 0 : i32
    %c0_i32_1 = arith.constant 0 : i32
    return %c0_i32, %c0_i32_0 : i32, i32
  }
  func.func @transform_8(%arg0: i32) -> (i32, i32) {
    %c0_i32 = arith.constant 0 : i32
    %c0_i32_0 = arith.constant 0 : i32
    %c0_i32_1 = arith.constant 0 : i32
    return %c0_i32, %c0_i32_0 : i32, i32
  }
  func.func @transform_9(%arg0: i32) -> (i32, i32) {
    %c0_i32 = arith.constant 0 : i32
    %c0_i32_0 = arith.constant 0 : i32
    %c0_i32_1 = arith.constant 0 : i32
    return %c0_i32, %c0_i32_0 : i32, i32
  }
  func.func @transform_10(%arg0: i32) -> (i32, i32) {
    %c0_i32 = arith.constant 0 : i32
    %c0_i32_0 = arith.constant 0 : i32
    %c0_i32_1 = arith.constant 0 : i32
    return %c0_i32, %c0_i32_0 : i32, i32
  }
  func.func @transform_11(%arg0: i32) -> (i32, i32) {
    %c0_i32 = arith.constant 0 : i32
    %c0_i32_0 = arith.constant 0 : i32
    return %arg0, %c0_i32 : i32, i32
  }
}

</mosaic_0001>

<llo_original>
// kernel: decoder_conv_forward.1
$region0: #{decoder_conv_forward.1}
  #allocation0 [shape = 'u32[]', space=smem, size = 0x4, offset = 0x4, fixed_abs, tag = 'smem constant byte address 0x4 - core index']
  #allocation1 [shape = 'u32[72,128]{1,0:T(1,128)}', space=vmem, size = 0x9000, scoped, tag = 'internal scratch']
  %s0 = inlined_call_operand.vmem [shape: f32[8,8], index: 0, kind: input, shape index: {}]
  %s1 = inlined_call_operand.hbm [shape: f32[8,32], index: 1, kind: input, shape index: {}]
  %s2 = inlined_call_operand.hbm [shape: f32[1,32], index: 2, kind: input, shape index: {}]
  %s3 = inlined_call_operand.hbm [shape: f32[32,128], index: 3, kind: input, shape index: {}]
  %s4 = inlined_call_operand.hbm [shape: f32[1,128], index: 4, kind: input, shape index: {}]
  %s5 = inlined_call_operand.hbm [shape: bf16[128,512], index: 5, kind: input, shape index: {}]
  %s6 = inlined_call_operand.hbm [shape: f32[1,512], index: 6, kind: input, shape index: {}]
  %s7 = inlined_call_operand.hbm [shape: bf16[512,1152], index: 7, kind: input, shape index: {}]
  %s8 = inlined_call_operand.hbm [shape: f32[1,1152], index: 8, kind: input, shape index: {}]
  %s9 = inlined_call_operand.hbm [shape: bf16[1152,640], index: 9, kind: input, shape index: {}]
  %s10 = inlined_call_operand.hbm [shape: f32[1,640], index: 10, kind: input, shape index: {}]
  %s11 = inlined_call_operand.vmem [shape: f32[8,640], index: 11, kind: output, shape index: {}]
  %s12 = sld [smem:[#allocation0]]
  $region94: #{decoder_conv_forward.1} parent=0
    _
  %s14 = ssub.s32 1, %s12
  %s15 = scalar_select 0, %s14, %s12
  $region1: #{decoder_conv_forward.1} parent=0
    #allocation2 [shape = 'u8[4096]{0}', space=vmem, size = 0x1000, scoped, tag = 'input window, operand 1, single buffered']
    #allocation3 [shape = 's32[1]{0}', space=sflag, size = 0x4, scoped, tag = 'scoped memory for decoder_conv_forward.1']
    #allocation4 [shape = 'u8[512]{0}', space=vmem, size = 0x400, scoped, tag = 'input window, operand 2, single buffered']
    #allocation5 [shape = 's32[1]{0}', space=sflag, size = 0x4, scoped, tag = 'scoped memory for decoder_conv_forward.1']
    #allocation6 [shape = 'u8[16384]{0}', space=vmem, size = 0x4000, scoped, tag = 'input window, operand 3, single buffered']
    #allocation7 [shape = 'u8[512]{0}', space=vmem, size = 0x400, scoped, tag = 'input window, operand 4, single buffered']
    #allocation8 [shape = 's32[1]{0}', space=sflag, size = 0x4, scoped, tag = 'scoped memory for decoder_conv_forward.1']
    #allocation9 [shape = 'u8[131072]{0}', space=vmem, size = 0x20000, scoped, tag = 'input window, operand 5, single buffered']
    #allocation10 [shape = 'u8[2048]{0}', space=vmem, size = 0x800, scoped, tag = 'input window, operand 6, single buffered']
    #allocation11 [shape = 's32[1]{0}', space=sflag, size = 0x4, scoped, tag = 'scoped memory for decoder_conv_forward.1']
    #allocation12 [shape = 'u8[1179648]{0}', space=vmem, size = 0x120000, scoped, tag = 'input window, operand 7, single buffered']
    #allocation13 [shape = 'u8[4608]{0}', space=vmem, size = 0x1400, scoped, tag = 'input window, operand 8, single buffered']
    #allocation14 [shape = 's32[1]{0}', space=sflag, size = 0x4, scoped, tag = 'scoped memory for decoder_conv_forward.1']
    #allocation15 [shape = 'u8[1474560]{0}', space=vmem, size = 0x168000, scoped, tag = 'input window, operand 9, single buffered']
    #allocation16 [shape = 'u8[2560]{0}', space=vmem, size = 0xc00, scoped, tag = 'input window, operand 10, single buffered']
    #allocation17 [shape = 's32[1]{0}', space=sflag, size = 0x4, scoped, tag = 'scoped memory for decoder_conv_forward.1']
    %16 = vsyncpa [#allocation3], 0
    %17 = vsyncpa [#allocation5], 0
    %18 = vsyncpa [#allocation8], 0
    %19 = vsyncpa [#allocation11], 0
    %20 = vsyncpa [#allocation14], 0
    %21 = vsyncpa [#allocation17], 0
    // Predicated region
    $region2: #{decoder_conv_forward.1} parent=1 // pred_check
      _
    $region3: #{decoder_conv_forward.1} parent=1 // pred_check_branch
      %23 = sbr.rel (0) target = $region5
    $region4: #{decoder_conv_forward.1} parent=1 // pred_region
      _
    $region5: #{decoder_conv_forward.1} parent=1 // pred_fallthru
      _
    // Predicated region
    $region6: #{decoder_conv_forward.1} parent=1 // pred_check
      _
    $region7: #{decoder_conv_forward.1} parent=1 // pred_check_branch
      %25 = sbr.rel (0) target = $region9
    $region8: #{decoder_conv_forward.1} parent=1 // pred_region
      %27 = vsyncadd [#allocation3], 0
      %s29 = sshll.u32 %s1, 4
      %s30 = int_to_ptr.hbm [resolvable:$true] %s29
      %s31 = sshll.u32 [#allocation2], 4
      %s32 = int_to_ptr.vmem [resolvable:$true] %s31
      %34 = dma.hbm_to_vmem [thread:$0]  %s30, 128, %s32, [#allocation3]
    $region9: #{decoder_conv_forward.1} parent=1 // pred_fallthru
      _
    // Predicated region
    $region10: #{decoder_conv_forward.1} parent=1 // pred_check
      _
    $region11: #{decoder_conv_forward.1} parent=1 // pred_check_branch
      %36 = sbr.rel (0) target = $region13
    $region12: #{decoder_conv_forward.1} parent=1 // pred_region
      %38 = vsyncadd [#allocation5], 0
      %s40 = sshll.u32 %s2, 4
      %s41 = int_to_ptr.hbm [resolvable:$true] %s40
      %s42 = sshll.u32 [#allocation4], 4
      %s43 = int_to_ptr.vmem [resolvable:$true] %s42
      %45 = dma.hbm_to_vmem [thread:$0]  %s41, 16, %s43, [#allocation5]
    $region13: #{decoder_conv_forward.1} parent=1 // pred_fallthru
      _
    // Predicated region
    $region14: #{decoder_conv_forward.1} parent=1 // pred_check
      _
    $region15: #{decoder_conv_forward.1} parent=1 // pred_check_branch
      %47 = sbr.rel (0) target = $region17
    $region16: #{decoder_conv_forward.1} parent=1 // pred_region
      %49 = vsyncadd [#allocation5], 0
      %s50 = sshll.u32 %s3, 4
      %s51 = int_to_ptr.hbm [resolvable:$true] %s50
      %s52 = sshll.u32 [#allocation6], 4
      %s53 = int_to_ptr.vmem [resolvable:$true] %s52
      %58 = dma.hbm_to_vmem [thread:$0]  %s51, 512, %s53, [#allocation5], 128, 128, 8
    $region17: #{decoder_conv_forward.1} parent=1 // pred_fallthru
      _
    // Predicated region
    $region18: #{decoder_conv_forward.1} parent=1 // pred_check
      _
    $region19: #{decoder_conv_forward.1} parent=1 // pred_check_branch
      %60 = sbr.rel (0) target = $region21
    $region20: #{decoder_conv_forward.1} parent=1 // pred_region
      %62 = vsyncadd [#allocation8], 0
      %s64 = sshll.u32 %s4, 4
      %s65 = int_to_ptr.hbm [resolvable:$true] %s64
      %s66 = sshll.u32 [#allocation7], 4
      %s67 = int_to_ptr.vmem [resolvable:$true] %s66
      %69 = dma.hbm_to_vmem [thread:$0]  %s65, 16, %s67, [#allocation8]
    $region21: #{decoder_conv_forward.1} parent=1 // pred_fallthru
      _
    // Predicated region
    $region22: #{decoder_conv_forward.1} parent=1 // pred_check
      _
    $region23: #{decoder_conv_forward.1} parent=1 // pred_check_branch
      %71 = sbr.rel (0) target = $region25
    $region24: #{decoder_conv_forward.1} parent=1 // pred_region
      %73 = vsyncadd [#allocation8], 0
      %s74 = sshll.u32 %s5, 4
      %s75 = int_to_ptr.hbm [resolvable:$true] %s74
      %s76 = sshll.u32 [#allocation9], 4
      %s77 = int_to_ptr.vmem [resolvable:$true] %s76
      %82 = dma.hbm_to_vmem [thread:$0]  %s75, 4096, %s77, [#allocation8], 256, 256, 16
    $region25: #{decoder_conv_forward.1} parent=1 // pred_fallthru
      _
    // Predicated region
    $region26: #{decoder_conv_forward.1} parent=1 // pred_check
      _
    $region27: #{decoder_conv_forward.1} parent=1 // pred_check_branch
      %84 = sbr.rel (0) target = $region29
    $region28: #{decoder_conv_forward.1} parent=1 // pred_region
      %86 = vsyncadd [#allocation11], 0
      %s88 = sshll.u32 %s6, 4
      %s89 = int_to_ptr.hbm [resolvable:$true] %s88
      %s90 = sshll.u32 [#allocation10], 4
      %s91 = int_to_ptr.vmem [resolvable:$true] %s90
      %93 = dma.hbm_to_vmem [thread:$0]  %s89, 64, %s91, [#allocation11]
    $region29: #{decoder_conv_forward.1} parent=1 // pred_fallthru
      _
    // Predicated region
    $region30: #{decoder_conv_forward.1} parent=1 // pred_check
      _
    $region31: #{decoder_conv_forward.1} parent=1 // pred_check_branch
      %95 = sbr.rel (0) target = $region33
    $region32: #{decoder_conv_forward.1} parent=1 // pred_region
      %97 = vsyncadd [#allocation11], 0
      %s98 = sshll.u32 %s7, 4
      %s99 = int_to_ptr.hbm [resolvable:$true] %s98
      %s100 = sshll.u32 [#allocation12], 4
      %s101 = int_to_ptr.vmem [resolvable:$true] %s100
      %106 = dma.hbm_to_vmem [thread:$0]  %s99, 36864, %s101, [#allocation11], 576, 576, 36
    $region33: #{decoder_conv_forward.1} parent=1 // pred_fallthru
      _
    // Predicated region
    $region34: #{decoder_conv_forward.1} parent=1 // pred_check
      _
    $region35: #{decoder_conv_forward.1} parent=1 // pred_check_branch
      %108 = sbr.rel (0) target = $region37
    $region36: #{decoder_conv_forward.1} parent=1 // pred_region
      %110 = vsyncadd [#allocation14], 0
      %s112 = sshll.u32 %s8, 4
      %s113 = int_to_ptr.hbm [resolvable:$true] %s112
      %s114 = sshll.u32 [#allocation13], 4
      %s115 = int_to_ptr.vmem [resolvable:$true] %s114
      %117 = dma.hbm_to_vmem [thread:$0]  %s113, 144, %s115, [#allocation14]
    $region37: #{decoder_conv_forward.1} parent=1 // pred_fallthru
      _
    // Predicated region
    $region38: #{decoder_conv_forward.1} parent=1 // pred_check
      _
    $region39: #{decoder_conv_forward.1} parent=1 // pred_check_branch
      %119 = sbr.rel (0) target = $region41
    $region40: #{decoder_conv_forward.1} parent=1 // pred_region
      %121 = vsyncadd [#allocation14], 0
      %s122 = sshll.u32 %s9, 4
      %s123 = int_to_ptr.hbm [resolvable:$true] %s122
      %s124 = sshll.u32 [#allocation15], 4
      %s125 = int_to_ptr.vmem [resolvable:$true] %s124
      %130 = dma.hbm_to_vmem [thread:$0]  %s123, 46080, %s125, [#allocation14], 320, 320, 20
    $region41: #{decoder_conv_forward.1} parent=1 // pred_fallthru
      _
    // Predicated region
    $region42: #{decoder_conv_forward.1} parent=1 // pred_check
      _
    $region43: #{decoder_conv_forward.1} parent=1 // pred_check_branch
      %132 = sbr.rel (0) target = $region45
    $region44: #{decoder_conv_forward.1} parent=1 // pred_region
      %134 = vsyncadd [#allocation17], 0
      %s136 = sshll.u32 %s10, 4
      %s137 = int_to_ptr.hbm [resolvable:$true] %s136
      %s138 = sshll.u32 [#allocation16], 4
      %s139 = int_to_ptr.vmem [resolvable:$true] %s138
      %141 = dma.hbm_to_vmem [thread:$0]  %s137, 80, %s139, [#allocation17]
    $region45: #{decoder_conv_forward.1} parent=1 // pred_fallthru
      _
    // Predicated region
    $region46: #{decoder_conv_forward.1} parent=1 // pred_check
      _
    $region47: #{decoder_conv_forward.1} parent=1 // pred_check_branch
      %143 = sbr.rel (0) target = $region49
    $region48: #{decoder_conv_forward.1} parent=1 // pred_region
      %145 = dma.done [#allocation3], 128
    $region49: #{decoder_conv_forward.1} parent=1 // pred_fallthru
      _
    // Predicated region
    $region50: #{decoder_conv_forward.1} parent=1 // pred_check
      _
    $region51: #{decoder_conv_forward.1} parent=1 // pred_check_branch
      %147 = sbr.rel (0) target = $region53
    $region52: #{decoder_conv_forward.1} parent=1 // pred_region
      %149 = dma.done [#allocation5], 16
    $region53: #{decoder_conv_forward.1} parent=1 // pred_fallthru
      _
    // Predicated region
    $region54: #{decoder_conv_forward.1} parent=1 // pred_check
      _
    $region55: #{decoder_conv_forward.1} parent=1 // pred_check_branch
      %151 = sbr.rel (0) target = $region57
    $region56: #{decoder_conv_forward.1} parent=1 // pred_region
      %153 = dma.done [#allocation5], 512
    $region57: #{decoder_conv_forward.1} parent=1 // pred_fallthru
      _
    // Predicated region
    $region58: #{decoder_conv_forward.1} parent=1 // pred_check
      _
    $region59: #{decoder_conv_forward.1} parent=1 // pred_check_branch
      %155 = sbr.rel (0) target = $region61
    $region60: #{decoder_conv_forward.1} parent=1 // pred_region
      %157 = dma.done [#allocation8], 16
    $region61: #{decoder_conv_forward.1} parent=1 // pred_fallthru
      _
    // Predicated region
    $region62: #{decoder_conv_forward.1} parent=1 // pred_check
      _
    $region63: #{decoder_conv_forward.1} parent=1 // pred_check_branch
      %159 = sbr.rel (0) target = $region65
    $region64: #{decoder_conv_forward.1} parent=1 // pred_region
      %161 = dma.done [#allocation8], 4096
    $region65: #{decoder_conv_forward.1} parent=1 // pred_fallthru
      _
    // Predicated region
    $region66: #{decoder_conv_forward.1} parent=1 // pred_check
      _
    $region67: #{decoder_conv_forward.1} parent=1 // pred_check_branch
      %163 = sbr.rel (0) target = $region69
    $region68: #{decoder_conv_forward.1} parent=1 // pred_region
      %165 = dma.done [#allocation11], 64
    $region69: #{decoder_conv_forward.1} parent=1 // pred_fallthru
      _
    // Predicated region
    $region70: #{decoder_conv_forward.1} parent=1 // pred_check
      _
    $region71: #{decoder_conv_forward.1} parent=1 // pred_check_branch
      %167 = sbr.rel (0) target = $region73
    $region72: #{decoder_conv_forward.1} parent=1 // pred_region
      %169 = dma.done [#allocation11], 36864
    $region73: #{decoder_conv_forward.1} parent=1 // pred_fallthru
      _
    // Predicated region
    $region74: #{decoder_conv_forward.1} parent=1 // pred_check
      _
    $region75: #{decoder_conv_forward.1} parent=1 // pred_check_branch
      %171 = sbr.rel (0) target = $region77
    $region76: #{decoder_conv_forward.1} parent=1 // pred_region
      %173 = dma.done [#allocation14], 144
    $region77: #{decoder_conv_forward.1} parent=1 // pred_fallthru
      _
    // Predicated region
    $region78: #{decoder_conv_forward.1} parent=1 // pred_check
      _
    $region79: #{decoder_conv_forward.1} parent=1 // pred_check_branch
      %175 = sbr.rel (0) target = $region81
    $region80: #{decoder_conv_forward.1} parent=1 // pred_region
      %177 = dma.done [#allocation14], 46080
    $region81: #{decoder_conv_forward.1} parent=1 // pred_fallthru
      _
    // Predicated region
    $region82: #{decoder_conv_forward.1} parent=1 // pred_check
      _
    $region83: #{decoder_conv_forward.1} parent=1 // pred_check_branch
      %179 = sbr.rel (0) target = $region85
    $region84: #{decoder_conv_forward.1} parent=1 // pred_region
      %181 = dma.done [#allocation17], 80
    $region85: #{decoder_conv_forward.1} parent=1 // pred_fallthru
      _
    %v182 = vld [vmem:[%s0] sm:$0xff]
    %v183 = vld [vmem:[#allocation2] sm:$0xff]
    %v184 = vld [vmem:[#allocation4] sm:$0x1]
    %v186 = vperm.slane %v184, 0
    %vm188 = vcmask 64512
    %v190 = vsel %vm188, %v182, 0
    %192 = vmatpush.msra.mxu0 0.0
    %193 = vmatpush.msra.mxu0 0.0
    %194 = vmatpush.msra.mxu0 0.0
    %195 = vmatpush.msra.mxu0 0.0
    %196 = vmatpush.msra.mxu0 0.0
    %197 = vmatpush.msra.mxu0 0.0
    %198 = vmatpush.msra.mxu0 0.0
    %199 = vmatpush.msra.mxu0 0.0
    %200 = vmatpush.msra.mxu0 0.0
    %201 = vmatpush.msra.mxu0 0.0
    %202 = vmatpush.msra.mxu0 0.0
    %203 = vmatpush.msra.mxu0 0.0
    %204 = vmatpush.msra.mxu0 0.0
    %205 = vmatpush.msra.mxu0 0.0
    %206 = vmatpush.msra.mxu0 0.0
    %207 = vmatpush.msra.mxu0 %v183
    %208 = vmatmul.f32.gmra.mxu0 %v190
    %v209 = vpop.f32.mrf.mxu0
    %v210 = vadd.f32 %v186, %v209
    %211 = vdwg.mxu0
    %v212 = vmax.f32 %v210, 0.0
    %v213 = vld [vmem:[#allocation6] sm:$0xff]
    %v214 = vld [vmem:[#allocation6 + $0x8] sm:$0xff]
    %v215 = vld [vmem:[#allocation6 + $0x10] sm:$0xff]
    %v216 = vld [vmem:[#allocation6 + $0x18] sm:$0xff]
    %v217 = vld [vmem:[#allocation7] sm:$0x1]
    %v219 = vperm.slane %v217, 0
    %vm221 = vcmask 261120
    %v223 = vsel %vm221, %v212, 0
    %225 = vmatpush.msra.mxu0 0.0
    %226 = vmatpush.msra.mxu0 0.0
    %227 = vmatpush.msra.mxu0 0.0
    %228 = vmatpush.msra.mxu0 0.0
    %229 = vmatpush.msra.mxu0 0.0
    %230 = vmatpush.msra.mxu0 0.0
    %231 = vmatpush.msra.mxu0 0.0
    %232 = vmatpush.msra.mxu0 0.0
    %233 = vmatpush.msra.mxu0 0.0
    %234 = vmatpush.msra.mxu0 0.0
    %235 = vmatpush.msra.mxu0 0.0
    %236 = vmatpush.msra.mxu0 0.0
    %237 = vmatpush.msra.mxu0 %v216
    %238 = vmatpush.msra.mxu0 %v215
    %239 = vmatpush.msra.mxu0 %v214
    %240 = vmatpush.msra.mxu0 %v213
    %241 = vmatmul.f32.gmra.mxu0 %v223
    %v242 = vpop.f32.mrf.mxu0
    %v243 = vadd.f32 %v219, %v242
    %244 = vdwg.mxu0
    %v245 = vmax.f32 %v243, 0.0
    %v246 = vpack.c.bf16 %v245, %v245
    %v247 = vld [vmem:[#allocation9] sm:$0xff]
    %v248 = vld [vmem:[#allocation9 + $0x8] sm:$0xff]
    %v249 = vld [vmem:[#allocation9 + $0x10] sm:$0xff]
    %v250 = vld [vmem:[#allocation9 + $0x18] sm:$0xff]
    %v251 = vld [vmem:[#allocation9 + $0x20] sm:$0xff]
    %v252 = vld [vmem:[#allocation9 + $0x28] sm:$0xff]
    %v253 = vld [vmem:[#allocation9 + $0x30] sm:$0xff]
    %v254 = vld [vmem:[#allocation9 + $0x38] sm:$0xff]
    %v255 = vld [vmem:[#allocation9 + $0x40] sm:$0xff]
    %v256 = vld [vmem:[#allocation9 + $0x48] sm:$0xff]
    %v257 = vld [vmem:[#allocation9 + $0x50] sm:$0xff]
    %v258 = vld [vmem:[#allocation9 + $0x58] sm:$0xff]
    %v259 = vld [vmem:[#allocation9 + $0x60] sm:$0xff]
    %v260 = vld [vmem:[#allocation9 + $0x68] sm:$0xff]
    %v261 = vld [vmem:[#allocation9 + $0x70] sm:$0xff]
    %v262 = vld [vmem:[#allocation9 + $0x78] sm:$0xff]
    %v263 = vld [vmem:[#allocation9 + $0x80] sm:$0xff]
    %v264 = vld [vmem:[#allocation9 + $0x88] sm:$0xff]
    %v265 = vld [vmem:[#allocation9 + $0x90] sm:$0xff]
    %v266 = vld [vmem:[#allocation9 + $0x98] sm:$0xff]
    %v267 = vld [vmem:[#allocation9 + $0xa0] sm:$0xff]
    %v268 = vld [vmem:[#allocation9 + $0xa8] sm:$0xff]
    %v269 = vld [vmem:[#allocation9 + $0xb0] sm:$0xff]
    %v270 = vld [vmem:[#allocation9 + $0xb8] sm:$0xff]
    %v271 = vld [vmem:[#allocation9 + $0xc0] sm:$0xff]
    %v272 = vld [vmem:[#allocation9 + $0xc8] sm:$0xff]
    %v273 = vld [vmem:[#allocation9 + $0xd0] sm:$0xff]
    %v274 = vld [vmem:[#allocation9 + $0xd8] sm:$0xff]
    %v275 = vld [vmem:[#allocation9 + $0xe0] sm:$0xff]
    %v276 = vld [vmem:[#allocation9 + $0xe8] sm:$0xff]
    %v277 = vld [vmem:[#allocation9 + $0xf0] sm:$0xff]
    %v278 = vld [vmem:[#allocation9 + $0xf8] sm:$0xff]
    %v279 = vld [vmem:[#allocation10] sm:$0xf]
    %v281 = vperm.slane %v279, 0
    %v282 = vperm.slane %v279, 1
    %v283 = vperm.slane %v279, 2
    %v284 = vperm.slane %v279, 3
    %v321 = vunpack.c.l.b16 %v247
    %v322 = vunpack.c.h.b16 %v247
    %v323 = vunpack.c.l.b16 %v248
    %v324 = vunpack.c.h.b16 %v248
    %v325 = vunpack.c.l.b16 %v249
    %v326 = vunpack.c.h.b16 %v249
    %v327 = vunpack.c.l.b16 %v250
    %v328 = vunpack.c.h.b16 %v250
    %v329 = vunpack.c.l.b16 %v251
    %v330 = vunpack.c.h.b16 %v251
    %v331 = vunpack.c.l.b16 %v252
    %v332 = vunpack.c.h.b16 %v252
    %v333 = vunpack.c.l.b16 %v253
    %v334 = vunpack.c.h.b16 %v253
    %v335 = vunpack.c.l.b16 %v254
    %v336 = vunpack.c.h.b16 %v254
    %v337 = vunpack.c.l.b16 %v255
    %v338 = vunpack.c.h.b16 %v255
    %v339 = vunpack.c.l.b16 %v256
    %v340 = vunpack.c.h.b16 %v256
    %v341 = vunpack.c.l.b16 %v257
    %v342 = vunpack.c.h.b16 %v257
    %v343 = vunpack.c.l.b16 %v258
    %v344 = vunpack.c.h.b16 %v258
    %v345 = vunpack.c.l.b16 %v259
    %v346 = vunpack.c.h.b16 %v259
    %v347 = vunpack.c.l.b16 %v260
    %v348 = vunpack.c.h.b16 %v260
    %v349 = vunpack.c.l.b16 %v261
    %v350 = vunpack.c.h.b16 %v261
    %v351 = vunpack.c.l.b16 %v262
    %v352 = vunpack.c.h.b16 %v262
    %v353 = vunpack.c.l.b16 %v263
    %v354 = vunpack.c.h.b16 %v263
    %v355 = vunpack.c.l.b16 %v264
    %v356 = vunpack.c.h.b16 %v264
    %v357 = vunpack.c.l.b16 %v265
    %v358 = vunpack.c.h.b16 %v265
    %v359 = vunpack.c.l.b16 %v266
    %v360 = vunpack.c.h.b16 %v266
    %v361 = vunpack.c.l.b16 %v267
    %v362 = vunpack.c.h.b16 %v267
    %v363 = vunpack.c.l.b16 %v268
    %v364 = vunpack.c.h.b16 %v268
    %v365 = vunpack.c.l.b16 %v269
    %v366 = vunpack.c.h.b16 %v269
    %v367 = vunpack.c.l.b16 %v270
    %v368 = vunpack.c.h.b16 %v270
    %v369 = vunpack.c.l.b16 %v271
    %v370 = vunpack.c.h.b16 %v271
    %v371 = vunpack.c.l.b16 %v272
    %v372 = vunpack.c.h.b16 %v272
    %v373 = vunpack.c.l.b16 %v273
    %v374 = vunpack.c.h.b16 %v273
    %v375 = vunpack.c.l.b16 %v274
    %v376 = vunpack.c.h.b16 %v274
    %v377 = vunpack.c.l.b16 %v275
    %v378 = vunpack.c.h.b16 %v275
    %v379 = vunpack.c.l.b16 %v276
    %v380 = vunpack.c.h.b16 %v276
    %v381 = vunpack.c.l.b16 %v277
    %v382 = vunpack.c.h.b16 %v277
    %v383 = vunpack.c.l.b16 %v278
    %v384 = vunpack.c.h.b16 %v278
    %v385 = vpack.c.b16 %v325, %v321
    %v386 = vpack.c.b16 %v326, %v322
    %v387 = vpack.c.b16 %v327, %v323
    %v388 = vpack.c.b16 %v328, %v324
    %v389 = vpack.c.b16 %v333, %v329
    %v390 = vpack.c.b16 %v334, %v330
    %v391 = vpack.c.b16 %v335, %v331
    %v392 = vpack.c.b16 %v336, %v332
    %v393 = vpack.c.b16 %v341, %v337
    %v394 = vpack.c.b16 %v342, %v338
    %v395 = vpack.c.b16 %v343, %v339
    %v396 = vpack.c.b16 %v344, %v340
    %v397 = vpack.c.b16 %v349, %v345
    %v398 = vpack.c.b16 %v350, %v346
    %v399 = vpack.c.b16 %v351, %v347
    %v400 = vpack.c.b16 %v352, %v348
    %v401 = vpack.c.b16 %v357, %v353
    %v402 = vpack.c.b16 %v358, %v354
    %v403 = vpack.c.b16 %v359, %v355
    %v404 = vpack.c.b16 %v360, %v356
    %v405 = vpack.c.b16 %v365, %v361
    %v406 = vpack.c.b16 %v366, %v362
    %v407 = vpack.c.b16 %v367, %v363
    %v408 = vpack.c.b16 %v368, %v364
    %v409 = vpack.c.b16 %v373, %v369
    %v410 = vpack.c.b16 %v374, %v370
    %v411 = vpack.c.b16 %v375, %v371
    %v412 = vpack.c.b16 %v376, %v372
    %v413 = vpack.c.b16 %v381, %v377
    %v414 = vpack.c.b16 %v382, %v378
    %v415 = vpack.c.b16 %v383, %v379
    %v416 = vpack.c.b16 %v384, %v380
    %449 = vmatpush.bf16.msra.mxu0 %v413
    %450 = vmatpush.bf16.msra.mxu0 %v409
    %451 = vmatpush.bf16.msra.mxu0 %v405
    %452 = vmatpush.bf16.msra.mxu0 %v401
    %453 = vmatpush.bf16.msra.mxu0 %v397
    %454 = vmatpush.bf16.msra.mxu0 %v393
    %455 = vmatpush.bf16.msra.mxu0 %v389
    %456 = vmatpush.bf16.msra.mxu0 %v385
    %457 = vmatmul.bf16.gmra.mxu0 %v246
    %v458 = vpop.f32.mrf.mxu0
    %v459 = vadd.f32 %v281, %v458
    %v460 = vpop.f32.mrf.mxu0
    %461 = vdwg.mxu0
    %462 = vmatpush.bf16.msra.mxu0 %v414
    %463 = vmatpush.bf16.msra.mxu0 %v410
    %464 = vmatpush.bf16.msra.mxu0 %v406
    %465 = vmatpush.bf16.msra.mxu0 %v402
    %466 = vmatpush.bf16.msra.mxu0 %v398
    %467 = vmatpush.bf16.msra.mxu0 %v394
    %468 = vmatpush.bf16.msra.mxu0 %v390
    %469 = vmatpush.bf16.msra.mxu0 %v386
    %470 = vmatmul.bf16.gmra.mxu0 %v246
    %v471 = vpop.f32.mrf.mxu0
    %v472 = vadd.f32 %v282, %v471
    %v473 = vpop.f32.mrf.mxu0
    %474 = vdwg.mxu0
    %475 = vmatpush.bf16.msra.mxu0 %v415
    %476 = vmatpush.bf16.msra.mxu0 %v411
    %477 = vmatpush.bf16.msra.mxu0 %v407
    %478 = vmatpush.bf16.msra.mxu0 %v403
    %479 = vmatpush.bf16.msra.mxu0 %v399
    %480 = vmatpush.bf16.msra.mxu0 %v395
    %481 = vmatpush.bf16.msra.mxu0 %v391
    %482 = vmatpush.bf16.msra.mxu0 %v387
    %483 = vmatmul.bf16.gmra.mxu0 %v246
    %v484 = vpop.f32.mrf.mxu0
    %v485 = vadd.f32 %v283, %v484
    %v486 = vpop.f32.mrf.mxu0
    %487 = vdwg.mxu0
    %488 = vmatpush.bf16.msra.mxu0 %v416
    %489 = vmatpush.bf16.msra.mxu0 %v412
    %490 = vmatpush.bf16.msra.mxu0 %v408
    %491 = vmatpush.bf16.msra.mxu0 %v404
    %492 = vmatpush.bf16.msra.mxu0 %v400
    %493 = vmatpush.bf16.msra.mxu0 %v396
    %494 = vmatpush.bf16.msra.mxu0 %v392
    %495 = vmatpush.bf16.msra.mxu0 %v388
    %496 = vmatmul.bf16.gmra.mxu0 %v246
    %v497 = vpop.f32.mrf.mxu0
    %v498 = vadd.f32 %v284, %v497
    %v499 = vpop.f32.mrf.mxu0
    %500 = vdwg.mxu0
    %v501 = vmax.f32 %v459, 0.0
    %v502 = vmax.f32 %v472, 0.0
    %v503 = vmax.f32 %v485, 0.0
    %v504 = vmax.f32 %v498, 0.0
    %v505 = vpack.c.bf16 %v501, %v501
    %v506 = vpack.c.bf16 %v502, %v502
    %v507 = vpack.c.bf16 %v503, %v503
    %v508 = vpack.c.bf16 %v504, %v504
    %v509 = vld [vmem:[#allocation12] sm:$0xff]
    %v510 = vld [vmem:[#allocation12 + $0x8] sm:$0xff]
    %v511 = vld [vmem:[#allocation12 + $0x10] sm:$0xff]
    %v512 = vld [vmem:[#allocation12 + $0x18] sm:$0xff]
    %v513 = vld [vmem:[#allocation12 + $0x20] sm:$0xf]
    %v514 = vld [vmem:[#allocation12 + $0x24] sm:$0xff]
    %v515 = vld [vmem:[#allocation12 + $0x2c] sm:$0xff]
    %v516 = vld [vmem:[#allocation12 + $0x34] sm:$0xff]
    %v517 = vld [vmem:[#allocation12 + $0x3c] sm:$0xff]
    %v518 = vld [vmem:[#allocation12 + $0x44] sm:$0xf]
    %v519 = vld [vmem:[#allocation12 + $0x48] sm:$0xff]
    %v520 = vld [vmem:[#allocation12 + $0x50] sm:$0xff]
    %v521 = vld [vmem:[#allocation12 + $0x58] sm:$0xff]
    %v522 = vld [vmem:[#allocation12 + $0x60] sm:$0xff]
    %v523 = vld [vmem:[#allocation12 + $0x68] sm:$0xf]
    %v524 = vld [vmem:[#allocation12 + $0x6c] sm:$0xff]
    %v525 = vld [vmem:[#allocation12 + $0x74] sm:$0xff]
    %v526 = vld [vmem:[#allocation12 + $0x7c] sm:$0xff]
    %v527 = vld [vmem:[#allocation12 + $0x84] sm:$0xff]
    %v528 = vld [vmem:[#allocation12 + $0x8c] sm:$0xf]
    %v529 = vld [vmem:[#allocation12 + $0x90] sm:$0xff]
    %v530 = vld [vmem:[#allocation12 + $0x98] sm:$0xff]
    %v531 = vld [vmem:[#allocation12 + $0xa0] sm:$0xff]
    %v532 = vld [vmem:[#allocation12 + $0xa8] sm:$0xff]
    %v533 = vld [vmem:[#allocation12 + $0xb0] sm:$0xf]
    %v534 = vld [vmem:[#allocation12 + $0xb4] sm:$0xff]
    %v535 = vld [vmem:[#allocation12 + $0xbc] sm:$0xff]
    %v536 = vld [vmem:[#allocation12 + $0xc4] sm:$0xff]
    %v537 = vld [vmem:[#allocation12 + $0xcc] sm:$0xff]
    %v538 = vld [vmem:[#allocation12 + $0xd4] sm:$0xf]
    %v539 = vld [vmem:[#allocation12 + $0xd8] sm:$0xff]
    %v540 = vld [vmem:[#allocation12 + $0xe0] sm:$0xff]
    %v541 = vld [vmem:[#allocation12 + $0xe8] sm:$0xff]
    %v542 = vld [vmem:[#allocation12 + $0xf0] sm:$0xff]
    %v543 = vld [vmem:[#allocation12 + $0xf8] sm:$0xf]
    %v544 = vld [vmem:[#allocation12 + $0xfc] sm:$0xff]
    %v545 = vld [vmem:[#allocation12 + $0x104] sm:$0xff]
    %v546 = vld [vmem:[#allocation12 + $0x10c] sm:$0xff]
    %v547 = vld [vmem:[#allocation12 + $0x114] sm:$0xff]
    %v548 = vld [vmem:[#allocation12 + $0x11c] sm:$0xf]
    %v549 = vld [vmem:[#allocation12 + $0x120] sm:$0xff]
    %v550 = vld [vmem:[#allocation12 + $0x128] sm:$0xff]
    %v551 = vld [vmem:[#allocation12 + $0x130] sm:$0xff]
    %v552 = vld [vmem:[#allocation12 + $0x138] sm:$0xff]
    %v553 = vld [vmem:[#allocation12 + $0x140] sm:$0xf]
    %v554 = vld [vmem:[#allocation12 + $0x144] sm:$0xff]
    %v555 = vld [vmem:[#allocation12 + $0x14c] sm:$0xff]
    %v556 = vld [vmem:[#allocation12 + $0x154] sm:$0xff]
    %v557 = vld [vmem:[#allocation12 + $0x15c] sm:$0xff]
    %v558 = vld [vmem:[#allocation12 + $0x164] sm:$0xf]
    %v559 = vld [vmem:[#allocation12 + $0x168] sm:$0xff]
    %v560 = vld [vmem:[#allocation12 + $0x170] sm:$0xff]
    %v561 = vld [vmem:[#allocation12 + $0x178] sm:$0xff]
    %v562 = vld [vmem:[#allocation12 + $0x180] sm:$0xff]
    %v563 = vld [vmem:[#allocation12 + $0x188] sm:$0xf]
    %v564 = vld [vmem:[#allocation12 + $0x18c] sm:$0xff]
    %v565 = vld [vmem:[#allocation12 + $0x194] sm:$0xff]
    %v566 = vld [vmem:[#allocation12 + $0x19c] sm:$0xff]
    %v567 = vld [vmem:[#allocation12 + $0x1a4] sm:$0xff]
    %v568 = vld [vmem:[#allocation12 + $0x1ac] sm:$0xf]
    %v569 = vld [vmem:[#allocation12 + $0x1b0] sm:$0xff]
    %v570 = vld [vmem:[#allocation12 + $0x1b8] sm:$0xff]
    %v571 = vld [vmem:[#allocation12 + $0x1c0] sm:$0xff]
    %v572 = vld [vmem:[#allocation12 + $0x1c8] sm:$0xff]
    %v573 = vld [vmem:[#allocation12 + $0x1d0] sm:$0xf]
    %v574 = vld [vmem:[#allocation12 + $0x1d4] sm:$0xff]
    %v575 = vld [vmem:[#allocation12 + $0x1dc] sm:$0xff]
    %v576 = vld [vmem:[#allocation12 + $0x1e4] sm:$0xff]
    %v577 = vld [vmem:[#allocation12 + $0x1ec] sm:$0xff]
    %v578 = vld [vmem:[#allocation12 + $0x1f4] sm:$0xf]
    %v579 = vld [vmem:[#allocation12 + $0x1f8] sm:$0xff]
    %v580 = vld [vmem:[#allocation12 + $0x200] sm:$0xff]
    %v581 = vld [vmem:[#allocation12 + $0x208] sm:$0xff]
    %v582 = vld [vmem:[#allocation12 + $0x210] sm:$0xff]
    %v583 = vld [vmem:[#allocation12 + $0x218] sm:$0xf]
    %v584 = vld [vmem:[#allocation12 + $0x21c] sm:$0xff]
    %v585 = vld [vmem:[#allocation12 + $0x224] sm:$0xff]
    %v586 = vld [vmem:[#allocation12 + $0x22c] sm:$0xff]
    %v587 = vld [vmem:[#allocation12 + $0x234] sm:$0xff]
    %v588 = vld [vmem:[#allocation12 + $0x23c] sm:$0xf]
    %v589 = vld [vmem:[#allocation12 + $0x240] sm:$0xff]
    %v590 = vld [vmem:[#allocation12 + $0x248] sm:$0xff]
    %v591 = vld [vmem:[#allocation12 + $0x250] sm:$0xff]
    %v592 = vld [vmem:[#allocation12 + $0x258] sm:$0xff]
    %v593 = vld [vmem:[#allocation12 + $0x260] sm:$0xf]
    %v594 = vld [vmem:[#allocation12 + $0x264] sm:$0xff]
    %v595 = vld [vmem:[#allocation12 + $0x26c] sm:$0xff]
    %v596 = vld [vmem:[#allocation12 + $0x274] sm:$0xff]
    %v597 = vld [vmem:[#allocation12 + $0x27c] sm:$0xff]
    %v598 = vld [vmem:[#allocation12 + $0x284] sm:$0xf]
    %v599 = vld [vmem:[#allocation12 + $0x288] sm:$0xff]
    %v600 = vld [vmem:[#allocation12 + $0x290] sm:$0xff]
    %v601 = vld [vmem:[#allocation12 + $0x298] sm:$0xff]
    %v602 = vld [vmem:[#allocation12 + $0x2a0] sm:$0xff]
    %v603 = vld [vmem:[#allocation12 + $0x2a8] sm:$0xf]
    %v604 = vld [vmem:[#allocation12 + $0x2ac] sm:$0xff]
    %v605 = vld [vmem:[#allocation12 + $0x2b4] sm:$0xff]
    %v606 = vld [vmem:[#allocation12 + $0x2bc] sm:$0xff]
    %v607 = vld [vmem:[#allocation12 + $0x2c4] sm:$0xff]
    %v608 = vld [vmem:[#allocation12 + $0x2cc] sm:$0xf]
    %v609 = vld [vmem:[#allocation12 + $0x2d0] sm:$0xff]
    %v610 = vld [vmem:[#allocation12 + $0x2d8] sm:$0xff]
    %v611 = vld [vmem:[#allocation12 + $0x2e0] sm:$0xff]
    %v612 = vld [vmem:[#allocation12 + $0x2e8] sm:$0xff]
    %v613 = vld [vmem:[#allocation12 + $0x2f0] sm:$0xf]
    %v614 = vld [vmem:[#allocation12 + $0x2f4] sm:$0xff]
    %v615 = vld [vmem:[#allocation12 + $0x2fc] sm:$0xff]
    %v616 = vld [vmem:[#allocation12 + $0x304] sm:$0xff]
    %v617 = vld [vmem:[#allocation12 + $0x30c] sm:$0xff]
    %v618 = vld [vmem:[#allocation12 + $0x314] sm:$0xf]
    %v619 = vld [vmem:[#allocation12 + $0x318] sm:$0xff]
    %v620 = vld [vmem:[#allocation12 + $0x320] sm:$0xff]
    %v621 = vld [vmem:[#allocation12 + $0x328] sm:$0xff]
    %v622 = vld [vmem:[#allocation12 + $0x330] sm:$0xff]
    %v623 = vld [vmem:[#allocation12 + $0x338] sm:$0xf]
    %v624 = vld [vmem:[#allocation12 + $0x33c] sm:$0xff]
    %v625 = vld [vmem:[#allocation12 + $0x344] sm:$0xff]
    %v626 = vld [vmem:[#allocation12 + $0x34c] sm:$0xff]
    %v627 = vld [vmem:[#allocation12 + $0x354] sm:$0xff]
    %v628 = vld [vmem:[#allocation12 + $0x35c] sm:$0xf]
    %v629 = vld [vmem:[#allocation12 + $0x360] sm:$0xff]
    %v630 = vld [vmem:[#allocation12 + $0x368] sm:$0xff]
    %v631 = vld [vmem:[#allocation12 + $0x370] sm:$0xff]
    %v632 = vld [vmem:[#allocation12 + $0x378] sm:$0xff]
    %v633 = vld [vmem:[#allocation12 + $0x380] sm:$0xf]
    %v634 = vld [vmem:[#allocation12 + $0x384] sm:$0xff]
    %v635 = vld [vmem:[#allocation12 + $0x38c] sm:$0xff]
    %v636 = vld [vmem:[#allocation12 + $0x394] sm:$0xff]
    %v637 = vld [vmem:[#allocation12 + $0x39c] sm:$0xff]
    %v638 = vld [vmem:[#allocation12 + $0x3a4] sm:$0xf]
    %v639 = vld [vmem:[#allocation12 + $0x3a8] sm:$0xff]
    %v640 = vld [vmem:[#allocation12 + $0x3b0] sm:$0xff]
    %v641 = vld [vmem:[#allocation12 + $0x3b8] sm:$0xff]
    %v642 = vld [vmem:[#allocation12 + $0x3c0] sm:$0xff]
    %v643 = vld [vmem:[#allocation12 + $0x3c8] sm:$0xf]
    %v644 = vld [vmem:[#allocation12 + $0x3cc] sm:$0xff]
    %v645 = vld [vmem:[#allocation12 + $0x3d4] sm:$0xff]
    %v646 = vld [vmem:[#allocation12 + $0x3dc] sm:$0xff]
    %v647 = vld [vmem:[#allocation12 + $0x3e4] sm:$0xff]
    %v648 = vld [vmem:[#allocation12 + $0x3ec] sm:$0xf]
    %v649 = vld [vmem:[#allocation12 + $0x3f0] sm:$0xff]
    %v650 = vld [vmem:[#allocation12 + $0x3f8] sm:$0xff]
    %v651 = vld [vmem:[#allocation12 + $0x400] sm:$0xff]
    %v652 = vld [vmem:[#allocation12 + $0x408] sm:$0xff]
    %v653 = vld [vmem:[#allocation12 + $0x410] sm:$0xf]
    %v654 = vld [vmem:[#allocation12 + $0x414] sm:$0xff]
    %v655 = vld [vmem:[#allocation12 + $0x41c] sm:$0xff]
    %v656 = vld [vmem:[#allocation12 + $0x424] sm:$0xff]
    %v657 = vld [vmem:[#allocation12 + $0x42c] sm:$0xff]
    %v658 = vld [vmem:[#allocation12 + $0x434] sm:$0xf]
    %v659 = vld [vmem:[#allocation12 + $0x438] sm:$0xff]
    %v660 = vld [vmem:[#allocation12 + $0x440] sm:$0xff]
    %v661 = vld [vmem:[#allocation12 + $0x448] sm:$0xff]
    %v662 = vld [vmem:[#allocation12 + $0x450] sm:$0xff]
    %v663 = vld [vmem:[#allocation12 + $0x458] sm:$0xf]
    %v664 = vld [vmem:[#allocation12 + $0x45c] sm:$0xff]
    %v665 = vld [vmem:[#allocation12 + $0x464] sm:$0xff]
    %v666 = vld [vmem:[#allocation12 + $0x46c] sm:$0xff]
    %v667 = vld [vmem:[#allocation12 + $0x474] sm:$0xff]
    %v668 = vld [vmem:[#allocation12 + $0x47c] sm:$0xf]
    %v669 = vld [vmem:[#allocation12 + $0x480] sm:$0xff]
    %v670 = vld [vmem:[#allocation12 + $0x488] sm:$0xff]
    %v671 = vld [vmem:[#allocation12 + $0x490] sm:$0xff]
    %v672 = vld [vmem:[#allocation12 + $0x498] sm:$0xff]
    %v673 = vld [vmem:[#allocation12 + $0x4a0] sm:$0xf]
    %v674 = vld [vmem:[#allocation12 + $0x4a4] sm:$0xff]
    %v675 = vld [vmem:[#allocation12 + $0x4ac] sm:$0xff]
    %v676 = vld [vmem:[#allocation12 + $0x4b4] sm:$0xff]
    %v677 = vld [vmem:[#allocation12 + $0x4bc] sm:$0xff]
    %v678 = vld [vmem:[#allocation12 + $0x4c4] sm:$0xf]
    %v679 = vld [vmem:[#allocation12 + $0x4c8] sm:$0xff]
    %v680 = vld [vmem:[#allocation12 + $0x4d0] sm:$0xff]
    %v681 = vld [vmem:[#allocation12 + $0x4d8] sm:$0xff]
    %v682 = vld [vmem:[#allocation12 + $0x4e0] sm:$0xff]
    %v683 = vld [vmem:[#allocation12 + $0x4e8] sm:$0xf]
    %v684 = vld [vmem:[#allocation12 + $0x4ec] sm:$0xff]
    %v685 = vld [vmem:[#allocation12 + $0x4f4] sm:$0xff]
    %v686 = vld [vmem:[#allocation12 + $0x4fc] sm:$0xff]
    %v687 = vld [vmem:[#allocation12 + $0x504] sm:$0xff]
    %v688 = vld [vmem:[#allocation12 + $0x50c] sm:$0xf]
    %v689 = vld [vmem:[#allocation12 + $0x510] sm:$0xff]
    %v690 = vld [vmem:[#allocation12 + $0x518] sm:$0xff]
    %v691 = vld [vmem:[#allocation12 + $0x520] sm:$0xff]
    %v692 = vld [vmem:[#allocation12 + $0x528] sm:$0xff]
    %v693 = vld [vmem:[#allocation12 + $0x530] sm:$0xf]
    %v694 = vld [vmem:[#allocation12 + $0x534] sm:$0xff]
    %v695 = vld [vmem:[#allocation12 + $0x53c] sm:$0xff]
    %v696 = vld [vmem:[#allocation12 + $0x544] sm:$0xff]
    %v697 = vld [vmem:[#allocation12 + $0x54c] sm:$0xff]
    %v698 = vld [vmem:[#allocation12 + $0x554] sm:$0xf]
    %v699 = vld [vmem:[#allocation12 + $0x558] sm:$0xff]
    %v700 = vld [vmem:[#allocation12 + $0x560] sm:$0xff]
    %v701 = vld [vmem:[#allocation12 + $0x568] sm:$0xff]
    %v702 = vld [vmem:[#allocation12 + $0x570] sm:$0xff]
    %v703 = vld [vmem:[#allocation12 + $0x578] sm:$0xf]
    %v704 = vld [vmem:[#allocation12 + $0x57c] sm:$0xff]
    %v705 = vld [vmem:[#allocation12 + $0x584] sm:$0xff]
    %v706 = vld [vmem:[#allocation12 + $0x58c] sm:$0xff]
    %v707 = vld [vmem:[#allocation12 + $0x594] sm:$0xff]
    %v708 = vld [vmem:[#allocation12 + $0x59c] sm:$0xf]
    %v709 = vld [vmem:[#allocation12 + $0x5a0] sm:$0xff]
    %v710 = vld [vmem:[#allocation12 + $0x5a8] sm:$0xff]
    %v711 = vld [vmem:[#allocation12 + $0x5b0] sm:$0xff]
    %v712 = vld [vmem:[#allocation12 + $0x5b8] sm:$0xff]
    %v713 = vld [vmem:[#allocation12 + $0x5c0] sm:$0xf]
    %v714 = vld [vmem:[#allocation12 + $0x5c4] sm:$0xff]
    %v715 = vld [vmem:[#allocation12 + $0x5cc] sm:$0xff]
    %v716 = vld [vmem:[#allocation12 + $0x5d4] sm:$0xff]
    %v717 = vld [vmem:[#allocation12 + $0x5dc] sm:$0xff]
    %v718 = vld [vmem:[#allocation12 + $0x5e4] sm:$0xf]
    %v719 = vld [vmem:[#allocation12 + $0x5e8] sm:$0xff]
    %v720 = vld [vmem:[#allocation12 + $0x5f0] sm:$0xff]
    %v721 = vld [vmem:[#allocation12 + $0x5f8] sm:$0xff]
    %v722 = vld [vmem:[#allocation12 + $0x600] sm:$0xff]
    %v723 = vld [vmem:[#allocation12 + $0x608] sm:$0xf]
    %v724 = vld [vmem:[#allocation12 + $0x60c] sm:$0xff]
    %v725 = vld [vmem:[#allocation12 + $0x614] sm:$0xff]
    %v726 = vld [vmem:[#allocation12 + $0x61c] sm:$0xff]
    %v727 = vld [vmem:[#allocation12 + $0x624] sm:$0xff]
    %v728 = vld [vmem:[#allocation12 + $0x62c] sm:$0xf]
    %v729 = vld [vmem:[#allocation12 + $0x630] sm:$0xff]
    %v730 = vld [vmem:[#allocation12 + $0x638] sm:$0xff]
    %v731 = vld [vmem:[#allocation12 + $0x640] sm:$0xff]
    %v732 = vld [vmem:[#allocation12 + $0x648] sm:$0xff]
    %v733 = vld [vmem:[#allocation12 + $0x650] sm:$0xf]
    %v734 = vld [vmem:[#allocation12 + $0x654] sm:$0xff]
    %v735 = vld [vmem:[#allocation12 + $0x65c] sm:$0xff]
    %v736 = vld [vmem:[#allocation12 + $0x664] sm:$0xff]
    %v737 = vld [vmem:[#allocation12 + $0x66c] sm:$0xff]
    %v738 = vld [vmem:[#allocation12 + $0x674] sm:$0xf]
    %v739 = vld [vmem:[#allocation12 + $0x678] sm:$0xff]
    %v740 = vld [vmem:[#allocation12 + $0x680] sm:$0xff]
    %v741 = vld [vmem:[#allocation12 + $0x688] sm:$0xff]
    %v742 = vld [vmem:[#allocation12 + $0x690] sm:$0xff]
    %v743 = vld [vmem:[#allocation12 + $0x698] sm:$0xf]
    %v744 = vld [vmem:[#allocation12 + $0x69c] sm:$0xff]
    %v745 = vld [vmem:[#allocation12 + $0x6a4] sm:$0xff]
    %v746 = vld [vmem:[#allocation12 + $0x6ac] sm:$0xff]
    %v747 = vld [vmem:[#allocation12 + $0x6b4] sm:$0xff]
    %v748 = vld [vmem:[#allocation12 + $0x6bc] sm:$0xf]
    %v749 = vld [vmem:[#allocation12 + $0x6c0] sm:$0xff]
    %v750 = vld [vmem:[#allocation12 + $0x6c8] sm:$0xff]
    %v751 = vld [vmem:[#allocation12 + $0x6d0] sm:$0xff]
    %v752 = vld [vmem:[#allocation12 + $0x6d8] sm:$0xff]
    %v753 = vld [vmem:[#allocation12 + $0x6e0] sm:$0xf]
    %v754 = vld [vmem:[#allocation12 + $0x6e4] sm:$0xff]
    %v755 = vld [vmem:[#allocation12 + $0x6ec] sm:$0xff]
    %v756 = vld [vmem:[#allocation12 + $0x6f4] sm:$0xff]
    %v757 = vld [vmem:[#allocation12 + $0x6fc] sm:$0xff]
    %v758 = vld [vmem:[#allocation12 + $0x704] sm:$0xf]
    %v759 = vld [vmem:[#allocation12 + $0x708] sm:$0xff]
    %v760 = vld [vmem:[#allocation12 + $0x710] sm:$0xff]
    %v761 = vld [vmem:[#allocation12 + $0x718] sm:$0xff]
    %v762 = vld [vmem:[#allocation12 + $0x720] sm:$0xff]
    %v763 = vld [vmem:[#allocation12 + $0x728] sm:$0xf]
    %v764 = vld [vmem:[#allocation12 + $0x72c] sm:$0xff]
    %v765 = vld [vmem:[#allocation12 + $0x734] sm:$0xff]
    %v766 = vld [vmem:[#allocation12 + $0x73c] sm:$0xff]
    %v767 = vld [vmem:[#allocation12 + $0x744] sm:$0xff]
    %v768 = vld [vmem:[#allocation12 + $0x74c] sm:$0xf]
    %v769 = vld [vmem:[#allocation12 + $0x750] sm:$0xff]
    %v770 = vld [vmem:[#allocation12 + $0x758] sm:$0xff]
    %v771 = vld [vmem:[#allocation12 + $0x760] sm:$0xff]
    %v772 = vld [vmem:[#allocation12 + $0x768] sm:$0xff]
    %v773 = vld [vmem:[#allocation12 + $0x770] sm:$0xf]
    %v774 = vld [vmem:[#allocation12 + $0x774] sm:$0xff]
    %v775 = vld [vmem:[#allocation12 + $0x77c] sm:$0xff]
    %v776 = vld [vmem:[#allocation12 + $0x784] sm:$0xff]
    %v777 = vld [vmem:[#allocation12 + $0x78c] sm:$0xff]
    %v778 = vld [vmem:[#allocation12 + $0x794] sm:$0xf]
    %v779 = vld [vmem:[#allocation12 + $0x798] sm:$0xff]
    %v780 = vld [vmem:[#allocation12 + $0x7a0] sm:$0xff]
    %v781 = vld [vmem:[#allocation12 + $0x7a8] sm:$0xff]
    %v782 = vld [vmem:[#allocation12 + $0x7b0] sm:$0xff]
    %v783 = vld [vmem:[#allocation12 + $0x7b8] sm:$0xf]
    %v784 = vld [vmem:[#allocation12 + $0x7bc] sm:$0xff]
    %v785 = vld [vmem:[#allocation12 + $0x7c4] sm:$0xff]
    %v786 = vld [vmem:[#allocation12 + $0x7cc] sm:$0xff]
    %v787 = vld [vmem:[#allocation12 + $0x7d4] sm:$0xff]
    %v788 = vld [vmem:[#allocation12 + $0x7dc] sm:$0xf]
    %v789 = vld [vmem:[#allocation12 + $0x7e0] sm:$0xff]
    %v790 = vld [vmem:[#allocation12 + $0x7e8] sm:$0xff]
    %v791 = vld [vmem:[#allocation12 + $0x7f0] sm:$0xff]
    %v792 = vld [vmem:[#allocation12 + $0x7f8] sm:$0xff]
    %v793 = vld [vmem:[#allocation12 + $0x800] sm:$0xf]
    %v794 = vld [vmem:[#allocation12 + $0x804] sm:$0xff]
    %v795 = vld [vmem:[#allocation12 + $0x80c] sm:$0xff]
    %v796 = vld [vmem:[#allocation12 + $0x814] sm:$0xff]
    %v797 = vld [vmem:[#allocation12 + $0x81c] sm:$0xff]
    %v798 = vld [vmem:[#allocation12 + $0x824] sm:$0xf]
    %v799 = vld [vmem:[#allocation12 + $0x828] sm:$0xff]
    %v800 = vld [vmem:[#allocation12 + $0x830] sm:$0xff]
    %v801 = vld [vmem:[#allocation12 + $0x838] sm:$0xff]
    %v802 = vld [vmem:[#allocation12 + $0x840] sm:$0xff]
    %v803 = vld [vmem:[#allocation12 + $0x848] sm:$0xf]
    %v804 = vld [vmem:[#allocation12 + $0x84c] sm:$0xff]
    %v805 = vld [vmem:[#allocation12 + $0x854] sm:$0xff]
    %v806 = vld [vmem:[#allocation12 + $0x85c] sm:$0xff]
    %v807 = vld [vmem:[#allocation12 + $0x864] sm:$0xff]
    %v808 = vld [vmem:[#allocation12 + $0x86c] sm:$0xf]
    %v809 = vld [vmem:[#allocation12 + $0x870] sm:$0xff]
    %v810 = vld [vmem:[#allocation12 + $0x878] sm:$0xff]
    %v811 = vld [vmem:[#allocation12 + $0x880] sm:$0xff]
    %v812 = vld [vmem:[#allocation12 + $0x888] sm:$0xff]
    %v813 = vld [vmem:[#allocation12 + $0x890] sm:$0xf]
    %v814 = vld [vmem:[#allocation12 + $0x894] sm:$0xff]
    %v815 = vld [vmem:[#allocation12 + $0x89c] sm:$0xff]
    %v816 = vld [vmem:[#allocation12 + $0x8a4] sm:$0xff]
    %v817 = vld [vmem:[#allocation12 + $0x8ac] sm:$0xff]
    %v818 = vld [vmem:[#allocation12 + $0x8b4] sm:$0xf]
    %v819 = vld [vmem:[#allocation12 + $0x8b8] sm:$0xff]
    %v820 = vld [vmem:[#allocation12 + $0x8c0] sm:$0xff]
    %v821 = vld [vmem:[#allocation12 + $0x8c8] sm:$0xff]
    %v822 = vld [vmem:[#allocation12 + $0x8d0] sm:$0xff]
    %v823 = vld [vmem:[#allocation12 + $0x8d8] sm:$0xf]
    %v824 = vld [vmem:[#allocation12 + $0x8dc] sm:$0xff]
    %v825 = vld [vmem:[#allocation12 + $0x8e4] sm:$0xff]
    %v826 = vld [vmem:[#allocation12 + $0x8ec] sm:$0xff]
    %v827 = vld [vmem:[#allocation12 + $0x8f4] sm:$0xff]
    %v828 = vld [vmem:[#allocation12 + $0x8fc] sm:$0xf]
    %v829 = vld [vmem:[#allocation13] sm:$0xff]
    %v830 = vld [vmem:[#allocation13 + $0x8] sm:$0x1]
    %v833 = vperm.slane %v829, 0
    %v834 = vperm.slane %v829, 1
    %v835 = vperm.slane %v829, 2
    %v836 = vperm.slane %v829, 3
    %v837 = vperm.slane %v829, 4
    %v838 = vperm.slane %v829, 5
    %v839 = vperm.slane %v829, 6
    %v840 = vperm.slane %v829, 7
    %v841 = vperm.slane %v830, 0
    %v1171 = vunpack.c.l.b16 %v509
    %v1172 = vunpack.c.h.b16 %v509
    %v1173 = vunpack.c.l.b16 %v510
    %v1174 = vunpack.c.h.b16 %v510
    %v1175 = vunpack.c.l.b16 %v511
    %v1176 = vunpack.c.h.b16 %v511
    %v1177 = vunpack.c.l.b16 %v512
    %v1178 = vunpack.c.h.b16 %v512
    %v1179 = vunpack.c.l.b16 %v513
    %v1180 = vunpack.c.l.b16 %v514
    %v1181 = vunpack.c.h.b16 %v514
    %v1182 = vunpack.c.l.b16 %v515
    %v1183 = vunpack.c.h.b16 %v515
    %v1184 = vunpack.c.l.b16 %v516
    %v1185 = vunpack.c.h.b16 %v516
    %v1186 = vunpack.c.l.b16 %v517
    %v1187 = vunpack.c.h.b16 %v517
    %v1188 = vunpack.c.l.b16 %v518
    %v1189 = vunpack.c.l.b16 %v519
    %v1190 = vunpack.c.h.b16 %v519
    %v1191 = vunpack.c.l.b16 %v520
    %v1192 = vunpack.c.h.b16 %v520
    %v1193 = vunpack.c.l.b16 %v521
    %v1194 = vunpack.c.h.b16 %v521
    %v1195 = vunpack.c.l.b16 %v522
    %v1196 = vunpack.c.h.b16 %v522
    %v1197 = vunpack.c.l.b16 %v523
    %v1198 = vunpack.c.l.b16 %v524
    %v1199 = vunpack.c.h.b16 %v524
    %v1200 = vunpack.c.l.b16 %v525
    %v1201 = vunpack.c.h.b16 %v525
    %v1202 = vunpack.c.l.b16 %v526
    %v1203 = vunpack.c.h.b16 %v526
    %v1204 = vunpack.c.l.b16 %v527
    %v1205 = vunpack.c.h.b16 %v527
    %v1206 = vunpack.c.l.b16 %v528
    %v1207 = vunpack.c.l.b16 %v529
    %v1208 = vunpack.c.h.b16 %v529
    %v1209 = vunpack.c.l.b16 %v530
    %v1210 = vunpack.c.h.b16 %v530
    %v1211 = vunpack.c.l.b16 %v531
    %v1212 = vunpack.c.h.b16 %v531
    %v1213 = vunpack.c.l.b16 %v532
    %v1214 = vunpack.c.h.b16 %v532
    %v1215 = vunpack.c.l.b16 %v533
    %v1216 = vunpack.c.l.b16 %v534
    %v1217 = vunpack.c.h.b16 %v534
    %v1218 = vunpack.c.l.b16 %v535
    %v1219 = vunpack.c.h.b16 %v535
    %v1220 = vunpack.c.l.b16 %v536
    %v1221 = vunpack.c.h.b16 %v536
    %v1222 = vunpack.c.l.b16 %v537
    %v1223 = vunpack.c.h.b16 %v537
    %v1224 = vunpack.c.l.b16 %v538
    %v1225 = vunpack.c.l.b16 %v539
    %v1226 = vunpack.c.h.b16 %v539
    %v1227 = vunpack.c.l.b16 %v540
    %v1228 = vunpack.c.h.b16 %v540
    %v1229 = vunpack.c.l.b16 %v541
    %v1230 = vunpack.c.h.b16 %v541
    %v1231 = vunpack.c.l.b16 %v542
    %v1232 = vunpack.c.h.b16 %v542
    %v1233 = vunpack.c.l.b16 %v543
    %v1234 = vunpack.c.l.b16 %v544
    %v1235 = vunpack.c.h.b16 %v544
    %v1236 = vunpack.c.l.b16 %v545
    %v1237 = vunpack.c.h.b16 %v545
    %v1238 = vunpack.c.l.b16 %v546
    %v1239 = vunpack.c.h.b16 %v546
    %v1240 = vunpack.c.l.b16 %v547
    %v1241 = vunpack.c.h.b16 %v547
    %v1242 = vunpack.c.l.b16 %v548
    %v1243 = vunpack.c.l.b16 %v549
    %v1244 = vunpack.c.h.b16 %v549
    %v1245 = vunpack.c.l.b16 %v550
    %v1246 = vunpack.c.h.b16 %v550
    %v1247 = vunpack.c.l.b16 %v551
    %v1248 = vunpack.c.h.b16 %v551
    %v1249 = vunpack.c.l.b16 %v552
    %v1250 = vunpack.c.h.b16 %v552
    %v1251 = vunpack.c.l.b16 %v553
    %v1252 = vunpack.c.l.b16 %v554
    %v1253 = vunpack.c.h.b16 %v554
    %v1254 = vunpack.c.l.b16 %v555
    %v1255 = vunpack.c.h.b16 %v555
    %v1256 = vunpack.c.l.b16 %v556
    %v1257 = vunpack.c.h.b16 %v556
    %v1258 = vunpack.c.l.b16 %v557
    %v1259 = vunpack.c.h.b16 %v557
    %v1260 = vunpack.c.l.b16 %v558
    %v1261 = vunpack.c.l.b16 %v559
    %v1262 = vunpack.c.h.b16 %v559
    %v1263 = vunpack.c.l.b16 %v560
    %v1264 = vunpack.c.h.b16 %v560
    %v1265 = vunpack.c.l.b16 %v561
    %v1266 = vunpack.c.h.b16 %v561
    %v1267 = vunpack.c.l.b16 %v562
    %v1268 = vunpack.c.h.b16 %v562
    %v1269 = vunpack.c.l.b16 %v563
    %v1270 = vunpack.c.l.b16 %v564
    %v1271 = vunpack.c.h.b16 %v564
    %v1272 = vunpack.c.l.b16 %v565
    %v1273 = vunpack.c.h.b16 %v565
    %v1274 = vunpack.c.l.b16 %v566
    %v1275 = vunpack.c.h.b16 %v566
    %v1276 = vunpack.c.l.b16 %v567
    %v1277 = vunpack.c.h.b16 %v567
    %v1278 = vunpack.c.l.b16 %v568
    %v1279 = vunpack.c.l.b16 %v569
    %v1280 = vunpack.c.h.b16 %v569
    %v1281 = vunpack.c.l.b16 %v570
    %v1282 = vunpack.c.h.b16 %v570
    %v1283 = vunpack.c.l.b16 %v571
    %v1284 = vunpack.c.h.b16 %v571
    %v1285 = vunpack.c.l.b16 %v572
    %v1286 = vunpack.c.h.b16 %v572
    %v1287 = vunpack.c.l.b16 %v573
    %v1288 = vunpack.c.l.b16 %v574
    %v1289 = vunpack.c.h.b16 %v574
    %v1290 = vunpack.c.l.b16 %v575
    %v1291 = vunpack.c.h.b16 %v575
    %v1292 = vunpack.c.l.b16 %v576
    %v1293 = vunpack.c.h.b16 %v576
    %v1294 = vunpack.c.l.b16 %v577
    %v1295 = vunpack.c.h.b16 %v577
    %v1296 = vunpack.c.l.b16 %v578
    %v1297 = vunpack.c.l.b16 %v579
    %v1298 = vunpack.c.h.b16 %v579
    %v1299 = vunpack.c.l.b16 %v580
    %v1300 = vunpack.c.h.b16 %v580
    %v1301 = vunpack.c.l.b16 %v581
    %v1302 = vunpack.c.h.b16 %v581
    %v1303 = vunpack.c.l.b16 %v582
    %v1304 = vunpack.c.h.b16 %v582
    %v1305 = vunpack.c.l.b16 %v583
    %v1306 = vunpack.c.l.b16 %v584
    %v1307 = vunpack.c.h.b16 %v584
    %v1308 = vunpack.c.l.b16 %v585
    %v1309 = vunpack.c.h.b16 %v585
    %v1310 = vunpack.c.l.b16 %v586
    %v1311 = vunpack.c.h.b16 %v586
    %v1312 = vunpack.c.l.b16 %v587
    %v1313 = vunpack.c.h.b16 %v587
    %v1314 = vunpack.c.l.b16 %v588
    %v1315 = vunpack.c.l.b16 %v589
    %v1316 = vunpack.c.h.b16 %v589
    %v1317 = vunpack.c.l.b16 %v590
    %v1318 = vunpack.c.h.b16 %v590
    %v1319 = vunpack.c.l.b16 %v591
    %v1320 = vunpack.c.h.b16 %v591
    %v1321 = vunpack.c.l.b16 %v592
    %v1322 = vunpack.c.h.b16 %v592
    %v1323 = vunpack.c.l.b16 %v593
    %v1324 = vunpack.c.l.b16 %v594
    %v1325 = vunpack.c.h.b16 %v594
    %v1326 = vunpack.c.l.b16 %v595
    %v1327 = vunpack.c.h.b16 %v595
    %v1328 = vunpack.c.l.b16 %v596
    %v1329 = vunpack.c.h.b16 %v596
    %v1330 = vunpack.c.l.b16 %v597
    %v1331 = vunpack.c.h.b16 %v597
    %v1332 = vunpack.c.l.b16 %v598
    %v1333 = vunpack.c.l.b16 %v599
    %v1334 = vunpack.c.h.b16 %v599
    %v1335 = vunpack.c.l.b16 %v600
    %v1336 = vunpack.c.h.b16 %v600
    %v1337 = vunpack.c.l.b16 %v601
    %v1338 = vunpack.c.h.b16 %v601
    %v1339 = vunpack.c.l.b16 %v602
    %v1340 = vunpack.c.h.b16 %v602
    %v1341 = vunpack.c.l.b16 %v603
    %v1342 = vunpack.c.l.b16 %v604
    %v1343 = vunpack.c.h.b16 %v604
    %v1344 = vunpack.c.l.b16 %v605
    %v1345 = vunpack.c.h.b16 %v605
    %v1346 = vunpack.c.l.b16 %v606
    %v1347 = vunpack.c.h.b16 %v606
    %v1348 = vunpack.c.l.b16 %v607
    %v1349 = vunpack.c.h.b16 %v607
    %v1350 = vunpack.c.l.b16 %v608
    %v1351 = vunpack.c.l.b16 %v609
    %v1352 = vunpack.c.h.b16 %v609
    %v1353 = vunpack.c.l.b16 %v610
    %v1354 = vunpack.c.h.b16 %v610
    %v1355 = vunpack.c.l.b16 %v611
    %v1356 = vunpack.c.h.b16 %v611
    %v1357 = vunpack.c.l.b16 %v612
    %v1358 = vunpack.c.h.b16 %v612
    %v1359 = vunpack.c.l.b16 %v613
    %v1360 = vunpack.c.l.b16 %v614
    %v1361 = vunpack.c.h.b16 %v614
    %v1362 = vunpack.c.l.b16 %v615
    %v1363 = vunpack.c.h.b16 %v615
    %v1364 = vunpack.c.l.b16 %v616
    %v1365 = vunpack.c.h.b16 %v616
    %v1366 = vunpack.c.l.b16 %v617
    %v1367 = vunpack.c.h.b16 %v617
    %v1368 = vunpack.c.l.b16 %v618
    %v1369 = vunpack.c.l.b16 %v619
    %v1370 = vunpack.c.h.b16 %v619
    %v1371 = vunpack.c.l.b16 %v620
    %v1372 = vunpack.c.h.b16 %v620
    %v1373 = vunpack.c.l.b16 %v621
    %v1374 = vunpack.c.h.b16 %v621
    %v1375 = vunpack.c.l.b16 %v622
    %v1376 = vunpack.c.h.b16 %v622
    %v1377 = vunpack.c.l.b16 %v623
    %v1378 = vunpack.c.l.b16 %v624
    %v1379 = vunpack.c.h.b16 %v624
    %v1380 = vunpack.c.l.b16 %v625
    %v1381 = vunpack.c.h.b16 %v625
    %v1382 = vunpack.c.l.b16 %v626
    %v1383 = vunpack.c.h.b16 %v626
    %v1384 = vunpack.c.l.b16 %v627
    %v1385 = vunpack.c.h.b16 %v627
    %v1386 = vunpack.c.l.b16 %v628
    %v1387 = vunpack.c.l.b16 %v629
    %v1388 = vunpack.c.h.b16 %v629
    %v1389 = vunpack.c.l.b16 %v630
    %v1390 = vunpack.c.h.b16 %v630
    %v1391 = vunpack.c.l.b16 %v631
    %v1392 = vunpack.c.h.b16 %v631
    %v1393 = vunpack.c.l.b16 %v632
    %v1394 = vunpack.c.h.b16 %v632
    %v1395 = vunpack.c.l.b16 %v633
    %v1396 = vunpack.c.l.b16 %v634
    %v1397 = vunpack.c.h.b16 %v634
    %v1398 = vunpack.c.l.b16 %v635
    %v1399 = vunpack.c.h.b16 %v635
    %v1400 = vunpack.c.l.b16 %v636
    %v1401 = vunpack.c.h.b16 %v636
    %v1402 = vunpack.c.l.b16 %v637
    %v1403 = vunpack.c.h.b16 %v637
    %v1404 = vunpack.c.l.b16 %v638
    %v1405 = vunpack.c.l.b16 %v639
    %v1406 = vunpack.c.h.b16 %v639
    %v1407 = vunpack.c.l.b16 %v640
    %v1408 = vunpack.c.h.b16 %v640
    %v1409 = vunpack.c.l.b16 %v641
    %v1410 = vunpack.c.h.b16 %v641
    %v1411 = vunpack.c.l.b16 %v642
    %v1412 = vunpack.c.h.b16 %v642
    %v1413 = vunpack.c.l.b16 %v643
    %v1414 = vunpack.c.l.b16 %v644
    %v1415 = vunpack.c.h.b16 %v644
    %v1416 = vunpack.c.l.b16 %v645
    %v1417 = vunpack.c.h.b16 %v645
    %v1418 = vunpack.c.l.b16 %v646
    %v1419 = vunpack.c.h.b16 %v646
    %v1420 = vunpack.c.l.b16 %v647
    %v1421 = vunpack.c.h.b16 %v647
    %v1422 = vunpack.c.l.b16 %v648
    %v1423 = vunpack.c.l.b16 %v649
    %v1424 = vunpack.c.h.b16 %v649
    %v1425 = vunpack.c.l.b16 %v650
    %v1426 = vunpack.c.h.b16 %v650
    %v1427 = vunpack.c.l.b16 %v651
    %v1428 = vunpack.c.h.b16 %v651
    %v1429 = vunpack.c.l.b16 %v652
    %v1430 = vunpack.c.h.b16 %v652
    %v1431 = vunpack.c.l.b16 %v653
    %v1432 = vunpack.c.l.b16 %v654
    %v1433 = vunpack.c.h.b16 %v654
    %v1434 = vunpack.c.l.b16 %v655
    %v1435 = vunpack.c.h.b16 %v655
    %v1436 = vunpack.c.l.b16 %v656
    %v1437 = vunpack.c.h.b16 %v656
    %v1438 = vunpack.c.l.b16 %v657
    %v1439 = vunpack.c.h.b16 %v657
    %v1440 = vunpack.c.l.b16 %v658
    %v1441 = vunpack.c.l.b16 %v659
    %v1442 = vunpack.c.h.b16 %v659
    %v1443 = vunpack.c.l.b16 %v660
    %v1444 = vunpack.c.h.b16 %v660
    %v1445 = vunpack.c.l.b16 %v661
    %v1446 = vunpack.c.h.b16 %v661
    %v1447 = vunpack.c.l.b16 %v662
    %v1448 = vunpack.c.h.b16 %v662
    %v1449 = vunpack.c.l.b16 %v663
    %v1450 = vunpack.c.l.b16 %v664
    %v1451 = vunpack.c.h.b16 %v664
    %v1452 = vunpack.c.l.b16 %v665
    %v1453 = vunpack.c.h.b16 %v665
    %v1454 = vunpack.c.l.b16 %v666
    %v1455 = vunpack.c.h.b16 %v666
    %v1456 = vunpack.c.l.b16 %v667
    %v1457 = vunpack.c.h.b16 %v667
    %v1458 = vunpack.c.l.b16 %v668
    %v1459 = vunpack.c.l.b16 %v669
    %v1460 = vunpack.c.h.b16 %v669
    %v1461 = vunpack.c.l.b16 %v670
    %v1462 = vunpack.c.h.b16 %v670
    %v1463 = vunpack.c.l.b16 %v671
    %v1464 = vunpack.c.h.b16 %v671
    %v1465 = vunpack.c.l.b16 %v672
    %v1466 = vunpack.c.h.b16 %v672
    %v1467 = vunpack.c.l.b16 %v673
    %v1468 = vunpack.c.l.b16 %v674
    %v1469 = vunpack.c.h.b16 %v674
    %v1470 = vunpack.c.l.b16 %v675
    %v1471 = vunpack.c.h.b16 %v675
    %v1472 = vunpack.c.l.b16 %v676
    %v1473 = vunpack.c.h.b16 %v676
    %v1474 = vunpack.c.l.b16 %v677
    %v1475 = vunpack.c.h.b16 %v677
    %v1476 = vunpack.c.l.b16 %v678
    %v1477 = vunpack.c.l.b16 %v679
    %v1478 = vunpack.c.h.b16 %v679
    %v1479 = vunpack.c.l.b16 %v680
    %v1480 = vunpack.c.h.b16 %v680
    %v1481 = vunpack.c.l.b16 %v681
    %v1482 = vunpack.c.h.b16 %v681
    %v1483 = vunpack.c.l.b16 %v682
    %v1484 = vunpack.c.h.b16 %v682
    %v1485 = vunpack.c.l.b16 %v683
    %v1486 = vunpack.c.l.b16 %v684
    %v1487 = vunpack.c.h.b16 %v684
    %v1488 = vunpack.c.l.b16 %v685
    %v1489 = vunpack.c.h.b16 %v685
    %v1490 = vunpack.c.l.b16 %v686
    %v1491 = vunpack.c.h.b16 %v686
    %v1492 = vunpack.c.l.b16 %v687
    %v1493 = vunpack.c.h.b16 %v687
    %v1494 = vunpack.c.l.b16 %v688
    %v1495 = vunpack.c.l.b16 %v689
    %v1496 = vunpack.c.h.b16 %v689
    %v1497 = vunpack.c.l.b16 %v690
    %v1498 = vunpack.c.h.b16 %v690
    %v1499 = vunpack.c.l.b16 %v691
    %v1500 = vunpack.c.h.b16 %v691
    %v1501 = vunpack.c.l.b16 %v692
    %v1502 = vunpack.c.h.b16 %v692
    %v1503 = vunpack.c.l.b16 %v693
    %v1504 = vunpack.c.l.b16 %v694
    %v1505 = vunpack.c.h.b16 %v694
    %v1506 = vunpack.c.l.b16 %v695
    %v1507 = vunpack.c.h.b16 %v695
    %v1508 = vunpack.c.l.b16 %v696
    %v1509 = vunpack.c.h.b16 %v696
    %v1510 = vunpack.c.l.b16 %v697
    %v1511 = vunpack.c.h.b16 %v697
    %v1512 = vunpack.c.l.b16 %v698
    %v1513 = vunpack.c.l.b16 %v699
    %v1514 = vunpack.c.h.b16 %v699
    %v1515 = vunpack.c.l.b16 %v700
    %v1516 = vunpack.c.h.b16 %v700
    %v1517 = vunpack.c.l.b16 %v701
    %v1518 = vunpack.c.h.b16 %v701
    %v1519 = vunpack.c.l.b16 %v702
    %v1520 = vunpack.c.h.b16 %v702
    %v1521 = vunpack.c.l.b16 %v703
    %v1522 = vunpack.c.l.b16 %v704
    %v1523 = vunpack.c.h.b16 %v704
    %v1524 = vunpack.c.l.b16 %v705
    %v1525 = vunpack.c.h.b16 %v705
    %v1526 = vunpack.c.l.b16 %v706
    %v1527 = vunpack.c.h.b16 %v706
    %v1528 = vunpack.c.l.b16 %v707
    %v1529 = vunpack.c.h.b16 %v707
    %v1530 = vunpack.c.l.b16 %v708
    %v1531 = vunpack.c.l.b16 %v709
    %v1532 = vunpack.c.h.b16 %v709
    %v1533 = vunpack.c.l.b16 %v710
    %v1534 = vunpack.c.h.b16 %v710
    %v1535 = vunpack.c.l.b16 %v711
    %v1536 = vunpack.c.h.b16 %v711
    %v1537 = vunpack.c.l.b16 %v712
    %v1538 = vunpack.c.h.b16 %v712
    %v1539 = vunpack.c.l.b16 %v713
    %v1540 = vunpack.c.l.b16 %v714
    %v1541 = vunpack.c.h.b16 %v714
    %v1542 = vunpack.c.l.b16 %v715
    %v1543 = vunpack.c.h.b16 %v715
    %v1544 = vunpack.c.l.b16 %v716
    %v1545 = vunpack.c.h.b16 %v716
    %v1546 = vunpack.c.l.b16 %v717
    %v1547 = vunpack.c.h.b16 %v717
    %v1548 = vunpack.c.l.b16 %v718
    %v1549 = vunpack.c.l.b16 %v719
    %v1550 = vunpack.c.h.b16 %v719
    %v1551 = vunpack.c.l.b16 %v720
    %v1552 = vunpack.c.h.b16 %v720
    %v1553 = vunpack.c.l.b16 %v721
    %v1554 = vunpack.c.h.b16 %v721
    %v1555 = vunpack.c.l.b16 %v722
    %v1556 = vunpack.c.h.b16 %v722
    %v1557 = vunpack.c.l.b16 %v723
    %v1558 = vunpack.c.l.b16 %v724
    %v1559 = vunpack.c.h.b16 %v724
    %v1560 = vunpack.c.l.b16 %v725
    %v1561 = vunpack.c.h.b16 %v725
    %v1562 = vunpack.c.l.b16 %v726
    %v1563 = vunpack.c.h.b16 %v726
    %v1564 = vunpack.c.l.b16 %v727
    %v1565 = vunpack.c.h.b16 %v727
    %v1566 = vunpack.c.l.b16 %v728
    %v1567 = vunpack.c.l.b16 %v729
    %v1568 = vunpack.c.h.b16 %v729
    %v1569 = vunpack.c.l.b16 %v730
    %v1570 = vunpack.c.h.b16 %v730
    %v1571 = vunpack.c.l.b16 %v731
    %v1572 = vunpack.c.h.b16 %v731
    %v1573 = vunpack.c.l.b16 %v732
    %v1574 = vunpack.c.h.b16 %v732
    %v1575 = vunpack.c.l.b16 %v733
    %v1576 = vunpack.c.l.b16 %v734
    %v1577 = vunpack.c.h.b16 %v734
    %v1578 = vunpack.c.l.b16 %v735
    %v1579 = vunpack.c.h.b16 %v735
    %v1580 = vunpack.c.l.b16 %v736
    %v1581 = vunpack.c.h.b16 %v736
    %v1582 = vunpack.c.l.b16 %v737
    %v1583 = vunpack.c.h.b16 %v737
    %v1584 = vunpack.c.l.b16 %v738
    %v1585 = vunpack.c.l.b16 %v739
    %v1586 = vunpack.c.h.b16 %v739
    %v1587 = vunpack.c.l.b16 %v740
    %v1588 = vunpack.c.h.b16 %v740
    %v1589 = vunpack.c.l.b16 %v741
    %v1590 = vunpack.c.h.b16 %v741
    %v1591 = vunpack.c.l.b16 %v742
    %v1592 = vunpack.c.h.b16 %v742
    %v1593 = vunpack.c.l.b16 %v743
    %v1594 = vunpack.c.l.b16 %v744
    %v1595 = vunpack.c.h.b16 %v744
    %v1596 = vunpack.c.l.b16 %v745
    %v1597 = vunpack.c.h.b16 %v745
    %v1598 = vunpack.c.l.b16 %v746
    %v1599 = vunpack.c.h.b16 %v746
    %v1600 = vunpack.c.l.b16 %v747
    %v1601 = vunpack.c.h.b16 %v747
    %v1602 = vunpack.c.l.b16 %v748
    %v1603 = vunpack.c.l.b16 %v749
    %v1604 = vunpack.c.h.b16 %v749
    %v1605 = vunpack.c.l.b16 %v750
    %v1606 = vunpack.c.h.b16 %v750
    %v1607 = vunpack.c.l.b16 %v751
    %v1608 = vunpack.c.h.b16 %v751
    %v1609 = vunpack.c.l.b16 %v752
    %v1610 = vunpack.c.h.b16 %v752
    %v1611 = vunpack.c.l.b16 %v753
    %v1612 = vunpack.c.l.b16 %v754
    %v1613 = vunpack.c.h.b16 %v754
    %v1614 = vunpack.c.l.b16 %v755
    %v1615 = vunpack.c.h.b16 %v755
    %v1616 = vunpack.c.l.b16 %v756
    %v1617 = vunpack.c.h.b16 %v756
    %v1618 = vunpack.c.l.b16 %v757
    %v1619 = vunpack.c.h.b16 %v757
    %v1620 = vunpack.c.l.b16 %v758
    %v1621 = vunpack.c.l.b16 %v759
    %v1622 = vunpack.c.h.b16 %v759
    %v1623 = vunpack.c.l.b16 %v760
    %v1624 = vunpack.c.h.b16 %v760
    %v1625 = vunpack.c.l.b16 %v761
    %v1626 = vunpack.c.h.b16 %v761
    %v1627 = vunpack.c.l.b16 %v762
    %v1628 = vunpack.c.h.b16 %v762
    %v1629 = vunpack.c.l.b16 %v763
    %v1630 = vunpack.c.l.b16 %v764
    %v1631 = vunpack.c.h.b16 %v764
    %v1632 = vunpack.c.l.b16 %v765
    %v1633 = vunpack.c.h.b16 %v765
    %v1634 = vunpack.c.l.b16 %v766
    %v1635 = vunpack.c.h.b16 %v766
    %v1636 = vunpack.c.l.b16 %v767
    %v1637 = vunpack.c.h.b16 %v767
    %v1638 = vunpack.c.l.b16 %v768
    %v1639 = vunpack.c.l.b16 %v769
    %v1640 = vunpack.c.h.b16 %v769
    %v1641 = vunpack.c.l.b16 %v770
    %v1642 = vunpack.c.h.b16 %v770
    %v1643 = vunpack.c.l.b16 %v771
    %v1644 = vunpack.c.h.b16 %v771
    %v1645 = vunpack.c.l.b16 %v772
    %v1646 = vunpack.c.h.b16 %v772
    %v1647 = vunpack.c.l.b16 %v773
    %v1648 = vunpack.c.l.b16 %v774
    %v1649 = vunpack.c.h.b16 %v774
    %v1650 = vunpack.c.l.b16 %v775
    %v1651 = vunpack.c.h.b16 %v775
    %v1652 = vunpack.c.l.b16 %v776
    %v1653 = vunpack.c.h.b16 %v776
    %v1654 = vunpack.c.l.b16 %v777
    %v1655 = vunpack.c.h.b16 %v777
    %v1656 = vunpack.c.l.b16 %v778
    %v1657 = vunpack.c.l.b16 %v779
    %v1658 = vunpack.c.h.b16 %v779
    %v1659 = vunpack.c.l.b16 %v780
    %v1660 = vunpack.c.h.b16 %v780
    %v1661 = vunpack.c.l.b16 %v781
    %v1662 = vunpack.c.h.b16 %v781
    %v1663 = vunpack.c.l.b16 %v782
    %v1664 = vunpack.c.h.b16 %v782
    %v1665 = vunpack.c.l.b16 %v783
    %v1666 = vunpack.c.l.b16 %v784
    %v1667 = vunpack.c.h.b16 %v784
    %v1668 = vunpack.c.l.b16 %v785
    %v1669 = vunpack.c.h.b16 %v785
    %v1670 = vunpack.c.l.b16 %v786
    %v1671 = vunpack.c.h.b16 %v786
    %v1672 = vunpack.c.l.b16 %v787
    %v1673 = vunpack.c.h.b16 %v787
    %v1674 = vunpack.c.l.b16 %v788
    %v1675 = vunpack.c.l.b16 %v789
    %v1676 = vunpack.c.h.b16 %v789
    %v1677 = vunpack.c.l.b16 %v790
    %v1678 = vunpack.c.h.b16 %v790
    %v1679 = vunpack.c.l.b16 %v791
    %v1680 = vunpack.c.h.b16 %v791
    %v1681 = vunpack.c.l.b16 %v792
    %v1682 = vunpack.c.h.b16 %v792
    %v1683 = vunpack.c.l.b16 %v793
    %v1684 = vunpack.c.l.b16 %v794
    %v1685 = vunpack.c.h.b16 %v794
    %v1686 = vunpack.c.l.b16 %v795
    %v1687 = vunpack.c.h.b16 %v795
    %v1688 = vunpack.c.l.b16 %v796
    %v1689 = vunpack.c.h.b16 %v796
    %v1690 = vunpack.c.l.b16 %v797
    %v1691 = vunpack.c.h.b16 %v797
    %v1692 = vunpack.c.l.b16 %v798
    %v1693 = vunpack.c.l.b16 %v799
    %v1694 = vunpack.c.h.b16 %v799
    %v1695 = vunpack.c.l.b16 %v800
    %v1696 = vunpack.c.h.b16 %v800
    %v1697 = vunpack.c.l.b16 %v801
    %v1698 = vunpack.c.h.b16 %v801
    %v1699 = vunpack.c.l.b16 %v802
    %v1700 = vunpack.c.h.b16 %v802
    %v1701 = vunpack.c.l.b16 %v803
    %v1702 = vunpack.c.l.b16 %v804
    %v1703 = vunpack.c.h.b16 %v804
    %v1704 = vunpack.c.l.b16 %v805
    %v1705 = vunpack.c.h.b16 %v805
    %v1706 = vunpack.c.l.b16 %v806
    %v1707 = vunpack.c.h.b16 %v806
    %v1708 = vunpack.c.l.b16 %v807
    %v1709 = vunpack.c.h.b16 %v807
    %v1710 = vunpack.c.l.b16 %v808
    %v1711 = vunpack.c.l.b16 %v809
    %v1712 = vunpack.c.h.b16 %v809
    %v1713 = vunpack.c.l.b16 %v810
    %v1714 = vunpack.c.h.b16 %v810
    %v1715 = vunpack.c.l.b16 %v811
    %v1716 = vunpack.c.h.b16 %v811
    %v1717 = vunpack.c.l.b16 %v812
    %v1718 = vunpack.c.h.b16 %v812
    %v1719 = vunpack.c.l.b16 %v813
    %v1720 = vunpack.c.l.b16 %v814
    %v1721 = vunpack.c.h.b16 %v814
    %v1722 = vunpack.c.l.b16 %v815
    %v1723 = vunpack.c.h.b16 %v815
    %v1724 = vunpack.c.l.b16 %v816
    %v1725 = vunpack.c.h.b16 %v816
    %v1726 = vunpack.c.l.b16 %v817
    %v1727 = vunpack.c.h.b16 %v817
    %v1728 = vunpack.c.l.b16 %v818
    %v1729 = vunpack.c.l.b16 %v819
    %v1730 = vunpack.c.h.b16 %v819
    %v1731 = vunpack.c.l.b16 %v820
    %v1732 = vunpack.c.h.b16 %v820
    %v1733 = vunpack.c.l.b16 %v821
    %v1734 = vunpack.c.h.b16 %v821
    %v1735 = vunpack.c.l.b16 %v822
    %v1736 = vunpack.c.h.b16 %v822
    %v1737 = vunpack.c.l.b16 %v823
    %v1738 = vunpack.c.l.b16 %v824
    %v1739 = vunpack.c.h.b16 %v824
    %v1740 = vunpack.c.l.b16 %v825
    %v1741 = vunpack.c.h.b16 %v825
    %v1742 = vunpack.c.l.b16 %v826
    %v1743 = vunpack.c.h.b16 %v826
    %v1744 = vunpack.c.l.b16 %v827
    %v1745 = vunpack.c.h.b16 %v827
    %v1746 = vunpack.c.l.b16 %v828
    %v1747 = vpack.c.b16 %v1180, %v1171
    %v1748 = vpack.c.b16 %v1181, %v1172
    %v1749 = vpack.c.b16 %v1182, %v1173
    %v1750 = vpack.c.b16 %v1183, %v1174
    %v1751 = vpack.c.b16 %v1184, %v1175
    %v1752 = vpack.c.b16 %v1185, %v1176
    %v1753 = vpack.c.b16 %v1186, %v1177
    %v1754 = vpack.c.b16 %v1187, %v1178
    %v1755 = vpack.c.b16 %v1188, %v1179
    %v1756 = vpack.c.b16 %v1198, %v1189
    %v1757 = vpack.c.b16 %v1199, %v1190
    %v1758 = vpack.c.b16 %v1200, %v1191
    %v1759 = vpack.c.b16 %v1201, %v1192
    %v1760 = vpack.c.b16 %v1202, %v1193
    %v1761 = vpack.c.b16 %v1203, %v1194
    %v1762 = vpack.c.b16 %v1204, %v1195
    %v1763 = vpack.c.b16 %v1205, %v1196
    %v1764 = vpack.c.b16 %v1206, %v1197
    %v1765 = vpack.c.b16 %v1216, %v1207
    %v1766 = vpack.c.b16 %v1217, %v1208
    %v1767 = vpack.c.b16 %v1218, %v1209
    %v1768 = vpack.c.b16 %v1219, %v1210
    %v1769 = vpack.c.b16 %v1220, %v1211
    %v1770 = vpack.c.b16 %v1221, %v1212
    %v1771 = vpack.c.b16 %v1222, %v1213
    %v1772 = vpack.c.b16 %v1223, %v1214
    %v1773 = vpack.c.b16 %v1224, %v1215
    %v1774 = vpack.c.b16 %v1234, %v1225
    %v1775 = vpack.c.b16 %v1235, %v1226
    %v1776 = vpack.c.b16 %v1236, %v1227
    %v1777 = vpack.c.b16 %v1237, %v1228
    %v1778 = vpack.c.b16 %v1238, %v1229
    %v1779 = vpack.c.b16 %v1239, %v1230
    %v1780 = vpack.c.b16 %v1240, %v1231
    %v1781 = vpack.c.b16 %v1241, %v1232
    %v1782 = vpack.c.b16 %v1242, %v1233
    %v1783 = vpack.c.b16 %v1252, %v1243
    %v1784 = vpack.c.b16 %v1253, %v1244
    %v1785 = vpack.c.b16 %v1254, %v1245
    %v1786 = vpack.c.b16 %v1255, %v1246
    %v1787 = vpack.c.b16 %v1256, %v1247
    %v1788 = vpack.c.b16 %v1257, %v1248
    %v1789 = vpack.c.b16 %v1258, %v1249
    %v1790 = vpack.c.b16 %v1259, %v1250
    %v1791 = vpack.c.b16 %v1260, %v1251
    %v1792 = vpack.c.b16 %v1270, %v1261
    %v1793 = vpack.c.b16 %v1271, %v1262
    %v1794 = vpack.c.b16 %v1272, %v1263
    %v1795 = vpack.c.b16 %v1273, %v1264
    %v1796 = vpack.c.b16 %v1274, %v1265
    %v1797 = vpack.c.b16 %v1275, %v1266
    %v1798 = vpack.c.b16 %v1276, %v1267
    %v1799 = vpack.c.b16 %v1277, %v1268
    %v1800 = vpack.c.b16 %v1278, %v1269
    %v1801 = vpack.c.b16 %v1288, %v1279
    %v1802 = vpack.c.b16 %v1289, %v1280
    %v1803 = vpack.c.b16 %v1290, %v1281
    %v1804 = vpack.c.b16 %v1291, %v1282
    %v1805 = vpack.c.b16 %v1292, %v1283
    %v1806 = vpack.c.b16 %v1293, %v1284
    %v1807 = vpack.c.b16 %v1294, %v1285
    %v1808 = vpack.c.b16 %v1295, %v1286
    %v1809 = vpack.c.b16 %v1296, %v1287
    %v1810 = vpack.c.b16 %v1306, %v1297
    %v1811 = vpack.c.b16 %v1307, %v1298
    %v1812 = vpack.c.b16 %v1308, %v1299
    %v1813 = vpack.c.b16 %v1309, %v1300
    %v1814 = vpack.c.b16 %v1310, %v1301
    %v1815 = vpack.c.b16 %v1311, %v1302
    %v1816 = vpack.c.b16 %v1312, %v1303
    %v1817 = vpack.c.b16 %v1313, %v1304
    %v1818 = vpack.c.b16 %v1314, %v1305
    %v1819 = vpack.c.b16 %v1324, %v1315
    %v1820 = vpack.c.b16 %v1325, %v1316
    %v1821 = vpack.c.b16 %v1326, %v1317
    %v1822 = vpack.c.b16 %v1327, %v1318
    %v1823 = vpack.c.b16 %v1328, %v1319
    %v1824 = vpack.c.b16 %v1329, %v1320
    %v1825 = vpack.c.b16 %v1330, %v1321
    %v1826 = vpack.c.b16 %v1331, %v1322
    %v1827 = vpack.c.b16 %v1332, %v1323
    %v1828 = vpack.c.b16 %v1342, %v1333
    %v1829 = vpack.c.b16 %v1343, %v1334
    %v1830 = vpack.c.b16 %v1344, %v1335
    %v1831 = vpack.c.b16 %v1345, %v1336
    %v1832 = vpack.c.b16 %v1346, %v1337
    %v1833 = vpack.c.b16 %v1347, %v1338
    %v1834 = vpack.c.b16 %v1348, %v1339
    %v1835 = vpack.c.b16 %v1349, %v1340
    %v1836 = vpack.c.b16 %v1350, %v1341
    %v1837 = vpack.c.b16 %v1360, %v1351
    %v1838 = vpack.c.b16 %v1361, %v1352
    %v1839 = vpack.c.b16 %v1362, %v1353
    %v1840 = vpack.c.b16 %v1363, %v1354
    %v1841 = vpack.c.b16 %v1364, %v1355
    %v1842 = vpack.c.b16 %v1365, %v1356
    %v1843 = vpack.c.b16 %v1366, %v1357
    %v1844 = vpack.c.b16 %v1367, %v1358
    %v1845 = vpack.c.b16 %v1368, %v1359
    %v1846 = vpack.c.b16 %v1378, %v1369
    %v1847 = vpack.c.b16 %v1379, %v1370
    %v1848 = vpack.c.b16 %v1380, %v1371
    %v1849 = vpack.c.b16 %v1381, %v1372
    %v1850 = vpack.c.b16 %v1382, %v1373
    %v1851 = vpack.c.b16 %v1383, %v1374
    %v1852 = vpack.c.b16 %v1384, %v1375
    %v1853 = vpack.c.b16 %v1385, %v1376
    %v1854 = vpack.c.b16 %v1386, %v1377
    %v1855 = vpack.c.b16 %v1396, %v1387
    %v1856 = vpack.c.b16 %v1397, %v1388
    %v1857 = vpack.c.b16 %v1398, %v1389
    %v1858 = vpack.c.b16 %v1399, %v1390
    %v1859 = vpack.c.b16 %v1400, %v1391
    %v1860 = vpack.c.b16 %v1401, %v1392
    %v1861 = vpack.c.b16 %v1402, %v1393
    %v1862 = vpack.c.b16 %v1403, %v1394
    %v1863 = vpack.c.b16 %v1404, %v1395
    %v1864 = vpack.c.b16 %v1414, %v1405
    %v1865 = vpack.c.b16 %v1415, %v1406
    %v1866 = vpack.c.b16 %v1416, %v1407
    %v1867 = vpack.c.b16 %v1417, %v1408
    %v1868 = vpack.c.b16 %v1418, %v1409
    %v1869 = vpack.c.b16 %v1419, %v1410
    %v1870 = vpack.c.b16 %v1420, %v1411
    %v1871 = vpack.c.b16 %v1421, %v1412
    %v1872 = vpack.c.b16 %v1422, %v1413
    %v1873 = vpack.c.b16 %v1432, %v1423
    %v1874 = vpack.c.b16 %v1433, %v1424
    %v1875 = vpack.c.b16 %v1434, %v1425
    %v1876 = vpack.c.b16 %v1435, %v1426
    %v1877 = vpack.c.b16 %v1436, %v1427
    %v1878 = vpack.c.b16 %v1437, %v1428
    %v1879 = vpack.c.b16 %v1438, %v1429
    %v1880 = vpack.c.b16 %v1439, %v1430
    %v1881 = vpack.c.b16 %v1440, %v1431
    %v1882 = vpack.c.b16 %v1450, %v1441
    %v1883 = vpack.c.b16 %v1451, %v1442
    %v1884 = vpack.c.b16 %v1452, %v1443
    %v1885 = vpack.c.b16 %v1453, %v1444
    %v1886 = vpack.c.b16 %v1454, %v1445
    %v1887 = vpack.c.b16 %v1455, %v1446
    %v1888 = vpack.c.b16 %v1456, %v1447
    %v1889 = vpack.c.b16 %v1457, %v1448
    %v1890 = vpack.c.b16 %v1458, %v1449
    %v1891 = vpack.c.b16 %v1468, %v1459
    %v1892 = vpack.c.b16 %v1469, %v1460
    %v1893 = vpack.c.b16 %v1470, %v1461
    %v1894 = vpack.c.b16 %v1471, %v1462
    %v1895 = vpack.c.b16 %v1472, %v1463
    %v1896 = vpack.c.b16 %v1473, %v1464
    %v1897 = vpack.c.b16 %v1474, %v1465
    %v1898 = vpack.c.b16 %v1475, %v1466
    %v1899 = vpack.c.b16 %v1476, %v1467
    %v1900 = vpack.c.b16 %v1486, %v1477
    %v1901 = vpack.c.b16 %v1487, %v1478
    %v1902 = vpack.c.b16 %v1488, %v1479
    %v1903 = vpack.c.b16 %v1489, %v1480
    %v1904 = vpack.c.b16 %v1490, %v1481
    %v1905 = vpack.c.b16 %v1491, %v1482
    %v1906 = vpack.c.b16 %v1492, %v1483
    %v1907 = vpack.c.b16 %v1493, %v1484
    %v1908 = vpack.c.b16 %v1494, %v1485
    %v1909 = vpack.c.b16 %v1504, %v1495
    %v1910 = vpack.c.b16 %v1505, %v1496
    %v1911 = vpack.c.b16 %v1506, %v1497
    %v1912 = vpack.c.b16 %v1507, %v1498
    %v1913 = vpack.c.b16 %v1508, %v1499
    %v1914 = vpack.c.b16 %v1509, %v1500
    %v1915 = vpack.c.b16 %v1510, %v1501
    %v1916 = vpack.c.b16 %v1511, %v1502
    %v1917 = vpack.c.b16 %v1512, %v1503
    %v1918 = vpack.c.b16 %v1522, %v1513
    %v1919 = vpack.c.b16 %v1523, %v1514
    %v1920 = vpack.c.b16 %v1524, %v1515
    %v1921 = vpack.c.b16 %v1525, %v1516
    %v1922 = vpack.c.b16 %v1526, %v1517
    %v1923 = vpack.c.b16 %v1527, %v1518
    %v1924 = vpack.c.b16 %v1528, %v1519
    %v1925 = vpack.c.b16 %v1529, %v1520
    %v1926 = vpack.c.b16 %v1530, %v1521
    %v1927 = vpack.c.b16 %v1540, %v1531
    %v1928 = vpack.c.b16 %v1541, %v1532
    %v1929 = vpack.c.b16 %v1542, %v1533
    %v1930 = vpack.c.b16 %v1543, %v1534
    %v1931 = vpack.c.b16 %v1544, %v1535
    %v1932 = vpack.c.b16 %v1545, %v1536
    %v1933 = vpack.c.b16 %v1546, %v1537
    %v1934 = vpack.c.b16 %v1547, %v1538
    %v1935 = vpack.c.b16 %v1548, %v1539
    %v1936 = vpack.c.b16 %v1558, %v1549
    %v1937 = vpack.c.b16 %v1559, %v1550
    %v1938 = vpack.c.b16 %v1560, %v1551
    %v1939 = vpack.c.b16 %v1561, %v1552
    %v1940 = vpack.c.b16 %v1562, %v1553
    %v1941 = vpack.c.b16 %v1563, %v1554
    %v1942 = vpack.c.b16 %v1564, %v1555
    %v1943 = vpack.c.b16 %v1565, %v1556
    %v1944 = vpack.c.b16 %v1566, %v1557
    %v1945 = vpack.c.b16 %v1576, %v1567
    %v1946 = vpack.c.b16 %v1577, %v1568
    %v1947 = vpack.c.b16 %v1578, %v1569
    %v1948 = vpack.c.b16 %v1579, %v1570
    %v1949 = vpack.c.b16 %v1580, %v1571
    %v1950 = vpack.c.b16 %v1581, %v1572
    %v1951 = vpack.c.b16 %v1582, %v1573
    %v1952 = vpack.c.b16 %v1583, %v1574
    %v1953 = vpack.c.b16 %v1584, %v1575
    %v1954 = vpack.c.b16 %v1594, %v1585
    %v1955 = vpack.c.b16 %v1595, %v1586
    %v1956 = vpack.c.b16 %v1596, %v1587
    %v1957 = vpack.c.b16 %v1597, %v1588
    %v1958 = vpack.c.b16 %v1598, %v1589
    %v1959 = vpack.c.b16 %v1599, %v1590
    %v1960 = vpack.c.b16 %v1600, %v1591
    %v1961 = vpack.c.b16 %v1601, %v1592
    %v1962 = vpack.c.b16 %v1602, %v1593
    %v1963 = vpack.c.b16 %v1612, %v1603
    %v1964 = vpack.c.b16 %v1613, %v1604
    %v1965 = vpack.c.b16 %v1614, %v1605
    %v1966 = vpack.c.b16 %v1615, %v1606
    %v1967 = vpack.c.b16 %v1616, %v1607
    %v1968 = vpack.c.b16 %v1617, %v1608
    %v1969 = vpack.c.b16 %v1618, %v1609
    %v1970 = vpack.c.b16 %v1619, %v1610
    %v1971 = vpack.c.b16 %v1620, %v1611
    %v1972 = vpack.c.b16 %v1630, %v1621
    %v1973 = vpack.c.b16 %v1631, %v1622
    %v1974 = vpack.c.b16 %v1632, %v1623
    %v1975 = vpack.c.b16 %v1633, %v1624
    %v1976 = vpack.c.b16 %v1634, %v1625
    %v1977 = vpack.c.b16 %v1635, %v1626
    %v1978 = vpack.c.b16 %v1636, %v1627
    %v1979 = vpack.c.b16 %v1637, %v1628
    %v1980 = vpack.c.b16 %v1638, %v1629
    %v1981 = vpack.c.b16 %v1648, %v1639
    %v1982 = vpack.c.b16 %v1649, %v1640
    %v1983 = vpack.c.b16 %v1650, %v1641
    %v1984 = vpack.c.b16 %v1651, %v1642
    %v1985 = vpack.c.b16 %v1652, %v1643
    %v1986 = vpack.c.b16 %v1653, %v1644
    %v1987 = vpack.c.b16 %v1654, %v1645
    %v1988 = vpack.c.b16 %v1655, %v1646
    %v1989 = vpack.c.b16 %v1656, %v1647
    %v1990 = vpack.c.b16 %v1666, %v1657
    %v1991 = vpack.c.b16 %v1667, %v1658
    %v1992 = vpack.c.b16 %v1668, %v1659
    %v1993 = vpack.c.b16 %v1669, %v1660
    %v1994 = vpack.c.b16 %v1670, %v1661
    %v1995 = vpack.c.b16 %v1671, %v1662
    %v1996 = vpack.c.b16 %v1672, %v1663
    %v1997 = vpack.c.b16 %v1673, %v1664
    %v1998 = vpack.c.b16 %v1674, %v1665
    %v1999 = vpack.c.b16 %v1684, %v1675
    %v2000 = vpack.c.b16 %v1685, %v1676
    %v2001 = vpack.c.b16 %v1686, %v1677
    %v2002 = vpack.c.b16 %v1687, %v1678
    %v2003 = vpack.c.b16 %v1688, %v1679
    %v2004 = vpack.c.b16 %v1689, %v1680
    %v2005 = vpack.c.b16 %v1690, %v1681
    %v2006 = vpack.c.b16 %v1691, %v1682
    %v2007 = vpack.c.b16 %v1692, %v1683
    %v2008 = vpack.c.b16 %v1702, %v1693
    %v2009 = vpack.c.b16 %v1703, %v1694
    %v2010 = vpack.c.b16 %v1704, %v1695
    %v2011 = vpack.c.b16 %v1705, %v1696
    %v2012 = vpack.c.b16 %v1706, %v1697
    %v2013 = vpack.c.b16 %v1707, %v1698
    %v2014 = vpack.c.b16 %v1708, %v1699
    %v2015 = vpack.c.b16 %v1709, %v1700
    %v2016 = vpack.c.b16 %v1710, %v1701
    %v2017 = vpack.c.b16 %v1720, %v1711
    %v2018 = vpack.c.b16 %v1721, %v1712
    %v2019 = vpack.c.b16 %v1722, %v1713
    %v2020 = vpack.c.b16 %v1723, %v1714
    %v2021 = vpack.c.b16 %v1724, %v1715
    %v2022 = vpack.c.b16 %v1725, %v1716
    %v2023 = vpack.c.b16 %v1726, %v1717
    %v2024 = vpack.c.b16 %v1727, %v1718
    %v2025 = vpack.c.b16 %v1728, %v1719
    %v2026 = vpack.c.b16 %v1738, %v1729
    %v2027 = vpack.c.b16 %v1739, %v1730
    %v2028 = vpack.c.b16 %v1740, %v1731
    %v2029 = vpack.c.b16 %v1741, %v1732
    %v2030 = vpack.c.b16 %v1742, %v1733
    %v2031 = vpack.c.b16 %v1743, %v1734
    %v2032 = vpack.c.b16 %v1744, %v1735
    %v2033 = vpack.c.b16 %v1745, %v1736
    %v2034 = vpack.c.b16 %v1746, %v1737
    %2323 = vmatpush.bf16.msra.mxu0 %v1810
    %2324 = vmatpush.bf16.msra.mxu0 %v1801
    %2325 = vmatpush.bf16.msra.mxu0 %v1792
    %2326 = vmatpush.bf16.msra.mxu0 %v1783
    %2327 = vmatpush.bf16.msra.mxu0 %v1774
    %2328 = vmatpush.bf16.msra.mxu0 %v1765
    %2329 = vmatpush.bf16.msra.mxu0 %v1756
    %2330 = vmatpush.bf16.msra.mxu0 %v1747
    %2331 = vmatmul.bf16.gmra.mxu0 %v505
    %v2332 = vpop.f32.mrf.mxu0
    %v2333 = vadd.f32 %v833, %v2332
    %v2334 = vpop.f32.mrf.mxu0
    %2335 = vdwg.mxu0
    %2336 = vmatpush.bf16.msra.mxu0 %v1882
    %2337 = vmatpush.bf16.msra.mxu0 %v1873
    %2338 = vmatpush.bf16.msra.mxu0 %v1864
    %2339 = vmatpush.bf16.msra.mxu0 %v1855
    %2340 = vmatpush.bf16.msra.mxu0 %v1846
    %2341 = vmatpush.bf16.msra.mxu0 %v1837
    %2342 = vmatpush.bf16.msra.mxu0 %v1828
    %2343 = vmatpush.bf16.msra.mxu0 %v1819
    %2344 = vmatmul.bf16.gmra.mxu0 %v506
    %v2345 = vpop.f32.mrf.mxu0
    %v2346 = vadd.f32 %v2333, %v2345
    %v2347 = vpop.f32.mrf.mxu0
    %2348 = vdwg.mxu0
    %2349 = vmatpush.bf16.msra.mxu0 %v1954
    %2350 = vmatpush.bf16.msra.mxu0 %v1945
    %2351 = vmatpush.bf16.msra.mxu0 %v1936
    %2352 = vmatpush.bf16.msra.mxu0 %v1927
    %2353 = vmatpush.bf16.msra.mxu0 %v1918
    %2354 = vmatpush.bf16.msra.mxu0 %v1909
    %2355 = vmatpush.bf16.msra.mxu0 %v1900
    %2356 = vmatpush.bf16.msra.mxu0 %v1891
    %2357 = vmatmul.bf16.gmra.mxu0 %v507
    %v2358 = vpop.f32.mrf.mxu0
    %v2359 = vadd.f32 %v2346, %v2358
    %v2360 = vpop.f32.mrf.mxu0
    %2361 = vdwg.mxu0
    %2362 = vmatpush.bf16.msra.mxu0 %v2026
    %2363 = vmatpush.bf16.msra.mxu0 %v2017
    %2364 = vmatpush.bf16.msra.mxu0 %v2008
    %2365 = vmatpush.bf16.msra.mxu0 %v1999
    %2366 = vmatpush.bf16.msra.mxu0 %v1990
    %2367 = vmatpush.bf16.msra.mxu0 %v1981
    %2368 = vmatpush.bf16.msra.mxu0 %v1972
    %2369 = vmatpush.bf16.msra.mxu0 %v1963
    %2370 = vmatmul.bf16.gmra.mxu0 %v508
    %v2371 = vpop.f32.mrf.mxu0
    %v2372 = vadd.f32 %v2359, %v2371
    %v2373 = vpop.f32.mrf.mxu0
    %2374 = vdwg.mxu0
    %2375 = vmatpush.bf16.msra.mxu0 %v1811
    %2376 = vmatpush.bf16.msra.mxu0 %v1802
    %2377 = vmatpush.bf16.msra.mxu0 %v1793
    %2378 = vmatpush.bf16.msra.mxu0 %v1784
    %2379 = vmatpush.bf16.msra.mxu0 %v1775
    %2380 = vmatpush.bf16.msra.mxu0 %v1766
    %2381 = vmatpush.bf16.msra.mxu0 %v1757
    %2382 = vmatpush.bf16.msra.mxu0 %v1748
    %2383 = vmatmul.bf16.gmra.mxu0 %v505
    %v2384 = vpop.f32.mrf.mxu0
    %v2385 = vadd.f32 %v834, %v2384
    %v2386 = vpop.f32.mrf.mxu0
    %2387 = vdwg.mxu0
    %2388 = vmatpush.bf16.msra.mxu0 %v1883
    %2389 = vmatpush.bf16.msra.mxu0 %v1874
    %2390 = vmatpush.bf16.msra.mxu0 %v1865
    %2391 = vmatpush.bf16.msra.mxu0 %v1856
    %2392 = vmatpush.bf16.msra.mxu0 %v1847
    %2393 = vmatpush.bf16.msra.mxu0 %v1838
    %2394 = vmatpush.bf16.msra.mxu0 %v1829
    %2395 = vmatpush.bf16.msra.mxu0 %v1820
    %2396 = vmatmul.bf16.gmra.mxu0 %v506
    %v2397 = vpop.f32.mrf.mxu0
    %v2398 = vadd.f32 %v2385, %v2397
    %v2399 = vpop.f32.mrf.mxu0
    %2400 = vdwg.mxu0
    %2401 = vmatpush.bf16.msra.mxu0 %v1955
    %2402 = vmatpush.bf16.msra.mxu0 %v1946
    %2403 = vmatpush.bf16.msra.mxu0 %v1937
    %2404 = vmatpush.bf16.msra.mxu0 %v1928
    %2405 = vmatpush.bf16.msra.mxu0 %v1919
    %2406 = vmatpush.bf16.msra.mxu0 %v1910
    %2407 = vmatpush.bf16.msra.mxu0 %v1901
    %2408 = vmatpush.bf16.msra.mxu0 %v1892
    %2409 = vmatmul.bf16.gmra.mxu0 %v507
    %v2410 = vpop.f32.mrf.mxu0
    %v2411 = vadd.f32 %v2398, %v2410
    %v2412 = vpop.f32.mrf.mxu0
    %2413 = vdwg.mxu0
    %2414 = vmatpush.bf16.msra.mxu0 %v2027
    %2415 = vmatpush.bf16.msra.mxu0 %v2018
    %2416 = vmatpush.bf16.msra.mxu0 %v2009
    %2417 = vmatpush.bf16.msra.mxu0 %v2000
    %2418 = vmatpush.bf16.msra.mxu0 %v1991
    %2419 = vmatpush.bf16.msra.mxu0 %v1982
    %2420 = vmatpush.bf16.msra.mxu0 %v1973
    %2421 = vmatpush.bf16.msra.mxu0 %v1964
    %2422 = vmatmul.bf16.gmra.mxu0 %v508
    %v2423 = vpop.f32.mrf.mxu0
    %v2424 = vadd.f32 %v2411, %v2423
    %v2425 = vpop.f32.mrf.mxu0
    %2426 = vdwg.mxu0
    %2427 = vmatpush.bf16.msra.mxu0 %v1812
    %2428 = vmatpush.bf16.msra.mxu0 %v1803
    %2429 = vmatpush.bf16.msra.mxu0 %v1794
    %2430 = vmatpush.bf16.msra.mxu0 %v1785
    %2431 = vmatpush.bf16.msra.mxu0 %v1776
    %2432 = vmatpush.bf16.msra.mxu0 %v1767
    %2433 = vmatpush.bf16.msra.mxu0 %v1758
    %2434 = vmatpush.bf16.msra.mxu0 %v1749
    %2435 = vmatmul.bf16.gmra.mxu0 %v505
    %v2436 = vpop.f32.mrf.mxu0
    %v2437 = vadd.f32 %v835, %v2436
    %v2438 = vpop.f32.mrf.mxu0
    %2439 = vdwg.mxu0
    %2440 = vmatpush.bf16.msra.mxu0 %v1884
    %2441 = vmatpush.bf16.msra.mxu0 %v1875
    %2442 = vmatpush.bf16.msra.mxu0 %v1866
    %2443 = vmatpush.bf16.msra.mxu0 %v1857
    %2444 = vmatpush.bf16.msra.mxu0 %v1848
    %2445 = vmatpush.bf16.msra.mxu0 %v1839
    %2446 = vmatpush.bf16.msra.mxu0 %v1830
    %2447 = vmatpush.bf16.msra.mxu0 %v1821
    %2448 = vmatmul.bf16.gmra.mxu0 %v506
    %v2449 = vpop.f32.mrf.mxu0
    %v2450 = vadd.f32 %v2437, %v2449
    %v2451 = vpop.f32.mrf.mxu0
    %2452 = vdwg.mxu0
    %2453 = vmatpush.bf16.msra.mxu0 %v1956
    %2454 = vmatpush.bf16.msra.mxu0 %v1947
    %2455 = vmatpush.bf16.msra.mxu0 %v1938
    %2456 = vmatpush.bf16.msra.mxu0 %v1929
    %2457 = vmatpush.bf16.msra.mxu0 %v1920
    %2458 = vmatpush.bf16.msra.mxu0 %v1911
    %2459 = vmatpush.bf16.msra.mxu0 %v1902
    %2460 = vmatpush.bf16.msra.mxu0 %v1893
    %2461 = vmatmul.bf16.gmra.mxu0 %v507
    %v2462 = vpop.f32.mrf.mxu0
    %v2463 = vadd.f32 %v2450, %v2462
    %v2464 = vpop.f32.mrf.mxu0
    %2465 = vdwg.mxu0
    %2466 = vmatpush.bf16.msra.mxu0 %v2028
    %2467 = vmatpush.bf16.msra.mxu0 %v2019
    %2468 = vmatpush.bf16.msra.mxu0 %v2010
    %2469 = vmatpush.bf16.msra.mxu0 %v2001
    %2470 = vmatpush.bf16.msra.mxu0 %v1992
    %2471 = vmatpush.bf16.msra.mxu0 %v1983
    %2472 = vmatpush.bf16.msra.mxu0 %v1974
    %2473 = vmatpush.bf16.msra.mxu0 %v1965
    %2474 = vmatmul.bf16.gmra.mxu0 %v508
    %v2475 = vpop.f32.mrf.mxu0
    %v2476 = vadd.f32 %v2463, %v2475
    %v2477 = vpop.f32.mrf.mxu0
    %2478 = vdwg.mxu0
    %2479 = vmatpush.bf16.msra.mxu0 %v1813
    %2480 = vmatpush.bf16.msra.mxu0 %v1804
    %2481 = vmatpush.bf16.msra.mxu0 %v1795
    %2482 = vmatpush.bf16.msra.mxu0 %v1786
    %2483 = vmatpush.bf16.msra.mxu0 %v1777
    %2484 = vmatpush.bf16.msra.mxu0 %v1768
    %2485 = vmatpush.bf16.msra.mxu0 %v1759
    %2486 = vmatpush.bf16.msra.mxu0 %v1750
    %2487 = vmatmul.bf16.gmra.mxu0 %v505
    %v2488 = vpop.f32.mrf.mxu0
    %v2489 = vadd.f32 %v836, %v2488
    %v2490 = vpop.f32.mrf.mxu0
    %2491 = vdwg.mxu0
    %2492 = vmatpush.bf16.msra.mxu0 %v1885
    %2493 = vmatpush.bf16.msra.mxu0 %v1876
    %2494 = vmatpush.bf16.msra.mxu0 %v1867
    %2495 = vmatpush.bf16.msra.mxu0 %v1858
    %2496 = vmatpush.bf16.msra.mxu0 %v1849
    %2497 = vmatpush.bf16.msra.mxu0 %v1840
    %2498 = vmatpush.bf16.msra.mxu0 %v1831
    %2499 = vmatpush.bf16.msra.mxu0 %v1822
    %2500 = vmatmul.bf16.gmra.mxu0 %v506
    %v2501 = vpop.f32.mrf.mxu0
    %v2502 = vadd.f32 %v2489, %v2501
    %v2503 = vpop.f32.mrf.mxu0
    %2504 = vdwg.mxu0
    %2505 = vmatpush.bf16.msra.mxu0 %v1957
    %2506 = vmatpush.bf16.msra.mxu0 %v1948
    %2507 = vmatpush.bf16.msra.mxu0 %v1939
    %2508 = vmatpush.bf16.msra.mxu0 %v1930
    %2509 = vmatpush.bf16.msra.mxu0 %v1921
    %2510 = vmatpush.bf16.msra.mxu0 %v1912
    %2511 = vmatpush.bf16.msra.mxu0 %v1903
    %2512 = vmatpush.bf16.msra.mxu0 %v1894
    %2513 = vmatmul.bf16.gmra.mxu0 %v507
    %v2514 = vpop.f32.mrf.mxu0
    %v2515 = vadd.f32 %v2502, %v2514
    %v2516 = vpop.f32.mrf.mxu0
    %2517 = vdwg.mxu0
    %2518 = vmatpush.bf16.msra.mxu0 %v2029
    %2519 = vmatpush.bf16.msra.mxu0 %v2020
    %2520 = vmatpush.bf16.msra.mxu0 %v2011
    %2521 = vmatpush.bf16.msra.mxu0 %v2002
    %2522 = vmatpush.bf16.msra.mxu0 %v1993
    %2523 = vmatpush.bf16.msra.mxu0 %v1984
    %2524 = vmatpush.bf16.msra.mxu0 %v1975
    %2525 = vmatpush.bf16.msra.mxu0 %v1966
    %2526 = vmatmul.bf16.gmra.mxu0 %v508
    %v2527 = vpop.f32.mrf.mxu0
    %v2528 = vadd.f32 %v2515, %v2527
    %v2529 = vpop.f32.mrf.mxu0
    %2530 = vdwg.mxu0
    %2531 = vmatpush.bf16.msra.mxu0 %v1814
    %2532 = vmatpush.bf16.msra.mxu0 %v1805
    %2533 = vmatpush.bf16.msra.mxu0 %v1796
    %2534 = vmatpush.bf16.msra.mxu0 %v1787
    %2535 = vmatpush.bf16.msra.mxu0 %v1778
    %2536 = vmatpush.bf16.msra.mxu0 %v1769
    %2537 = vmatpush.bf16.msra.mxu0 %v1760
    %2538 = vmatpush.bf16.msra.mxu0 %v1751
    %2539 = vmatmul.bf16.gmra.mxu0 %v505
    %v2540 = vpop.f32.mrf.mxu0
    %v2541 = vadd.f32 %v837, %v2540
    %v2542 = vpop.f32.mrf.mxu0
    %2543 = vdwg.mxu0
    %2544 = vmatpush.bf16.msra.mxu0 %v1886
    %2545 = vmatpush.bf16.msra.mxu0 %v1877
    %2546 = vmatpush.bf16.msra.mxu0 %v1868
    %2547 = vmatpush.bf16.msra.mxu0 %v1859
    %2548 = vmatpush.bf16.msra.mxu0 %v1850
    %2549 = vmatpush.bf16.msra.mxu0 %v1841
    %2550 = vmatpush.bf16.msra.mxu0 %v1832
    %2551 = vmatpush.bf16.msra.mxu0 %v1823
    %2552 = vmatmul.bf16.gmra.mxu0 %v506
    %v2553 = vpop.f32.mrf.mxu0
    %v2554 = vadd.f32 %v2541, %v2553
    %v2555 = vpop.f32.mrf.mxu0
    %2556 = vdwg.mxu0
    %2557 = vmatpush.bf16.msra.mxu0 %v1958
    %2558 = vmatpush.bf16.msra.mxu0 %v1949
    %2559 = vmatpush.bf16.msra.mxu0 %v1940
    %2560 = vmatpush.bf16.msra.mxu0 %v1931
    %2561 = vmatpush.bf16.msra.mxu0 %v1922
    %2562 = vmatpush.bf16.msra.mxu0 %v1913
    %2563 = vmatpush.bf16.msra.mxu0 %v1904
    %2564 = vmatpush.bf16.msra.mxu0 %v1895
    %2565 = vmatmul.bf16.gmra.mxu0 %v507
    %v2566 = vpop.f32.mrf.mxu0
    %v2567 = vadd.f32 %v2554, %v2566
    %v2568 = vpop.f32.mrf.mxu0
    %2569 = vdwg.mxu0
    %2570 = vmatpush.bf16.msra.mxu0 %v2030
    %2571 = vmatpush.bf16.msra.mxu0 %v2021
    %2572 = vmatpush.bf16.msra.mxu0 %v2012
    %2573 = vmatpush.bf16.msra.mxu0 %v2003
    %2574 = vmatpush.bf16.msra.mxu0 %v1994
    %2575 = vmatpush.bf16.msra.mxu0 %v1985
    %2576 = vmatpush.bf16.msra.mxu0 %v1976
    %2577 = vmatpush.bf16.msra.mxu0 %v1967
    %2578 = vmatmul.bf16.gmra.mxu0 %v508
    %v2579 = vpop.f32.mrf.mxu0
    %v2580 = vadd.f32 %v2567, %v2579
    %v2581 = vpop.f32.mrf.mxu0
    %2582 = vdwg.mxu0
    %2583 = vmatpush.bf16.msra.mxu0 %v1815
    %2584 = vmatpush.bf16.msra.mxu0 %v1806
    %2585 = vmatpush.bf16.msra.mxu0 %v1797
    %2586 = vmatpush.bf16.msra.mxu0 %v1788
    %2587 = vmatpush.bf16.msra.mxu0 %v1779
    %2588 = vmatpush.bf16.msra.mxu0 %v1770
    %2589 = vmatpush.bf16.msra.mxu0 %v1761
    %2590 = vmatpush.bf16.msra.mxu0 %v1752
    %2591 = vmatmul.bf16.gmra.mxu0 %v505
    %v2592 = vpop.f32.mrf.mxu0
    %v2593 = vadd.f32 %v838, %v2592
    %v2594 = vpop.f32.mrf.mxu0
    %2595 = vdwg.mxu0
    %2596 = vmatpush.bf16.msra.mxu0 %v1887
    %2597 = vmatpush.bf16.msra.mxu0 %v1878
    %2598 = vmatpush.bf16.msra.mxu0 %v1869
    %2599 = vmatpush.bf16.msra.mxu0 %v1860
    %2600 = vmatpush.bf16.msra.mxu0 %v1851
    %2601 = vmatpush.bf16.msra.mxu0 %v1842
    %2602 = vmatpush.bf16.msra.mxu0 %v1833
    %2603 = vmatpush.bf16.msra.mxu0 %v1824
    %2604 = vmatmul.bf16.gmra.mxu0 %v506
    %v2605 = vpop.f32.mrf.mxu0
    %v2606 = vadd.f32 %v2593, %v2605
    %v2607 = vpop.f32.mrf.mxu0
    %2608 = vdwg.mxu0
    %2609 = vmatpush.bf16.msra.mxu0 %v1959
    %2610 = vmatpush.bf16.msra.mxu0 %v1950
    %2611 = vmatpush.bf16.msra.mxu0 %v1941
    %2612 = vmatpush.bf16.msra.mxu0 %v1932
    %2613 = vmatpush.bf16.msra.mxu0 %v1923
    %2614 = vmatpush.bf16.msra.mxu0 %v1914
    %2615 = vmatpush.bf16.msra.mxu0 %v1905
    %2616 = vmatpush.bf16.msra.mxu0 %v1896
    %2617 = vmatmul.bf16.gmra.mxu0 %v507
    %v2618 = vpop.f32.mrf.mxu0
    %v2619 = vadd.f32 %v2606, %v2618
    %v2620 = vpop.f32.mrf.mxu0
    %2621 = vdwg.mxu0
    %2622 = vmatpush.bf16.msra.mxu0 %v2031
    %2623 = vmatpush.bf16.msra.mxu0 %v2022
    %2624 = vmatpush.bf16.msra.mxu0 %v2013
    %2625 = vmatpush.bf16.msra.mxu0 %v2004
    %2626 = vmatpush.bf16.msra.mxu0 %v1995
    %2627 = vmatpush.bf16.msra.mxu0 %v1986
    %2628 = vmatpush.bf16.msra.mxu0 %v1977
    %2629 = vmatpush.bf16.msra.mxu0 %v1968
    %2630 = vmatmul.bf16.gmra.mxu0 %v508
    %v2631 = vpop.f32.mrf.mxu0
    %v2632 = vadd.f32 %v2619, %v2631
    %v2633 = vpop.f32.mrf.mxu0
    %2634 = vdwg.mxu0
    %2635 = vmatpush.bf16.msra.mxu0 %v1816
    %2636 = vmatpush.bf16.msra.mxu0 %v1807
    %2637 = vmatpush.bf16.msra.mxu0 %v1798
    %2638 = vmatpush.bf16.msra.mxu0 %v1789
    %2639 = vmatpush.bf16.msra.mxu0 %v1780
    %2640 = vmatpush.bf16.msra.mxu0 %v1771
    %2641 = vmatpush.bf16.msra.mxu0 %v1762
    %2642 = vmatpush.bf16.msra.mxu0 %v1753
    %2643 = vmatmul.bf16.gmra.mxu0 %v505
    %v2644 = vpop.f32.mrf.mxu0
    %v2645 = vadd.f32 %v839, %v2644
    %v2646 = vpop.f32.mrf.mxu0
    %2647 = vdwg.mxu0
    %2648 = vmatpush.bf16.msra.mxu0 %v1888
    %2649 = vmatpush.bf16.msra.mxu0 %v1879
    %2650 = vmatpush.bf16.msra.mxu0 %v1870
    %2651 = vmatpush.bf16.msra.mxu0 %v1861
    %2652 = vmatpush.bf16.msra.mxu0 %v1852
    %2653 = vmatpush.bf16.msra.mxu0 %v1843
    %2654 = vmatpush.bf16.msra.mxu0 %v1834
    %2655 = vmatpush.bf16.msra.mxu0 %v1825
    %2656 = vmatmul.bf16.gmra.mxu0 %v506
    %v2657 = vpop.f32.mrf.mxu0
    %v2658 = vadd.f32 %v2645, %v2657
    %v2659 = vpop.f32.mrf.mxu0
    %2660 = vdwg.mxu0
    %2661 = vmatpush.bf16.msra.mxu0 %v1960
    %2662 = vmatpush.bf16.msra.mxu0 %v1951
    %2663 = vmatpush.bf16.msra.mxu0 %v1942
    %2664 = vmatpush.bf16.msra.mxu0 %v1933
    %2665 = vmatpush.bf16.msra.mxu0 %v1924
    %2666 = vmatpush.bf16.msra.mxu0 %v1915
    %2667 = vmatpush.bf16.msra.mxu0 %v1906
    %2668 = vmatpush.bf16.msra.mxu0 %v1897
    %2669 = vmatmul.bf16.gmra.mxu0 %v507
    %v2670 = vpop.f32.mrf.mxu0
    %v2671 = vadd.f32 %v2658, %v2670
    %v2672 = vpop.f32.mrf.mxu0
    %2673 = vdwg.mxu0
    %2674 = vmatpush.bf16.msra.mxu0 %v2032
    %2675 = vmatpush.bf16.msra.mxu0 %v2023
    %2676 = vmatpush.bf16.msra.mxu0 %v2014
    %2677 = vmatpush.bf16.msra.mxu0 %v2005
    %2678 = vmatpush.bf16.msra.mxu0 %v1996
    %2679 = vmatpush.bf16.msra.mxu0 %v1987
    %2680 = vmatpush.bf16.msra.mxu0 %v1978
    %2681 = vmatpush.bf16.msra.mxu0 %v1969
    %2682 = vmatmul.bf16.gmra.mxu0 %v508
    %v2683 = vpop.f32.mrf.mxu0
    %v2684 = vadd.f32 %v2671, %v2683
    %v2685 = vpop.f32.mrf.mxu0
    %2686 = vdwg.mxu0
    %2687 = vmatpush.bf16.msra.mxu0 %v1817
    %2688 = vmatpush.bf16.msra.mxu0 %v1808
    %2689 = vmatpush.bf16.msra.mxu0 %v1799
    %2690 = vmatpush.bf16.msra.mxu0 %v1790
    %2691 = vmatpush.bf16.msra.mxu0 %v1781
    %2692 = vmatpush.bf16.msra.mxu0 %v1772
    %2693 = vmatpush.bf16.msra.mxu0 %v1763
    %2694 = vmatpush.bf16.msra.mxu0 %v1754
    %2695 = vmatmul.bf16.gmra.mxu0 %v505
    %v2696 = vpop.f32.mrf.mxu0
    %v2697 = vadd.f32 %v840, %v2696
    %v2698 = vpop.f32.mrf.mxu0
    %2699 = vdwg.mxu0
    %2700 = vmatpush.bf16.msra.mxu0 %v1889
    %2701 = vmatpush.bf16.msra.mxu0 %v1880
    %2702 = vmatpush.bf16.msra.mxu0 %v1871
    %2703 = vmatpush.bf16.msra.mxu0 %v1862
    %2704 = vmatpush.bf16.msra.mxu0 %v1853
    %2705 = vmatpush.bf16.msra.mxu0 %v1844
    %2706 = vmatpush.bf16.msra.mxu0 %v1835
    %2707 = vmatpush.bf16.msra.mxu0 %v1826
    %2708 = vmatmul.bf16.gmra.mxu0 %v506
    %v2709 = vpop.f32.mrf.mxu0
    %v2710 = vadd.f32 %v2697, %v2709
    %v2711 = vpop.f32.mrf.mxu0
    %2712 = vdwg.mxu0
    %2713 = vmatpush.bf16.msra.mxu0 %v1961
    %2714 = vmatpush.bf16.msra.mxu0 %v1952
    %2715 = vmatpush.bf16.msra.mxu0 %v1943
    %2716 = vmatpush.bf16.msra.mxu0 %v1934
    %2717 = vmatpush.bf16.msra.mxu0 %v1925
    %2718 = vmatpush.bf16.msra.mxu0 %v1916
    %2719 = vmatpush.bf16.msra.mxu0 %v1907
    %2720 = vmatpush.bf16.msra.mxu0 %v1898
    %2721 = vmatmul.bf16.gmra.mxu0 %v507
    %v2722 = vpop.f32.mrf.mxu0
    %v2723 = vadd.f32 %v2710, %v2722
    %v2724 = vpop.f32.mrf.mxu0
    %2725 = vdwg.mxu0
    %2726 = vmatpush.bf16.msra.mxu0 %v2033
    %2727 = vmatpush.bf16.msra.mxu0 %v2024
    %2728 = vmatpush.bf16.msra.mxu0 %v2015
    %2729 = vmatpush.bf16.msra.mxu0 %v2006
    %2730 = vmatpush.bf16.msra.mxu0 %v1997
    %2731 = vmatpush.bf16.msra.mxu0 %v1988
    %2732 = vmatpush.bf16.msra.mxu0 %v1979
    %2733 = vmatpush.bf16.msra.mxu0 %v1970
    %2734 = vmatmul.bf16.gmra.mxu0 %v508
    %v2735 = vpop.f32.mrf.mxu0
    %v2736 = vadd.f32 %v2723, %v2735
    %v2737 = vpop.f32.mrf.mxu0
    %2738 = vdwg.mxu0
    %2739 = vmatpush.bf16.msra.mxu0 %v1818
    %2740 = vmatpush.bf16.msra.mxu0 %v1809
    %2741 = vmatpush.bf16.msra.mxu0 %v1800
    %2742 = vmatpush.bf16.msra.mxu0 %v1791
    %2743 = vmatpush.bf16.msra.mxu0 %v1782
    %2744 = vmatpush.bf16.msra.mxu0 %v1773
    %2745 = vmatpush.bf16.msra.mxu0 %v1764
    %2746 = vmatpush.bf16.msra.mxu0 %v1755
    %2747 = vmatmul.bf16.gmra.mxu0 %v505
    %v2748 = vpop.f32.mrf.mxu0
    %v2749 = vadd.f32 %v841, %v2748
    %v2750 = vpop.f32.mrf.mxu0
    %2751 = vdwg.mxu0
    %2752 = vmatpush.bf16.msra.mxu0 %v1890
    %2753 = vmatpush.bf16.msra.mxu0 %v1881
    %2754 = vmatpush.bf16.msra.mxu0 %v1872
    %2755 = vmatpush.bf16.msra.mxu0 %v1863
    %2756 = vmatpush.bf16.msra.mxu0 %v1854
    %2757 = vmatpush.bf16.msra.mxu0 %v1845
    %2758 = vmatpush.bf16.msra.mxu0 %v1836
    %2759 = vmatpush.bf16.msra.mxu0 %v1827
    %2760 = vmatmul.bf16.gmra.mxu0 %v506
    %v2761 = vpop.f32.mrf.mxu0
    %v2762 = vadd.f32 %v2749, %v2761
    %v2763 = vpop.f32.mrf.mxu0
    %2764 = vdwg.mxu0
    %2765 = vmatpush.bf16.msra.mxu0 %v1962
    %2766 = vmatpush.bf16.msra.mxu0 %v1953
    %2767 = vmatpush.bf16.msra.mxu0 %v1944
    %2768 = vmatpush.bf16.msra.mxu0 %v1935
    %2769 = vmatpush.bf16.msra.mxu0 %v1926
    %2770 = vmatpush.bf16.msra.mxu0 %v1917
    %2771 = vmatpush.bf16.msra.mxu0 %v1908
    %2772 = vmatpush.bf16.msra.mxu0 %v1899
    %2773 = vmatmul.bf16.gmra.mxu0 %v507
    %v2774 = vpop.f32.mrf.mxu0
    %v2775 = vadd.f32 %v2762, %v2774
    %v2776 = vpop.f32.mrf.mxu0
    %2777 = vdwg.mxu0
    %2778 = vmatpush.bf16.msra.mxu0 %v2034
    %2779 = vmatpush.bf16.msra.mxu0 %v2025
    %2780 = vmatpush.bf16.msra.mxu0 %v2016
    %2781 = vmatpush.bf16.msra.mxu0 %v2007
    %2782 = vmatpush.bf16.msra.mxu0 %v1998
    %2783 = vmatpush.bf16.msra.mxu0 %v1989
    %2784 = vmatpush.bf16.msra.mxu0 %v1980
    %2785 = vmatpush.bf16.msra.mxu0 %v1971
    %2786 = vmatmul.bf16.gmra.mxu0 %v508
    %v2787 = vpop.f32.mrf.mxu0
    %v2788 = vadd.f32 %v2775, %v2787
    %v2789 = vpop.f32.mrf.mxu0
    %2790 = vdwg.mxu0
    %v2791 = vmax.f32 %v2372, 0.0
    %v2792 = vmax.f32 %v2424, 0.0
    %v2793 = vmax.f32 %v2476, 0.0
    %v2794 = vmax.f32 %v2528, 0.0
    %v2795 = vmax.f32 %v2580, 0.0
    %v2796 = vmax.f32 %v2632, 0.0
    %v2797 = vmax.f32 %v2684, 0.0
    %v2798 = vmax.f32 %v2736, 0.0
    %v2799 = vmax.f32 %v2788, 0.0
    %v2800 = vpack.c.bf16 %v2791, %v2791
    %v2801 = vpack.c.bf16 %v2792, %v2792
    %v2802 = vpack.c.bf16 %v2793, %v2793
    %v2803 = vpack.c.bf16 %v2794, %v2794
    %v2804 = vpack.c.bf16 %v2795, %v2795
    %v2805 = vpack.c.bf16 %v2796, %v2796
    %v2806 = vpack.c.bf16 %v2797, %v2797
    %v2807 = vpack.c.bf16 %v2798, %v2798
    %v2808 = vpack.c.bf16 %v2799, %v2799
    %v2809 = vld [vmem:[#allocation15] sm:$0xff]
    %v2810 = vld [vmem:[#allocation15 + $0x8] sm:$0xff]
    %v2811 = vld [vmem:[#allocation15 + $0x10] sm:$0xf]
    %v2812 = vld [vmem:[#allocation15 + $0x14] sm:$0xff]
    %v2813 = vld [vmem:[#allocation15 + $0x1c] sm:$0xff]
    %v2814 = vld [vmem:[#allocation15 + $0x24] sm:$0xf]
    %v2815 = vld [vmem:[#allocation15 + $0x28] sm:$0xff]
    %v2816 = vld [vmem:[#allocation15 + $0x30] sm:$0xff]
    %v2817 = vld [vmem:[#allocation15 + $0x38] sm:$0xf]
    %v2818 = vld [vmem:[#allocation15 + $0x3c] sm:$0xff]
    %v2819 = vld [vmem:[#allocation15 + $0x44] sm:$0xff]
    %v2820 = vld [vmem:[#allocation15 + $0x4c] sm:$0xf]
    %v2821 = vld [vmem:[#allocation15 + $0x50] sm:$0xff]
    %v2822 = vld [vmem:[#allocation15 + $0x58] sm:$0xff]
    %v2823 = vld [vmem:[#allocation15 + $0x60] sm:$0xf]
    %v2824 = vld [vmem:[#allocation15 + $0x64] sm:$0xff]
    %v2825 = vld [vmem:[#allocation15 + $0x6c] sm:$0xff]
    %v2826 = vld [vmem:[#allocation15 + $0x74] sm:$0xf]
    %v2827 = vld [vmem:[#allocation15 + $0x78] sm:$0xff]
    %v2828 = vld [vmem:[#allocation15 + $0x80] sm:$0xff]
    %v2829 = vld [vmem:[#allocation15 + $0x88] sm:$0xf]
    %v2830 = vld [vmem:[#allocation15 + $0x8c] sm:$0xff]
    %v2831 = vld [vmem:[#allocation15 + $0x94] sm:$0xff]
    %v2832 = vld [vmem:[#allocation15 + $0x9c] sm:$0xf]
    %v2833 = vld [vmem:[#allocation15 + $0xa0] sm:$0xff]
    %v2834 = vld [vmem:[#allocation15 + $0xa8] sm:$0xff]
    %v2835 = vld [vmem:[#allocation15 + $0xb0] sm:$0xf]
    %v2836 = vld [vmem:[#allocation15 + $0xb4] sm:$0xff]
    %v2837 = vld [vmem:[#allocation15 + $0xbc] sm:$0xff]
    %v2838 = vld [vmem:[#allocation15 + $0xc4] sm:$0xf]
    %v2839 = vld [vmem:[#allocation15 + $0xc8] sm:$0xff]
    %v2840 = vld [vmem:[#allocation15 + $0xd0] sm:$0xff]
    %v2841 = vld [vmem:[#allocation15 + $0xd8] sm:$0xf]
    %v2842 = vld [vmem:[#allocation15 + $0xdc] sm:$0xff]
    %v2843 = vld [vmem:[#allocation15 + $0xe4] sm:$0xff]
    %v2844 = vld [vmem:[#allocation15 + $0xec] sm:$0xf]
    %v2845 = vld [vmem:[#allocation15 + $0xf0] sm:$0xff]
    %v2846 = vld [vmem:[#allocation15 + $0xf8] sm:$0xff]
    %v2847 = vld [vmem:[#allocation15 + $0x100] sm:$0xf]
    %v2848 = vld [vmem:[#allocation15 + $0x104] sm:$0xff]
    %v2849 = vld [vmem:[#allocation15 + $0x10c] sm:$0xff]
    %v2850 = vld [vmem:[#allocation15 + $0x114] sm:$0xf]
    %v2851 = vld [vmem:[#allocation15 + $0x118] sm:$0xff]
    %v2852 = vld [vmem:[#allocation15 + $0x120] sm:$0xff]
    %v2853 = vld [vmem:[#allocation15 + $0x128] sm:$0xf]
    %v2854 = vld [vmem:[#allocation15 + $0x12c] sm:$0xff]
    %v2855 = vld [vmem:[#allocation15 + $0x134] sm:$0xff]
    %v2856 = vld [vmem:[#allocation15 + $0x13c] sm:$0xf]
    %v2857 = vld [vmem:[#allocation15 + $0x140] sm:$0xff]
    %v2858 = vld [vmem:[#allocation15 + $0x148] sm:$0xff]
    %v2859 = vld [vmem:[#allocation15 + $0x150] sm:$0xf]
    %v2860 = vld [vmem:[#allocation15 + $0x154] sm:$0xff]
    %v2861 = vld [vmem:[#allocation15 + $0x15c] sm:$0xff]
    %v2862 = vld [vmem:[#allocation15 + $0x164] sm:$0xf]
    %v2863 = vld [vmem:[#allocation15 + $0x168] sm:$0xff]
    %v2864 = vld [vmem:[#allocation15 + $0x170] sm:$0xff]
    %v2865 = vld [vmem:[#allocation15 + $0x178] sm:$0xf]
    %v2866 = vld [vmem:[#allocation15 + $0x17c] sm:$0xff]
    %v2867 = vld [vmem:[#allocation15 + $0x184] sm:$0xff]
    %v2868 = vld [vmem:[#allocation15 + $0x18c] sm:$0xf]
    %v2869 = vld [vmem:[#allocation15 + $0x190] sm:$0xff]
    %v2870 = vld [vmem:[#allocation15 + $0x198] sm:$0xff]
    %v2871 = vld [vmem:[#allocation15 + $0x1a0] sm:$0xf]
    %v2872 = vld [vmem:[#allocation15 + $0x1a4] sm:$0xff]
    %v2873 = vld [vmem:[#allocation15 + $0x1ac] sm:$0xff]
    %v2874 = vld [vmem:[#allocation15 + $0x1b4] sm:$0xf]
    %v2875 = vld [vmem:[#allocation15 + $0x1b8] sm:$0xff]
    %v2876 = vld [vmem:[#allocation15 + $0x1c0] sm:$0xff]
    %v2877 = vld [vmem:[#allocation15 + $0x1c8] sm:$0xf]
    %v2878 = vld [vmem:[#allocation15 + $0x1cc] sm:$0xff]
    %v2879 = vld [vmem:[#allocation15 + $0x1d4] sm:$0xff]
    %v2880 = vld [vmem:[#allocation15 + $0x1dc] sm:$0xf]
    %v2881 = vld [vmem:[#allocation15 + $0x1e0] sm:$0xff]
    %v2882 = vld [vmem:[#allocation15 + $0x1e8] sm:$0xff]
    %v2883 = vld [vmem:[#allocation15 + $0x1f0] sm:$0xf]
    %v2884 = vld [vmem:[#allocation15 + $0x1f4] sm:$0xff]
    %v2885 = vld [vmem:[#allocation15 + $0x1fc] sm:$0xff]
    %v2886 = vld [vmem:[#allocation15 + $0x204] sm:$0xf]
    %v2887 = vld [vmem:[#allocation15 + $0x208] sm:$0xff]
    %v2888 = vld [vmem:[#allocation15 + $0x210] sm:$0xff]
    %v2889 = vld [vmem:[#allocation15 + $0x218] sm:$0xf]
    %v2890 = vld [vmem:[#allocation15 + $0x21c] sm:$0xff]
    %v2891 = vld [vmem:[#allocation15 + $0x224] sm:$0xff]
    %v2892 = vld [vmem:[#allocation15 + $0x22c] sm:$0xf]
    %v2893 = vld [vmem:[#allocation15 + $0x230] sm:$0xff]
    %v2894 = vld [vmem:[#allocation15 + $0x238] sm:$0xff]
    %v2895 = vld [vmem:[#allocation15 + $0x240] sm:$0xf]
    %v2896 = vld [vmem:[#allocation15 + $0x244] sm:$0xff]
    %v2897 = vld [vmem:[#allocation15 + $0x24c] sm:$0xff]
    %v2898 = vld [vmem:[#allocation15 + $0x254] sm:$0xf]
    %v2899 = vld [vmem:[#allocation15 + $0x258] sm:$0xff]
    %v2900 = vld [vmem:[#allocation15 + $0x260] sm:$0xff]
    %v2901 = vld [vmem:[#allocation15 + $0x268] sm:$0xf]
    %v2902 = vld [vmem:[#allocation15 + $0x26c] sm:$0xff]
    %v2903 = vld [vmem:[#allocation15 + $0x274] sm:$0xff]
    %v2904 = vld [vmem:[#allocation15 + $0x27c] sm:$0xf]
    %v2905 = vld [vmem:[#allocation15 + $0x280] sm:$0xff]
    %v2906 = vld [vmem:[#allocation15 + $0x288] sm:$0xff]
    %v2907 = vld [vmem:[#allocation15 + $0x290] sm:$0xf]
    %v2908 = vld [vmem:[#allocation15 + $0x294] sm:$0xff]
    %v2909 = vld [vmem:[#allocation15 + $0x29c] sm:$0xff]
    %v2910 = vld [vmem:[#allocation15 + $0x2a4] sm:$0xf]
    %v2911 = vld [vmem:[#allocation15 + $0x2a8] sm:$0xff]
    %v2912 = vld [vmem:[#allocation15 + $0x2b0] sm:$0xff]
    %v2913 = vld [vmem:[#allocation15 + $0x2b8] sm:$0xf]
    %v2914 = vld [vmem:[#allocation15 + $0x2bc] sm:$0xff]
    %v2915 = vld [vmem:[#allocation15 + $0x2c4] sm:$0xff]
    %v2916 = vld [vmem:[#allocation15 + $0x2cc] sm:$0xf]
    %v2917 = vld [vmem:[#allocation15 + $0x2d0] sm:$0xff]
    %v2918 = vld [vmem:[#allocation15 + $0x2d8] sm:$0xff]
    %v2919 = vld [vmem:[#allocation15 + $0x2e0] sm:$0xf]
    %v2920 = vld [vmem:[#allocation15 + $0x2e4] sm:$0xff]
    %v2921 = vld [vmem:[#allocation15 + $0x2ec] sm:$0xff]
    %v2922 = vld [vmem:[#allocation15 + $0x2f4] sm:$0xf]
    %v2923 = vld [vmem:[#allocation15 + $0x2f8] sm:$0xff]
    %v2924 = vld [vmem:[#allocation15 + $0x300] sm:$0xff]
    %v2925 = vld [vmem:[#allocation15 + $0x308] sm:$0xf]
    %v2926 = vld [vmem:[#allocation15 + $0x30c] sm:$0xff]
    %v2927 = vld [vmem:[#allocation15 + $0x314] sm:$0xff]
    %v2928 = vld [vmem:[#allocation15 + $0x31c] sm:$0xf]
    %v2929 = vld [vmem:[#allocation15 + $0x320] sm:$0xff]
    %v2930 = vld [vmem:[#allocation15 + $0x328] sm:$0xff]
    %v2931 = vld [vmem:[#allocation15 + $0x330] sm:$0xf]
    %v2932 = vld [vmem:[#allocation15 + $0x334] sm:$0xff]
    %v2933 = vld [vmem:[#allocation15 + $0x33c] sm:$0xff]
    %v2934 = vld [vmem:[#allocation15 + $0x344] sm:$0xf]
    %v2935 = vld [vmem:[#allocation15 + $0x348] sm:$0xff]
    %v2936 = vld [vmem:[#allocation15 + $0x350] sm:$0xff]
    %v2937 = vld [vmem:[#allocation15 + $0x358] sm:$0xf]
    %v2938 = vld [vmem:[#allocation15 + $0x35c] sm:$0xff]
    %v2939 = vld [vmem:[#allocation15 + $0x364] sm:$0xff]
    %v2940 = vld [vmem:[#allocation15 + $0x36c] sm:$0xf]
    %v2941 = vld [vmem:[#allocation15 + $0x370] sm:$0xff]
    %v2942 = vld [vmem:[#allocation15 + $0x378] sm:$0xff]
    %v2943 = vld [vmem:[#allocation15 + $0x380] sm:$0xf]
    %v2944 = vld [vmem:[#allocation15 + $0x384] sm:$0xff]
    %v2945 = vld [vmem:[#allocation15 + $0x38c] sm:$0xff]
    %v2946 = vld [vmem:[#allocation15 + $0x394] sm:$0xf]
    %v2947 = vld [vmem:[#allocation15 + $0x398] sm:$0xff]
    %v2948 = vld [vmem:[#allocation15 + $0x3a0] sm:$0xff]
    %v2949 = vld [vmem:[#allocation15 + $0x3a8] sm:$0xf]
    %v2950 = vld [vmem:[#allocation15 + $0x3ac] sm:$0xff]
    %v2951 = vld [vmem:[#allocation15 + $0x3b4] sm:$0xff]
    %v2952 = vld [vmem:[#allocation15 + $0x3bc] sm:$0xf]
    %v2953 = vld [vmem:[#allocation15 + $0x3c0] sm:$0xff]
    %v2954 = vld [vmem:[#allocation15 + $0x3c8] sm:$0xff]
    %v2955 = vld [vmem:[#allocation15 + $0x3d0] sm:$0xf]
    %v2956 = vld [vmem:[#allocation15 + $0x3d4] sm:$0xff]
    %v2957 = vld [vmem:[#allocation15 + $0x3dc] sm:$0xff]
    %v2958 = vld [vmem:[#allocation15 + $0x3e4] sm:$0xf]
    %v2959 = vld [vmem:[#allocation15 + $0x3e8] sm:$0xff]
    %v2960 = vld [vmem:[#allocation15 + $0x3f0] sm:$0xff]
    %v2961 = vld [vmem:[#allocation15 + $0x3f8] sm:$0xf]
    %v2962 = vld [vmem:[#allocation15 + $0x3fc] sm:$0xff]
    %v2963 = vld [vmem:[#allocation15 + $0x404] sm:$0xff]
    %v2964 = vld [vmem:[#allocation15 + $0x40c] sm:$0xf]
    %v2965 = vld [vmem:[#allocation15 + $0x410] sm:$0xff]
    %v2966 = vld [vmem:[#allocation15 + $0x418] sm:$0xff]
    %v2967 = vld [vmem:[#allocation15 + $0x420] sm:$0xf]
    %v2968 = vld [vmem:[#allocation15 + $0x424] sm:$0xff]
    %v2969 = vld [vmem:[#allocation15 + $0x42c] sm:$0xff]
    %v2970 = vld [vmem:[#allocation15 + $0x434] sm:$0xf]
    %v2971 = vld [vmem:[#allocation15 + $0x438] sm:$0xff]
    %v2972 = vld [vmem:[#allocation15 + $0x440] sm:$0xff]
    %v2973 = vld [vmem:[#allocation15 + $0x448] sm:$0xf]
    %v2974 = vld [vmem:[#allocation15 + $0x44c] sm:$0xff]
    %v2975 = vld [vmem:[#allocation15 + $0x454] sm:$0xff]
    %v2976 = vld [vmem:[#allocation15 + $0x45c] sm:$0xf]
    %v2977 = vld [vmem:[#allocation15 + $0x460] sm:$0xff]
    %v2978 = vld [vmem:[#allocation15 + $0x468] sm:$0xff]
    %v2979 = vld [vmem:[#allocation15 + $0x470] sm:$0xf]
    %v2980 = vld [vmem:[#allocation15 + $0x474] sm:$0xff]
    %v2981 = vld [vmem:[#allocation15 + $0x47c] sm:$0xff]
    %v2982 = vld [vmem:[#allocation15 + $0x484] sm:$0xf]
    %v2983 = vld [vmem:[#allocation15 + $0x488] sm:$0xff]
    %v2984 = vld [vmem:[#allocation15 + $0x490] sm:$0xff]
    %v2985 = vld [vmem:[#allocation15 + $0x498] sm:$0xf]
    %v2986 = vld [vmem:[#allocation15 + $0x49c] sm:$0xff]
    %v2987 = vld [vmem:[#allocation15 + $0x4a4] sm:$0xff]
    %v2988 = vld [vmem:[#allocation15 + $0x4ac] sm:$0xf]
    %v2989 = vld [vmem:[#allocation15 + $0x4b0] sm:$0xff]
    %v2990 = vld [vmem:[#allocation15 + $0x4b8] sm:$0xff]
    %v2991 = vld [vmem:[#allocation15 + $0x4c0] sm:$0xf]
    %v2992 = vld [vmem:[#allocation15 + $0x4c4] sm:$0xff]
    %v2993 = vld [vmem:[#allocation15 + $0x4cc] sm:$0xff]
    %v2994 = vld [vmem:[#allocation15 + $0x4d4] sm:$0xf]
    %v2995 = vld [vmem:[#allocation15 + $0x4d8] sm:$0xff]
    %v2996 = vld [vmem:[#allocation15 + $0x4e0] sm:$0xff]
    %v2997 = vld [vmem:[#allocation15 + $0x4e8] sm:$0xf]
    %v2998 = vld [vmem:[#allocation15 + $0x4ec] sm:$0xff]
    %v2999 = vld [vmem:[#allocation15 + $0x4f4] sm:$0xff]
    %v3000 = vld [vmem:[#allocation15 + $0x4fc] sm:$0xf]
    %v3001 = vld [vmem:[#allocation15 + $0x500] sm:$0xff]
    %v3002 = vld [vmem:[#allocation15 + $0x508] sm:$0xff]
    %v3003 = vld [vmem:[#allocation15 + $0x510] sm:$0xf]
    %v3004 = vld [vmem:[#allocation15 + $0x514] sm:$0xff]
    %v3005 = vld [vmem:[#allocation15 + $0x51c] sm:$0xff]
    %v3006 = vld [vmem:[#allocation15 + $0x524] sm:$0xf]
    %v3007 = vld [vmem:[#allocation15 + $0x528] sm:$0xff]
    %v3008 = vld [vmem:[#allocation15 + $0x530] sm:$0xff]
    %v3009 = vld [vmem:[#allocation15 + $0x538] sm:$0xf]
    %v3010 = vld [vmem:[#allocation15 + $0x53c] sm:$0xff]
    %v3011 = vld [vmem:[#allocation15 + $0x544] sm:$0xff]
    %v3012 = vld [vmem:[#allocation15 + $0x54c] sm:$0xf]
    %v3013 = vld [vmem:[#allocation15 + $0x550] sm:$0xff]
    %v3014 = vld [vmem:[#allocation15 + $0x558] sm:$0xff]
    %v3015 = vld [vmem:[#allocation15 + $0x560] sm:$0xf]
    %v3016 = vld [vmem:[#allocation15 + $0x564] sm:$0xff]
    %v3017 = vld [vmem:[#allocation15 + $0x56c] sm:$0xff]
    %v3018 = vld [vmem:[#allocation15 + $0x574] sm:$0xf]
    %v3019 = vld [vmem:[#allocation15 + $0x578] sm:$0xff]
    %v3020 = vld [vmem:[#allocation15 + $0x580] sm:$0xff]
    %v3021 = vld [vmem:[#allocation15 + $0x588] sm:$0xf]
    %v3022 = vld [vmem:[#allocation15 + $0x58c] sm:$0xff]
    %v3023 = vld [vmem:[#allocation15 + $0x594] sm:$0xff]
    %v3024 = vld [vmem:[#allocation15 + $0x59c] sm:$0xf]
    %v3025 = vld [vmem:[#allocation15 + $0x5a0] sm:$0xff]
    %v3026 = vld [vmem:[#allocation15 + $0x5a8] sm:$0xff]
    %v3027 = vld [vmem:[#allocation15 + $0x5b0] sm:$0xf]
    %v3028 = vld [vmem:[#allocation15 + $0x5b4] sm:$0xff]
    %v3029 = vld [vmem:[#allocation15 + $0x5bc] sm:$0xff]
    %v3030 = vld [vmem:[#allocation15 + $0x5c4] sm:$0xf]
    %v3031 = vld [vmem:[#allocation15 + $0x5c8] sm:$0xff]
    %v3032 = vld [vmem:[#allocation15 + $0x5d0] sm:$0xff]
    %v3033 = vld [vmem:[#allocation15 + $0x5d8] sm:$0xf]
    %v3034 = vld [vmem:[#allocation15 + $0x5dc] sm:$0xff]
    %v3035 = vld [vmem:[#allocation15 + $0x5e4] sm:$0xff]
    %v3036 = vld [vmem:[#allocation15 + $0x5ec] sm:$0xf]
    %v3037 = vld [vmem:[#allocation15 + $0x5f0] sm:$0xff]
    %v3038 = vld [vmem:[#allocation15 + $0x5f8] sm:$0xff]
    %v3039 = vld [vmem:[#allocation15 + $0x600] sm:$0xf]
    %v3040 = vld [vmem:[#allocation15 + $0x604] sm:$0xff]
    %v3041 = vld [vmem:[#allocation15 + $0x60c] sm:$0xff]
    %v3042 = vld [vmem:[#allocation15 + $0x614] sm:$0xf]
    %v3043 = vld [vmem:[#allocation15 + $0x618] sm:$0xff]
    %v3044 = vld [vmem:[#allocation15 + $0x620] sm:$0xff]
    %v3045 = vld [vmem:[#allocation15 + $0x628] sm:$0xf]
    %v3046 = vld [vmem:[#allocation15 + $0x62c] sm:$0xff]
    %v3047 = vld [vmem:[#allocation15 + $0x634] sm:$0xff]
    %v3048 = vld [vmem:[#allocation15 + $0x63c] sm:$0xf]
    %v3049 = vld [vmem:[#allocation15 + $0x640] sm:$0xff]
    %v3050 = vld [vmem:[#allocation15 + $0x648] sm:$0xff]
    %v3051 = vld [vmem:[#allocation15 + $0x650] sm:$0xf]
    %v3052 = vld [vmem:[#allocation15 + $0x654] sm:$0xff]
    %v3053 = vld [vmem:[#allocation15 + $0x65c] sm:$0xff]
    %v3054 = vld [vmem:[#allocation15 + $0x664] sm:$0xf]
    %v3055 = vld [vmem:[#allocation15 + $0x668] sm:$0xff]
    %v3056 = vld [vmem:[#allocation15 + $0x670] sm:$0xff]
    %v3057 = vld [vmem:[#allocation15 + $0x678] sm:$0xf]
    %v3058 = vld [vmem:[#allocation15 + $0x67c] sm:$0xff]
    %v3059 = vld [vmem:[#allocation15 + $0x684] sm:$0xff]
    %v3060 = vld [vmem:[#allocation15 + $0x68c] sm:$0xf]
    %v3061 = vld [vmem:[#allocation15 + $0x690] sm:$0xff]
    %v3062 = vld [vmem:[#allocation15 + $0x698] sm:$0xff]
    %v3063 = vld [vmem:[#allocation15 + $0x6a0] sm:$0xf]
    %v3064 = vld [vmem:[#allocation15 + $0x6a4] sm:$0xff]
    %v3065 = vld [vmem:[#allocation15 + $0x6ac] sm:$0xff]
    %v3066 = vld [vmem:[#allocation15 + $0x6b4] sm:$0xf]
    %v3067 = vld [vmem:[#allocation15 + $0x6b8] sm:$0xff]
    %v3068 = vld [vmem:[#allocation15 + $0x6c0] sm:$0xff]
    %v3069 = vld [vmem:[#allocation15 + $0x6c8] sm:$0xf]
    %v3070 = vld [vmem:[#allocation15 + $0x6cc] sm:$0xff]
    %v3071 = vld [vmem:[#allocation15 + $0x6d4] sm:$0xff]
    %v3072 = vld [vmem:[#allocation15 + $0x6dc] sm:$0xf]
    %v3073 = vld [vmem:[#allocation15 + $0x6e0] sm:$0xff]
    %v3074 = vld [vmem:[#allocation15 + $0x6e8] sm:$0xff]
    %v3075 = vld [vmem:[#allocation15 + $0x6f0] sm:$0xf]
    %v3076 = vld [vmem:[#allocation15 + $0x6f4] sm:$0xff]
    %v3077 = vld [vmem:[#allocation15 + $0x6fc] sm:$0xff]
    %v3078 = vld [vmem:[#allocation15 + $0x704] sm:$0xf]
    %v3079 = vld [vmem:[#allocation15 + $0x708] sm:$0xff]
    %v3080 = vld [vmem:[#allocation15 + $0x710] sm:$0xff]
    %v3081 = vld [vmem:[#allocation15 + $0x718] sm:$0xf]
    %v3082 = vld [vmem:[#allocation15 + $0x71c] sm:$0xff]
    %v3083 = vld [vmem:[#allocation15 + $0x724] sm:$0xff]
    %v3084 = vld [vmem:[#allocation15 + $0x72c] sm:$0xf]
    %v3085 = vld [vmem:[#allocation15 + $0x730] sm:$0xff]
    %v3086 = vld [vmem:[#allocation15 + $0x738] sm:$0xff]
    %v3087 = vld [vmem:[#allocation15 + $0x740] sm:$0xf]
    %v3088 = vld [vmem:[#allocation15 + $0x744] sm:$0xff]
    %v3089 = vld [vmem:[#allocation15 + $0x74c] sm:$0xff]
    %v3090 = vld [vmem:[#allocation15 + $0x754] sm:$0xf]
    %v3091 = vld [vmem:[#allocation15 + $0x758] sm:$0xff]
    %v3092 = vld [vmem:[#allocation15 + $0x760] sm:$0xff]
    %v3093 = vld [vmem:[#allocation15 + $0x768] sm:$0xf]
    %v3094 = vld [vmem:[#allocation15 + $0x76c] sm:$0xff]
    %v3095 = vld [vmem:[#allocation15 + $0x774] sm:$0xff]
    %v3096 = vld [vmem:[#allocation15 + $0x77c] sm:$0xf]
    %v3097 = vld [vmem:[#allocation15 + $0x780] sm:$0xff]
    %v3098 = vld [vmem:[#allocation15 + $0x788] sm:$0xff]
    %v3099 = vld [vmem:[#allocation15 + $0x790] sm:$0xf]
    %v3100 = vld [vmem:[#allocation15 + $0x794] sm:$0xff]
    %v3101 = vld [vmem:[#allocation15 + $0x79c] sm:$0xff]
    %v3102 = vld [vmem:[#allocation15 + $0x7a4] sm:$0xf]
    %v3103 = vld [vmem:[#allocation15 + $0x7a8] sm:$0xff]
    %v3104 = vld [vmem:[#allocation15 + $0x7b0] sm:$0xff]
    %v3105 = vld [vmem:[#allocation15 + $0x7b8] sm:$0xf]
    %v3106 = vld [vmem:[#allocation15 + $0x7bc] sm:$0xff]
    %v3107 = vld [vmem:[#allocation15 + $0x7c4] sm:$0xff]
    %v3108 = vld [vmem:[#allocation15 + $0x7cc] sm:$0xf]
    %v3109 = vld [vmem:[#allocation15 + $0x7d0] sm:$0xff]
    %v3110 = vld [vmem:[#allocation15 + $0x7d8] sm:$0xff]
    %v3111 = vld [vmem:[#allocation15 + $0x7e0] sm:$0xf]
    %v3112 = vld [vmem:[#allocation15 + $0x7e4] sm:$0xff]
    %v3113 = vld [vmem:[#allocation15 + $0x7ec] sm:$0xff]
    %v3114 = vld [vmem:[#allocation15 + $0x7f4] sm:$0xf]
    %v3115 = vld [vmem:[#allocation15 + $0x7f8] sm:$0xff]
    %v3116 = vld [vmem:[#allocation15 + $0x800] sm:$0xff]
    %v3117 = vld [vmem:[#allocation15 + $0x808] sm:$0xf]
    %v3118 = vld [vmem:[#allocation15 + $0x80c] sm:$0xff]
    %v3119 = vld [vmem:[#allocation15 + $0x814] sm:$0xff]
    %v3120 = vld [vmem:[#allocation15 + $0x81c] sm:$0xf]
    %v3121 = vld [vmem:[#allocation15 + $0x820] sm:$0xff]
    %v3122 = vld [vmem:[#allocation15 + $0x828] sm:$0xff]
    %v3123 = vld [vmem:[#allocation15 + $0x830] sm:$0xf]
    %v3124 = vld [vmem:[#allocation15 + $0x834] sm:$0xff]
    %v3125 = vld [vmem:[#allocation15 + $0x83c] sm:$0xff]
    %v3126 = vld [vmem:[#allocation15 + $0x844] sm:$0xf]
    %v3127 = vld [vmem:[#allocation15 + $0x848] sm:$0xff]
    %v3128 = vld [vmem:[#allocation15 + $0x850] sm:$0xff]
    %v3129 = vld [vmem:[#allocation15 + $0x858] sm:$0xf]
    %v3130 = vld [vmem:[#allocation15 + $0x85c] sm:$0xff]
    %v3131 = vld [vmem:[#allocation15 + $0x864] sm:$0xff]
    %v3132 = vld [vmem:[#allocation15 + $0x86c] sm:$0xf]
    %v3133 = vld [vmem:[#allocation15 + $0x870] sm:$0xff]
    %v3134 = vld [vmem:[#allocation15 + $0x878] sm:$0xff]
    %v3135 = vld [vmem:[#allocation15 + $0x880] sm:$0xf]
    %v3136 = vld [vmem:[#allocation15 + $0x884] sm:$0xff]
    %v3137 = vld [vmem:[#allocation15 + $0x88c] sm:$0xff]
    %v3138 = vld [vmem:[#allocation15 + $0x894] sm:$0xf]
    %v3139 = vld [vmem:[#allocation15 + $0x898] sm:$0xff]
    %v3140 = vld [vmem:[#allocation15 + $0x8a0] sm:$0xff]
    %v3141 = vld [vmem:[#allocation15 + $0x8a8] sm:$0xf]
    %v3142 = vld [vmem:[#allocation15 + $0x8ac] sm:$0xff]
    %v3143 = vld [vmem:[#allocation15 + $0x8b4] sm:$0xff]
    %v3144 = vld [vmem:[#allocation15 + $0x8bc] sm:$0xf]
    %v3145 = vld [vmem:[#allocation15 + $0x8c0] sm:$0xff]
    %v3146 = vld [vmem:[#allocation15 + $0x8c8] sm:$0xff]
    %v3147 = vld [vmem:[#allocation15 + $0x8d0] sm:$0xf]
    %v3148 = vld [vmem:[#allocation15 + $0x8d4] sm:$0xff]
    %v3149 = vld [vmem:[#allocation15 + $0x8dc] sm:$0xff]
    %v3150 = vld [vmem:[#allocation15 + $0x8e4] sm:$0xf]
    %v3151 = vld [vmem:[#allocation15 + $0x8e8] sm:$0xff]
    %v3152 = vld [vmem:[#allocation15 + $0x8f0] sm:$0xff]
    %v3153 = vld [vmem:[#allocation15 + $0x8f8] sm:$0xf]
    %v3154 = vld [vmem:[#allocation15 + $0x8fc] sm:$0xff]
    %v3155 = vld [vmem:[#allocation15 + $0x904] sm:$0xff]
    %v3156 = vld [vmem:[#allocation15 + $0x90c] sm:$0xf]
    %v3157 = vld [vmem:[#allocation15 + $0x910] sm:$0xff]
    %v3158 = vld [vmem:[#allocation15 + $0x918] sm:$0xff]
    %v3159 = vld [vmem:[#allocation15 + $0x920] sm:$0xf]
    %v3160 = vld [vmem:[#allocation15 + $0x924] sm:$0xff]
    %v3161 = vld [vmem:[#allocation15 + $0x92c] sm:$0xff]
    %v3162 = vld [vmem:[#allocation15 + $0x934] sm:$0xf]
    %v3163 = vld [vmem:[#allocation15 + $0x938] sm:$0xff]
    %v3164 = vld [vmem:[#allocation15 + $0x940] sm:$0xff]
    %v3165 = vld [vmem:[#allocation15 + $0x948] sm:$0xf]
    %v3166 = vld [vmem:[#allocation15 + $0x94c] sm:$0xff]
    %v3167 = vld [vmem:[#allocation15 + $0x954] sm:$0xff]
    %v3168 = vld [vmem:[#allocation15 + $0x95c] sm:$0xf]
    %v3169 = vld [vmem:[#allocation15 + $0x960] sm:$0xff]
    %v3170 = vld [vmem:[#allocation15 + $0x968] sm:$0xff]
    %v3171 = vld [vmem:[#allocation15 + $0x970] sm:$0xf]
    %v3172 = vld [vmem:[#allocation15 + $0x974] sm:$0xff]
    %v3173 = vld [vmem:[#allocation15 + $0x97c] sm:$0xff]
    %v3174 = vld [vmem:[#allocation15 + $0x984] sm:$0xf]
    %v3175 = vld [vmem:[#allocation15 + $0x988] sm:$0xff]
    %v3176 = vld [vmem:[#allocation15 + $0x990] sm:$0xff]
    %v3177 = vld [vmem:[#allocation15 + $0x998] sm:$0xf]
    %v3178 = vld [vmem:[#allocation15 + $0x99c] sm:$0xff]
    %v3179 = vld [vmem:[#allocation15 + $0x9a4] sm:$0xff]
    %v3180 = vld [vmem:[#allocation15 + $0x9ac] sm:$0xf]
    %v3181 = vld [vmem:[#allocation15 + $0x9b0] sm:$0xff]
    %v3182 = vld [vmem:[#allocation15 + $0x9b8] sm:$0xff]
    %v3183 = vld [vmem:[#allocation15 + $0x9c0] sm:$0xf]
    %v3184 = vld [vmem:[#allocation15 + $0x9c4] sm:$0xff]
    %v3185 = vld [vmem:[#allocation15 + $0x9cc] sm:$0xff]
    %v3186 = vld [vmem:[#allocation15 + $0x9d4] sm:$0xf]
    %v3187 = vld [vmem:[#allocation15 + $0x9d8] sm:$0xff]
    %v3188 = vld [vmem:[#allocation15 + $0x9e0] sm:$0xff]
    %v3189 = vld [vmem:[#allocation15 + $0x9e8] sm:$0xf]
    %v3190 = vld [vmem:[#allocation15 + $0x9ec] sm:$0xff]
    %v3191 = vld [vmem:[#allocation15 + $0x9f4] sm:$0xff]
    %v3192 = vld [vmem:[#allocation15 + $0x9fc] sm:$0xf]
    %v3193 = vld [vmem:[#allocation15 + $0xa00] sm:$0xff]
    %v3194 = vld [vmem:[#allocation15 + $0xa08] sm:$0xff]
    %v3195 = vld [vmem:[#allocation15 + $0xa10] sm:$0xf]
    %v3196 = vld [vmem:[#allocation15 + $0xa14] sm:$0xff]
    %v3197 = vld [vmem:[#allocation15 + $0xa1c] sm:$0xff]
    %v3198 = vld [vmem:[#allocation15 + $0xa24] sm:$0xf]
    %v3199 = vld [vmem:[#allocation15 + $0xa28] sm:$0xff]
    %v3200 = vld [vmem:[#allocation15 + $0xa30] sm:$0xff]
    %v3201 = vld [vmem:[#allocation15 + $0xa38] sm:$0xf]
    %v3202 = vld [vmem:[#allocation15 + $0xa3c] sm:$0xff]
    %v3203 = vld [vmem:[#allocation15 + $0xa44] sm:$0xff]
    %v3204 = vld [vmem:[#allocation15 + $0xa4c] sm:$0xf]
    %v3205 = vld [vmem:[#allocation15 + $0xa50] sm:$0xff]
    %v3206 = vld [vmem:[#allocation15 + $0xa58] sm:$0xff]
    %v3207 = vld [vmem:[#allocation15 + $0xa60] sm:$0xf]
    %v3208 = vld [vmem:[#allocation15 + $0xa64] sm:$0xff]
    %v3209 = vld [vmem:[#allocation15 + $0xa6c] sm:$0xff]
    %v3210 = vld [vmem:[#allocation15 + $0xa74] sm:$0xf]
    %v3211 = vld [vmem:[#allocation15 + $0xa78] sm:$0xff]
    %v3212 = vld [vmem:[#allocation15 + $0xa80] sm:$0xff]
    %v3213 = vld [vmem:[#allocation15 + $0xa88] sm:$0xf]
    %v3214 = vld [vmem:[#allocation15 + $0xa8c] sm:$0xff]
    %v3215 = vld [vmem:[#allocation15 + $0xa94] sm:$0xff]
    %v3216 = vld [vmem:[#allocation15 + $0xa9c] sm:$0xf]
    %v3217 = vld [vmem:[#allocation15 + $0xaa0] sm:$0xff]
    %v3218 = vld [vmem:[#allocation15 + $0xaa8] sm:$0xff]
    %v3219 = vld [vmem:[#allocation15 + $0xab0] sm:$0xf]
    %v3220 = vld [vmem:[#allocation15 + $0xab4] sm:$0xff]
    %v3221 = vld [vmem:[#allocation15 + $0xabc] sm:$0xff]
    %v3222 = vld [vmem:[#allocation15 + $0xac4] sm:$0xf]
    %v3223 = vld [vmem:[#allocation15 + $0xac8] sm:$0xff]
    %v3224 = vld [vmem:[#allocation15 + $0xad0] sm:$0xff]
    %v3225 = vld [vmem:[#allocation15 + $0xad8] sm:$0xf]
    %v3226 = vld [vmem:[#allocation15 + $0xadc] sm:$0xff]
    %v3227 = vld [vmem:[#allocation15 + $0xae4] sm:$0xff]
    %v3228 = vld [vmem:[#allocation15 + $0xaec] sm:$0xf]
    %v3229 = vld [vmem:[#allocation15 + $0xaf0] sm:$0xff]
    %v3230 = vld [vmem:[#allocation15 + $0xaf8] sm:$0xff]
    %v3231 = vld [vmem:[#allocation15 + $0xb00] sm:$0xf]
    %v3232 = vld [vmem:[#allocation15 + $0xb04] sm:$0xff]
    %v3233 = vld [vmem:[#allocation15 + $0xb0c] sm:$0xff]
    %v3234 = vld [vmem:[#allocation15 + $0xb14] sm:$0xf]
    %v3235 = vld [vmem:[#allocation15 + $0xb18] sm:$0xff]
    %v3236 = vld [vmem:[#allocation15 + $0xb20] sm:$0xff]
    %v3237 = vld [vmem:[#allocation15 + $0xb28] sm:$0xf]
    %v3238 = vld [vmem:[#allocation15 + $0xb2c] sm:$0xff]
    %v3239 = vld [vmem:[#allocation15 + $0xb34] sm:$0xff]
    %v3240 = vld [vmem:[#allocation15 + $0xb3c] sm:$0xf]
    %v3241 = vld [vmem:[#allocation16] sm:$0x1f]
    %v3243 = vperm.slane %v3241, 0
    %v3244 = vperm.slane %v3241, 1
    %v3245 = vperm.slane %v3241, 2
    %v3246 = vperm.slane %v3241, 3
    %v3247 = vperm.slane %v3241, 4
    %v3685 = vunpack.c.l.b16 %v2809
    %v3686 = vunpack.c.h.b16 %v2809
    %v3687 = vunpack.c.l.b16 %v2810
    %v3688 = vunpack.c.h.b16 %v2810
    %v3689 = vunpack.c.l.b16 %v2811
    %v3690 = vunpack.c.l.b16 %v2812
    %v3691 = vunpack.c.h.b16 %v2812
    %v3692 = vunpack.c.l.b16 %v2813
    %v3693 = vunpack.c.h.b16 %v2813
    %v3694 = vunpack.c.l.b16 %v2814
    %v3695 = vunpack.c.l.b16 %v2815
    %v3696 = vunpack.c.h.b16 %v2815
    %v3697 = vunpack.c.l.b16 %v2816
    %v3698 = vunpack.c.h.b16 %v2816
    %v3699 = vunpack.c.l.b16 %v2817
    %v3700 = vunpack.c.l.b16 %v2818
    %v3701 = vunpack.c.h.b16 %v2818
    %v3702 = vunpack.c.l.b16 %v2819
    %v3703 = vunpack.c.h.b16 %v2819
    %v3704 = vunpack.c.l.b16 %v2820
    %v3705 = vunpack.c.l.b16 %v2821
    %v3706 = vunpack.c.h.b16 %v2821
    %v3707 = vunpack.c.l.b16 %v2822
    %v3708 = vunpack.c.h.b16 %v2822
    %v3709 = vunpack.c.l.b16 %v2823
    %v3710 = vunpack.c.l.b16 %v2824
    %v3711 = vunpack.c.h.b16 %v2824
    %v3712 = vunpack.c.l.b16 %v2825
    %v3713 = vunpack.c.h.b16 %v2825
    %v3714 = vunpack.c.l.b16 %v2826
    %v3715 = vunpack.c.l.b16 %v2827
    %v3716 = vunpack.c.h.b16 %v2827
    %v3717 = vunpack.c.l.b16 %v2828
    %v3718 = vunpack.c.h.b16 %v2828
    %v3719 = vunpack.c.l.b16 %v2829
    %v3720 = vunpack.c.l.b16 %v2830
    %v3721 = vunpack.c.h.b16 %v2830
    %v3722 = vunpack.c.l.b16 %v2831
    %v3723 = vunpack.c.h.b16 %v2831
    %v3724 = vunpack.c.l.b16 %v2832
    %v3725 = vunpack.c.l.b16 %v2833
    %v3726 = vunpack.c.h.b16 %v2833
    %v3727 = vunpack.c.l.b16 %v2834
    %v3728 = vunpack.c.h.b16 %v2834
    %v3729 = vunpack.c.l.b16 %v2835
    %v3730 = vunpack.c.l.b16 %v2836
    %v3731 = vunpack.c.h.b16 %v2836
    %v3732 = vunpack.c.l.b16 %v2837
    %v3733 = vunpack.c.h.b16 %v2837
    %v3734 = vunpack.c.l.b16 %v2838
    %v3735 = vunpack.c.l.b16 %v2839
    %v3736 = vunpack.c.h.b16 %v2839
    %v3737 = vunpack.c.l.b16 %v2840
    %v3738 = vunpack.c.h.b16 %v2840
    %v3739 = vunpack.c.l.b16 %v2841
    %v3740 = vunpack.c.l.b16 %v2842
    %v3741 = vunpack.c.h.b16 %v2842
    %v3742 = vunpack.c.l.b16 %v2843
    %v3743 = vunpack.c.h.b16 %v2843
    %v3744 = vunpack.c.l.b16 %v2844
    %v3745 = vunpack.c.l.b16 %v2845
    %v3746 = vunpack.c.h.b16 %v2845
    %v3747 = vunpack.c.l.b16 %v2846
    %v3748 = vunpack.c.h.b16 %v2846
    %v3749 = vunpack.c.l.b16 %v2847
    %v3750 = vunpack.c.l.b16 %v2848
    %v3751 = vunpack.c.h.b16 %v2848
    %v3752 = vunpack.c.l.b16 %v2849
    %v3753 = vunpack.c.h.b16 %v2849
    %v3754 = vunpack.c.l.b16 %v2850
    %v3755 = vunpack.c.l.b16 %v2851
    %v3756 = vunpack.c.h.b16 %v2851
    %v3757 = vunpack.c.l.b16 %v2852
    %v3758 = vunpack.c.h.b16 %v2852
    %v3759 = vunpack.c.l.b16 %v2853
    %v3760 = vunpack.c.l.b16 %v2854
    %v3761 = vunpack.c.h.b16 %v2854
    %v3762 = vunpack.c.l.b16 %v2855
    %v3763 = vunpack.c.h.b16 %v2855
    %v3764 = vunpack.c.l.b16 %v2856
    %v3765 = vunpack.c.l.b16 %v2857
    %v3766 = vunpack.c.h.b16 %v2857
    %v3767 = vunpack.c.l.b16 %v2858
    %v3768 = vunpack.c.h.b16 %v2858
    %v3769 = vunpack.c.l.b16 %v2859
    %v3770 = vunpack.c.l.b16 %v2860
    %v3771 = vunpack.c.h.b16 %v2860
    %v3772 = vunpack.c.l.b16 %v2861
    %v3773 = vunpack.c.h.b16 %v2861
    %v3774 = vunpack.c.l.b16 %v2862
    %v3775 = vunpack.c.l.b16 %v2863
    %v3776 = vunpack.c.h.b16 %v2863
    %v3777 = vunpack.c.l.b16 %v2864
    %v3778 = vunpack.c.h.b16 %v2864
    %v3779 = vunpack.c.l.b16 %v2865
    %v3780 = vunpack.c.l.b16 %v2866
    %v3781 = vunpack.c.h.b16 %v2866
    %v3782 = vunpack.c.l.b16 %v2867
    %v3783 = vunpack.c.h.b16 %v2867
    %v3784 = vunpack.c.l.b16 %v2868
    %v3785 = vunpack.c.l.b16 %v2869
    %v3786 = vunpack.c.h.b16 %v2869
    %v3787 = vunpack.c.l.b16 %v2870
    %v3788 = vunpack.c.h.b16 %v2870
    %v3789 = vunpack.c.l.b16 %v2871
    %v3790 = vunpack.c.l.b16 %v2872
    %v3791 = vunpack.c.h.b16 %v2872
    %v3792 = vunpack.c.l.b16 %v2873
    %v3793 = vunpack.c.h.b16 %v2873
    %v3794 = vunpack.c.l.b16 %v2874
    %v3795 = vunpack.c.l.b16 %v2875
    %v3796 = vunpack.c.h.b16 %v2875
    %v3797 = vunpack.c.l.b16 %v2876
    %v3798 = vunpack.c.h.b16 %v2876
    %v3799 = vunpack.c.l.b16 %v2877
    %v3800 = vunpack.c.l.b16 %v2878
    %v3801 = vunpack.c.h.b16 %v2878
    %v3802 = vunpack.c.l.b16 %v2879
    %v3803 = vunpack.c.h.b16 %v2879
    %v3804 = vunpack.c.l.b16 %v2880
    %v3805 = vunpack.c.l.b16 %v2881
    %v3806 = vunpack.c.h.b16 %v2881
    %v3807 = vunpack.c.l.b16 %v2882
    %v3808 = vunpack.c.h.b16 %v2882
    %v3809 = vunpack.c.l.b16 %v2883
    %v3810 = vunpack.c.l.b16 %v2884
    %v3811 = vunpack.c.h.b16 %v2884
    %v3812 = vunpack.c.l.b16 %v2885
    %v3813 = vunpack.c.h.b16 %v2885
    %v3814 = vunpack.c.l.b16 %v2886
    %v3815 = vunpack.c.l.b16 %v2887
    %v3816 = vunpack.c.h.b16 %v2887
    %v3817 = vunpack.c.l.b16 %v2888
    %v3818 = vunpack.c.h.b16 %v2888
    %v3819 = vunpack.c.l.b16 %v2889
    %v3820 = vunpack.c.l.b16 %v2890
    %v3821 = vunpack.c.h.b16 %v2890
    %v3822 = vunpack.c.l.b16 %v2891
    %v3823 = vunpack.c.h.b16 %v2891
    %v3824 = vunpack.c.l.b16 %v2892
    %v3825 = vunpack.c.l.b16 %v2893
    %v3826 = vunpack.c.h.b16 %v2893
    %v3827 = vunpack.c.l.b16 %v2894
    %v3828 = vunpack.c.h.b16 %v2894
    %v3829 = vunpack.c.l.b16 %v2895
    %v3830 = vunpack.c.l.b16 %v2896
    %v3831 = vunpack.c.h.b16 %v2896
    %v3832 = vunpack.c.l.b16 %v2897
    %v3833 = vunpack.c.h.b16 %v2897
    %v3834 = vunpack.c.l.b16 %v2898
    %v3835 = vunpack.c.l.b16 %v2899
    %v3836 = vunpack.c.h.b16 %v2899
    %v3837 = vunpack.c.l.b16 %v2900
    %v3838 = vunpack.c.h.b16 %v2900
    %v3839 = vunpack.c.l.b16 %v2901
    %v3840 = vunpack.c.l.b16 %v2902
    %v3841 = vunpack.c.h.b16 %v2902
    %v3842 = vunpack.c.l.b16 %v2903
    %v3843 = vunpack.c.h.b16 %v2903
    %v3844 = vunpack.c.l.b16 %v2904
    %v3845 = vunpack.c.l.b16 %v2905
    %v3846 = vunpack.c.h.b16 %v2905
    %v3847 = vunpack.c.l.b16 %v2906
    %v3848 = vunpack.c.h.b16 %v2906
    %v3849 = vunpack.c.l.b16 %v2907
    %v3850 = vunpack.c.l.b16 %v2908
    %v3851 = vunpack.c.h.b16 %v2908
    %v3852 = vunpack.c.l.b16 %v2909
    %v3853 = vunpack.c.h.b16 %v2909
    %v3854 = vunpack.c.l.b16 %v2910
    %v3855 = vunpack.c.l.b16 %v2911
    %v3856 = vunpack.c.h.b16 %v2911
    %v3857 = vunpack.c.l.b16 %v2912
    %v3858 = vunpack.c.h.b16 %v2912
    %v3859 = vunpack.c.l.b16 %v2913
    %v3860 = vunpack.c.l.b16 %v2914
    %v3861 = vunpack.c.h.b16 %v2914
    %v3862 = vunpack.c.l.b16 %v2915
    %v3863 = vunpack.c.h.b16 %v2915
    %v3864 = vunpack.c.l.b16 %v2916
    %v3865 = vunpack.c.l.b16 %v2917
    %v3866 = vunpack.c.h.b16 %v2917
    %v3867 = vunpack.c.l.b16 %v2918
    %v3868 = vunpack.c.h.b16 %v2918
    %v3869 = vunpack.c.l.b16 %v2919
    %v3870 = vunpack.c.l.b16 %v2920
    %v3871 = vunpack.c.h.b16 %v2920
    %v3872 = vunpack.c.l.b16 %v2921
    %v3873 = vunpack.c.h.b16 %v2921
    %v3874 = vunpack.c.l.b16 %v2922
    %v3875 = vunpack.c.l.b16 %v2923
    %v3876 = vunpack.c.h.b16 %v2923
    %v3877 = vunpack.c.l.b16 %v2924
    %v3878 = vunpack.c.h.b16 %v2924
    %v3879 = vunpack.c.l.b16 %v2925
    %v3880 = vunpack.c.l.b16 %v2926
    %v3881 = vunpack.c.h.b16 %v2926
    %v3882 = vunpack.c.l.b16 %v2927
    %v3883 = vunpack.c.h.b16 %v2927
    %v3884 = vunpack.c.l.b16 %v2928
    %v3885 = vunpack.c.l.b16 %v2929
    %v3886 = vunpack.c.h.b16 %v2929
    %v3887 = vunpack.c.l.b16 %v2930
    %v3888 = vunpack.c.h.b16 %v2930
    %v3889 = vunpack.c.l.b16 %v2931
    %v3890 = vunpack.c.l.b16 %v2932
    %v3891 = vunpack.c.h.b16 %v2932
    %v3892 = vunpack.c.l.b16 %v2933
    %v3893 = vunpack.c.h.b16 %v2933
    %v3894 = vunpack.c.l.b16 %v2934
    %v3895 = vunpack.c.l.b16 %v2935
    %v3896 = vunpack.c.h.b16 %v2935
    %v3897 = vunpack.c.l.b16 %v2936
    %v3898 = vunpack.c.h.b16 %v2936
    %v3899 = vunpack.c.l.b16 %v2937
    %v3900 = vunpack.c.l.b16 %v2938
    %v3901 = vunpack.c.h.b16 %v2938
    %v3902 = vunpack.c.l.b16 %v2939
    %v3903 = vunpack.c.h.b16 %v2939
    %v3904 = vunpack.c.l.b16 %v2940
    %v3905 = vunpack.c.l.b16 %v2941
    %v3906 = vunpack.c.h.b16 %v2941
    %v3907 = vunpack.c.l.b16 %v2942
    %v3908 = vunpack.c.h.b16 %v2942
    %v3909 = vunpack.c.l.b16 %v2943
    %v3910 = vunpack.c.l.b16 %v2944
    %v3911 = vunpack.c.h.b16 %v2944
    %v3912 = vunpack.c.l.b16 %v2945
    %v3913 = vunpack.c.h.b16 %v2945
    %v3914 = vunpack.c.l.b16 %v2946
    %v3915 = vunpack.c.l.b16 %v2947
    %v3916 = vunpack.c.h.b16 %v2947
    %v3917 = vunpack.c.l.b16 %v2948
    %v3918 = vunpack.c.h.b16 %v2948
    %v3919 = vunpack.c.l.b16 %v2949
    %v3920 = vunpack.c.l.b16 %v2950
    %v3921 = vunpack.c.h.b16 %v2950
    %v3922 = vunpack.c.l.b16 %v2951
    %v3923 = vunpack.c.h.b16 %v2951
    %v3924 = vunpack.c.l.b16 %v2952
    %v3925 = vunpack.c.l.b16 %v2953
    %v3926 = vunpack.c.h.b16 %v2953
    %v3927 = vunpack.c.l.b16 %v2954
    %v3928 = vunpack.c.h.b16 %v2954
    %v3929 = vunpack.c.l.b16 %v2955
    %v3930 = vunpack.c.l.b16 %v2956
    %v3931 = vunpack.c.h.b16 %v2956
    %v3932 = vunpack.c.l.b16 %v2957
    %v3933 = vunpack.c.h.b16 %v2957
    %v3934 = vunpack.c.l.b16 %v2958
    %v3935 = vunpack.c.l.b16 %v2959
    %v3936 = vunpack.c.h.b16 %v2959
    %v3937 = vunpack.c.l.b16 %v2960
    %v3938 = vunpack.c.h.b16 %v2960
    %v3939 = vunpack.c.l.b16 %v2961
    %v3940 = vunpack.c.l.b16 %v2962
    %v3941 = vunpack.c.h.b16 %v2962
    %v3942 = vunpack.c.l.b16 %v2963
    %v3943 = vunpack.c.h.b16 %v2963
    %v3944 = vunpack.c.l.b16 %v2964
    %v3945 = vunpack.c.l.b16 %v2965
    %v3946 = vunpack.c.h.b16 %v2965
    %v3947 = vunpack.c.l.b16 %v2966
    %v3948 = vunpack.c.h.b16 %v2966
    %v3949 = vunpack.c.l.b16 %v2967
    %v3950 = vunpack.c.l.b16 %v2968
    %v3951 = vunpack.c.h.b16 %v2968
    %v3952 = vunpack.c.l.b16 %v2969
    %v3953 = vunpack.c.h.b16 %v2969
    %v3954 = vunpack.c.l.b16 %v2970
    %v3955 = vunpack.c.l.b16 %v2971
    %v3956 = vunpack.c.h.b16 %v2971
    %v3957 = vunpack.c.l.b16 %v2972
    %v3958 = vunpack.c.h.b16 %v2972
    %v3959 = vunpack.c.l.b16 %v2973
    %v3960 = vunpack.c.l.b16 %v2974
    %v3961 = vunpack.c.h.b16 %v2974
    %v3962 = vunpack.c.l.b16 %v2975
    %v3963 = vunpack.c.h.b16 %v2975
    %v3964 = vunpack.c.l.b16 %v2976
    %v3965 = vunpack.c.l.b16 %v2977
    %v3966 = vunpack.c.h.b16 %v2977
    %v3967 = vunpack.c.l.b16 %v2978
    %v3968 = vunpack.c.h.b16 %v2978
    %v3969 = vunpack.c.l.b16 %v2979
    %v3970 = vunpack.c.l.b16 %v2980
    %v3971 = vunpack.c.h.b16 %v2980
    %v3972 = vunpack.c.l.b16 %v2981
    %v3973 = vunpack.c.h.b16 %v2981
    %v3974 = vunpack.c.l.b16 %v2982
    %v3975 = vunpack.c.l.b16 %v2983
    %v3976 = vunpack.c.h.b16 %v2983
    %v3977 = vunpack.c.l.b16 %v2984
    %v3978 = vunpack.c.h.b16 %v2984
    %v3979 = vunpack.c.l.b16 %v2985
    %v3980 = vunpack.c.l.b16 %v2986
    %v3981 = vunpack.c.h.b16 %v2986
    %v3982 = vunpack.c.l.b16 %v2987
    %v3983 = vunpack.c.h.b16 %v2987
    %v3984 = vunpack.c.l.b16 %v2988
    %v3985 = vunpack.c.l.b16 %v2989
    %v3986 = vunpack.c.h.b16 %v2989
    %v3987 = vunpack.c.l.b16 %v2990
    %v3988 = vunpack.c.h.b16 %v2990
    %v3989 = vunpack.c.l.b16 %v2991
    %v3990 = vunpack.c.l.b16 %v2992
    %v3991 = vunpack.c.h.b16 %v2992
    %v3992 = vunpack.c.l.b16 %v2993
    %v3993 = vunpack.c.h.b16 %v2993
    %v3994 = vunpack.c.l.b16 %v2994
    %v3995 = vunpack.c.l.b16 %v2995
    %v3996 = vunpack.c.h.b16 %v2995
    %v3997 = vunpack.c.l.b16 %v2996
    %v3998 = vunpack.c.h.b16 %v2996
    %v3999 = vunpack.c.l.b16 %v2997
    %v4000 = vunpack.c.l.b16 %v2998
    %v4001 = vunpack.c.h.b16 %v2998
    %v4002 = vunpack.c.l.b16 %v2999
    %v4003 = vunpack.c.h.b16 %v2999
    %v4004 = vunpack.c.l.b16 %v3000
    %v4005 = vunpack.c.l.b16 %v3001
    %v4006 = vunpack.c.h.b16 %v3001
    %v4007 = vunpack.c.l.b16 %v3002
    %v4008 = vunpack.c.h.b16 %v3002
    %v4009 = vunpack.c.l.b16 %v3003
    %v4010 = vunpack.c.l.b16 %v3004
    %v4011 = vunpack.c.h.b16 %v3004
    %v4012 = vunpack.c.l.b16 %v3005
    %v4013 = vunpack.c.h.b16 %v3005
    %v4014 = vunpack.c.l.b16 %v3006
    %v4015 = vunpack.c.l.b16 %v3007
    %v4016 = vunpack.c.h.b16 %v3007
    %v4017 = vunpack.c.l.b16 %v3008
    %v4018 = vunpack.c.h.b16 %v3008
    %v4019 = vunpack.c.l.b16 %v3009
    %v4020 = vunpack.c.l.b16 %v3010
    %v4021 = vunpack.c.h.b16 %v3010
    %v4022 = vunpack.c.l.b16 %v3011
    %v4023 = vunpack.c.h.b16 %v3011
    %v4024 = vunpack.c.l.b16 %v3012
    %v4025 = vunpack.c.l.b16 %v3013
    %v4026 = vunpack.c.h.b16 %v3013
    %v4027 = vunpack.c.l.b16 %v3014
    %v4028 = vunpack.c.h.b16 %v3014
    %v4029 = vunpack.c.l.b16 %v3015
    %v4030 = vunpack.c.l.b16 %v3016
    %v4031 = vunpack.c.h.b16 %v3016
    %v4032 = vunpack.c.l.b16 %v3017
    %v4033 = vunpack.c.h.b16 %v3017
    %v4034 = vunpack.c.l.b16 %v3018
    %v4035 = vunpack.c.l.b16 %v3019
    %v4036 = vunpack.c.h.b16 %v3019
    %v4037 = vunpack.c.l.b16 %v3020
    %v4038 = vunpack.c.h.b16 %v3020
    %v4039 = vunpack.c.l.b16 %v3021
    %v4040 = vunpack.c.l.b16 %v3022
    %v4041 = vunpack.c.h.b16 %v3022
    %v4042 = vunpack.c.l.b16 %v3023
    %v4043 = vunpack.c.h.b16 %v3023
    %v4044 = vunpack.c.l.b16 %v3024
    %v4045 = vunpack.c.l.b16 %v3025
    %v4046 = vunpack.c.h.b16 %v3025
    %v4047 = vunpack.c.l.b16 %v3026
    %v4048 = vunpack.c.h.b16 %v3026
    %v4049 = vunpack.c.l.b16 %v3027
    %v4050 = vunpack.c.l.b16 %v3028
    %v4051 = vunpack.c.h.b16 %v3028
    %v4052 = vunpack.c.l.b16 %v3029
    %v4053 = vunpack.c.h.b16 %v3029
    %v4054 = vunpack.c.l.b16 %v3030
    %v4055 = vunpack.c.l.b16 %v3031
    %v4056 = vunpack.c.h.b16 %v3031
    %v4057 = vunpack.c.l.b16 %v3032
    %v4058 = vunpack.c.h.b16 %v3032
    %v4059 = vunpack.c.l.b16 %v3033
    %v4060 = vunpack.c.l.b16 %v3034
    %v4061 = vunpack.c.h.b16 %v3034
    %v4062 = vunpack.c.l.b16 %v3035
    %v4063 = vunpack.c.h.b16 %v3035
    %v4064 = vunpack.c.l.b16 %v3036
    %v4065 = vunpack.c.l.b16 %v3037
    %v4066 = vunpack.c.h.b16 %v3037
    %v4067 = vunpack.c.l.b16 %v3038
    %v4068 = vunpack.c.h.b16 %v3038
    %v4069 = vunpack.c.l.b16 %v3039
    %v4070 = vunpack.c.l.b16 %v3040
    %v4071 = vunpack.c.h.b16 %v3040
    %v4072 = vunpack.c.l.b16 %v3041
    %v4073 = vunpack.c.h.b16 %v3041
    %v4074 = vunpack.c.l.b16 %v3042
    %v4075 = vunpack.c.l.b16 %v3043
    %v4076 = vunpack.c.h.b16 %v3043
    %v4077 = vunpack.c.l.b16 %v3044
    %v4078 = vunpack.c.h.b16 %v3044
    %v4079 = vunpack.c.l.b16 %v3045
    %v4080 = vunpack.c.l.b16 %v3046
    %v4081 = vunpack.c.h.b16 %v3046
    %v4082 = vunpack.c.l.b16 %v3047
    %v4083 = vunpack.c.h.b16 %v3047
    %v4084 = vunpack.c.l.b16 %v3048
    %v4085 = vunpack.c.l.b16 %v3049
    %v4086 = vunpack.c.h.b16 %v3049
    %v4087 = vunpack.c.l.b16 %v3050
    %v4088 = vunpack.c.h.b16 %v3050
    %v4089 = vunpack.c.l.b16 %v3051
    %v4090 = vunpack.c.l.b16 %v3052
    %v4091 = vunpack.c.h.b16 %v3052
    %v4092 = vunpack.c.l.b16 %v3053
    %v4093 = vunpack.c.h.b16 %v3053
    %v4094 = vunpack.c.l.b16 %v3054
    %v4095 = vunpack.c.l.b16 %v3055
    %v4096 = vunpack.c.h.b16 %v3055
    %v4097 = vunpack.c.l.b16 %v3056
    %v4098 = vunpack.c.h.b16 %v3056
    %v4099 = vunpack.c.l.b16 %v3057
    %v4100 = vunpack.c.l.b16 %v3058
    %v4101 = vunpack.c.h.b16 %v3058
    %v4102 = vunpack.c.l.b16 %v3059
    %v4103 = vunpack.c.h.b16 %v3059
    %v4104 = vunpack.c.l.b16 %v3060
    %v4105 = vunpack.c.l.b16 %v3061
    %v4106 = vunpack.c.h.b16 %v3061
    %v4107 = vunpack.c.l.b16 %v3062
    %v4108 = vunpack.c.h.b16 %v3062
    %v4109 = vunpack.c.l.b16 %v3063
    %v4110 = vunpack.c.l.b16 %v3064
    %v4111 = vunpack.c.h.b16 %v3064
    %v4112 = vunpack.c.l.b16 %v3065
    %v4113 = vunpack.c.h.b16 %v3065
    %v4114 = vunpack.c.l.b16 %v3066
    %v4115 = vunpack.c.l.b16 %v3067
    %v4116 = vunpack.c.h.b16 %v3067
    %v4117 = vunpack.c.l.b16 %v3068
    %v4118 = vunpack.c.h.b16 %v3068
    %v4119 = vunpack.c.l.b16 %v3069
    %v4120 = vunpack.c.l.b16 %v3070
    %v4121 = vunpack.c.h.b16 %v3070
    %v4122 = vunpack.c.l.b16 %v3071
    %v4123 = vunpack.c.h.b16 %v3071
    %v4124 = vunpack.c.l.b16 %v3072
    %v4125 = vunpack.c.l.b16 %v3073
    %v4126 = vunpack.c.h.b16 %v3073
    %v4127 = vunpack.c.l.b16 %v3074
    %v4128 = vunpack.c.h.b16 %v3074
    %v4129 = vunpack.c.l.b16 %v3075
    %v4130 = vunpack.c.l.b16 %v3076
    %v4131 = vunpack.c.h.b16 %v3076
    %v4132 = vunpack.c.l.b16 %v3077
    %v4133 = vunpack.c.h.b16 %v3077
    %v4134 = vunpack.c.l.b16 %v3078
    %v4135 = vunpack.c.l.b16 %v3079
    %v4136 = vunpack.c.h.b16 %v3079
    %v4137 = vunpack.c.l.b16 %v3080
    %v4138 = vunpack.c.h.b16 %v3080
    %v4139 = vunpack.c.l.b16 %v3081
    %v4140 = vunpack.c.l.b16 %v3082
    %v4141 = vunpack.c.h.b16 %v3082
    %v4142 = vunpack.c.l.b16 %v3083
    %v4143 = vunpack.c.h.b16 %v3083
    %v4144 = vunpack.c.l.b16 %v3084
    %v4145 = vunpack.c.l.b16 %v3085
    %v4146 = vunpack.c.h.b16 %v3085
    %v4147 = vunpack.c.l.b16 %v3086
    %v4148 = vunpack.c.h.b16 %v3086
    %v4149 = vunpack.c.l.b16 %v3087
    %v4150 = vunpack.c.l.b16 %v3088
    %v4151 = vunpack.c.h.b16 %v3088
    %v4152 = vunpack.c.l.b16 %v3089
    %v4153 = vunpack.c.h.b16 %v3089
    %v4154 = vunpack.c.l.b16 %v3090
    %v4155 = vunpack.c.l.b16 %v3091
    %v4156 = vunpack.c.h.b16 %v3091
    %v4157 = vunpack.c.l.b16 %v3092
    %v4158 = vunpack.c.h.b16 %v3092
    %v4159 = vunpack.c.l.b16 %v3093
    %v4160 = vunpack.c.l.b16 %v3094
    %v4161 = vunpack.c.h.b16 %v3094
    %v4162 = vunpack.c.l.b16 %v3095
    %v4163 = vunpack.c.h.b16 %v3095
    %v4164 = vunpack.c.l.b16 %v3096
    %v4165 = vunpack.c.l.b16 %v3097
    %v4166 = vunpack.c.h.b16 %v3097
    %v4167 = vunpack.c.l.b16 %v3098
    %v4168 = vunpack.c.h.b16 %v3098
    %v4169 = vunpack.c.l.b16 %v3099
    %v4170 = vunpack.c.l.b16 %v3100
    %v4171 = vunpack.c.h.b16 %v3100
    %v4172 = vunpack.c.l.b16 %v3101
    %v4173 = vunpack.c.h.b16 %v3101
    %v4174 = vunpack.c.l.b16 %v3102
    %v4175 = vunpack.c.l.b16 %v3103
    %v4176 = vunpack.c.h.b16 %v3103
    %v4177 = vunpack.c.l.b16 %v3104
    %v4178 = vunpack.c.h.b16 %v3104
    %v4179 = vunpack.c.l.b16 %v3105
    %v4180 = vunpack.c.l.b16 %v3106
    %v4181 = vunpack.c.h.b16 %v3106
    %v4182 = vunpack.c.l.b16 %v3107
    %v4183 = vunpack.c.h.b16 %v3107
    %v4184 = vunpack.c.l.b16 %v3108
    %v4185 = vunpack.c.l.b16 %v3109
    %v4186 = vunpack.c.h.b16 %v3109
    %v4187 = vunpack.c.l.b16 %v3110
    %v4188 = vunpack.c.h.b16 %v3110
    %v4189 = vunpack.c.l.b16 %v3111
    %v4190 = vunpack.c.l.b16 %v3112
    %v4191 = vunpack.c.h.b16 %v3112
    %v4192 = vunpack.c.l.b16 %v3113
    %v4193 = vunpack.c.h.b16 %v3113
    %v4194 = vunpack.c.l.b16 %v3114
    %v4195 = vunpack.c.l.b16 %v3115
    %v4196 = vunpack.c.h.b16 %v3115
    %v4197 = vunpack.c.l.b16 %v3116
    %v4198 = vunpack.c.h.b16 %v3116
    %v4199 = vunpack.c.l.b16 %v3117
    %v4200 = vunpack.c.l.b16 %v3118
    %v4201 = vunpack.c.h.b16 %v3118
    %v4202 = vunpack.c.l.b16 %v3119
    %v4203 = vunpack.c.h.b16 %v3119
    %v4204 = vunpack.c.l.b16 %v3120
    %v4205 = vunpack.c.l.b16 %v3121
    %v4206 = vunpack.c.h.b16 %v3121
    %v4207 = vunpack.c.l.b16 %v3122
    %v4208 = vunpack.c.h.b16 %v3122
    %v4209 = vunpack.c.l.b16 %v3123
    %v4210 = vunpack.c.l.b16 %v3124
    %v4211 = vunpack.c.h.b16 %v3124
    %v4212 = vunpack.c.l.b16 %v3125
    %v4213 = vunpack.c.h.b16 %v3125
    %v4214 = vunpack.c.l.b16 %v3126
    %v4215 = vunpack.c.l.b16 %v3127
    %v4216 = vunpack.c.h.b16 %v3127
    %v4217 = vunpack.c.l.b16 %v3128
    %v4218 = vunpack.c.h.b16 %v3128
    %v4219 = vunpack.c.l.b16 %v3129
    %v4220 = vunpack.c.l.b16 %v3130
    %v4221 = vunpack.c.h.b16 %v3130
    %v4222 = vunpack.c.l.b16 %v3131
    %v4223 = vunpack.c.h.b16 %v3131
    %v4224 = vunpack.c.l.b16 %v3132
    %v4225 = vunpack.c.l.b16 %v3133
    %v4226 = vunpack.c.h.b16 %v3133
    %v4227 = vunpack.c.l.b16 %v3134
    %v4228 = vunpack.c.h.b16 %v3134
    %v4229 = vunpack.c.l.b16 %v3135
    %v4230 = vunpack.c.l.b16 %v3136
    %v4231 = vunpack.c.h.b16 %v3136
    %v4232 = vunpack.c.l.b16 %v3137
    %v4233 = vunpack.c.h.b16 %v3137
    %v4234 = vunpack.c.l.b16 %v3138
    %v4235 = vunpack.c.l.b16 %v3139
    %v4236 = vunpack.c.h.b16 %v3139
    %v4237 = vunpack.c.l.b16 %v3140
    %v4238 = vunpack.c.h.b16 %v3140
    %v4239 = vunpack.c.l.b16 %v3141
    %v4240 = vunpack.c.l.b16 %v3142
    %v4241 = vunpack.c.h.b16 %v3142
    %v4242 = vunpack.c.l.b16 %v3143
    %v4243 = vunpack.c.h.b16 %v3143
    %v4244 = vunpack.c.l.b16 %v3144
    %v4245 = vunpack.c.l.b16 %v3145
    %v4246 = vunpack.c.h.b16 %v3145
    %v4247 = vunpack.c.l.b16 %v3146
    %v4248 = vunpack.c.h.b16 %v3146
    %v4249 = vunpack.c.l.b16 %v3147
    %v4250 = vunpack.c.l.b16 %v3148
    %v4251 = vunpack.c.h.b16 %v3148
    %v4252 = vunpack.c.l.b16 %v3149
    %v4253 = vunpack.c.h.b16 %v3149
    %v4254 = vunpack.c.l.b16 %v3150
    %v4255 = vunpack.c.l.b16 %v3151
    %v4256 = vunpack.c.h.b16 %v3151
    %v4257 = vunpack.c.l.b16 %v3152
    %v4258 = vunpack.c.h.b16 %v3152
    %v4259 = vunpack.c.l.b16 %v3153
    %v4260 = vunpack.c.l.b16 %v3154
    %v4261 = vunpack.c.h.b16 %v3154
    %v4262 = vunpack.c.l.b16 %v3155
    %v4263 = vunpack.c.h.b16 %v3155
    %v4264 = vunpack.c.l.b16 %v3156
    %v4265 = vunpack.c.l.b16 %v3157
    %v4266 = vunpack.c.h.b16 %v3157
    %v4267 = vunpack.c.l.b16 %v3158
    %v4268 = vunpack.c.h.b16 %v3158
    %v4269 = vunpack.c.l.b16 %v3159
    %v4270 = vunpack.c.l.b16 %v3160
    %v4271 = vunpack.c.h.b16 %v3160
    %v4272 = vunpack.c.l.b16 %v3161
    %v4273 = vunpack.c.h.b16 %v3161
    %v4274 = vunpack.c.l.b16 %v3162
    %v4275 = vunpack.c.l.b16 %v3163
    %v4276 = vunpack.c.h.b16 %v3163
    %v4277 = vunpack.c.l.b16 %v3164
    %v4278 = vunpack.c.h.b16 %v3164
    %v4279 = vunpack.c.l.b16 %v3165
    %v4280 = vunpack.c.l.b16 %v3166
    %v4281 = vunpack.c.h.b16 %v3166
    %v4282 = vunpack.c.l.b16 %v3167
    %v4283 = vunpack.c.h.b16 %v3167
    %v4284 = vunpack.c.l.b16 %v3168
    %v4285 = vunpack.c.l.b16 %v3169
    %v4286 = vunpack.c.h.b16 %v3169
    %v4287 = vunpack.c.l.b16 %v3170
    %v4288 = vunpack.c.h.b16 %v3170
    %v4289 = vunpack.c.l.b16 %v3171
    %v4290 = vunpack.c.l.b16 %v3172
    %v4291 = vunpack.c.h.b16 %v3172
    %v4292 = vunpack.c.l.b16 %v3173
    %v4293 = vunpack.c.h.b16 %v3173
    %v4294 = vunpack.c.l.b16 %v3174
    %v4295 = vunpack.c.l.b16 %v3175
    %v4296 = vunpack.c.h.b16 %v3175
    %v4297 = vunpack.c.l.b16 %v3176
    %v4298 = vunpack.c.h.b16 %v3176
    %v4299 = vunpack.c.l.b16 %v3177
    %v4300 = vunpack.c.l.b16 %v3178
    %v4301 = vunpack.c.h.b16 %v3178
    %v4302 = vunpack.c.l.b16 %v3179
    %v4303 = vunpack.c.h.b16 %v3179
    %v4304 = vunpack.c.l.b16 %v3180
    %v4305 = vunpack.c.l.b16 %v3181
    %v4306 = vunpack.c.h.b16 %v3181
    %v4307 = vunpack.c.l.b16 %v3182
    %v4308 = vunpack.c.h.b16 %v3182
    %v4309 = vunpack.c.l.b16 %v3183
    %v4310 = vunpack.c.l.b16 %v3184
    %v4311 = vunpack.c.h.b16 %v3184
    %v4312 = vunpack.c.l.b16 %v3185
    %v4313 = vunpack.c.h.b16 %v3185
    %v4314 = vunpack.c.l.b16 %v3186
    %v4315 = vunpack.c.l.b16 %v3187
    %v4316 = vunpack.c.h.b16 %v3187
    %v4317 = vunpack.c.l.b16 %v3188
    %v4318 = vunpack.c.h.b16 %v3188
    %v4319 = vunpack.c.l.b16 %v3189
    %v4320 = vunpack.c.l.b16 %v3190
    %v4321 = vunpack.c.h.b16 %v3190
    %v4322 = vunpack.c.l.b16 %v3191
    %v4323 = vunpack.c.h.b16 %v3191
    %v4324 = vunpack.c.l.b16 %v3192
    %v4325 = vunpack.c.l.b16 %v3193
    %v4326 = vunpack.c.h.b16 %v3193
    %v4327 = vunpack.c.l.b16 %v3194
    %v4328 = vunpack.c.h.b16 %v3194
    %v4329 = vunpack.c.l.b16 %v3195
    %v4330 = vunpack.c.l.b16 %v3196
    %v4331 = vunpack.c.h.b16 %v3196
    %v4332 = vunpack.c.l.b16 %v3197
    %v4333 = vunpack.c.h.b16 %v3197
    %v4334 = vunpack.c.l.b16 %v3198
    %v4335 = vunpack.c.l.b16 %v3199
    %v4336 = vunpack.c.h.b16 %v3199
    %v4337 = vunpack.c.l.b16 %v3200
    %v4338 = vunpack.c.h.b16 %v3200
    %v4339 = vunpack.c.l.b16 %v3201
    %v4340 = vunpack.c.l.b16 %v3202
    %v4341 = vunpack.c.h.b16 %v3202
    %v4342 = vunpack.c.l.b16 %v3203
    %v4343 = vunpack.c.h.b16 %v3203
    %v4344 = vunpack.c.l.b16 %v3204
    %v4345 = vunpack.c.l.b16 %v3205
    %v4346 = vunpack.c.h.b16 %v3205
    %v4347 = vunpack.c.l.b16 %v3206
    %v4348 = vunpack.c.h.b16 %v3206
    %v4349 = vunpack.c.l.b16 %v3207
    %v4350 = vunpack.c.l.b16 %v3208
    %v4351 = vunpack.c.h.b16 %v3208
    %v4352 = vunpack.c.l.b16 %v3209
    %v4353 = vunpack.c.h.b16 %v3209
    %v4354 = vunpack.c.l.b16 %v3210
    %v4355 = vunpack.c.l.b16 %v3211
    %v4356 = vunpack.c.h.b16 %v3211
    %v4357 = vunpack.c.l.b16 %v3212
    %v4358 = vunpack.c.h.b16 %v3212
    %v4359 = vunpack.c.l.b16 %v3213
    %v4360 = vunpack.c.l.b16 %v3214
    %v4361 = vunpack.c.h.b16 %v3214
    %v4362 = vunpack.c.l.b16 %v3215
    %v4363 = vunpack.c.h.b16 %v3215
    %v4364 = vunpack.c.l.b16 %v3216
    %v4365 = vunpack.c.l.b16 %v3217
    %v4366 = vunpack.c.h.b16 %v3217
    %v4367 = vunpack.c.l.b16 %v3218
    %v4368 = vunpack.c.h.b16 %v3218
    %v4369 = vunpack.c.l.b16 %v3219
    %v4370 = vunpack.c.l.b16 %v3220
    %v4371 = vunpack.c.h.b16 %v3220
    %v4372 = vunpack.c.l.b16 %v3221
    %v4373 = vunpack.c.h.b16 %v3221
    %v4374 = vunpack.c.l.b16 %v3222
    %v4375 = vunpack.c.l.b16 %v3223
    %v4376 = vunpack.c.h.b16 %v3223
    %v4377 = vunpack.c.l.b16 %v3224
    %v4378 = vunpack.c.h.b16 %v3224
    %v4379 = vunpack.c.l.b16 %v3225
    %v4380 = vunpack.c.l.b16 %v3226
    %v4381 = vunpack.c.h.b16 %v3226
    %v4382 = vunpack.c.l.b16 %v3227
    %v4383 = vunpack.c.h.b16 %v3227
    %v4384 = vunpack.c.l.b16 %v3228
    %v4385 = vunpack.c.l.b16 %v3229
    %v4386 = vunpack.c.h.b16 %v3229
    %v4387 = vunpack.c.l.b16 %v3230
    %v4388 = vunpack.c.h.b16 %v3230
    %v4389 = vunpack.c.l.b16 %v3231
    %v4390 = vunpack.c.l.b16 %v3232
    %v4391 = vunpack.c.h.b16 %v3232
    %v4392 = vunpack.c.l.b16 %v3233
    %v4393 = vunpack.c.h.b16 %v3233
    %v4394 = vunpack.c.l.b16 %v3234
    %v4395 = vunpack.c.l.b16 %v3235
    %v4396 = vunpack.c.h.b16 %v3235
    %v4397 = vunpack.c.l.b16 %v3236
    %v4398 = vunpack.c.h.b16 %v3236
    %v4399 = vunpack.c.l.b16 %v3237
    %v4400 = vunpack.c.l.b16 %v3238
    %v4401 = vunpack.c.h.b16 %v3238
    %v4402 = vunpack.c.l.b16 %v3239
    %v4403 = vunpack.c.h.b16 %v3239
    %v4404 = vunpack.c.l.b16 %v3240
    %v4405 = vpack.c.b16 %v3690, %v3685
    %v4406 = vpack.c.b16 %v3691, %v3686
    %v4407 = vpack.c.b16 %v3692, %v3687
    %v4408 = vpack.c.b16 %v3693, %v3688
    %v4409 = vpack.c.b16 %v3694, %v3689
    %v4410 = vpack.c.b16 %v3700, %v3695
    %v4411 = vpack.c.b16 %v3701, %v3696
    %v4412 = vpack.c.b16 %v3702, %v3697
    %v4413 = vpack.c.b16 %v3703, %v3698
    %v4414 = vpack.c.b16 %v3704, %v3699
    %v4415 = vpack.c.b16 %v3710, %v3705
    %v4416 = vpack.c.b16 %v3711, %v3706
    %v4417 = vpack.c.b16 %v3712, %v3707
    %v4418 = vpack.c.b16 %v3713, %v3708
    %v4419 = vpack.c.b16 %v3714, %v3709
    %v4420 = vpack.c.b16 %v3720, %v3715
    %v4421 = vpack.c.b16 %v3721, %v3716
    %v4422 = vpack.c.b16 %v3722, %v3717
    %v4423 = vpack.c.b16 %v3723, %v3718
    %v4424 = vpack.c.b16 %v3724, %v3719
    %v4425 = vpack.c.b16 %v3730, %v3725
    %v4426 = vpack.c.b16 %v3731, %v3726
    %v4427 = vpack.c.b16 %v3732, %v3727
    %v4428 = vpack.c.b16 %v3733, %v3728
    %v4429 = vpack.c.b16 %v3734, %v3729
    %v4430 = vpack.c.b16 %v3740, %v3735
    %v4431 = vpack.c.b16 %v3741, %v3736
    %v4432 = vpack.c.b16 %v3742, %v3737
    %v4433 = vpack.c.b16 %v3743, %v3738
    %v4434 = vpack.c.b16 %v3744, %v3739
    %v4435 = vpack.c.b16 %v3750, %v3745
    %v4436 = vpack.c.b16 %v3751, %v3746
    %v4437 = vpack.c.b16 %v3752, %v3747
    %v4438 = vpack.c.b16 %v3753, %v3748
    %v4439 = vpack.c.b16 %v3754, %v3749
    %v4440 = vpack.c.b16 %v3760, %v3755
    %v4441 = vpack.c.b16 %v3761, %v3756
    %v4442 = vpack.c.b16 %v3762, %v3757
    %v4443 = vpack.c.b16 %v3763, %v3758
    %v4444 = vpack.c.b16 %v3764, %v3759
    %v4445 = vpack.c.b16 %v3770, %v3765
    %v4446 = vpack.c.b16 %v3771, %v3766
    %v4447 = vpack.c.b16 %v3772, %v3767
    %v4448 = vpack.c.b16 %v3773, %v3768
    %v4449 = vpack.c.b16 %v3774, %v3769
    %v4450 = vpack.c.b16 %v3780, %v3775
    %v4451 = vpack.c.b16 %v3781, %v3776
    %v4452 = vpack.c.b16 %v3782, %v3777
    %v4453 = vpack.c.b16 %v3783, %v3778
    %v4454 = vpack.c.b16 %v3784, %v3779
    %v4455 = vpack.c.b16 %v3790, %v3785
    %v4456 = vpack.c.b16 %v3791, %v3786
    %v4457 = vpack.c.b16 %v3792, %v3787
    %v4458 = vpack.c.b16 %v3793, %v3788
    %v4459 = vpack.c.b16 %v3794, %v3789
    %v4460 = vpack.c.b16 %v3800, %v3795
    %v4461 = vpack.c.b16 %v3801, %v3796
    %v4462 = vpack.c.b16 %v3802, %v3797
    %v4463 = vpack.c.b16 %v3803, %v3798
    %v4464 = vpack.c.b16 %v3804, %v3799
    %v4465 = vpack.c.b16 %v3810, %v3805
    %v4466 = vpack.c.b16 %v3811, %v3806
    %v4467 = vpack.c.b16 %v3812, %v3807
    %v4468 = vpack.c.b16 %v3813, %v3808
    %v4469 = vpack.c.b16 %v3814, %v3809
    %v4470 = vpack.c.b16 %v3820, %v3815
    %v4471 = vpack.c.b16 %v3821, %v3816
    %v4472 = vpack.c.b16 %v3822, %v3817
    %v4473 = vpack.c.b16 %v3823, %v3818
    %v4474 = vpack.c.b16 %v3824, %v3819
    %v4475 = vpack.c.b16 %v3830, %v3825
    %v4476 = vpack.c.b16 %v3831, %v3826
    %v4477 = vpack.c.b16 %v3832, %v3827
    %v4478 = vpack.c.b16 %v3833, %v3828
    %v4479 = vpack.c.b16 %v3834, %v3829
    %v4480 = vpack.c.b16 %v3840, %v3835
    %v4481 = vpack.c.b16 %v3841, %v3836
    %v4482 = vpack.c.b16 %v3842, %v3837
    %v4483 = vpack.c.b16 %v3843, %v3838
    %v4484 = vpack.c.b16 %v3844, %v3839
    %v4485 = vpack.c.b16 %v3850, %v3845
    %v4486 = vpack.c.b16 %v3851, %v3846
    %v4487 = vpack.c.b16 %v3852, %v3847
    %v4488 = vpack.c.b16 %v3853, %v3848
    %v4489 = vpack.c.b16 %v3854, %v3849
    %v4490 = vpack.c.b16 %v3860, %v3855
    %v4491 = vpack.c.b16 %v3861, %v3856
    %v4492 = vpack.c.b16 %v3862, %v3857
    %v4493 = vpack.c.b16 %v3863, %v3858
    %v4494 = vpack.c.b16 %v3864, %v3859
    %v4495 = vpack.c.b16 %v3870, %v3865
    %v4496 = vpack.c.b16 %v3871, %v3866
    %v4497 = vpack.c.b16 %v3872, %v3867
    %v4498 = vpack.c.b16 %v3873, %v3868
    %v4499 = vpack.c.b16 %v3874, %v3869
    %v4500 = vpack.c.b16 %v3880, %v3875
    %v4501 = vpack.c.b16 %v3881, %v3876
    %v4502 = vpack.c.b16 %v3882, %v3877
    %v4503 = vpack.c.b16 %v3883, %v3878
    %v4504 = vpack.c.b16 %v3884, %v3879
    %v4505 = vpack.c.b16 %v3890, %v3885
    %v4506 = vpack.c.b16 %v3891, %v3886
    %v4507 = vpack.c.b16 %v3892, %v3887
    %v4508 = vpack.c.b16 %v3893, %v3888
    %v4509 = vpack.c.b16 %v3894, %v3889
    %v4510 = vpack.c.b16 %v3900, %v3895
    %v4511 = vpack.c.b16 %v3901, %v3896
    %v4512 = vpack.c.b16 %v3902, %v3897
    %v4513 = vpack.c.b16 %v3903, %v3898
    %v4514 = vpack.c.b16 %v3904, %v3899
    %v4515 = vpack.c.b16 %v3910, %v3905
    %v4516 = vpack.c.b16 %v3911, %v3906
    %v4517 = vpack.c.b16 %v3912, %v3907
    %v4518 = vpack.c.b16 %v3913, %v3908
    %v4519 = vpack.c.b16 %v3914, %v3909
    %v4520 = vpack.c.b16 %v3920, %v3915
    %v4521 = vpack.c.b16 %v3921, %v3916
    %v4522 = vpack.c.b16 %v3922, %v3917
    %v4523 = vpack.c.b16 %v3923, %v3918
    %v4524 = vpack.c.b16 %v3924, %v3919
    %v4525 = vpack.c.b16 %v3930, %v3925
    %v4526 = vpack.c.b16 %v3931, %v3926
    %v4527 = vpack.c.b16 %v3932, %v3927
    %v4528 = vpack.c.b16 %v3933, %v3928
    %v4529 = vpack.c.b16 %v3934, %v3929
    %v4530 = vpack.c.b16 %v3940, %v3935
    %v4531 = vpack.c.b16 %v3941, %v3936
    %v4532 = vpack.c.b16 %v3942, %v3937
    %v4533 = vpack.c.b16 %v3943, %v3938
    %v4534 = vpack.c.b16 %v3944, %v3939
    %v4535 = vpack.c.b16 %v3950, %v3945
    %v4536 = vpack.c.b16 %v3951, %v3946
    %v4537 = vpack.c.b16 %v3952, %v3947
    %v4538 = vpack.c.b16 %v3953, %v3948
    %v4539 = vpack.c.b16 %v3954, %v3949
    %v4540 = vpack.c.b16 %v3960, %v3955
    %v4541 = vpack.c.b16 %v3961, %v3956
    %v4542 = vpack.c.b16 %v3962, %v3957
    %v4543 = vpack.c.b16 %v3963, %v3958
    %v4544 = vpack.c.b16 %v3964, %v3959
    %v4545 = vpack.c.b16 %v3970, %v3965
    %v4546 = vpack.c.b16 %v3971, %v3966
    %v4547 = vpack.c.b16 %v3972, %v3967
    %v4548 = vpack.c.b16 %v3973, %v3968
    %v4549 = vpack.c.b16 %v3974, %v3969
    %v4550 = vpack.c.b16 %v3980, %v3975
    %v4551 = vpack.c.b16 %v3981, %v3976
    %v4552 = vpack.c.b16 %v3982, %v3977
    %v4553 = vpack.c.b16 %v3983, %v3978
    %v4554 = vpack.c.b16 %v3984, %v3979
    %v4555 = vpack.c.b16 %v3990, %v3985
    %v4556 = vpack.c.b16 %v3991, %v3986
    %v4557 = vpack.c.b16 %v3992, %v3987
    %v4558 = vpack.c.b16 %v3993, %v3988
    %v4559 = vpack.c.b16 %v3994, %v3989
    %v4560 = vpack.c.b16 %v4000, %v3995
    %v4561 = vpack.c.b16 %v4001, %v3996
    %v4562 = vpack.c.b16 %v4002, %v3997
    %v4563 = vpack.c.b16 %v4003, %v3998
    %v4564 = vpack.c.b16 %v4004, %v3999
    %v4565 = vpack.c.b16 %v4010, %v4005
    %v4566 = vpack.c.b16 %v4011, %v4006
    %v4567 = vpack.c.b16 %v4012, %v4007
    %v4568 = vpack.c.b16 %v4013, %v4008
    %v4569 = vpack.c.b16 %v4014, %v4009
    %v4570 = vpack.c.b16 %v4020, %v4015
    %v4571 = vpack.c.b16 %v4021, %v4016
    %v4572 = vpack.c.b16 %v4022, %v4017
    %v4573 = vpack.c.b16 %v4023, %v4018
    %v4574 = vpack.c.b16 %v4024, %v4019
    %v4575 = vpack.c.b16 %v4030, %v4025
    %v4576 = vpack.c.b16 %v4031, %v4026
    %v4577 = vpack.c.b16 %v4032, %v4027
    %v4578 = vpack.c.b16 %v4033, %v4028
    %v4579 = vpack.c.b16 %v4034, %v4029
    %v4580 = vpack.c.b16 %v4040, %v4035
    %v4581 = vpack.c.b16 %v4041, %v4036
    %v4582 = vpack.c.b16 %v4042, %v4037
    %v4583 = vpack.c.b16 %v4043, %v4038
    %v4584 = vpack.c.b16 %v4044, %v4039
    %v4585 = vpack.c.b16 %v4050, %v4045
    %v4586 = vpack.c.b16 %v4051, %v4046
    %v4587 = vpack.c.b16 %v4052, %v4047
    %v4588 = vpack.c.b16 %v4053, %v4048
    %v4589 = vpack.c.b16 %v4054, %v4049
    %v4590 = vpack.c.b16 %v4060, %v4055
    %v4591 = vpack.c.b16 %v4061, %v4056
    %v4592 = vpack.c.b16 %v4062, %v4057
    %v4593 = vpack.c.b16 %v4063, %v4058
    %v4594 = vpack.c.b16 %v4064, %v4059
    %v4595 = vpack.c.b16 %v4070, %v4065
    %v4596 = vpack.c.b16 %v4071, %v4066
    %v4597 = vpack.c.b16 %v4072, %v4067
    %v4598 = vpack.c.b16 %v4073, %v4068
    %v4599 = vpack.c.b16 %v4074, %v4069
    %v4600 = vpack.c.b16 %v4080, %v4075
    %v4601 = vpack.c.b16 %v4081, %v4076
    %v4602 = vpack.c.b16 %v4082, %v4077
    %v4603 = vpack.c.b16 %v4083, %v4078
    %v4604 = vpack.c.b16 %v4084, %v4079
    %v4605 = vpack.c.b16 %v4090, %v4085
    %v4606 = vpack.c.b16 %v4091, %v4086
    %v4607 = vpack.c.b16 %v4092, %v4087
    %v4608 = vpack.c.b16 %v4093, %v4088
    %v4609 = vpack.c.b16 %v4094, %v4089
    %v4610 = vpack.c.b16 %v4100, %v4095
    %v4611 = vpack.c.b16 %v4101, %v4096
    %v4612 = vpack.c.b16 %v4102, %v4097
    %v4613 = vpack.c.b16 %v4103, %v4098
    %v4614 = vpack.c.b16 %v4104, %v4099
    %v4615 = vpack.c.b16 %v4110, %v4105
    %v4616 = vpack.c.b16 %v4111, %v4106
    %v4617 = vpack.c.b16 %v4112, %v4107
    %v4618 = vpack.c.b16 %v4113, %v4108
    %v4619 = vpack.c.b16 %v4114, %v4109
    %v4620 = vpack.c.b16 %v4120, %v4115
    %v4621 = vpack.c.b16 %v4121, %v4116
    %v4622 = vpack.c.b16 %v4122, %v4117
    %v4623 = vpack.c.b16 %v4123, %v4118
    %v4624 = vpack.c.b16 %v4124, %v4119
    %v4625 = vpack.c.b16 %v4130, %v4125
    %v4626 = vpack.c.b16 %v4131, %v4126
    %v4627 = vpack.c.b16 %v4132, %v4127
    %v4628 = vpack.c.b16 %v4133, %v4128
    %v4629 = vpack.c.b16 %v4134, %v4129
    %v4630 = vpack.c.b16 %v4140, %v4135
    %v4631 = vpack.c.b16 %v4141, %v4136
    %v4632 = vpack.c.b16 %v4142, %v4137
    %v4633 = vpack.c.b16 %v4143, %v4138
    %v4634 = vpack.c.b16 %v4144, %v4139
    %v4635 = vpack.c.b16 %v4150, %v4145
    %v4636 = vpack.c.b16 %v4151, %v4146
    %v4637 = vpack.c.b16 %v4152, %v4147
    %v4638 = vpack.c.b16 %v4153, %v4148
    %v4639 = vpack.c.b16 %v4154, %v4149
    %v4640 = vpack.c.b16 %v4160, %v4155
    %v4641 = vpack.c.b16 %v4161, %v4156
    %v4642 = vpack.c.b16 %v4162, %v4157
    %v4643 = vpack.c.b16 %v4163, %v4158
    %v4644 = vpack.c.b16 %v4164, %v4159
    %v4645 = vpack.c.b16 %v4170, %v4165
    %v4646 = vpack.c.b16 %v4171, %v4166
    %v4647 = vpack.c.b16 %v4172, %v4167
    %v4648 = vpack.c.b16 %v4173, %v4168
    %v4649 = vpack.c.b16 %v4174, %v4169
    %v4650 = vpack.c.b16 %v4180, %v4175
    %v4651 = vpack.c.b16 %v4181, %v4176
    %v4652 = vpack.c.b16 %v4182, %v4177
    %v4653 = vpack.c.b16 %v4183, %v4178
    %v4654 = vpack.c.b16 %v4184, %v4179
    %v4655 = vpack.c.b16 %v4190, %v4185
    %v4656 = vpack.c.b16 %v4191, %v4186
    %v4657 = vpack.c.b16 %v4192, %v4187
    %v4658 = vpack.c.b16 %v4193, %v4188
    %v4659 = vpack.c.b16 %v4194, %v4189
    %v4660 = vpack.c.b16 %v4200, %v4195
    %v4661 = vpack.c.b16 %v4201, %v4196
    %v4662 = vpack.c.b16 %v4202, %v4197
    %v4663 = vpack.c.b16 %v4203, %v4198
    %v4664 = vpack.c.b16 %v4204, %v4199
    %v4665 = vpack.c.b16 %v4210, %v4205
    %v4666 = vpack.c.b16 %v4211, %v4206
    %v4667 = vpack.c.b16 %v4212, %v4207
    %v4668 = vpack.c.b16 %v4213, %v4208
    %v4669 = vpack.c.b16 %v4214, %v4209
    %v4670 = vpack.c.b16 %v4220, %v4215
    %v4671 = vpack.c.b16 %v4221, %v4216
    %v4672 = vpack.c.b16 %v4222, %v4217
    %v4673 = vpack.c.b16 %v4223, %v4218
    %v4674 = vpack.c.b16 %v4224, %v4219
    %v4675 = vpack.c.b16 %v4230, %v4225
    %v4676 = vpack.c.b16 %v4231, %v4226
    %v4677 = vpack.c.b16 %v4232, %v4227
    %v4678 = vpack.c.b16 %v4233, %v4228
    %v4679 = vpack.c.b16 %v4234, %v4229
    %v4680 = vpack.c.b16 %v4240, %v4235
    %v4681 = vpack.c.b16 %v4241, %v4236
    %v4682 = vpack.c.b16 %v4242, %v4237
    %v4683 = vpack.c.b16 %v4243, %v4238
    %v4684 = vpack.c.b16 %v4244, %v4239
    %v4685 = vpack.c.b16 %v4250, %v4245
    %v4686 = vpack.c.b16 %v4251, %v4246
    %v4687 = vpack.c.b16 %v4252, %v4247
    %v4688 = vpack.c.b16 %v4253, %v4248
    %v4689 = vpack.c.b16 %v4254, %v4249
    %v4690 = vpack.c.b16 %v4260, %v4255
    %v4691 = vpack.c.b16 %v4261, %v4256
    %v4692 = vpack.c.b16 %v4262, %v4257
    %v4693 = vpack.c.b16 %v4263, %v4258
    %v4694 = vpack.c.b16 %v4264, %v4259
    %v4695 = vpack.c.b16 %v4270, %v4265
    %v4696 = vpack.c.b16 %v4271, %v4266
    %v4697 = vpack.c.b16 %v4272, %v4267
    %v4698 = vpack.c.b16 %v4273, %v4268
    %v4699 = vpack.c.b16 %v4274, %v4269
    %v4700 = vpack.c.b16 %v4280, %v4275
    %v4701 = vpack.c.b16 %v4281, %v4276
    %v4702 = vpack.c.b16 %v4282, %v4277
    %v4703 = vpack.c.b16 %v4283, %v4278
    %v4704 = vpack.c.b16 %v4284, %v4279
    %v4705 = vpack.c.b16 %v4290, %v4285
    %v4706 = vpack.c.b16 %v4291, %v4286
    %v4707 = vpack.c.b16 %v4292, %v4287
    %v4708 = vpack.c.b16 %v4293, %v4288
    %v4709 = vpack.c.b16 %v4294, %v4289
    %v4710 = vpack.c.b16 %v4300, %v4295
    %v4711 = vpack.c.b16 %v4301, %v4296
    %v4712 = vpack.c.b16 %v4302, %v4297
    %v4713 = vpack.c.b16 %v4303, %v4298
    %v4714 = vpack.c.b16 %v4304, %v4299
    %v4715 = vpack.c.b16 %v4310, %v4305
    %v4716 = vpack.c.b16 %v4311, %v4306
    %v4717 = vpack.c.b16 %v4312, %v4307
    %v4718 = vpack.c.b16 %v4313, %v4308
    %v4719 = vpack.c.b16 %v4314, %v4309
    %v4720 = vpack.c.b16 %v4320, %v4315
    %v4721 = vpack.c.b16 %v4321, %v4316
    %v4722 = vpack.c.b16 %v4322, %v4317
    %v4723 = vpack.c.b16 %v4323, %v4318
    %v4724 = vpack.c.b16 %v4324, %v4319
    %v4725 = vpack.c.b16 %v4330, %v4325
    %v4726 = vpack.c.b16 %v4331, %v4326
    %v4727 = vpack.c.b16 %v4332, %v4327
    %v4728 = vpack.c.b16 %v4333, %v4328
    %v4729 = vpack.c.b16 %v4334, %v4329
    %v4730 = vpack.c.b16 %v4340, %v4335
    %v4731 = vpack.c.b16 %v4341, %v4336
    %v4732 = vpack.c.b16 %v4342, %v4337
    %v4733 = vpack.c.b16 %v4343, %v4338
    %v4734 = vpack.c.b16 %v4344, %v4339
    %v4735 = vpack.c.b16 %v4350, %v4345
    %v4736 = vpack.c.b16 %v4351, %v4346
    %v4737 = vpack.c.b16 %v4352, %v4347
    %v4738 = vpack.c.b16 %v4353, %v4348
    %v4739 = vpack.c.b16 %v4354, %v4349
    %v4740 = vpack.c.b16 %v4360, %v4355
    %v4741 = vpack.c.b16 %v4361, %v4356
    %v4742 = vpack.c.b16 %v4362, %v4357
    %v4743 = vpack.c.b16 %v4363, %v4358
    %v4744 = vpack.c.b16 %v4364, %v4359
    %v4745 = vpack.c.b16 %v4370, %v4365
    %v4746 = vpack.c.b16 %v4371, %v4366
    %v4747 = vpack.c.b16 %v4372, %v4367
    %v4748 = vpack.c.b16 %v4373, %v4368
    %v4749 = vpack.c.b16 %v4374, %v4369
    %v4750 = vpack.c.b16 %v4380, %v4375
    %v4751 = vpack.c.b16 %v4381, %v4376
    %v4752 = vpack.c.b16 %v4382, %v4377
    %v4753 = vpack.c.b16 %v4383, %v4378
    %v4754 = vpack.c.b16 %v4384, %v4379
    %v4755 = vpack.c.b16 %v4390, %v4385
    %v4756 = vpack.c.b16 %v4391, %v4386
    %v4757 = vpack.c.b16 %v4392, %v4387
    %v4758 = vpack.c.b16 %v4393, %v4388
    %v4759 = vpack.c.b16 %v4394, %v4389
    %v4760 = vpack.c.b16 %v4400, %v4395
    %v4761 = vpack.c.b16 %v4401, %v4396
    %v4762 = vpack.c.b16 %v4402, %v4397
    %v4763 = vpack.c.b16 %v4403, %v4398
    %v4764 = vpack.c.b16 %v4404, %v4399
    %5125 = vmatpush.bf16.msra.mxu0 %v4440
    %5126 = vmatpush.bf16.msra.mxu0 %v4435
    %5127 = vmatpush.bf16.msra.mxu0 %v4430
    %5128 = vmatpush.bf16.msra.mxu0 %v4425
    %5129 = vmatpush.bf16.msra.mxu0 %v4420
    %5130 = vmatpush.bf16.msra.mxu0 %v4415
    %5131 = vmatpush.bf16.msra.mxu0 %v4410
    %5132 = vmatpush.bf16.msra.mxu0 %v4405
    %5133 = vmatmul.bf16.gmra.mxu0 %v2800
    %v5134 = vpop.f32.mrf.mxu0
    %v5135 = vadd.f32 %v3243, %v5134
    %v5136 = vpop.f32.mrf.mxu0
    %5137 = vdwg.mxu0
    %5138 = vmatpush.bf16.msra.mxu0 %v4480
    %5139 = vmatpush.bf16.msra.mxu0 %v4475
    %5140 = vmatpush.bf16.msra.mxu0 %v4470
    %5141 = vmatpush.bf16.msra.mxu0 %v4465
    %5142 = vmatpush.bf16.msra.mxu0 %v4460
    %5143 = vmatpush.bf16.msra.mxu0 %v4455
    %5144 = vmatpush.bf16.msra.mxu0 %v4450
    %5145 = vmatpush.bf16.msra.mxu0 %v4445
    %5146 = vmatmul.bf16.gmra.mxu0 %v2801
    %v5147 = vpop.f32.mrf.mxu0
    %v5148 = vadd.f32 %v5135, %v5147
    %v5149 = vpop.f32.mrf.mxu0
    %5150 = vdwg.mxu0
    %5151 = vmatpush.bf16.msra.mxu0 %v4520
    %5152 = vmatpush.bf16.msra.mxu0 %v4515
    %5153 = vmatpush.bf16.msra.mxu0 %v4510
    %5154 = vmatpush.bf16.msra.mxu0 %v4505
    %5155 = vmatpush.bf16.msra.mxu0 %v4500
    %5156 = vmatpush.bf16.msra.mxu0 %v4495
    %5157 = vmatpush.bf16.msra.mxu0 %v4490
    %5158 = vmatpush.bf16.msra.mxu0 %v4485
    %5159 = vmatmul.bf16.gmra.mxu0 %v2802
    %v5160 = vpop.f32.mrf.mxu0
    %v5161 = vadd.f32 %v5148, %v5160
    %v5162 = vpop.f32.mrf.mxu0
    %5163 = vdwg.mxu0
    %5164 = vmatpush.bf16.msra.mxu0 %v4560
    %5165 = vmatpush.bf16.msra.mxu0 %v4555
    %5166 = vmatpush.bf16.msra.mxu0 %v4550
    %5167 = vmatpush.bf16.msra.mxu0 %v4545
    %5168 = vmatpush.bf16.msra.mxu0 %v4540
    %5169 = vmatpush.bf16.msra.mxu0 %v4535
    %5170 = vmatpush.bf16.msra.mxu0 %v4530
    %5171 = vmatpush.bf16.msra.mxu0 %v4525
    %5172 = vmatmul.bf16.gmra.mxu0 %v2803
    %v5173 = vpop.f32.mrf.mxu0
    %v5174 = vadd.f32 %v5161, %v5173
    %v5175 = vpop.f32.mrf.mxu0
    %5176 = vdwg.mxu0
    %5177 = vmatpush.bf16.msra.mxu0 %v4600
    %5178 = vmatpush.bf16.msra.mxu0 %v4595
    %5179 = vmatpush.bf16.msra.mxu0 %v4590
    %5180 = vmatpush.bf16.msra.mxu0 %v4585
    %5181 = vmatpush.bf16.msra.mxu0 %v4580
    %5182 = vmatpush.bf16.msra.mxu0 %v4575
    %5183 = vmatpush.bf16.msra.mxu0 %v4570
    %5184 = vmatpush.bf16.msra.mxu0 %v4565
    %5185 = vmatmul.bf16.gmra.mxu0 %v2804
    %v5186 = vpop.f32.mrf.mxu0
    %v5187 = vadd.f32 %v5174, %v5186
    %v5188 = vpop.f32.mrf.mxu0
    %5189 = vdwg.mxu0
    %5190 = vmatpush.bf16.msra.mxu0 %v4640
    %5191 = vmatpush.bf16.msra.mxu0 %v4635
    %5192 = vmatpush.bf16.msra.mxu0 %v4630
    %5193 = vmatpush.bf16.msra.mxu0 %v4625
    %5194 = vmatpush.bf16.msra.mxu0 %v4620
    %5195 = vmatpush.bf16.msra.mxu0 %v4615
    %5196 = vmatpush.bf16.msra.mxu0 %v4610
    %5197 = vmatpush.bf16.msra.mxu0 %v4605
    %5198 = vmatmul.bf16.gmra.mxu0 %v2805
    %v5199 = vpop.f32.mrf.mxu0
    %v5200 = vadd.f32 %v5187, %v5199
    %v5201 = vpop.f32.mrf.mxu0
    %5202 = vdwg.mxu0
    %5203 = vmatpush.bf16.msra.mxu0 %v4680
    %5204 = vmatpush.bf16.msra.mxu0 %v4675
    %5205 = vmatpush.bf16.msra.mxu0 %v4670
    %5206 = vmatpush.bf16.msra.mxu0 %v4665
    %5207 = vmatpush.bf16.msra.mxu0 %v4660
    %5208 = vmatpush.bf16.msra.mxu0 %v4655
    %5209 = vmatpush.bf16.msra.mxu0 %v4650
    %5210 = vmatpush.bf16.msra.mxu0 %v4645
    %5211 = vmatmul.bf16.gmra.mxu0 %v2806
    %v5212 = vpop.f32.mrf.mxu0
    %v5213 = vadd.f32 %v5200, %v5212
    %v5214 = vpop.f32.mrf.mxu0
    %5215 = vdwg.mxu0
    %5216 = vmatpush.bf16.msra.mxu0 %v4720
    %5217 = vmatpush.bf16.msra.mxu0 %v4715
    %5218 = vmatpush.bf16.msra.mxu0 %v4710
    %5219 = vmatpush.bf16.msra.mxu0 %v4705
    %5220 = vmatpush.bf16.msra.mxu0 %v4700
    %5221 = vmatpush.bf16.msra.mxu0 %v4695
    %5222 = vmatpush.bf16.msra.mxu0 %v4690
    %5223 = vmatpush.bf16.msra.mxu0 %v4685
    %5224 = vmatmul.bf16.gmra.mxu0 %v2807
    %v5225 = vpop.f32.mrf.mxu0
    %v5226 = vadd.f32 %v5213, %v5225
    %v5227 = vpop.f32.mrf.mxu0
    %5228 = vdwg.mxu0
    %5229 = vmatpush.bf16.msra.mxu0 %v4760
    %5230 = vmatpush.bf16.msra.mxu0 %v4755
    %5231 = vmatpush.bf16.msra.mxu0 %v4750
    %5232 = vmatpush.bf16.msra.mxu0 %v4745
    %5233 = vmatpush.bf16.msra.mxu0 %v4740
    %5234 = vmatpush.bf16.msra.mxu0 %v4735
    %5235 = vmatpush.bf16.msra.mxu0 %v4730
    %5236 = vmatpush.bf16.msra.mxu0 %v4725
    %5237 = vmatmul.bf16.gmra.mxu0 %v2808
    %v5238 = vpop.f32.mrf.mxu0
    %v5239 = vadd.f32 %v5226, %v5238
    %v5240 = vpop.f32.mrf.mxu0
    %5241 = vdwg.mxu0
    %5242 = vmatpush.bf16.msra.mxu0 %v4441
    %5243 = vmatpush.bf16.msra.mxu0 %v4436
    %5244 = vmatpush.bf16.msra.mxu0 %v4431
    %5245 = vmatpush.bf16.msra.mxu0 %v4426
    %5246 = vmatpush.bf16.msra.mxu0 %v4421
    %5247 = vmatpush.bf16.msra.mxu0 %v4416
    %5248 = vmatpush.bf16.msra.mxu0 %v4411
    %5249 = vmatpush.bf16.msra.mxu0 %v4406
    %5250 = vmatmul.bf16.gmra.mxu0 %v2800
    %v5251 = vpop.f32.mrf.mxu0
    %v5252 = vadd.f32 %v3244, %v5251
    %v5253 = vpop.f32.mrf.mxu0
    %5254 = vdwg.mxu0
    %5255 = vmatpush.bf16.msra.mxu0 %v4481
    %5256 = vmatpush.bf16.msra.mxu0 %v4476
    %5257 = vmatpush.bf16.msra.mxu0 %v4471
    %5258 = vmatpush.bf16.msra.mxu0 %v4466
    %5259 = vmatpush.bf16.msra.mxu0 %v4461
    %5260 = vmatpush.bf16.msra.mxu0 %v4456
    %5261 = vmatpush.bf16.msra.mxu0 %v4451
    %5262 = vmatpush.bf16.msra.mxu0 %v4446
    %5263 = vmatmul.bf16.gmra.mxu0 %v2801
    %v5264 = vpop.f32.mrf.mxu0
    %v5265 = vadd.f32 %v5252, %v5264
    %v5266 = vpop.f32.mrf.mxu0
    %5267 = vdwg.mxu0
    %5268 = vmatpush.bf16.msra.mxu0 %v4521
    %5269 = vmatpush.bf16.msra.mxu0 %v4516
    %5270 = vmatpush.bf16.msra.mxu0 %v4511
    %5271 = vmatpush.bf16.msra.mxu0 %v4506
    %5272 = vmatpush.bf16.msra.mxu0 %v4501
    %5273 = vmatpush.bf16.msra.mxu0 %v4496
    %5274 = vmatpush.bf16.msra.mxu0 %v4491
    %5275 = vmatpush.bf16.msra.mxu0 %v4486
    %5276 = vmatmul.bf16.gmra.mxu0 %v2802
    %v5277 = vpop.f32.mrf.mxu0
    %v5278 = vadd.f32 %v5265, %v5277
    %v5279 = vpop.f32.mrf.mxu0
    %5280 = vdwg.mxu0
    %5281 = vmatpush.bf16.msra.mxu0 %v4561
    %5282 = vmatpush.bf16.msra.mxu0 %v4556
    %5283 = vmatpush.bf16.msra.mxu0 %v4551
    %5284 = vmatpush.bf16.msra.mxu0 %v4546
    %5285 = vmatpush.bf16.msra.mxu0 %v4541
    %5286 = vmatpush.bf16.msra.mxu0 %v4536
    %5287 = vmatpush.bf16.msra.mxu0 %v4531
    %5288 = vmatpush.bf16.msra.mxu0 %v4526
    %5289 = vmatmul.bf16.gmra.mxu0 %v2803
    %v5290 = vpop.f32.mrf.mxu0
    %v5291 = vadd.f32 %v5278, %v5290
    %v5292 = vpop.f32.mrf.mxu0
    %5293 = vdwg.mxu0
    %5294 = vmatpush.bf16.msra.mxu0 %v4601
    %5295 = vmatpush.bf16.msra.mxu0 %v4596
    %5296 = vmatpush.bf16.msra.mxu0 %v4591
    %5297 = vmatpush.bf16.msra.mxu0 %v4586
    %5298 = vmatpush.bf16.msra.mxu0 %v4581
    %5299 = vmatpush.bf16.msra.mxu0 %v4576
    %5300 = vmatpush.bf16.msra.mxu0 %v4571
    %5301 = vmatpush.bf16.msra.mxu0 %v4566
    %5302 = vmatmul.bf16.gmra.mxu0 %v2804
    %v5303 = vpop.f32.mrf.mxu0
    %v5304 = vadd.f32 %v5291, %v5303
    %v5305 = vpop.f32.mrf.mxu0
    %5306 = vdwg.mxu0
    %5307 = vmatpush.bf16.msra.mxu0 %v4641
    %5308 = vmatpush.bf16.msra.mxu0 %v4636
    %5309 = vmatpush.bf16.msra.mxu0 %v4631
    %5310 = vmatpush.bf16.msra.mxu0 %v4626
    %5311 = vmatpush.bf16.msra.mxu0 %v4621
    %5312 = vmatpush.bf16.msra.mxu0 %v4616
    %5313 = vmatpush.bf16.msra.mxu0 %v4611
    %5314 = vmatpush.bf16.msra.mxu0 %v4606
    %5315 = vmatmul.bf16.gmra.mxu0 %v2805
    %v5316 = vpop.f32.mrf.mxu0
    %v5317 = vadd.f32 %v5304, %v5316
    %v5318 = vpop.f32.mrf.mxu0
    %5319 = vdwg.mxu0
    %5320 = vmatpush.bf16.msra.mxu0 %v4681
    %5321 = vmatpush.bf16.msra.mxu0 %v4676
    %5322 = vmatpush.bf16.msra.mxu0 %v4671
    %5323 = vmatpush.bf16.msra.mxu0 %v4666
    %5324 = vmatpush.bf16.msra.mxu0 %v4661
    %5325 = vmatpush.bf16.msra.mxu0 %v4656
    %5326 = vmatpush.bf16.msra.mxu0 %v4651
    %5327 = vmatpush.bf16.msra.mxu0 %v4646
    %5328 = vmatmul.bf16.gmra.mxu0 %v2806
    %v5329 = vpop.f32.mrf.mxu0
    %v5330 = vadd.f32 %v5317, %v5329
    %v5331 = vpop.f32.mrf.mxu0
    %5332 = vdwg.mxu0
    %5333 = vmatpush.bf16.msra.mxu0 %v4721
    %5334 = vmatpush.bf16.msra.mxu0 %v4716
    %5335 = vmatpush.bf16.msra.mxu0 %v4711
    %5336 = vmatpush.bf16.msra.mxu0 %v4706
    %5337 = vmatpush.bf16.msra.mxu0 %v4701
    %5338 = vmatpush.bf16.msra.mxu0 %v4696
    %5339 = vmatpush.bf16.msra.mxu0 %v4691
    %5340 = vmatpush.bf16.msra.mxu0 %v4686
    %5341 = vmatmul.bf16.gmra.mxu0 %v2807
    %v5342 = vpop.f32.mrf.mxu0
    %v5343 = vadd.f32 %v5330, %v5342
    %v5344 = vpop.f32.mrf.mxu0
    %5345 = vdwg.mxu0
    %5346 = vmatpush.bf16.msra.mxu0 %v4761
    %5347 = vmatpush.bf16.msra.mxu0 %v4756
    %5348 = vmatpush.bf16.msra.mxu0 %v4751
    %5349 = vmatpush.bf16.msra.mxu0 %v4746
    %5350 = vmatpush.bf16.msra.mxu0 %v4741
    %5351 = vmatpush.bf16.msra.mxu0 %v4736
    %5352 = vmatpush.bf16.msra.mxu0 %v4731
    %5353 = vmatpush.bf16.msra.mxu0 %v4726
    %5354 = vmatmul.bf16.gmra.mxu0 %v2808
    %v5355 = vpop.f32.mrf.mxu0
    %v5356 = vadd.f32 %v5343, %v5355
    %v5357 = vpop.f32.mrf.mxu0
    %5358 = vdwg.mxu0
    %5359 = vmatpush.bf16.msra.mxu0 %v4442
    %5360 = vmatpush.bf16.msra.mxu0 %v4437
    %5361 = vmatpush.bf16.msra.mxu0 %v4432
    %5362 = vmatpush.bf16.msra.mxu0 %v4427
    %5363 = vmatpush.bf16.msra.mxu0 %v4422
    %5364 = vmatpush.bf16.msra.mxu0 %v4417
    %5365 = vmatpush.bf16.msra.mxu0 %v4412
    %5366 = vmatpush.bf16.msra.mxu0 %v4407
    %5367 = vmatmul.bf16.gmra.mxu0 %v2800
    %v5368 = vpop.f32.mrf.mxu0
    %v5369 = vadd.f32 %v3245, %v5368
    %v5370 = vpop.f32.mrf.mxu0
    %5371 = vdwg.mxu0
    %5372 = vmatpush.bf16.msra.mxu0 %v4482
    %5373 = vmatpush.bf16.msra.mxu0 %v4477
    %5374 = vmatpush.bf16.msra.mxu0 %v4472
    %5375 = vmatpush.bf16.msra.mxu0 %v4467
    %5376 = vmatpush.bf16.msra.mxu0 %v4462
    %5377 = vmatpush.bf16.msra.mxu0 %v4457
    %5378 = vmatpush.bf16.msra.mxu0 %v4452
    %5379 = vmatpush.bf16.msra.mxu0 %v4447
    %5380 = vmatmul.bf16.gmra.mxu0 %v2801
    %v5381 = vpop.f32.mrf.mxu0
    %v5382 = vadd.f32 %v5369, %v5381
    %v5383 = vpop.f32.mrf.mxu0
    %5384 = vdwg.mxu0
    %5385 = vmatpush.bf16.msra.mxu0 %v4522
    %5386 = vmatpush.bf16.msra.mxu0 %v4517
    %5387 = vmatpush.bf16.msra.mxu0 %v4512
    %5388 = vmatpush.bf16.msra.mxu0 %v4507
    %5389 = vmatpush.bf16.msra.mxu0 %v4502
    %5390 = vmatpush.bf16.msra.mxu0 %v4497
    %5391 = vmatpush.bf16.msra.mxu0 %v4492
    %5392 = vmatpush.bf16.msra.mxu0 %v4487
    %5393 = vmatmul.bf16.gmra.mxu0 %v2802
    %v5394 = vpop.f32.mrf.mxu0
    %v5395 = vadd.f32 %v5382, %v5394
    %v5396 = vpop.f32.mrf.mxu0
    %5397 = vdwg.mxu0
    %5398 = vmatpush.bf16.msra.mxu0 %v4562
    %5399 = vmatpush.bf16.msra.mxu0 %v4557
    %5400 = vmatpush.bf16.msra.mxu0 %v4552
    %5401 = vmatpush.bf16.msra.mxu0 %v4547
    %5402 = vmatpush.bf16.msra.mxu0 %v4542
    %5403 = vmatpush.bf16.msra.mxu0 %v4537
    %5404 = vmatpush.bf16.msra.mxu0 %v4532
    %5405 = vmatpush.bf16.msra.mxu0 %v4527
    %5406 = vmatmul.bf16.gmra.mxu0 %v2803
    %v5407 = vpop.f32.mrf.mxu0
    %v5408 = vadd.f32 %v5395, %v5407
    %v5409 = vpop.f32.mrf.mxu0
    %5410 = vdwg.mxu0
    %5411 = vmatpush.bf16.msra.mxu0 %v4602
    %5412 = vmatpush.bf16.msra.mxu0 %v4597
    %5413 = vmatpush.bf16.msra.mxu0 %v4592
    %5414 = vmatpush.bf16.msra.mxu0 %v4587
    %5415 = vmatpush.bf16.msra.mxu0 %v4582
    %5416 = vmatpush.bf16.msra.mxu0 %v4577
    %5417 = vmatpush.bf16.msra.mxu0 %v4572
    %5418 = vmatpush.bf16.msra.mxu0 %v4567
    %5419 = vmatmul.bf16.gmra.mxu0 %v2804
    %v5420 = vpop.f32.mrf.mxu0
    %v5421 = vadd.f32 %v5408, %v5420
    %v5422 = vpop.f32.mrf.mxu0
    %5423 = vdwg.mxu0
    %5424 = vmatpush.bf16.msra.mxu0 %v4642
    %5425 = vmatpush.bf16.msra.mxu0 %v4637
    %5426 = vmatpush.bf16.msra.mxu0 %v4632
    %5427 = vmatpush.bf16.msra.mxu0 %v4627
    %5428 = vmatpush.bf16.msra.mxu0 %v4622
    %5429 = vmatpush.bf16.msra.mxu0 %v4617
    %5430 = vmatpush.bf16.msra.mxu0 %v4612
    %5431 = vmatpush.bf16.msra.mxu0 %v4607
    %5432 = vmatmul.bf16.gmra.mxu0 %v2805
    %v5433 = vpop.f32.mrf.mxu0
    %v5434 = vadd.f32 %v5421, %v5433
    %v5435 = vpop.f32.mrf.mxu0
    %5436 = vdwg.mxu0
    %5437 = vmatpush.bf16.msra.mxu0 %v4682
    %5438 = vmatpush.bf16.msra.mxu0 %v4677
    %5439 = vmatpush.bf16.msra.mxu0 %v4672
    %5440 = vmatpush.bf16.msra.mxu0 %v4667
    %5441 = vmatpush.bf16.msra.mxu0 %v4662
    %5442 = vmatpush.bf16.msra.mxu0 %v4657
    %5443 = vmatpush.bf16.msra.mxu0 %v4652
    %5444 = vmatpush.bf16.msra.mxu0 %v4647
    %5445 = vmatmul.bf16.gmra.mxu0 %v2806
    %v5446 = vpop.f32.mrf.mxu0
    %v5447 = vadd.f32 %v5434, %v5446
    %v5448 = vpop.f32.mrf.mxu0
    %5449 = vdwg.mxu0
    %5450 = vmatpush.bf16.msra.mxu0 %v4722
    %5451 = vmatpush.bf16.msra.mxu0 %v4717
    %5452 = vmatpush.bf16.msra.mxu0 %v4712
    %5453 = vmatpush.bf16.msra.mxu0 %v4707
    %5454 = vmatpush.bf16.msra.mxu0 %v4702
    %5455 = vmatpush.bf16.msra.mxu0 %v4697
    %5456 = vmatpush.bf16.msra.mxu0 %v4692
    %5457 = vmatpush.bf16.msra.mxu0 %v4687
    %5458 = vmatmul.bf16.gmra.mxu0 %v2807
    %v5459 = vpop.f32.mrf.mxu0
    %v5460 = vadd.f32 %v5447, %v5459
    %v5461 = vpop.f32.mrf.mxu0
    %5462 = vdwg.mxu0
    %5463 = vmatpush.bf16.msra.mxu0 %v4762
    %5464 = vmatpush.bf16.msra.mxu0 %v4757
    %5465 = vmatpush.bf16.msra.mxu0 %v4752
    %5466 = vmatpush.bf16.msra.mxu0 %v4747
    %5467 = vmatpush.bf16.msra.mxu0 %v4742
    %5468 = vmatpush.bf16.msra.mxu0 %v4737
    %5469 = vmatpush.bf16.msra.mxu0 %v4732
    %5470 = vmatpush.bf16.msra.mxu0 %v4727
    %5471 = vmatmul.bf16.gmra.mxu0 %v2808
    %v5472 = vpop.f32.mrf.mxu0
    %v5473 = vadd.f32 %v5460, %v5472
    %v5474 = vpop.f32.mrf.mxu0
    %5475 = vdwg.mxu0
    %5476 = vmatpush.bf16.msra.mxu0 %v4443
    %5477 = vmatpush.bf16.msra.mxu0 %v4438
    %5478 = vmatpush.bf16.msra.mxu0 %v4433
    %5479 = vmatpush.bf16.msra.mxu0 %v4428
    %5480 = vmatpush.bf16.msra.mxu0 %v4423
    %5481 = vmatpush.bf16.msra.mxu0 %v4418
    %5482 = vmatpush.bf16.msra.mxu0 %v4413
    %5483 = vmatpush.bf16.msra.mxu0 %v4408
    %5484 = vmatmul.bf16.gmra.mxu0 %v2800
    %v5485 = vpop.f32.mrf.mxu0
    %v5486 = vadd.f32 %v3246, %v5485
    %v5487 = vpop.f32.mrf.mxu0
    %5488 = vdwg.mxu0
    %5489 = vmatpush.bf16.msra.mxu0 %v4483
    %5490 = vmatpush.bf16.msra.mxu0 %v4478
    %5491 = vmatpush.bf16.msra.mxu0 %v4473
    %5492 = vmatpush.bf16.msra.mxu0 %v4468
    %5493 = vmatpush.bf16.msra.mxu0 %v4463
    %5494 = vmatpush.bf16.msra.mxu0 %v4458
    %5495 = vmatpush.bf16.msra.mxu0 %v4453
    %5496 = vmatpush.bf16.msra.mxu0 %v4448
    %5497 = vmatmul.bf16.gmra.mxu0 %v2801
    %v5498 = vpop.f32.mrf.mxu0
    %v5499 = vadd.f32 %v5486, %v5498
    %v5500 = vpop.f32.mrf.mxu0
    %5501 = vdwg.mxu0
    %5502 = vmatpush.bf16.msra.mxu0 %v4523
    %5503 = vmatpush.bf16.msra.mxu0 %v4518
    %5504 = vmatpush.bf16.msra.mxu0 %v4513
    %5505 = vmatpush.bf16.msra.mxu0 %v4508
    %5506 = vmatpush.bf16.msra.mxu0 %v4503
    %5507 = vmatpush.bf16.msra.mxu0 %v4498
    %5508 = vmatpush.bf16.msra.mxu0 %v4493
    %5509 = vmatpush.bf16.msra.mxu0 %v4488
    %5510 = vmatmul.bf16.gmra.mxu0 %v2802
    %v5511 = vpop.f32.mrf.mxu0
    %v5512 = vadd.f32 %v5499, %v5511
    %v5513 = vpop.f32.mrf.mxu0
    %5514 = vdwg.mxu0
    %5515 = vmatpush.bf16.msra.mxu0 %v4563
    %5516 = vmatpush.bf16.msra.mxu0 %v4558
    %5517 = vmatpush.bf16.msra.mxu0 %v4553
    %5518 = vmatpush.bf16.msra.mxu0 %v4548
    %5519 = vmatpush.bf16.msra.mxu0 %v4543
    %5520 = vmatpush.bf16.msra.mxu0 %v4538
    %5521 = vmatpush.bf16.msra.mxu0 %v4533
    %5522 = vmatpush.bf16.msra.mxu0 %v4528
    %5523 = vmatmul.bf16.gmra.mxu0 %v2803
    %v5524 = vpop.f32.mrf.mxu0
    %v5525 = vadd.f32 %v5512, %v5524
    %v5526 = vpop.f32.mrf.mxu0
    %5527 = vdwg.mxu0
    %5528 = vmatpush.bf16.msra.mxu0 %v4603
    %5529 = vmatpush.bf16.msra.mxu0 %v4598
    %5530 = vmatpush.bf16.msra.mxu0 %v4593
    %5531 = vmatpush.bf16.msra.mxu0 %v4588
    %5532 = vmatpush.bf16.msra.mxu0 %v4583
    %5533 = vmatpush.bf16.msra.mxu0 %v4578
    %5534 = vmatpush.bf16.msra.mxu0 %v4573
    %5535 = vmatpush.bf16.msra.mxu0 %v4568
    %5536 = vmatmul.bf16.gmra.mxu0 %v2804
    %v5537 = vpop.f32.mrf.mxu0
    %v5538 = vadd.f32 %v5525, %v5537
    %v5539 = vpop.f32.mrf.mxu0
    %5540 = vdwg.mxu0
    %5541 = vmatpush.bf16.msra.mxu0 %v4643
    %5542 = vmatpush.bf16.msra.mxu0 %v4638
    %5543 = vmatpush.bf16.msra.mxu0 %v4633
    %5544 = vmatpush.bf16.msra.mxu0 %v4628
    %5545 = vmatpush.bf16.msra.mxu0 %v4623
    %5546 = vmatpush.bf16.msra.mxu0 %v4618
    %5547 = vmatpush.bf16.msra.mxu0 %v4613
    %5548 = vmatpush.bf16.msra.mxu0 %v4608
    %5549 = vmatmul.bf16.gmra.mxu0 %v2805
    %v5550 = vpop.f32.mrf.mxu0
    %v5551 = vadd.f32 %v5538, %v5550
    %v5552 = vpop.f32.mrf.mxu0
    %5553 = vdwg.mxu0
    %5554 = vmatpush.bf16.msra.mxu0 %v4683
    %5555 = vmatpush.bf16.msra.mxu0 %v4678
    %5556 = vmatpush.bf16.msra.mxu0 %v4673
    %5557 = vmatpush.bf16.msra.mxu0 %v4668
    %5558 = vmatpush.bf16.msra.mxu0 %v4663
    %5559 = vmatpush.bf16.msra.mxu0 %v4658
    %5560 = vmatpush.bf16.msra.mxu0 %v4653
    %5561 = vmatpush.bf16.msra.mxu0 %v4648
    %5562 = vmatmul.bf16.gmra.mxu0 %v2806
    %v5563 = vpop.f32.mrf.mxu0
    %v5564 = vadd.f32 %v5551, %v5563
    %v5565 = vpop.f32.mrf.mxu0
    %5566 = vdwg.mxu0
    %5567 = vmatpush.bf16.msra.mxu0 %v4723
    %5568 = vmatpush.bf16.msra.mxu0 %v4718
    %5569 = vmatpush.bf16.msra.mxu0 %v4713
    %5570 = vmatpush.bf16.msra.mxu0 %v4708
    %5571 = vmatpush.bf16.msra.mxu0 %v4703
    %5572 = vmatpush.bf16.msra.mxu0 %v4698
    %5573 = vmatpush.bf16.msra.mxu0 %v4693
    %5574 = vmatpush.bf16.msra.mxu0 %v4688
    %5575 = vmatmul.bf16.gmra.mxu0 %v2807
    %v5576 = vpop.f32.mrf.mxu0
    %v5577 = vadd.f32 %v5564, %v5576
    %v5578 = vpop.f32.mrf.mxu0
    %5579 = vdwg.mxu0
    %5580 = vmatpush.bf16.msra.mxu0 %v4763
    %5581 = vmatpush.bf16.msra.mxu0 %v4758
    %5582 = vmatpush.bf16.msra.mxu0 %v4753
    %5583 = vmatpush.bf16.msra.mxu0 %v4748
    %5584 = vmatpush.bf16.msra.mxu0 %v4743
    %5585 = vmatpush.bf16.msra.mxu0 %v4738
    %5586 = vmatpush.bf16.msra.mxu0 %v4733
    %5587 = vmatpush.bf16.msra.mxu0 %v4728
    %5588 = vmatmul.bf16.gmra.mxu0 %v2808
    %v5589 = vpop.f32.mrf.mxu0
    %v5590 = vadd.f32 %v5577, %v5589
    %v5591 = vpop.f32.mrf.mxu0
    %5592 = vdwg.mxu0
    %5593 = vmatpush.bf16.msra.mxu0 %v4444
    %5594 = vmatpush.bf16.msra.mxu0 %v4439
    %5595 = vmatpush.bf16.msra.mxu0 %v4434
    %5596 = vmatpush.bf16.msra.mxu0 %v4429
    %5597 = vmatpush.bf16.msra.mxu0 %v4424
    %5598 = vmatpush.bf16.msra.mxu0 %v4419
    %5599 = vmatpush.bf16.msra.mxu0 %v4414
    %5600 = vmatpush.bf16.msra.mxu0 %v4409
    %5601 = vmatmul.bf16.gmra.mxu0 %v2800
    %v5602 = vpop.f32.mrf.mxu0
    %v5603 = vadd.f32 %v3247, %v5602
    %v5604 = vpop.f32.mrf.mxu0
    %5605 = vdwg.mxu0
    %5606 = vmatpush.bf16.msra.mxu0 %v4484
    %5607 = vmatpush.bf16.msra.mxu0 %v4479
    %5608 = vmatpush.bf16.msra.mxu0 %v4474
    %5609 = vmatpush.bf16.msra.mxu0 %v4469
    %5610 = vmatpush.bf16.msra.mxu0 %v4464
    %5611 = vmatpush.bf16.msra.mxu0 %v4459
    %5612 = vmatpush.bf16.msra.mxu0 %v4454
    %5613 = vmatpush.bf16.msra.mxu0 %v4449
    %5614 = vmatmul.bf16.gmra.mxu0 %v2801
    %v5615 = vpop.f32.mrf.mxu0
    %v5616 = vadd.f32 %v5603, %v5615
    %v5617 = vpop.f32.mrf.mxu0
    %5618 = vdwg.mxu0
    %5619 = vmatpush.bf16.msra.mxu0 %v4524
    %5620 = vmatpush.bf16.msra.mxu0 %v4519
    %5621 = vmatpush.bf16.msra.mxu0 %v4514
    %5622 = vmatpush.bf16.msra.mxu0 %v4509
    %5623 = vmatpush.bf16.msra.mxu0 %v4504
    %5624 = vmatpush.bf16.msra.mxu0 %v4499
    %5625 = vmatpush.bf16.msra.mxu0 %v4494
    %5626 = vmatpush.bf16.msra.mxu0 %v4489
    %5627 = vmatmul.bf16.gmra.mxu0 %v2802
    %v5628 = vpop.f32.mrf.mxu0
    %v5629 = vadd.f32 %v5616, %v5628
    %v5630 = vpop.f32.mrf.mxu0
    %5631 = vdwg.mxu0
    %5632 = vmatpush.bf16.msra.mxu0 %v4564
    %5633 = vmatpush.bf16.msra.mxu0 %v4559
    %5634 = vmatpush.bf16.msra.mxu0 %v4554
    %5635 = vmatpush.bf16.msra.mxu0 %v4549
    %5636 = vmatpush.bf16.msra.mxu0 %v4544
    %5637 = vmatpush.bf16.msra.mxu0 %v4539
    %5638 = vmatpush.bf16.msra.mxu0 %v4534
    %5639 = vmatpush.bf16.msra.mxu0 %v4529
    %5640 = vmatmul.bf16.gmra.mxu0 %v2803
    %v5641 = vpop.f32.mrf.mxu0
    %v5642 = vadd.f32 %v5629, %v5641
    %v5643 = vpop.f32.mrf.mxu0
    %5644 = vdwg.mxu0
    %5645 = vmatpush.bf16.msra.mxu0 %v4604
    %5646 = vmatpush.bf16.msra.mxu0 %v4599
    %5647 = vmatpush.bf16.msra.mxu0 %v4594
    %5648 = vmatpush.bf16.msra.mxu0 %v4589
    %5649 = vmatpush.bf16.msra.mxu0 %v4584
    %5650 = vmatpush.bf16.msra.mxu0 %v4579
    %5651 = vmatpush.bf16.msra.mxu0 %v4574
    %5652 = vmatpush.bf16.msra.mxu0 %v4569
    %5653 = vmatmul.bf16.gmra.mxu0 %v2804
    %v5654 = vpop.f32.mrf.mxu0
    %v5655 = vadd.f32 %v5642, %v5654
    %v5656 = vpop.f32.mrf.mxu0
    %5657 = vdwg.mxu0
    %5658 = vmatpush.bf16.msra.mxu0 %v4644
    %5659 = vmatpush.bf16.msra.mxu0 %v4639
    %5660 = vmatpush.bf16.msra.mxu0 %v4634
    %5661 = vmatpush.bf16.msra.mxu0 %v4629
    %5662 = vmatpush.bf16.msra.mxu0 %v4624
    %5663 = vmatpush.bf16.msra.mxu0 %v4619
    %5664 = vmatpush.bf16.msra.mxu0 %v4614
    %5665 = vmatpush.bf16.msra.mxu0 %v4609
    %5666 = vmatmul.bf16.gmra.mxu0 %v2805
    %v5667 = vpop.f32.mrf.mxu0
    %v5668 = vadd.f32 %v5655, %v5667
    %v5669 = vpop.f32.mrf.mxu0
    %5670 = vdwg.mxu0
    %5671 = vmatpush.bf16.msra.mxu0 %v4684
    %5672 = vmatpush.bf16.msra.mxu0 %v4679
    %5673 = vmatpush.bf16.msra.mxu0 %v4674
    %5674 = vmatpush.bf16.msra.mxu0 %v4669
    %5675 = vmatpush.bf16.msra.mxu0 %v4664
    %5676 = vmatpush.bf16.msra.mxu0 %v4659
    %5677 = vmatpush.bf16.msra.mxu0 %v4654
    %5678 = vmatpush.bf16.msra.mxu0 %v4649
    %5679 = vmatmul.bf16.gmra.mxu0 %v2806
    %v5680 = vpop.f32.mrf.mxu0
    %v5681 = vadd.f32 %v5668, %v5680
    %v5682 = vpop.f32.mrf.mxu0
    %5683 = vdwg.mxu0
    %5684 = vmatpush.bf16.msra.mxu0 %v4724
    %5685 = vmatpush.bf16.msra.mxu0 %v4719
    %5686 = vmatpush.bf16.msra.mxu0 %v4714
    %5687 = vmatpush.bf16.msra.mxu0 %v4709
    %5688 = vmatpush.bf16.msra.mxu0 %v4704
    %5689 = vmatpush.bf16.msra.mxu0 %v4699
    %5690 = vmatpush.bf16.msra.mxu0 %v4694
    %5691 = vmatpush.bf16.msra.mxu0 %v4689
    %5692 = vmatmul.bf16.gmra.mxu0 %v2807
    %v5693 = vpop.f32.mrf.mxu0
    %v5694 = vadd.f32 %v5681, %v5693
    %v5695 = vpop.f32.mrf.mxu0
    %5696 = vdwg.mxu0
    %5697 = vmatpush.bf16.msra.mxu0 %v4764
    %5698 = vmatpush.bf16.msra.mxu0 %v4759
    %5699 = vmatpush.bf16.msra.mxu0 %v4754
    %5700 = vmatpush.bf16.msra.mxu0 %v4749
    %5701 = vmatpush.bf16.msra.mxu0 %v4744
    %5702 = vmatpush.bf16.msra.mxu0 %v4739
    %5703 = vmatpush.bf16.msra.mxu0 %v4734
    %5704 = vmatpush.bf16.msra.mxu0 %v4729
    %5705 = vmatmul.bf16.gmra.mxu0 %v2808
    %v5706 = vpop.f32.mrf.mxu0
    %v5707 = vadd.f32 %v5694, %v5706
    %v5708 = vpop.f32.mrf.mxu0
    %5709 = vdwg.mxu0
    %5710 = vst [vmem:[%s11] sm:$0xff] %v5239
    %5711 = vst [vmem:[%s11 + $0x8] sm:$0xff] %v5356
    %5712 = vst [vmem:[%s11 + $0x10] sm:$0xff] %v5473
    %5713 = vst [vmem:[%s11 + $0x18] sm:$0xff] %v5590
    %5714 = vst [vmem:[%s11 + $0x20] sm:$0xff] %v5707
    // Predicated region
    $region86: #{decoder_conv_forward.1} parent=1 // pred_check
      _
    $region87: #{decoder_conv_forward.1} parent=1 // pred_check_branch
      %5716 = sbr.rel (0) target = $region89
    $region88: #{decoder_conv_forward.1} parent=1 // pred_region
      _
    $region89: #{decoder_conv_forward.1} parent=1 // pred_fallthru
      _
    // Predicated region
    $region90: #{decoder_conv_forward.1} parent=1 // pred_check
      _
    $region91: #{decoder_conv_forward.1} parent=1 // pred_check_branch
      %5718 = sbr.rel (0) target = $region93
    $region92: #{decoder_conv_forward.1} parent=1 // pred_region
      _
    $region93: #{decoder_conv_forward.1} parent=1 // pred_fallthru
      _
    %5719 = vsyncpa [#allocation3], 1
    %5720 = vsyncpa [#allocation5], 1
    %5721 = vsyncpa [#allocation8], 1
    %5722 = vsyncpa [#allocation11], 1
    %5723 = vsyncpa [#allocation14], 1
    %5724 = vsyncpa [#allocation17], 1

// kernel: decoder_conv_forward.1
$region0: #{decoder_conv_forward.1}
  #allocation0 [shape = 'u32[]', space=smem, size = 0x4, offset = 0x4, fixed_abs, tag = 'smem constant byte address 0x4 - core index']
  #allocation1 [shape = 'u32[72,128]{1,0:T(1,128)}', space=vmem, size = 0x9000, scoped, tag = 'internal scratch']
  %s0 = inlined_call_operand.vmem [shape: f32[8,8], index: 0, kind: input, shape index: {}]
  %s1 = inlined_call_operand.hbm [shape: f32[8,32], index: 1, kind: input, shape index: {}]
  %s2 = inlined_call_operand.hbm [shape: f32[1,32], index: 2, kind: input, shape index: {}]
  %s3 = inlined_call_operand.hbm [shape: f32[32,128], index: 3, kind: input, shape index: {}]
  %s4 = inlined_call_operand.hbm [shape: f32[1,128], index: 4, kind: input, shape index: {}]
  %s5 = inlined_call_operand.hbm [shape: bf16[128,512], index: 5, kind: input, shape index: {}]
  %s6 = inlined_call_operand.hbm [shape: f32[1,512], index: 6, kind: input, shape index: {}]
  %s7 = inlined_call_operand.hbm [shape: bf16[512,1152], index: 7, kind: input, shape index: {}]
  %s8 = inlined_call_operand.hbm [shape: f32[1,1152], index: 8, kind: input, shape index: {}]
  %s9 = inlined_call_operand.hbm [shape: bf16[1152,640], index: 9, kind: input, shape index: {}]
  %s10 = inlined_call_operand.hbm [shape: f32[1,640], index: 10, kind: input, shape index: {}]
  %s11 = inlined_call_operand.vmem [shape: f32[8,640], index: 11, kind: output, shape index: {}]
  %s12 = sld [smem:[#allocation0]]
  $region94: #{decoder_conv_forward.1} parent=0
    _
  %s14 = ssub.s32 1, %s12
  %s15 = scalar_select 0, %s14, %s12
  $region1: #{decoder_conv_forward.1} parent=0
    #allocation2 [shape = 'u8[4096]{0}', space=vmem, size = 0x1000, scoped, tag = 'input window, operand 1, single buffered']
    #allocation3 [shape = 's32[1]{0}', space=sflag, size = 0x4, scoped, tag = 'scoped memory for decoder_conv_forward.1']
    #allocation4 [shape = 'u8[512]{0}', space=vmem, size = 0x400, scoped, tag = 'input window, operand 2, single buffered']
    #allocation5 [shape = 's32[1]{0}', space=sflag, size = 0x4, scoped, tag = 'scoped memory for decoder_conv_forward.1']
    #allocation6 [shape = 'u8[16384]{0}', space=vmem, size = 0x4000, scoped, tag = 'input window, operand 3, single buffered']
    #allocation7 [shape = 'u8[512]{0}', space=vmem, size = 0x400, scoped, tag = 'input window, operand 4, single buffered']
    #allocation8 [shape = 's32[1]{0}', space=sflag, size = 0x4, scoped, tag = 'scoped memory for decoder_conv_forward.1']
    #allocation9 [shape = 'u8[131072]{0}', space=vmem, size = 0x20000, scoped, tag = 'input window, operand 5, single buffered']
    #allocation10 [shape = 'u8[2048]{0}', space=vmem, size = 0x800, scoped, tag = 'input window, operand 6, single buffered']
    #allocation11 [shape = 's32[1]{0}', space=sflag, size = 0x4, scoped, tag = 'scoped memory for decoder_conv_forward.1']
    #allocation12 [shape = 'u8[1179648]{0}', space=vmem, size = 0x120000, scoped, tag = 'input window, operand 7, single buffered']
    #allocation13 [shape = 'u8[4608]{0}', space=vmem, size = 0x1400, scoped, tag = 'input window, operand 8, single buffered']
    #allocation14 [shape = 's32[1]{0}', space=sflag, size = 0x4, scoped, tag = 'scoped memory for decoder_conv_forward.1']
    #allocation15 [shape = 'u8[1474560]{0}', space=vmem, size = 0x168000, scoped, tag = 'input window, operand 9, single buffered']
    #allocation16 [shape = 'u8[2560]{0}', space=vmem, size = 0xc00, scoped, tag = 'input window, operand 10, single buffered']
    #allocation17 [shape = 's32[1]{0}', space=sflag, size = 0x4, scoped, tag = 'scoped memory for decoder_conv_forward.1']
    %16 = vsyncpa [#allocation3], 0
    %17 = vsyncpa [#allocation5], 0
    %18 = vsyncpa [#allocation8], 0
    %19 = vsyncpa [#allocation11], 0
    %20 = vsyncpa [#allocation14], 0
    %21 = vsyncpa [#allocation17], 0
    // Predicated region
    $region2: #{decoder_conv_forward.1} parent=1 // pred_check
      _
    $region3: #{decoder_conv_forward.1} parent=1 // pred_check_branch
      %23 = sbr.rel (0) target = $region5
    $region4: #{decoder_conv_forward.1} parent=1 // pred_region
      _
    $region5: #{decoder_conv_forward.1} parent=1 // pred_fallthru
      _
    // Predicated region
    $region6: #{decoder_conv_forward.1} parent=1 // pred_check
      _
    $region7: #{decoder_conv_forward.1} parent=1 // pred_check_branch
      %25 = sbr.rel (0) target = $region9
    $region8: #{decoder_conv_forward.1} parent=1 // pred_region
      %27 = vsyncadd [#allocation3], 0
      %s29 = sshll.u32 %s1, 4
      %s30 = int_to_ptr.hbm [resolvable:$true] %s29
      %s31 = sshll.u32 [#allocation2], 4
      %s32 = int_to_ptr.vmem [resolvable:$true] %s31
      %34 = dma.hbm_to_vmem [thread:$0]  %s30, 128, %s32, [#allocation3]
    $region9: #{decoder_conv_forward.1} parent=1 // pred_fallthru
      _
    // Predicated region
    $region10: #{decoder_conv_forward.1} parent=1 // pred_check
      _
    $region11: #{decoder_conv_forward.1} parent=1 // pred_check_branch
      %36 = sbr.rel (0) target = $region13
    $region12: #{decoder_conv_forward.1} parent=1 // pred_region
      %38 = vsyncadd [#allocation5], 0
      %s40 = sshll.u32 %s2, 4
      %s41 = int_to_ptr.hbm [resolvable:$true] %s40
      %s42 = sshll.u32 [#allocation4], 4
      %s43 = int_to_ptr.vmem [resolvable:$true] %s42
      %45 = dma.hbm_to_vmem [thread:$0]  %s41, 16, %s43, [#allocation5]
    $region13: #{decoder_conv_forward.1} parent=1 // pred_fallthru
      _
    // Predicated region
    $region14: #{decoder_conv_forward.1} parent=1 // pred_check
      _
    $region15: #{decoder_conv_forward.1} parent=1 // pred_check_branch
      %47 = sbr.rel (0) target = $region17
    $region16: #{decoder_conv_forward.1} parent=1 // pred_region
      %49 = vsyncadd [#allocation5], 0
      %s50 = sshll.u32 %s3, 4
      %s51 = int_to_ptr.hbm [resolvable:$true] %s50
      %s52 = sshll.u32 [#allocation6], 4
      %s53 = int_to_ptr.vmem [resolvable:$true] %s52
      %58 = dma.hbm_to_vmem [thread:$0]  %s51, 512, %s53, [#allocation5], 128, 128, 8
    $region17: #{decoder_conv_forward.1} parent=1 // pred_fallthru
      _
    // Predicated region
    $region18: #{decoder_conv_forward.1} parent=1 // pred_check
      _
    $region19: #{decoder_conv_forward.1} parent=1 // pred_check_branch
      %60 = sbr.rel (0) target = $region21
    $region20: #{decoder_conv_forward.1} parent=1 // pred_region
      %62 = vsyncadd [#allocation8], 0
      %s64 = sshll.u32 %s4, 4
      %s65 = int_to_ptr.hbm [resolvable:$true] %s64
      %s66 = sshll.u32 [#allocation7], 4
      %s67 = int_to_ptr.vmem [resolvable:$true] %s66
      %69 = dma.hbm_to_vmem [thread:$0]  %s65, 16, %s67, [#allocation8]
    $region21: #{decoder_conv_forward.1} parent=1 // pred_fallthru
      _
    // Predicated region
    $region22: #{decoder_conv_forward.1} parent=1 // pred_check
      _
    $region23: #{decoder_conv_forward.1} parent=1 // pred_check_branch
      %71 = sbr.rel (0) target = $region25
    $region24: #{decoder_conv_forward.1} parent=1 // pred_region
      %73 = vsyncadd [#allocation8], 0
      %s74 = sshll.u32 %s5, 4
      %s75 = int_to_ptr.hbm [resolvable:$true] %s74
      %s76 = sshll.u32 [#allocation9], 4
      %s77 = int_to_ptr.vmem [resolvable:$true] %s76
      %82 = dma.hbm_to_vmem [thread:$0]  %s75, 4096, %s77, [#allocation8], 256, 256, 16
    $region25: #{decoder_conv_forward.1} parent=1 // pred_fallthru
      _
    // Predicated region
    $region26: #{decoder_conv_forward.1} parent=1 // pred_check
      _
    $region27: #{decoder_conv_forward.1} parent=1 // pred_check_branch
      %84 = sbr.rel (0) target = $region29
    $region28: #{decoder_conv_forward.1} parent=1 // pred_region
      %86 = vsyncadd [#allocation11], 0
      %s88 = sshll.u32 %s6, 4
      %s89 = int_to_ptr.hbm [resolvable:$true] %s88
      %s90 = sshll.u32 [#allocation10], 4
      %s91 = int_to_ptr.vmem [resolvable:$true] %s90
      %93 = dma.hbm_to_vmem [thread:$0]  %s89, 64, %s91, [#allocation11]
    $region29: #{decoder_conv_forward.1} parent=1 // pred_fallthru
      _
    // Predicated region
    $region30: #{decoder_conv_forward.1} parent=1 // pred_check
      _
    $region31: #{decoder_conv_forward.1} parent=1 // pred_check_branch
      %95 = sbr.rel (0) target = $region33
    $region32: #{decoder_conv_forward.1} parent=1 // pred_region
      %97 = vsyncadd [#allocation11], 0
      %s98 = sshll.u32 %s7, 4
      %s99 = int_to_ptr.hbm [resolvable:$true] %s98
      %s100 = sshll.u32 [#allocation12], 4
      %s101 = int_to_ptr.vmem [resolvable:$true] %s100
      %106 = dma.hbm_to_vmem [thread:$0]  %s99, 36864, %s101, [#allocation11], 576, 576, 36
    $region33: #{decoder_conv_forward.1} parent=1 // pred_fallthru
      _
    // Predicated region
    $region34: #{decoder_conv_forward.1} parent=1 // pred_check
      _
    $region35: #{decoder_conv_forward.1} parent=1 // pred_check_branch
      %108 = sbr.rel (0) target = $region37
    $region36: #{decoder_conv_forward.1} parent=1 // pred_region
      %110 = vsyncadd [#allocation14], 0
      %s112 = sshll.u32 %s8, 4
      %s113 = int_to_ptr.hbm [resolvable:$true] %s112
      %s114 = sshll.u32 [#allocation13], 4
      %s115 = int_to_ptr.vmem [resolvable:$true] %s114
      %117 = dma.hbm_to_vmem [thread:$0]  %s113, 144, %s115, [#allocation14]
    $region37: #{decoder_conv_forward.1} parent=1 // pred_fallthru
      _
    // Predicated region
    $region38: #{decoder_conv_forward.1} parent=1 // pred_check
      _
    $region39: #{decoder_conv_forward.1} parent=1 // pred_check_branch
      %119 = sbr.rel (0) target = $region41
    $region40: #{decoder_conv_forward.1} parent=1 // pred_region
      %121 = vsyncadd [#allocation14], 0
      %s122 = sshll.u32 %s9, 4
      %s123 = int_to_ptr.hbm [resolvable:$true] %s122
      %s124 = sshll.u32 [#allocation15], 4
      %s125 = int_to_ptr.vmem [resolvable:$true] %s124
      %130 = dma.hbm_to_vmem [thread:$0]  %s123, 46080, %s125, [#allocation14], 320, 320, 20
    $region41: #{decoder_conv_forward.1} parent=1 // pred_fallthru
      _
    // Predicated region
    $region42: #{decoder_conv_forward.1} parent=1 // pred_check
      _
    $region43: #{decoder_conv_forward.1} parent=1 // pred_check_branch
      %132 = sbr.rel (0) target = $region45
    $region44: #{decoder_conv_forward.1} parent=1 // pred_region
      %134 = vsyncadd [#allocation17], 0
      %s136 = sshll.u32 %s10, 4
      %s137 = int_to_ptr.hbm [resolvable:$true] %s136
      %s138 = sshll.u32 [#allocation16], 4
      %s139 = int_to_ptr.vmem [resolvable:$true] %s138
      %141 = dma.hbm_to_vmem [thread:$0]  %s137, 80, %s139, [#allocation17]
    $region45: #{decoder_conv_forward.1} parent=1 // pred_fallthru
      _
    // Predicated region
    $region46: #{decoder_conv_forward.1} parent=1 // pred_check
      _
    $region47: #{decoder_conv_forward.1} parent=1 // pred_check_branch
      %143 = sbr.rel (0) target = $region49
    $region48: #{decoder_conv_forward.1} parent=1 // pred_region
      %145 = dma.done [#allocation3], 128
    $region49: #{decoder_conv_forward.1} parent=1 // pred_fallthru
      _
    // Predicated region
    $region50: #{decoder_conv_forward.1} parent=1 // pred_check
      _
    $region51: #{decoder_conv_forward.1} parent=1 // pred_check_branch
      %147 = sbr.rel (0) target = $region53
    $region52: #{decoder_conv_forward.1} parent=1 // pred_region
      %149 = dma.done [#allocation5], 16
    $region53: #{decoder_conv_forward.1} parent=1 // pred_fallthru
      _
    // Predicated region
    $region54: #{decoder_conv_forward.1} parent=1 // pred_check
      _
    $region55: #{decoder_conv_forward.1} parent=1 // pred_check_branch
      %151 = sbr.rel (0) target = $region57
    $region56: #{decoder_conv_forward.1} parent=1 // pred_region
      %153 = dma.done [#allocation5], 512
    $region57: #{decoder_conv_forward.1} parent=1 // pred_fallthru
      _
    // Predicated region
    $region58: #{decoder_conv_forward.1} parent=1 // pred_check
      _
    $region59: #{decoder_conv_forward.1} parent=1 // pred_check_branch
      %155 = sbr.rel (0) target = $region61
    $region60: #{decoder_conv_forward.1} parent=1 // pred_region
      %157 = dma.done [#allocation8], 16
    $region61: #{decoder_conv_forward.1} parent=1 // pred_fallthru
      _
    // Predicated region
    $region62: #{decoder_conv_forward.1} parent=1 // pred_check
      _
    $region63: #{decoder_conv_forward.1} parent=1 // pred_check_branch
      %159 = sbr.rel (0) target = $region65
    $region64: #{decoder_conv_forward.1} parent=1 // pred_region
      %161 = dma.done [#allocation8], 4096
    $region65: #{decoder_conv_forward.1} parent=1 // pred_fallthru
      _
    // Predicated region
    $region66: #{decoder_conv_forward.1} parent=1 // pred_check
      _
    $region67: #{decoder_conv_forward.1} parent=1 // pred_check_branch
      %163 = sbr.rel (0) target = $region69
    $region68: #{decoder_conv_forward.1} parent=1 // pred_region
      %165 = dma.done [#allocation11], 64
    $region69: #{decoder_conv_forward.1} parent=1 // pred_fallthru
      _
    // Predicated region
    $region70: #{decoder_conv_forward.1} parent=1 // pred_check
      _
    $region71: #{decoder_conv_forward.1} parent=1 // pred_check_branch
      %167 = sbr.rel (0) target = $region73
    $region72: #{decoder_conv_forward.1} parent=1 // pred_region
      %169 = dma.done [#allocation11], 36864
    $region73: #{decoder_conv_forward.1} parent=1 // pred_fallthru
      _
    // Predicated region
    $region74: #{decoder_conv_forward.1} parent=1 // pred_check
      _
    $region75: #{decoder_conv_forward.1} parent=1 // pred_check_branch
      %171 = sbr.rel (0) target = $region77
    $region76: #{decoder_conv_forward.1} parent=1 // pred_region
      %173 = dma.done [#allocation14], 144
    $region77: #{decoder_conv_forward.1} parent=1 // pred_fallthru
      _
    // Predicated region
    $region78: #{decoder_conv_forward.1} parent=1 // pred_check
      _
    $region79: #{decoder_conv_forward.1} parent=1 // pred_check_branch
      %175 = sbr.rel (0) target = $region81
    $region80: #{decoder_conv_forward.1} parent=1 // pred_region
      %177 = dma.done [#allocation14], 46080
    $region81: #{decoder_conv_forward.1} parent=1 // pred_fallthru
      _
    // Predicated region
    $region82: #{decoder_conv_forward.1} parent=1 // pred_check
      _
    $region83: #{decoder_conv_forward.1} parent=1 // pred_check_branch
      %179 = sbr.rel (0) target = $region85
    $region84: #{decoder_conv_forward.1} parent=1 // pred_region
      %181 = dma.done [#allocation17], 80
    $region85: #{decoder_conv_forward.1} parent=1 // pred_fallthru
      _
    %v182 = vld [vmem:[%s0] sm:$0xff]
    %v183 = vld [vmem:[#allocation2] sm:$0xff]
    %v184 = vld [vmem:[#allocation4] sm:$0x1]
    %v186 = vperm.slane %v184, 0
    %vm188 = vcmask 64512
    %v190 = vsel %vm188, %v182, 0
    %192 = vmatpush.msra.mxu0 0.0
    %193 = vmatpush.msra.mxu0 0.0
    %194 = vmatpush.msra.mxu0 0.0
    %195 = vmatpush.msra.mxu0 0.0
    %196 = vmatpush.msra.mxu0 0.0
    %197 = vmatpush.msra.mxu0 0.0
    %198 = vmatpush.msra.mxu0 0.0
    %199 = vmatpush.msra.mxu0 0.0
    %200 = vmatpush.msra.mxu0 0.0
    %201 = vmatpush.msra.mxu0 0.0
    %202 = vmatpush.msra.mxu0 0.0
    %203 = vmatpush.msra.mxu0 0.0
    %204 = vmatpush.msra.mxu0 0.0
    %205 = vmatpush.msra.mxu0 0.0
    %206 = vmatpush.msra.mxu0 0.0
    %207 = vmatpush.msra.mxu0 %v183
    %208 = vmatmul.f32.gmra.mxu0 %v190
    %v209 = vpop.f32.mrf.mxu0
    %v210 = vadd.f32 %v186, %v209
    %211 = vdwg.mxu0
    %v212 = vmax.f32 %v210, 0.0
    %v213 = vld [vmem:[#allocation6] sm:$0xff]
    %v214 = vld [vmem:[#allocation6 + $0x8] sm:$0xff]
    %v215 = vld [vmem:[#allocation6 + $0x10] sm:$0xff]
    %v216 = vld [vmem:[#allocation6 + $0x18] sm:$0xff]
    %v217 = vld [vmem:[#allocation7] sm:$0x1]
    %v219 = vperm.slane %v217, 0
    %vm221 = vcmask 261120
    %v223 = vsel %vm221, %v212, 0
    %225 = vmatpush.msra.mxu0 0.0
    %226 = vmatpush.msra.mxu0 0.0
    %227 = vmatpush.msra.mxu0 0.0
    %228 = vmatpush.msra.mxu0 0.0
    %229 = vmatpush.msra.mxu0 0.0
    %230 = vmatpush.msra.mxu0 0.0
    %231 = vmatpush.msra.mxu0 0.0
    %232 = vmatpush.msra.mxu0 0.0
    %233 = vmatpush.msra.mxu0 0.0
    %234 = vmatpush.msra.mxu0 0.0
    %235 = vmatpush.msra.mxu0 0.0
    %236 = vmatpush.msra.mxu0 0.0
    %237 = vmatpush.msra.mxu0 %v216
    %238 = vmatpush.msra.mxu0 %v215
    %239 = vmatpush.msra.mxu0 %v214
    %240 = vmatpush.msra.mxu0 %v213
    %241 = vmatmul.f32.gmra.mxu0 %v223
    %v242 = vpop.f32.mrf.mxu0
    %v243 = vadd.f32 %v219, %v242
    %244 = vdwg.mxu0
    %v245 = vmax.f32 %v243, 0.0
    %v246 = vpack.c.bf16 %v245, %v245
    %v247 = vld [vmem:[#allocation9] sm:$0xff]
    %v248 = vld [vmem:[#allocation9 + $0x8] sm:$0xff]
    %v249 = vld [vmem:[#allocation9 + $0x10] sm:$0xff]
    %v250 = vld [vmem:[#allocation9 + $0x18] sm:$0xff]
    %v251 = vld [vmem:[#allocation9 + $0x20] sm:$0xff]
    %v252 = vld [vmem:[#allocation9 + $0x28] sm:$0xff]
    %v253 = vld [vmem:[#allocation9 + $0x30] sm:$0xff]
    %v254 = vld [vmem:[#allocation9 + $0x38] sm:$0xff]
    %v255 = vld [vmem:[#allocation9 + $0x40] sm:$0xff]
    %v256 = vld [vmem:[#allocation9 + $0x48] sm:$0xff]
    %v257 = vld [vmem:[#allocation9 + $0x50] sm:$0xff]
    %v258 = vld [vmem:[#allocation9 + $0x58] sm:$0xff]
    %v259 = vld [vmem:[#allocation9 + $0x60] sm:$0xff]
    %v260 = vld [vmem:[#allocation9 + $0x68] sm:$0xff]
    %v261 = vld [vmem:[#allocation9 + $0x70] sm:$0xff]
    %v262 = vld [vmem:[#allocation9 + $0x78] sm:$0xff]
    %v263 = vld [vmem:[#allocation9 + $0x80] sm:$0xff]
    %v264 = vld [vmem:[#allocation9 + $0x88] sm:$0xff]
    %v265 = vld [vmem:[#allocation9 + $0x90] sm:$0xff]
    %v266 = vld [vmem:[#allocation9 + $0x98] sm:$0xff]
    %v267 = vld [vmem:[#allocation9 + $0xa0] sm:$0xff]
    %v268 = vld [vmem:[#allocation9 + $0xa8] sm:$0xff]
    %v269 = vld [vmem:[#allocation9 + $0xb0] sm:$0xff]
    %v270 = vld [vmem:[#allocation9 + $0xb8] sm:$0xff]
    %v271 = vld [vmem:[#allocation9 + $0xc0] sm:$0xff]
    %v272 = vld [vmem:[#allocation9 + $0xc8] sm:$0xff]
    %v273 = vld [vmem:[#allocation9 + $0xd0] sm:$0xff]
    %v274 = vld [vmem:[#allocation9 + $0xd8] sm:$0xff]
    %v275 = vld [vmem:[#allocation9 + $0xe0] sm:$0xff]
    %v276 = vld [vmem:[#allocation9 + $0xe8] sm:$0xff]
    %v277 = vld [vmem:[#allocation9 + $0xf0] sm:$0xff]
    %v278 = vld [vmem:[#allocation9 + $0xf8] sm:$0xff]
    %v279 = vld [vmem:[#allocation10] sm:$0xf]
    %v281 = vperm.slane %v279, 0
    %v282 = vperm.slane %v279, 1
    %v283 = vperm.slane %v279, 2
    %v284 = vperm.slane %v279, 3
    %v321 = vunpack.c.l.b16 %v247
    %v322 = vunpack.c.h.b16 %v247
    %v323 = vunpack.c.l.b16 %v248
    %v324 = vunpack.c.h.b16 %v248
    %v325 = vunpack.c.l.b16 %v249
    %v326 = vunpack.c.h.b16 %v249
    %v327 = vunpack.c.l.b16 %v250
    %v328 = vunpack.c.h.b16 %v250
    %v329 = vunpack.c.l.b16 %v251
    %v330 = vunpack.c.h.b16 %v251
    %v331 = vunpack.c.l.b16 %v252
    %v332 = vunpack.c.h.b16 %v252
    %v333 = vunpack.c.l.b16 %v253
    %v334 = vunpack.c.h.b16 %v253
    %v335 = vunpack.c.l.b16 %v254
    %v336 = vunpack.c.h.b16 %v254
    %v337 = vunpack.c.l.b16 %v255
    %v338 = vunpack.c.h.b16 %v255
    %v339 = vunpack.c.l.b16 %v256
    %v340 = vunpack.c.h.b16 %v256
    %v341 = vunpack.c.l.b16 %v257
    %v342 = vunpack.c.h.b16 %v257
    %v343 = vunpack.c.l.b16 %v258
    %v344 = vunpack.c.h.b16 %v258
    %v345 = vunpack.c.l.b16 %v259
    %v346 = vunpack.c.h.b16 %v259
    %v347 = vunpack.c.l.b16 %v260
    %v348 = vunpack.c.h.b16 %v260
    %v349 = vunpack.c.l.b16 %v261
    %v350 = vunpack.c.h.b16 %v261
    %v351 = vunpack.c.l.b16 %v262
    %v352 = vunpack.c.h.b16 %v262
    %v353 = vunpack.c.l.b16 %v263
    %v354 = vunpack.c.h.b16 %v263
    %v355 = vunpack.c.l.b16 %v264
    %v356 = vunpack.c.h.b16 %v264
    %v357 = vunpack.c.l.b16 %v265
    %v358 = vunpack.c.h.b16 %v265
    %v359 = vunpack.c.l.b16 %v266
    %v360 = vunpack.c.h.b16 %v266
    %v361 = vunpack.c.l.b16 %v267
    %v362 = vunpack.c.h.b16 %v267
    %v363 = vunpack.c.l.b16 %v268
    %v364 = vunpack.c.h.b16 %v268
    %v365 = vunpack.c.l.b16 %v269
    %v366 = vunpack.c.h.b16 %v269
    %v367 = vunpack.c.l.b16 %v270
    %v368 = vunpack.c.h.b16 %v270
    %v369 = vunpack.c.l.b16 %v271
    %v370 = vunpack.c.h.b16 %v271
    %v371 = vunpack.c.l.b16 %v272
    %v372 = vunpack.c.h.b16 %v272
    %v373 = vunpack.c.l.b16 %v273
    %v374 = vunpack.c.h.b16 %v273
    %v375 = vunpack.c.l.b16 %v274
    %v376 = vunpack.c.h.b16 %v274
    %v377 = vunpack.c.l.b16 %v275
    %v378 = vunpack.c.h.b16 %v275
    %v379 = vunpack.c.l.b16 %v276
    %v380 = vunpack.c.h.b16 %v276
    %v381 = vunpack.c.l.b16 %v277
    %v382 = vunpack.c.h.b16 %v277
    %v383 = vunpack.c.l.b16 %v278
    %v384 = vunpack.c.h.b16 %v278
    %v385 = vpack.c.b16 %v325, %v321
    %v386 = vpack.c.b16 %v326, %v322
    %v387 = vpack.c.b16 %v327, %v323
    %v388 = vpack.c.b16 %v328, %v324
    %v389 = vpack.c.b16 %v333, %v329
    %v390 = vpack.c.b16 %v334, %v330
    %v391 = vpack.c.b16 %v335, %v331
    %v392 = vpack.c.b16 %v336, %v332
    %v393 = vpack.c.b16 %v341, %v337
    %v394 = vpack.c.b16 %v342, %v338
    %v395 = vpack.c.b16 %v343, %v339
    %v396 = vpack.c.b16 %v344, %v340
    %v397 = vpack.c.b16 %v349, %v345
    %v398 = vpack.c.b16 %v350, %v346
    %v399 = vpack.c.b16 %v351, %v347
    %v400 = vpack.c.b16 %v352, %v348
    %v401 = vpack.c.b16 %v357, %v353
    %v402 = vpack.c.b16 %v358, %v354
    %v403 = vpack.c.b16 %v359, %v355
    %v404 = vpack.c.b16 %v360, %v356
    %v405 = vpack.c.b16 %v365, %v361
    %v406 = vpack.c.b16 %v366, %v362
    %v407 = vpack.c.b16 %v367, %v363
    %v408 = vpack.c.b16 %v368, %v364
    %v409 = vpack.c.b16 %v373, %v369
    %v410 = vpack.c.b16 %v374, %v370
    %v411 = vpack.c.b16 %v375, %v371
    %v412 = vpack.c.b16 %v376, %v372
    %v413 = vpack.c.b16 %v381, %v377
    %v414 = vpack.c.b16 %v382, %v378
    %v415 = vpack.c.b16 %v383, %v379
    %v416 = vpack.c.b16 %v384, %v380
    %449 = vmatpush.bf16.msra.mxu0 %v413
    %450 = vmatpush.bf16.msra.mxu0 %v409
    %451 = vmatpush.bf16.msra.mxu0 %v405
    %452 = vmatpush.bf16.msra.mxu0 %v401
    %453 = vmatpush.bf16.msra.mxu0 %v397
    %454 = vmatpush.bf16.msra.mxu0 %v393
    %455 = vmatpush.bf16.msra.mxu0 %v389
    %456 = vmatpush.bf16.msra.mxu0 %v385
    %457 = vmatmul.bf16.gmra.mxu0 %v246
    %v458 = vpop.f32.mrf.mxu0
    %v459 = vadd.f32 %v281, %v458
    %v460 = vpop.f32.mrf.mxu0
    %461 = vdwg.mxu0
    %462 = vmatpush.bf16.msra.mxu0 %v414
    %463 = vmatpush.bf16.msra.mxu0 %v410
    %464 = vmatpush.bf16.msra.mxu0 %v406
    %465 = vmatpush.bf16.msra.mxu0 %v402
    %466 = vmatpush.bf16.msra.mxu0 %v398
    %467 = vmatpush.bf16.msra.mxu0 %v394
    %468 = vmatpush.bf16.msra.mxu0 %v390
    %469 = vmatpush.bf16.msra.mxu0 %v386
    %470 = vmatmul.bf16.gmra.mxu0 %v246
    %v471 = vpop.f32.mrf.mxu0
    %v472 = vadd.f32 %v282, %v471
    %v473 = vpop.f32.mrf.mxu0
    %474 = vdwg.mxu0
    %475 = vmatpush.bf16.msra.mxu0 %v415
    %476 = vmatpush.bf16.msra.mxu0 %v411
    %477 = vmatpush.bf16.msra.mxu0 %v407
    %478 = vmatpush.bf16.msra.mxu0 %v403
    %479 = vmatpush.bf16.msra.mxu0 %v399
    %480 = vmatpush.bf16.msra.mxu0 %v395
    %481 = vmatpush.bf16.msra.mxu0 %v391
    %482 = vmatpush.bf16.msra.mxu0 %v387
    %483 = vmatmul.bf16.gmra.mxu0 %v246
    %v484 = vpop.f32.mrf.mxu0
    %v485 = vadd.f32 %v283, %v484
    %v486 = vpop.f32.mrf.mxu0
    %487 = vdwg.mxu0
    %488 = vmatpush.bf16.msra.mxu0 %v416
    %489 = vmatpush.bf16.msra.mxu0 %v412
    %490 = vmatpush.bf16.msra.mxu0 %v408
    %491 = vmatpush.bf16.msra.mxu0 %v404
    %492 = vmatpush.bf16.msra.mxu0 %v400
    %493 = vmatpush.bf16.msra.mxu0 %v396
    %494 = vmatpush.bf16.msra.mxu0 %v392
    %495 = vmatpush.bf16.msra.mxu0 %v388
    %496 = vmatmul.bf16.gmra.mxu0 %v246
    %v497 = vpop.f32.mrf.mxu0
    %v498 = vadd.f32 %v284, %v497
    %v499 = vpop.f32.mrf.mxu0
    %500 = vdwg.mxu0
    %v501 = vmax.f32 %v459, 0.0
    %v502 = vmax.f32 %v472, 0.0
    %v503 = vmax.f32 %v485, 0.0
    %v504 = vmax.f32 %v498, 0.0
    %v505 = vpack.c.bf16 %v501, %v501
    %v506 = vpack.c.bf16 %v502, %v502
    %v507 = vpack.c.bf16 %v503, %v503
    %v508 = vpack.c.bf16 %v504, %v504
    %v509 = vld [vmem:[#allocation12] sm:$0xff]
    %v510 = vld [vmem:[#allocation12 + $0x8] sm:$0xff]
    %v511 = vld [vmem:[#allocation12 + $0x10] sm:$0xff]
    %v512 = vld [vmem:[#allocation12 + $0x18] sm:$0xff]
    %v513 = vld [vmem:[#allocation12 + $0x20] sm:$0xf]
    %v514 = vld [vmem:[#allocation12 + $0x24] sm:$0xff]
    %v515 = vld [vmem:[#allocation12 + $0x2c] sm:$0xff]
    %v516 = vld [vmem:[#allocation12 + $0x34] sm:$0xff]
    %v517 = vld [vmem:[#allocation12 + $0x3c] sm:$0xff]
    %v518 = vld [vmem:[#allocation12 + $0x44] sm:$0xf]
    %v519 = vld [vmem:[#allocation12 + $0x48] sm:$0xff]
    %v520 = vld [vmem:[#allocation12 + $0x50] sm:$0xff]
    %v521 = vld [vmem:[#allocation12 + $0x58] sm:$0xff]
    %v522 = vld [vmem:[#allocation12 + $0x60] sm:$0xff]
    %v523 = vld [vmem:[#allocation12 + $0x68] sm:$0xf]
    %v524 = vld [vmem:[#allocation12 + $0x6c] sm:$0xff]
    %v525 = vld [vmem:[#allocation12 + $0x74] sm:$0xff]
    %v526 = vld [vmem:[#allocation12 + $0x7c] sm:$0xff]
    %v527 = vld [vmem:[#allocation12 + $0x84] sm:$0xff]
    %v528 = vld [vmem:[#allocation12 + $0x8c] sm:$0xf]
    %v529 = vld [vmem:[#allocation12 + $0x90] sm:$0xff]
    %v530 = vld [vmem:[#allocation12 + $0x98] sm:$0xff]
    %v531 = vld [vmem:[#allocation12 + $0xa0] sm:$0xff]
    %v532 = vld [vmem:[#allocation12 + $0xa8] sm:$0xff]
    %v533 = vld [vmem:[#allocation12 + $0xb0] sm:$0xf]
    %v534 = vld [vmem:[#allocation12 + $0xb4] sm:$0xff]
    %v535 = vld [vmem:[#allocation12 + $0xbc] sm:$0xff]
    %v536 = vld [vmem:[#allocation12 + $0xc4] sm:$0xff]
    %v537 = vld [vmem:[#allocation12 + $0xcc] sm:$0xff]
    %v538 = vld [vmem:[#allocation12 + $0xd4] sm:$0xf]
    %v539 = vld [vmem:[#allocation12 + $0xd8] sm:$0xff]
    %v540 = vld [vmem:[#allocation12 + $0xe0] sm:$0xff]
    %v541 = vld [vmem:[#allocation12 + $0xe8] sm:$0xff]
    %v542 = vld [vmem:[#allocation12 + $0xf0] sm:$0xff]
    %v543 = vld [vmem:[#allocation12 + $0xf8] sm:$0xf]
    %v544 = vld [vmem:[#allocation12 + $0xfc] sm:$0xff]
    %v545 = vld [vmem:[#allocation12 + $0x104] sm:$0xff]
    %v546 = vld [vmem:[#allocation12 + $0x10c] sm:$0xff]
    %v547 = vld [vmem:[#allocation12 + $0x114] sm:$0xff]
    %v548 = vld [vmem:[#allocation12 + $0x11c] sm:$0xf]
    %v549 = vld [vmem:[#allocation12 + $0x120] sm:$0xff]
    %v550 = vld [vmem:[#allocation12 + $0x128] sm:$0xff]
    %v551 = vld [vmem:[#allocation12 + $0x130] sm:$0xff]
    %v552 = vld [vmem:[#allocation12 + $0x138] sm:$0xff]
    %v553 = vld [vmem:[#allocation12 + $0x140] sm:$0xf]
    %v554 = vld [vmem:[#allocation12 + $0x144] sm:$0xff]
    %v555 = vld [vmem:[#allocation12 + $0x14c] sm:$0xff]
    %v556 = vld [vmem:[#allocation12 + $0x154] sm:$0xff]
    %v557 = vld [vmem:[#allocation12 + $0x15c] sm:$0xff]
    %v558 = vld [vmem:[#allocation12 + $0x164] sm:$0xf]
    %v559 = vld [vmem:[#allocation12 + $0x168] sm:$0xff]
    %v560 = vld [vmem:[#allocation12 + $0x170] sm:$0xff]
    %v561 = vld [vmem:[#allocation12 + $0x178] sm:$0xff]
    %v562 = vld [vmem:[#allocation12 + $0x180] sm:$0xff]
    %v563 = vld [vmem:[#allocation12 + $0x188] sm:$0xf]
    %v564 = vld [vmem:[#allocation12 + $0x18c] sm:$0xff]
    %v565 = vld [vmem:[#allocation12 + $0x194] sm:$0xff]
    %v566 = vld [vmem:[#allocation12 + $0x19c] sm:$0xff]
    %v567 = vld [vmem:[#allocation12 + $0x1a4] sm:$0xff]
    %v568 = vld [vmem:[#allocation12 + $0x1ac] sm:$0xf]
    %v569 = vld [vmem:[#allocation12 + $0x1b0] sm:$0xff]
    %v570 = vld [vmem:[#allocation12 + $0x1b8] sm:$0xff]
    %v571 = vld [vmem:[#allocation12 + $0x1c0] sm:$0xff]
    %v572 = vld [vmem:[#allocation12 + $0x1c8] sm:$0xff]
    %v573 = vld [vmem:[#allocation12 + $0x1d0] sm:$0xf]
    %v574 = vld [vmem:[#allocation12 + $0x1d4] sm:$0xff]
    %v575 = vld [vmem:[#allocation12 + $0x1dc] sm:$0xff]
    %v576 = vld [vmem:[#allocation12 + $0x1e4] sm:$0xff]
    %v577 = vld [vmem:[#allocation12 + $0x1ec] sm:$0xff]
    %v578 = vld [vmem:[#allocation12 + $0x1f4] sm:$0xf]
    %v579 = vld [vmem:[#allocation12 + $0x1f8] sm:$0xff]
    %v580 = vld [vmem:[#allocation12 + $0x200] sm:$0xff]
    %v581 = vld [vmem:[#allocation12 + $0x208] sm:$0xff]
    %v582 = vld [vmem:[#allocation12 + $0x210] sm:$0xff]
    %v583 = vld [vmem:[#allocation12 + $0x218] sm:$0xf]
    %v584 = vld [vmem:[#allocation12 + $0x21c] sm:$0xff]
    %v585 = vld [vmem:[#allocation12 + $0x224] sm:$0xff]
    %v586 = vld [vmem:[#allocation12 + $0x22c] sm:$0xff]
    %v587 = vld [vmem:[#allocation12 + $0x234] sm:$0xff]
    %v588 = vld [vmem:[#allocation12 + $0x23c] sm:$0xf]
    %v589 = vld [vmem:[#allocation12 + $0x240] sm:$0xff]
    %v590 = vld [vmem:[#allocation12 + $0x248] sm:$0xff]
    %v591 = vld [vmem:[#allocation12 + $0x250] sm:$0xff]
    %v592 = vld [vmem:[#allocation12 + $0x258] sm:$0xff]
    %v593 = vld [vmem:[#allocation12 + $0x260] sm:$0xf]
    %v594 = vld [vmem:[#allocation12 + $0x264] sm:$0xff]
    %v595 = vld [vmem:[#allocation12 + $0x26c] sm:$0xff]
    %v596 = vld [vmem:[#allocation12 + $0x274] sm:$0xff]
    %v597 = vld [vmem:[#allocation12 + $0x27c] sm:$0xff]
    %v598 = vld [vmem:[#allocation12 + $0x284] sm:$0xf]
    %v599 = vld [vmem:[#allocation12 + $0x288] sm:$0xff]
    %v600 = vld [vmem:[#allocation12 + $0x290] sm:$0xff]
    %v601 = vld [vmem:[#allocation12 + $0x298] sm:$0xff]
    %v602 = vld [vmem:[#allocation12 + $0x2a0] sm:$0xff]
    %v603 = vld [vmem:[#allocation12 + $0x2a8] sm:$0xf]
    %v604 = vld [vmem:[#allocation12 + $0x2ac] sm:$0xff]
    %v605 = vld [vmem:[#allocation12 + $0x2b4] sm:$0xff]
    %v606 = vld [vmem:[#allocation12 + $0x2bc] sm:$0xff]
    %v607 = vld [vmem:[#allocation12 + $0x2c4] sm:$0xff]
    %v608 = vld [vmem:[#allocation12 + $0x2cc] sm:$0xf]
    %v609 = vld [vmem:[#allocation12 + $0x2d0] sm:$0xff]
    %v610 = vld [vmem:[#allocation12 + $0x2d8] sm:$0xff]
    %v611 = vld [vmem:[#allocation12 + $0x2e0] sm:$0xff]
    %v612 = vld [vmem:[#allocation12 + $0x2e8] sm:$0xff]
    %v613 = vld [vmem:[#allocation12 + $0x2f0] sm:$0xf]
    %v614 = vld [vmem:[#allocation12 + $0x2f4] sm:$0xff]
    %v615 = vld [vmem:[#allocation12 + $0x2fc] sm:$0xff]
    %v616 = vld [vmem:[#allocation12 + $0x304] sm:$0xff]
    %v617 = vld [vmem:[#allocation12 + $0x30c] sm:$0xff]
    %v618 = vld [vmem:[#allocation12 + $0x314] sm:$0xf]
    %v619 = vld [vmem:[#allocation12 + $0x318] sm:$0xff]
    %v620 = vld [vmem:[#allocation12 + $0x320] sm:$0xff]
    %v621 = vld [vmem:[#allocation12 + $0x328] sm:$0xff]
    %v622 = vld [vmem:[#allocation12 + $0x330] sm:$0xff]
    %v623 = vld [vmem:[#allocation12 + $0x338] sm:$0xf]
    %v624 = vld [vmem:[#allocation12 + $0x33c] sm:$0xff]
    %v625 = vld [vmem:[#allocation12 + $0x344] sm:$0xff]
    %v626 = vld [vmem:[#allocation12 + $0x34c] sm:$0xff]
    %v627 = vld [vmem:[#allocation12 + $0x354] sm:$0xff]
    %v628 = vld [vmem:[#allocation12 + $0x35c] sm:$0xf]
    %v629 = vld [vmem:[#allocation12 + $0x360] sm:$0xff]
    %v630 = vld [vmem:[#allocation12 + $0x368] sm:$0xff]
    %v631 = vld [vmem:[#allocation12 + $0x370] sm:$0xff]
    %v632 = vld [vmem:[#allocation12 + $0x378] sm:$0xff]
    %v633 = vld [vmem:[#allocation12 + $0x380] sm:$0xf]
    %v634 = vld [vmem:[#allocation12 + $0x384] sm:$0xff]
    %v635 = vld [vmem:[#allocation12 + $0x38c] sm:$0xff]
    %v636 = vld [vmem:[#allocation12 + $0x394] sm:$0xff]
    %v637 = vld [vmem:[#allocation12 + $0x39c] sm:$0xff]
    %v638 = vld [vmem:[#allocation12 + $0x3a4] sm:$0xf]
    %v639 = vld [vmem:[#allocation12 + $0x3a8] sm:$0xff]
    %v640 = vld [vmem:[#allocation12 + $0x3b0] sm:$0xff]
    %v641 = vld [vmem:[#allocation12 + $0x3b8] sm:$0xff]
    %v642 = vld [vmem:[#allocation12 + $0x3c0] sm:$0xff]
    %v643 = vld [vmem:[#allocation12 + $0x3c8] sm:$0xf]
    %v644 = vld [vmem:[#allocation12 + $0x3cc] sm:$0xff]
    %v645 = vld [vmem:[#allocation12 + $0x3d4] sm:$0xff]
    %v646 = vld [vmem:[#allocation12 + $0x3dc] sm:$0xff]
    %v647 = vld [vmem:[#allocation12 + $0x3e4] sm:$0xff]
    %v648 = vld [vmem:[#allocation12 + $0x3ec] sm:$0xf]
    %v649 = vld [vmem:[#allocation12 + $0x3f0] sm:$0xff]
    %v650 = vld [vmem:[#allocation12 + $0x3f8] sm:$0xff]
    %v651 = vld [vmem:[#allocation12 + $0x400] sm:$0xff]
    %v652 = vld [vmem:[#allocation12 + $0x408] sm:$0xff]
    %v653 = vld [vmem:[#allocation12 + $0x410] sm:$0xf]
    %v654 = vld [vmem:[#allocation12 + $0x414] sm:$0xff]
    %v655 = vld [vmem:[#allocation12 + $0x41c] sm:$0xff]
    %v656 = vld [vmem:[#allocation12 + $0x424] sm:$0xff]
    %v657 = vld [vmem:[#allocation12 + $0x42c] sm:$0xff]
    %v658 = vld [vmem:[#allocation12 + $0x434] sm:$0xf]
    %v659 = vld [vmem:[#allocation12 + $0x438] sm:$0xff]
    %v660 = vld [vmem:[#allocation12 + $0x440] sm:$0xff]
    %v661 = vld [vmem:[#allocation12 + $0x448] sm:$0xff]
    %v662 = vld [vmem:[#allocation12 + $0x450] sm:$0xff]
    %v663 = vld [vmem:[#allocation12 + $0x458] sm:$0xf]
    %v664 = vld [vmem:[#allocation12 + $0x45c] sm:$0xff]
    %v665 = vld [vmem:[#allocation12 + $0x464] sm:$0xff]
    %v666 = vld [vmem:[#allocation12 + $0x46c] sm:$0xff]
    %v667 = vld [vmem:[#allocation12 + $0x474] sm:$0xff]
    %v668 = vld [vmem:[#allocation12 + $0x47c] sm:$0xf]
    %v669 = vld [vmem:[#allocation12 + $0x480] sm:$0xff]
    %v670 = vld [vmem:[#allocation12 + $0x488] sm:$0xff]
    %v671 = vld [vmem:[#allocation12 + $0x490] sm:$0xff]
    %v672 = vld [vmem:[#allocation12 + $0x498] sm:$0xff]
    %v673 = vld [vmem:[#allocation12 + $0x4a0] sm:$0xf]
    %v674 = vld [vmem:[#allocation12 + $0x4a4] sm:$0xff]
    %v675 = vld [vmem:[#allocation12 + $0x4ac] sm:$0xff]
    %v676 = vld [vmem:[#allocation12 + $0x4b4] sm:$0xff]
    %v677 = vld [vmem:[#allocation12 + $0x4bc] sm:$0xff]
    %v678 = vld [vmem:[#allocation12 + $0x4c4] sm:$0xf]
    %v679 = vld [vmem:[#allocation12 + $0x4c8] sm:$0xff]
    %v680 = vld [vmem:[#allocation12 + $0x4d0] sm:$0xff]
    %v681 = vld [vmem:[#allocation12 + $0x4d8] sm:$0xff]
    %v682 = vld [vmem:[#allocation12 + $0x4e0] sm:$0xff]
    %v683 = vld [vmem:[#allocation12 + $0x4e8] sm:$0xf]
    %v684 = vld [vmem:[#allocation12 + $0x4ec] sm:$0xff]
    %v685 = vld [vmem:[#allocation12 + $0x4f4] sm:$0xff]
    %v686 = vld [vmem:[#allocation12 + $0x4fc] sm:$0xff]
    %v687 = vld [vmem:[#allocation12 + $0x504] sm:$0xff]
    %v688 = vld [vmem:[#allocation12 + $0x50c] sm:$0xf]
    %v689 = vld [vmem:[#allocation12 + $0x510] sm:$0xff]
    %v690 = vld [vmem:[#allocation12 + $0x518] sm:$0xff]
    %v691 = vld [vmem:[#allocation12 + $0x520] sm:$0xff]
    %v692 = vld [vmem:[#allocation12 + $0x528] sm:$0xff]
    %v693 = vld [vmem:[#allocation12 + $0x530] sm:$0xf]
    %v694 = vld [vmem:[#allocation12 + $0x534] sm:$0xff]
    %v695 = vld [vmem:[#allocation12 + $0x53c] sm:$0xff]
    %v696 = vld [vmem:[#allocation12 + $0x544] sm:$0xff]
    %v697 = vld [vmem:[#allocation12 + $0x54c] sm:$0xff]
    %v698 = vld [vmem:[#allocation12 + $0x554] sm:$0xf]
    %v699 = vld [vmem:[#allocation12 + $0x558] sm:$0xff]
    %v700 = vld [vmem:[#allocation12 + $0x560] sm:$0xff]
    %v701 = vld [vmem:[#allocation12 + $0x568] sm:$0xff]
    %v702 = vld [vmem:[#allocation12 + $0x570] sm:$0xff]
    %v703 = vld [vmem:[#allocation12 + $0x578] sm:$0xf]
    %v704 = vld [vmem:[#allocation12 + $0x57c] sm:$0xff]
    %v705 = vld [vmem:[#allocation12 + $0x584] sm:$0xff]
    %v706 = vld [vmem:[#allocation12 + $0x58c] sm:$0xff]
    %v707 = vld [vmem:[#allocation12 + $0x594] sm:$0xff]
    %v708 = vld [vmem:[#allocation12 + $0x59c] sm:$0xf]
    %v709 = vld [vmem:[#allocation12 + $0x5a0] sm:$0xff]
    %v710 = vld [vmem:[#allocation12 + $0x5a8] sm:$0xff]
    %v711 = vld [vmem:[#allocation12 + $0x5b0] sm:$0xff]
    %v712 = vld [vmem:[#allocation12 + $0x5b8] sm:$0xff]
    %v713 = vld [vmem:[#allocation12 + $0x5c0] sm:$0xf]
    %v714 = vld [vmem:[#allocation12 + $0x5c4] sm:$0xff]
    %v715 = vld [vmem:[#allocation12 + $0x5cc] sm:$0xff]
    %v716 = vld [vmem:[#allocation12 + $0x5d4] sm:$0xff]
    %v717 = vld [vmem:[#allocation12 + $0x5dc] sm:$0xff]
    %v718 = vld [vmem:[#allocation12 + $0x5e4] sm:$0xf]
    %v719 = vld [vmem:[#allocation12 + $0x5e8] sm:$0xff]
    %v720 = vld [vmem:[#allocation12 + $0x5f0] sm:$0xff]
    %v721 = vld [vmem:[#allocation12 + $0x5f8] sm:$0xff]
    %v722 = vld [vmem:[#allocation12 + $0x600] sm:$0xff]
    %v723 = vld [vmem:[#allocation12 + $0x608] sm:$0xf]
    %v724 = vld [vmem:[#allocation12 + $0x60c] sm:$0xff]
    %v725 = vld [vmem:[#allocation12 + $0x614] sm:$0xff]
    %v726 = vld [vmem:[#allocation12 + $0x61c] sm:$0xff]
    %v727 = vld [vmem:[#allocation12 + $0x624] sm:$0xff]
    %v728 = vld [vmem:[#allocation12 + $0x62c] sm:$0xf]
    %v729 = vld [vmem:[#allocation12 + $0x630] sm:$0xff]
    %v730 = vld [vmem:[#allocation12 + $0x638] sm:$0xff]
    %v731 = vld [vmem:[#allocation12 + $0x640] sm:$0xff]
    %v732 = vld [vmem:[#allocation12 + $0x648] sm:$0xff]
    %v733 = vld [vmem:[#allocation12 + $0x650] sm:$0xf]
    %v734 = vld [vmem:[#allocation12 + $0x654] sm:$0xff]
    %v735 = vld [vmem:[#allocation12 + $0x65c] sm:$0xff]
    %v736 = vld [vmem:[#allocation12 + $0x664] sm:$0xff]
    %v737 = vld [vmem:[#allocation12 + $0x66c] sm:$0xff]
    %v738 = vld [vmem:[#allocation12 + $0x674] sm:$0xf]
    %v739 = vld [vmem:[#allocation12 + $0x678] sm:$0xff]
    %v740 = vld [vmem:[#allocation12 + $0x680] sm:$0xff]
    %v741 = vld [vmem:[#allocation12 + $0x688] sm:$0xff]
    %v742 = vld [vmem:[#allocation12 + $0x690] sm:$0xff]
    %v743 = vld [vmem:[#allocation12 + $0x698] sm:$0xf]
    %v744 = vld [vmem:[#allocation12 + $0x69c] sm:$0xff]
    %v745 = vld [vmem:[#allocation12 + $0x6a4] sm:$0xff]
    %v746 = vld [vmem:[#allocation12 + $0x6ac] sm:$0xff]
    %v747 = vld [vmem:[#allocation12 + $0x6b4] sm:$0xff]
    %v748 = vld [vmem:[#allocation12 + $0x6bc] sm:$0xf]
    %v749 = vld [vmem:[#allocation12 + $0x6c0] sm:$0xff]
    %v750 = vld [vmem:[#allocation12 + $0x6c8] sm:$0xff]
    %v751 = vld [vmem:[#allocation12 + $0x6d0] sm:$0xff]
    %v752 = vld [vmem:[#allocation12 + $0x6d8] sm:$0xff]
    %v753 = vld [vmem:[#allocation12 + $0x6e0] sm:$0xf]
    %v754 = vld [vmem:[#allocation12 + $0x6e4] sm:$0xff]
    %v755 = vld [vmem:[#allocation12 + $0x6ec] sm:$0xff]
    %v756 = vld [vmem:[#allocation12 + $0x6f4] sm:$0xff]
    %v757 = vld [vmem:[#allocation12 + $0x6fc] sm:$0xff]
    %v758 = vld [vmem:[#allocation12 + $0x704] sm:$0xf]
    %v759 = vld [vmem:[#allocation12 + $0x708] sm:$0xff]
    %v760 = vld [vmem:[#allocation12 + $0x710] sm:$0xff]
    %v761 = vld [vmem:[#allocation12 + $0x718] sm:$0xff]
    %v762 = vld [vmem:[#allocation12 + $0x720] sm:$0xff]
    %v763 = vld [vmem:[#allocation12 + $0x728] sm:$0xf]
    %v764 = vld [vmem:[#allocation12 + $0x72c] sm:$0xff]
    %v765 = vld [vmem:[#allocation12 + $0x734] sm:$0xff]
    %v766 = vld [vmem:[#allocation12 + $0x73c] sm:$0xff]
    %v767 = vld [vmem:[#allocation12 + $0x744] sm:$0xff]
    %v768 = vld [vmem:[#allocation12 + $0x74c] sm:$0xf]
    %v769 = vld [vmem:[#allocation12 + $0x750] sm:$0xff]
    %v770 = vld [vmem:[#allocation12 + $0x758] sm:$0xff]
    %v771 = vld [vmem:[#allocation12 + $0x760] sm:$0xff]
    %v772 = vld [vmem:[#allocation12 + $0x768] sm:$0xff]
    %v773 = vld [vmem:[#allocation12 + $0x770] sm:$0xf]
    %v774 = vld [vmem:[#allocation12 + $0x774] sm:$0xff]
    %v775 = vld [vmem:[#allocation12 + $0x77c] sm:$0xff]
    %v776 = vld [vmem:[#allocation12 + $0x784] sm:$0xff]
    %v777 = vld [vmem:[#allocation12 + $0x78c] sm:$0xff]
    %v778 = vld [vmem:[#allocation12 + $0x794] sm:$0xf]
    %v779 = vld [vmem:[#allocation12 + $0x798] sm:$0xff]
    %v780 = vld [vmem:[#allocation12 + $0x7a0] sm:$0xff]
    %v781 = vld [vmem:[#allocation12 + $0x7a8] sm:$0xff]
    %v782 = vld [vmem:[#allocation12 + $0x7b0] sm:$0xff]
    %v783 = vld [vmem:[#allocation12 + $0x7b8] sm:$0xf]
    %v784 = vld [vmem:[#allocation12 + $0x7bc] sm:$0xff]
    %v785 = vld [vmem:[#allocation12 + $0x7c4] sm:$0xff]
    %v786 = vld [vmem:[#allocation12 + $0x7cc] sm:$0xff]
    %v787 = vld [vmem:[#allocation12 + $0x7d4] sm:$0xff]
    %v788 = vld [vmem:[#allocation12 + $0x7dc] sm:$0xf]
    %v789 = vld [vmem:[#allocation12 + $0x7e0] sm:$0xff]
    %v790 = vld [vmem:[#allocation12 + $0x7e8] sm:$0xff]
    %v791 = vld [vmem:[#allocation12 + $0x7f0] sm:$0xff]
    %v792 = vld [vmem:[#allocation12 + $0x7f8] sm:$0xff]
    %v793 = vld [vmem:[#allocation12 + $0x800] sm:$0xf]
    %v794 = vld [vmem:[#allocation12 + $0x804] sm:$0xff]
    %v795 = vld [vmem:[#allocation12 + $0x80c] sm:$0xff]
    %v796 = vld [vmem:[#allocation12 + $0x814] sm:$0xff]
    %v797 = vld [vmem:[#allocation12 + $0x81c] sm:$0xff]
    %v798 = vld [vmem:[#allocation12 + $0x824] sm:$0xf]
    %v799 = vld [vmem:[#allocation12 + $0x828] sm:$0xff]
    %v800 = vld [vmem:[#allocation12 + $0x830] sm:$0xff]
    %v801 = vld [vmem:[#allocation12 + $0x838] sm:$0xff]
    %v802 = vld [vmem:[#allocation12 + $0x840] sm:$0xff]
    %v803 = vld [vmem:[#allocation12 + $0x848] sm:$0xf]
    %v804 = vld [vmem:[#allocation12 + $0x84c] sm:$0xff]
    %v805 = vld [vmem:[#allocation12 + $0x854] sm:$0xff]
    %v806 = vld [vmem:[#allocation12 + $0x85c] sm:$0xff]
    %v807 = vld [vmem:[#allocation12 + $0x864] sm:$0xff]
    %v808 = vld [vmem:[#allocation12 + $0x86c] sm:$0xf]
    %v809 = vld [vmem:[#allocation12 + $0x870] sm:$0xff]
    %v810 = vld [vmem:[#allocation12 + $0x878] sm:$0xff]
    %v811 = vld [vmem:[#allocation12 + $0x880] sm:$0xff]
    %v812 = vld [vmem:[#allocation12 + $0x888] sm:$0xff]
    %v813 = vld [vmem:[#allocation12 + $0x890] sm:$0xf]
    %v814 = vld [vmem:[#allocation12 + $0x894] sm:$0xff]
    %v815 = vld [vmem:[#allocation12 + $0x89c] sm:$0xff]
    %v816 = vld [vmem:[#allocation12 + $0x8a4] sm:$0xff]
    %v817 = vld [vmem:[#allocation12 + $0x8ac] sm:$0xff]
    %v818 = vld [vmem:[#allocation12 + $0x8b4] sm:$0xf]
    %v819 = vld [vmem:[#allocation12 + $0x8b8] sm:$0xff]
    %v820 = vld [vmem:[#allocation12 + $0x8c0] sm:$0xff]
    %v821 = vld [vmem:[#allocation12 + $0x8c8] sm:$0xff]
    %v822 = vld [vmem:[#allocation12 + $0x8d0] sm:$0xff]
    %v823 = vld [vmem:[#allocation12 + $0x8d8] sm:$0xf]
    %v824 = vld [vmem:[#allocation12 + $0x8dc] sm:$0xff]
    %v825 = vld [vmem:[#allocation12 + $0x8e4] sm:$0xff]
    %v826 = vld [vmem:[#allocation12 + $0x8ec] sm:$0xff]
    %v827 = vld [vmem:[#allocation12 + $0x8f4] sm:$0xff]
    %v828 = vld [vmem:[#allocation12 + $0x8fc] sm:$0xf]
    %v829 = vld [vmem:[#allocation13] sm:$0xff]
    %v830 = vld [vmem:[#allocation13 + $0x8] sm:$0x1]
    %v833 = vperm.slane %v829, 0
    %v834 = vperm.slane %v829, 1
    %v835 = vperm.slane %v829, 2
    %v836 = vperm.slane %v829, 3
    %v837 = vperm.slane %v829, 4
    %v838 = vperm.slane %v829, 5
    %v839 = vperm.slane %v829, 6
    %v840 = vperm.slane %v829, 7
    %v841 = vperm.slane %v830, 0
    %v1171 = vunpack.c.l.b16 %v509
    %v1172 = vunpack.c.h.b16 %v509
    %v1173 = vunpack.c.l.b16 %v510
    %v1174 = vunpack.c.h.b16 %v510
    %v1175 = vunpack.c.l.b16 %v511
    %v1176 = vunpack.c.h.b16 %v511
    %v1177 = vunpack.c.l.b16 %v512
    %v1178 = vunpack.c.h.b16 %v512
    %v1179 = vunpack.c.l.b16 %v513
    %v1180 = vunpack.c.l.b16 %v514
    %v1181 = vunpack.c.h.b16 %v514
    %v1182 = vunpack.c.l.b16 %v515
    %v1183 = vunpack.c.h.b16 %v515
    %v1184 = vunpack.c.l.b16 %v516
    %v1185 = vunpack.c.h.b16 %v516
    %v1186 = vunpack.c.l.b16 %v517
    %v1187 = vunpack.c.h.b16 %v517
    %v1188 = vunpack.c.l.b16 %v518
    %v1189 = vunpack.c.l.b16 %v519
    %v1190 = vunpack.c.h.b16 %v519
    %v1191 = vunpack.c.l.b16 %v520
    %v1192 = vunpack.c.h.b16 %v520
    %v1193 = vunpack.c.l.b16 %v521
    %v1194 = vunpack.c.h.b16 %v521
    %v1195 = vunpack.c.l.b16 %v522
    %v1196 = vunpack.c.h.b16 %v522
    %v1197 = vunpack.c.l.b16 %v523
    %v1198 = vunpack.c.l.b16 %v524
    %v1199 = vunpack.c.h.b16 %v524
    %v1200 = vunpack.c.l.b16 %v525
    %v1201 = vunpack.c.h.b16 %v525
    %v1202 = vunpack.c.l.b16 %v526
    %v1203 = vunpack.c.h.b16 %v526
    %v1204 = vunpack.c.l.b16 %v527
    %v1205 = vunpack.c.h.b16 %v527
    %v1206 = vunpack.c.l.b16 %v528
    %v1207 = vunpack.c.l.b16 %v529
    %v1208 = vunpack.c.h.b16 %v529
    %v1209 = vunpack.c.l.b16 %v530
    %v1210 = vunpack.c.h.b16 %v530
    %v1211 = vunpack.c.l.b16 %v531
    %v1212 = vunpack.c.h.b16 %v531
    %v1213 = vunpack.c.l.b16 %v532
    %v1214 = vunpack.c.h.b16 %v532
    %v1215 = vunpack.c.l.b16 %v533
    %v1216 = vunpack.c.l.b16 %v534
    %v1217 = vunpack.c.h.b16 %v534
    %v1218 = vunpack.c.l.b16 %v535
    %v1219 = vunpack.c.h.b16 %v535
    %v1220 = vunpack.c.l.b16 %v536
    %v1221 = vunpack.c.h.b16 %v536
    %v1222 = vunpack.c.l.b16 %v537
    %v1223 = vunpack.c.h.b16 %v537
    %v1224 = vunpack.c.l.b16 %v538
    %v1225 = vunpack.c.l.b16 %v539
    %v1226 = vunpack.c.h.b16 %v539
    %v1227 = vunpack.c.l.b16 %v540
    %v1228 = vunpack.c.h.b16 %v540
    %v1229 = vunpack.c.l.b16 %v541
    %v1230 = vunpack.c.h.b16 %v541
    %v1231 = vunpack.c.l.b16 %v542
    %v1232 = vunpack.c.h.b16 %v542
    %v1233 = vunpack.c.l.b16 %v543
    %v1234 = vunpack.c.l.b16 %v544
    %v1235 = vunpack.c.h.b16 %v544
    %v1236 = vunpack.c.l.b16 %v545
    %v1237 = vunpack.c.h.b16 %v545
    %v1238 = vunpack.c.l.b16 %v546
    %v1239 = vunpack.c.h.b16 %v546
    %v1240 = vunpack.c.l.b16 %v547
    %v1241 = vunpack.c.h.b16 %v547
    %v1242 = vunpack.c.l.b16 %v548
    %v1243 = vunpack.c.l.b16 %v549
    %v1244 = vunpack.c.h.b16 %v549
    %v1245 = vunpack.c.l.b16 %v550
    %v1246 = vunpack.c.h.b16 %v550
    %v1247 = vunpack.c.l.b16 %v551
    %v1248 = vunpack.c.h.b16 %v551
    %v1249 = vunpack.c.l.b16 %v552
    %v1250 = vunpack.c.h.b16 %v552
    %v1251 = vunpack.c.l.b16 %v553
    %v1252 = vunpack.c.l.b16 %v554
    %v1253 = vunpack.c.h.b16 %v554
    %v1254 = vunpack.c.l.b16 %v555
    %v1255 = vunpack.c.h.b16 %v555
    %v1256 = vunpack.c.l.b16 %v556
    %v1257 = vunpack.c.h.b16 %v556
    %v1258 = vunpack.c.l.b16 %v557
    %v1259 = vunpack.c.h.b16 %v557
    %v1260 = vunpack.c.l.b16 %v558
    %v1261 = vunpack.c.l.b16 %v559
    %v1262 = vunpack.c.h.b16 %v559
    %v1263 = vunpack.c.l.b16 %v560
    %v1264 = vunpack.c.h.b16 %v560
    %v1265 = vunpack.c.l.b16 %v561
    %v1266 = vunpack.c.h.b16 %v561
    %v1267 = vunpack.c.l.b16 %v562
    %v1268 = vunpack.c.h.b16 %v562
    %v1269 = vunpack.c.l.b16 %v563
    %v1270 = vunpack.c.l.b16 %v564
    %v1271 = vunpack.c.h.b16 %v564
    %v1272 = vunpack.c.l.b16 %v565
    %v1273 = vunpack.c.h.b16 %v565
    %v1274 = vunpack.c.l.b16 %v566
    %v1275 = vunpack.c.h.b16 %v566
    %v1276 = vunpack.c.l.b16 %v567
    %v1277 = vunpack.c.h.b16 %v567
    %v1278 = vunpack.c.l.b16 %v568
    %v1279 = vunpack.c.l.b16 %v569
    %v1280 = vunpack.c.h.b16 %v569
    %v1281 = vunpack.c.l.b16 %v570
    %v1282 = vunpack.c.h.b16 %v570
    %v1283 = vunpack.c.l.b16 %v571
    %v1284 = vunpack.c.h.b16 %v571
    %v1285 = vunpack.c.l.b16 %v572
    %v1286 = vunpack.c.h.b16 %v572
    %v1287 = vunpack.c.l.b16 %v573
    %v1288 = vunpack.c.l.b16 %v574
    %v1289 = vunpack.c.h.b16 %v574
    %v1290 = vunpack.c.l.b16 %v575
    %v1291 = vunpack.c.h.b16 %v575
    %v1292 = vunpack.c.l.b16 %v576
    %v1293 = vunpack.c.h.b16 %v576
    %v1294 = vunpack.c.l.b16 %v577
    %v1295 = vunpack.c.h.b16 %v577
    %v1296 = vunpack.c.l.b16 %v578
    %v1297 = vunpack.c.l.b16 %v579
    %v1298 = vunpack.c.h.b16 %v579
    %v1299 = vunpack.c.l.b16 %v580
    %v1300 = vunpack.c.h.b16 %v580
    %v1301 = vunpack.c.l.b16 %v581
    %v1302 = vunpack.c.h.b16 %v581
    %v1303 = vunpack.c.l.b16 %v582
    %v1304 = vunpack.c.h.b16 %v582
    %v1305 = vunpack.c.l.b16 %v583
    %v1306 = vunpack.c.l.b16 %v584
    %v1307 = vunpack.c.h.b16 %v584
    %v1308 = vunpack.c.l.b16 %v585
    %v1309 = vunpack.c.h.b16 %v585
    %v1310 = vunpack.c.l.b16 %v586
    %v1311 = vunpack.c.h.b16 %v586
    %v1312 = vunpack.c.l.b16 %v587
    %v1313 = vunpack.c.h.b16 %v587
    %v1314 = vunpack.c.l.b16 %v588
    %v1315 = vunpack.c.l.b16 %v589
    %v1316 = vunpack.c.h.b16 %v589
    %v1317 = vunpack.c.l.b16 %v590
    %v1318 = vunpack.c.h.b16 %v590
    %v1319 = vunpack.c.l.b16 %v591
    %v1320 = vunpack.c.h.b16 %v591
    %v1321 = vunpack.c.l.b16 %v592
    %v1322 = vunpack.c.h.b16 %v592
    %v1323 = vunpack.c.l.b16 %v593
    %v1324 = vunpack.c.l.b16 %v594
    %v1325 = vunpack.c.h.b16 %v594
    %v1326 = vunpack.c.l.b16 %v595
    %v1327 = vunpack.c.h.b16 %v595
    %v1328 = vunpack.c.l.b16 %v596
    %v1329 = vunpack.c.h.b16 %v596
    %v1330 = vunpack.c.l.b16 %v597
    %v1331 = vunpack.c.h.b16 %v597
    %v1332 = vunpack.c.l.b16 %v598
    %v1333 = vunpack.c.l.b16 %v599
    %v1334 = vunpack.c.h.b16 %v599
    %v1335 = vunpack.c.l.b16 %v600
    %v1336 = vunpack.c.h.b16 %v600
    %v1337 = vunpack.c.l.b16 %v601
    %v1338 = vunpack.c.h.b16 %v601
    %v1339 = vunpack.c.l.b16 %v602
    %v1340 = vunpack.c.h.b16 %v602
    %v1341 = vunpack.c.l.b16 %v603
    %v1342 = vunpack.c.l.b16 %v604
    %v1343 = vunpack.c.h.b16 %v604
    %v1344 = vunpack.c.l.b16 %v605
    %v1345 = vunpack.c.h.b16 %v605
    %v1346 = vunpack.c.l.b16 %v606
    %v1347 = vunpack.c.h.b16 %v606
    %v1348 = vunpack.c.l.b16 %v607
    %v1349 = vunpack.c.h.b16 %v607
    %v1350 = vunpack.c.l.b16 %v608
    %v1351 = vunpack.c.l.b16 %v609
    %v1352 = vunpack.c.h.b16 %v609
    %v1353 = vunpack.c.l.b16 %v610
    %v1354 = vunpack.c.h.b16 %v610
    %v1355 = vunpack.c.l.b16 %v611
    %v1356 = vunpack.c.h.b16 %v611
    %v1357 = vunpack.c.l.b16 %v612
    %v1358 = vunpack.c.h.b16 %v612
    %v1359 = vunpack.c.l.b16 %v613
    %v1360 = vunpack.c.l.b16 %v614
    %v1361 = vunpack.c.h.b16 %v614
    %v1362 = vunpack.c.l.b16 %v615
    %v1363 = vunpack.c.h.b16 %v615
    %v1364 = vunpack.c.l.b16 %v616
    %v1365 = vunpack.c.h.b16 %v616
    %v1366 = vunpack.c.l.b16 %v617
    %v1367 = vunpack.c.h.b16 %v617
    %v1368 = vunpack.c.l.b16 %v618
    %v1369 = vunpack.c.l.b16 %v619
    %v1370 = vunpack.c.h.b16 %v619
    %v1371 = vunpack.c.l.b16 %v620
    %v1372 = vunpack.c.h.b16 %v620
    %v1373 = vunpack.c.l.b16 %v621
    %v1374 = vunpack.c.h.b16 %v621
    %v1375 = vunpack.c.l.b16 %v622
    %v1376 = vunpack.c.h.b16 %v622
    %v1377 = vunpack.c.l.b16 %v623
    %v1378 = vunpack.c.l.b16 %v624
    %v1379 = vunpack.c.h.b16 %v624
    %v1380 = vunpack.c.l.b16 %v625
    %v1381 = vunpack.c.h.b16 %v625
    %v1382 = vunpack.c.l.b16 %v626
    %v1383 = vunpack.c.h.b16 %v626
    %v1384 = vunpack.c.l.b16 %v627
    %v1385 = vunpack.c.h.b16 %v627
    %v1386 = vunpack.c.l.b16 %v628
    %v1387 = vunpack.c.l.b16 %v629
    %v1388 = vunpack.c.h.b16 %v629
    %v1389 = vunpack.c.l.b16 %v630
    %v1390 = vunpack.c.h.b16 %v630
    %v1391 = vunpack.c.l.b16 %v631
    %v1392 = vunpack.c.h.b16 %v631
    %v1393 = vunpack.c.l.b16 %v632
    %v1394 = vunpack.c.h.b16 %v632
    %v1395 = vunpack.c.l.b16 %v633
    %v1396 = vunpack.c.l.b16 %v634
    %v1397 = vunpack.c.h.b16 %v634
    %v1398 = vunpack.c.l.b16 %v635
    %v1399 = vunpack.c.h.b16 %v635
    %v1400 = vunpack.c.l.b16 %v636
    %v1401 = vunpack.c.h.b16 %v636
    %v1402 = vunpack.c.l.b16 %v637
    %v1403 = vunpack.c.h.b16 %v637
    %v1404 = vunpack.c.l.b16 %v638
    %v1405 = vunpack.c.l.b16 %v639
    %v1406 = vunpack.c.h.b16 %v639
    %v1407 = vunpack.c.l.b16 %v640
    %v1408 = vunpack.c.h.b16 %v640
    %v1409 = vunpack.c.l.b16 %v641
    %v1410 = vunpack.c.h.b16 %v641
    %v1411 = vunpack.c.l.b16 %v642
    %v1412 = vunpack.c.h.b16 %v642
    %v1413 = vunpack.c.l.b16 %v643
    %v1414 = vunpack.c.l.b16 %v644
    %v1415 = vunpack.c.h.b16 %v644
    %v1416 = vunpack.c.l.b16 %v645
    %v1417 = vunpack.c.h.b16 %v645
    %v1418 = vunpack.c.l.b16 %v646
    %v1419 = vunpack.c.h.b16 %v646
    %v1420 = vunpack.c.l.b16 %v647
    %v1421 = vunpack.c.h.b16 %v647
    %v1422 = vunpack.c.l.b16 %v648
    %v1423 = vunpack.c.l.b16 %v649
    %v1424 = vunpack.c.h.b16 %v649
    %v1425 = vunpack.c.l.b16 %v650
    %v1426 = vunpack.c.h.b16 %v650
    %v1427 = vunpack.c.l.b16 %v651
    %v1428 = vunpack.c.h.b16 %v651
    %v1429 = vunpack.c.l.b16 %v652
    %v1430 = vunpack.c.h.b16 %v652
    %v1431 = vunpack.c.l.b16 %v653
    %v1432 = vunpack.c.l.b16 %v654
    %v1433 = vunpack.c.h.b16 %v654
    %v1434 = vunpack.c.l.b16 %v655
    %v1435 = vunpack.c.h.b16 %v655
    %v1436 = vunpack.c.l.b16 %v656
    %v1437 = vunpack.c.h.b16 %v656
    %v1438 = vunpack.c.l.b16 %v657
    %v1439 = vunpack.c.h.b16 %v657
    %v1440 = vunpack.c.l.b16 %v658
    %v1441 = vunpack.c.l.b16 %v659
    %v1442 = vunpack.c.h.b16 %v659
    %v1443 = vunpack.c.l.b16 %v660
    %v1444 = vunpack.c.h.b16 %v660
    %v1445 = vunpack.c.l.b16 %v661
    %v1446 = vunpack.c.h.b16 %v661
    %v1447 = vunpack.c.l.b16 %v662
    %v1448 = vunpack.c.h.b16 %v662
    %v1449 = vunpack.c.l.b16 %v663
    %v1450 = vunpack.c.l.b16 %v664
    %v1451 = vunpack.c.h.b16 %v664
    %v1452 = vunpack.c.l.b16 %v665
    %v1453 = vunpack.c.h.b16 %v665
    %v1454 = vunpack.c.l.b16 %v666
    %v1455 = vunpack.c.h.b16 %v666
    %v1456 = vunpack.c.l.b16 %v667
    %v1457 = vunpack.c.h.b16 %v667
    %v1458 = vunpack.c.l.b16 %v668
    %v1459 = vunpack.c.l.b16 %v669
    %v1460 = vunpack.c.h.b16 %v669
    %v1461 = vunpack.c.l.b16 %v670
    %v1462 = vunpack.c.h.b16 %v670
    %v1463 = vunpack.c.l.b16 %v671
    %v1464 = vunpack.c.h.b16 %v671
    %v1465 = vunpack.c.l.b16 %v672
    %v1466 = vunpack.c.h.b16 %v672
    %v1467 = vunpack.c.l.b16 %v673
    %v1468 = vunpack.c.l.b16 %v674
    %v1469 = vunpack.c.h.b16 %v674
    %v1470 = vunpack.c.l.b16 %v675
    %v1471 = vunpack.c.h.b16 %v675
    %v1472 = vunpack.c.l.b16 %v676
    %v1473 = vunpack.c.h.b16 %v676
    %v1474 = vunpack.c.l.b16 %v677
    %v1475 = vunpack.c.h.b16 %v677
    %v1476 = vunpack.c.l.b16 %v678
    %v1477 = vunpack.c.l.b16 %v679
    %v1478 = vunpack.c.h.b16 %v679
    %v1479 = vunpack.c.l.b16 %v680
    %v1480 = vunpack.c.h.b16 %v680
    %v1481 = vunpack.c.l.b16 %v681
    %v1482 = vunpack.c.h.b16 %v681
    %v1483 = vunpack.c.l.b16 %v682
    %v1484 = vunpack.c.h.b16 %v682
    %v1485 = vunpack.c.l.b16 %v683
    %v1486 = vunpack.c.l.b16 %v684
    %v1487 = vunpack.c.h.b16 %v684
    %v1488 = vunpack.c.l.b16 %v685
    %v1489 = vunpack.c.h.b16 %v685
    %v1490 = vunpack.c.l.b16 %v686
    %v1491 = vunpack.c.h.b16 %v686
    %v1492 = vunpack.c.l.b16 %v687
    %v1493 = vunpack.c.h.b16 %v687
    %v1494 = vunpack.c.l.b16 %v688
    %v1495 = vunpack.c.l.b16 %v689
    %v1496 = vunpack.c.h.b16 %v689
    %v1497 = vunpack.c.l.b16 %v690
    %v1498 = vunpack.c.h.b16 %v690
    %v1499 = vunpack.c.l.b16 %v691
    %v1500 = vunpack.c.h.b16 %v691
    %v1501 = vunpack.c.l.b16 %v692
    %v1502 = vunpack.c.h.b16 %v692
    %v1503 = vunpack.c.l.b16 %v693
    %v1504 = vunpack.c.l.b16 %v694
    %v1505 = vunpack.c.h.b16 %v694
    %v1506 = vunpack.c.l.b16 %v695
    %v1507 = vunpack.c.h.b16 %v695
    %v1508 = vunpack.c.l.b16 %v696
    %v1509 = vunpack.c.h.b16 %v696
    %v1510 = vunpack.c.l.b16 %v697
    %v1511 = vunpack.c.h.b16 %v697
    %v1512 = vunpack.c.l.b16 %v698
    %v1513 = vunpack.c.l.b16 %v699
    %v1514 = vunpack.c.h.b16 %v699
    %v1515 = vunpack.c.l.b16 %v700
    %v1516 = vunpack.c.h.b16 %v700
    %v1517 = vunpack.c.l.b16 %v701
    %v1518 = vunpack.c.h.b16 %v701
    %v1519 = vunpack.c.l.b16 %v702
    %v1520 = vunpack.c.h.b16 %v702
    %v1521 = vunpack.c.l.b16 %v703
    %v1522 = vunpack.c.l.b16 %v704
    %v1523 = vunpack.c.h.b16 %v704
    %v1524 = vunpack.c.l.b16 %v705
    %v1525 = vunpack.c.h.b16 %v705
    %v1526 = vunpack.c.l.b16 %v706
    %v1527 = vunpack.c.h.b16 %v706
    %v1528 = vunpack.c.l.b16 %v707
    %v1529 = vunpack.c.h.b16 %v707
    %v1530 = vunpack.c.l.b16 %v708
    %v1531 = vunpack.c.l.b16 %v709
    %v1532 = vunpack.c.h.b16 %v709
    %v1533 = vunpack.c.l.b16 %v710
    %v1534 = vunpack.c.h.b16 %v710
    %v1535 = vunpack.c.l.b16 %v711
    %v1536 = vunpack.c.h.b16 %v711
    %v1537 = vunpack.c.l.b16 %v712
    %v1538 = vunpack.c.h.b16 %v712
    %v1539 = vunpack.c.l.b16 %v713
    %v1540 = vunpack.c.l.b16 %v714
    %v1541 = vunpack.c.h.b16 %v714
    %v1542 = vunpack.c.l.b16 %v715
    %v1543 = vunpack.c.h.b16 %v715
    %v1544 = vunpack.c.l.b16 %v716
    %v1545 = vunpack.c.h.b16 %v716
    %v1546 = vunpack.c.l.b16 %v717
    %v1547 = vunpack.c.h.b16 %v717
    %v1548 = vunpack.c.l.b16 %v718
    %v1549 = vunpack.c.l.b16 %v719
    %v1550 = vunpack.c.h.b16 %v719
    %v1551 = vunpack.c.l.b16 %v720
    %v1552 = vunpack.c.h.b16 %v720
    %v1553 = vunpack.c.l.b16 %v721
    %v1554 = vunpack.c.h.b16 %v721
    %v1555 = vunpack.c.l.b16 %v722
    %v1556 = vunpack.c.h.b16 %v722
    %v1557 = vunpack.c.l.b16 %v723
    %v1558 = vunpack.c.l.b16 %v724
    %v1559 = vunpack.c.h.b16 %v724
    %v1560 = vunpack.c.l.b16 %v725
    %v1561 = vunpack.c.h.b16 %v725
    %v1562 = vunpack.c.l.b16 %v726
    %v1563 = vunpack.c.h.b16 %v726
    %v1564 = vunpack.c.l.b16 %v727
    %v1565 = vunpack.c.h.b16 %v727
    %v1566 = vunpack.c.l.b16 %v728
    %v1567 = vunpack.c.l.b16 %v729
    %v1568 = vunpack.c.h.b16 %v729
    %v1569 = vunpack.c.l.b16 %v730
    %v1570 = vunpack.c.h.b16 %v730
    %v1571 = vunpack.c.l.b16 %v731
    %v1572 = vunpack.c.h.b16 %v731
    %v1573 = vunpack.c.l.b16 %v732
    %v1574 = vunpack.c.h.b16 %v732
    %v1575 = vunpack.c.l.b16 %v733
    %v1576 = vunpack.c.l.b16 %v734
    %v1577 = vunpack.c.h.b16 %v734
    %v1578 = vunpack.c.l.b16 %v735
    %v1579 = vunpack.c.h.b16 %v735
    %v1580 = vunpack.c.l.b16 %v736
    %v1581 = vunpack.c.h.b16 %v736
    %v1582 = vunpack.c.l.b16 %v737
    %v1583 = vunpack.c.h.b16 %v737
    %v1584 = vunpack.c.l.b16 %v738
    %v1585 = vunpack.c.l.b16 %v739
    %v1586 = vunpack.c.h.b16 %v739
    %v1587 = vunpack.c.l.b16 %v740
    %v1588 = vunpack.c.h.b16 %v740
    %v1589 = vunpack.c.l.b16 %v741
    %v1590 = vunpack.c.h.b16 %v741
    %v1591 = vunpack.c.l.b16 %v742
    %v1592 = vunpack.c.h.b16 %v742
    %v1593 = vunpack.c.l.b16 %v743
    %v1594 = vunpack.c.l.b16 %v744
    %v1595 = vunpack.c.h.b16 %v744
    %v1596 = vunpack.c.l.b16 %v745
    %v1597 = vunpack.c.h.b16 %v745
    %v1598 = vunpack.c.l.b16 %v746
    %v1599 = vunpack.c.h.b16 %v746
    %v1600 = vunpack.c.l.b16 %v747
    %v1601 = vunpack.c.h.b16 %v747
    %v1602 = vunpack.c.l.b16 %v748
    %v1603 = vunpack.c.l.b16 %v749
    %v1604 = vunpack.c.h.b16 %v749
    %v1605 = vunpack.c.l.b16 %v750
    %v1606 = vunpack.c.h.b16 %v750
    %v1607 = vunpack.c.l.b16 %v751
    %v1608 = vunpack.c.h.b16 %v751
    %v1609 = vunpack.c.l.b16 %v752
    %v1610 = vunpack.c.h.b16 %v752
    %v1611 = vunpack.c.l.b16 %v753
    %v1612 = vunpack.c.l.b16 %v754
    %v1613 = vunpack.c.h.b16 %v754
    %v1614 = vunpack.c.l.b16 %v755
    %v1615 = vunpack.c.h.b16 %v755
    %v1616 = vunpack.c.l.b16 %v756
    %v1617 = vunpack.c.h.b16 %v756
    %v1618 = vunpack.c.l.b16 %v757
    %v1619 = vunpack.c.h.b16 %v757
    %v1620 = vunpack.c.l.b16 %v758
    %v1621 = vunpack.c.l.b16 %v759
    %v1622 = vunpack.c.h.b16 %v759
    %v1623 = vunpack.c.l.b16 %v760
    %v1624 = vunpack.c.h.b16 %v760
    %v1625 = vunpack.c.l.b16 %v761
    %v1626 = vunpack.c.h.b16 %v761
    %v1627 = vunpack.c.l.b16 %v762
    %v1628 = vunpack.c.h.b16 %v762
    %v1629 = vunpack.c.l.b16 %v763
    %v1630 = vunpack.c.l.b16 %v764
    %v1631 = vunpack.c.h.b16 %v764
    %v1632 = vunpack.c.l.b16 %v765
    %v1633 = vunpack.c.h.b16 %v765
    %v1634 = vunpack.c.l.b16 %v766
    %v1635 = vunpack.c.h.b16 %v766
    %v1636 = vunpack.c.l.b16 %v767
    %v1637 = vunpack.c.h.b16 %v767
    %v1638 = vunpack.c.l.b16 %v768
    %v1639 = vunpack.c.l.b16 %v769
    %v1640 = vunpack.c.h.b16 %v769
    %v1641 = vunpack.c.l.b16 %v770
    %v1642 = vunpack.c.h.b16 %v770
    %v1643 = vunpack.c.l.b16 %v771
    %v1644 = vunpack.c.h.b16 %v771
    %v1645 = vunpack.c.l.b16 %v772
    %v1646 = vunpack.c.h.b16 %v772
    %v1647 = vunpack.c.l.b16 %v773
    %v1648 = vunpack.c.l.b16 %v774
    %v1649 = vunpack.c.h.b16 %v774
    %v1650 = vunpack.c.l.b16 %v775
    %v1651 = vunpack.c.h.b16 %v775
    %v1652 = vunpack.c.l.b16 %v776
    %v1653 = vunpack.c.h.b16 %v776
    %v1654 = vunpack.c.l.b16 %v777
    %v1655 = vunpack.c.h.b16 %v777
    %v1656 = vunpack.c.l.b16 %v778
    %v1657 = vunpack.c.l.b16 %v779
    %v1658 = vunpack.c.h.b16 %v779
    %v1659 = vunpack.c.l.b16 %v780
    %v1660 = vunpack.c.h.b16 %v780
    %v1661 = vunpack.c.l.b16 %v781
    %v1662 = vunpack.c.h.b16 %v781
    %v1663 = vunpack.c.l.b16 %v782
    %v1664 = vunpack.c.h.b16 %v782
    %v1665 = vunpack.c.l.b16 %v783
    %v1666 = vunpack.c.l.b16 %v784
    %v1667 = vunpack.c.h.b16 %v784
    %v1668 = vunpack.c.l.b16 %v785
    %v1669 = vunpack.c.h.b16 %v785
    %v1670 = vunpack.c.l.b16 %v786
    %v1671 = vunpack.c.h.b16 %v786
    %v1672 = vunpack.c.l.b16 %v787
    %v1673 = vunpack.c.h.b16 %v787
    %v1674 = vunpack.c.l.b16 %v788
    %v1675 = vunpack.c.l.b16 %v789
    %v1676 = vunpack.c.h.b16 %v789
    %v1677 = vunpack.c.l.b16 %v790
    %v1678 = vunpack.c.h.b16 %v790
    %v1679 = vunpack.c.l.b16 %v791
    %v1680 = vunpack.c.h.b16 %v791
    %v1681 = vunpack.c.l.b16 %v792
    %v1682 = vunpack.c.h.b16 %v792
    %v1683 = vunpack.c.l.b16 %v793
    %v1684 = vunpack.c.l.b16 %v794
    %v1685 = vunpack.c.h.b16 %v794
    %v1686 = vunpack.c.l.b16 %v795
    %v1687 = vunpack.c.h.b16 %v795
    %v1688 = vunpack.c.l.b16 %v796
    %v1689 = vunpack.c.h.b16 %v796
    %v1690 = vunpack.c.l.b16 %v797
    %v1691 = vunpack.c.h.b16 %v797
    %v1692 = vunpack.c.l.b16 %v798
    %v1693 = vunpack.c.l.b16 %v799
    %v1694 = vunpack.c.h.b16 %v799
    %v1695 = vunpack.c.l.b16 %v800
    %v1696 = vunpack.c.h.b16 %v800
    %v1697 = vunpack.c.l.b16 %v801
    %v1698 = vunpack.c.h.b16 %v801
    %v1699 = vunpack.c.l.b16 %v802
    %v1700 = vunpack.c.h.b16 %v802
    %v1701 = vunpack.c.l.b16 %v803
    %v1702 = vunpack.c.l.b16 %v804
    %v1703 = vunpack.c.h.b16 %v804
    %v1704 = vunpack.c.l.b16 %v805
    %v1705 = vunpack.c.h.b16 %v805
    %v1706 = vunpack.c.l.b16 %v806
    %v1707 = vunpack.c.h.b16 %v806
    %v1708 = vunpack.c.l.b16 %v807
    %v1709 = vunpack.c.h.b16 %v807
    %v1710 = vunpack.c.l.b16 %v808
    %v1711 = vunpack.c.l.b16 %v809
    %v1712 = vunpack.c.h.b16 %v809
    %v1713 = vunpack.c.l.b16 %v810
    %v1714 = vunpack.c.h.b16 %v810
    %v1715 = vunpack.c.l.b16 %v811
    %v1716 = vunpack.c.h.b16 %v811
    %v1717 = vunpack.c.l.b16 %v812
    %v1718 = vunpack.c.h.b16 %v812
    %v1719 = vunpack.c.l.b16 %v813
    %v1720 = vunpack.c.l.b16 %v814
    %v1721 = vunpack.c.h.b16 %v814
    %v1722 = vunpack.c.l.b16 %v815
    %v1723 = vunpack.c.h.b16 %v815
    %v1724 = vunpack.c.l.b16 %v816
    %v1725 = vunpack.c.h.b16 %v816
    %v1726 = vunpack.c.l.b16 %v817
    %v1727 = vunpack.c.h.b16 %v817
    %v1728 = vunpack.c.l.b16 %v818
    %v1729 = vunpack.c.l.b16 %v819
    %v1730 = vunpack.c.h.b16 %v819
    %v1731 = vunpack.c.l.b16 %v820
    %v1732 = vunpack.c.h.b16 %v820
    %v1733 = vunpack.c.l.b16 %v821
    %v1734 = vunpack.c.h.b16 %v821
    %v1735 = vunpack.c.l.b16 %v822
    %v1736 = vunpack.c.h.b16 %v822
    %v1737 = vunpack.c.l.b16 %v823
    %v1738 = vunpack.c.l.b16 %v824
    %v1739 = vunpack.c.h.b16 %v824
    %v1740 = vunpack.c.l.b16 %v825
    %v1741 = vunpack.c.h.b16 %v825
    %v1742 = vunpack.c.l.b16 %v826
    %v1743 = vunpack.c.h.b16 %v826
    %v1744 = vunpack.c.l.b16 %v827
    %v1745 = vunpack.c.h.b16 %v827
    %v1746 = vunpack.c.l.b16 %v828
    %v1747 = vpack.c.b16 %v1180, %v1171
    %v1748 = vpack.c.b16 %v1181, %v1172
    %v1749 = vpack.c.b16 %v1182, %v1173
    %v1750 = vpack.c.b16 %v1183, %v1174
    %v1751 = vpack.c.b16 %v1184, %v1175
    %v1752 = vpack.c.b16 %v1185, %v1176
    %v1753 = vpack.c.b16 %v1186, %v1177
    %v1754 = vpack.c.b16 %v1187, %v1178
    %v1755 = vpack.c.b16 %v1188, %v1179
    %v1756 = vpack.c.b16 %v1198, %v1189
    %v1757 = vpack.c.b16 %v1199, %v1190
    %v1758 = vpack.c.b16 %v1200, %v1191
    %v1759 = vpack.c.b16 %v1201, %v1192
    %v1760 = vpack.c.b16 %v1202, %v1193
    %v1761 = vpack.c.b16 %v1203, %v1194
    %v1762 = vpack.c.b16 %v1204, %v1195
    %v1763 = vpack.c.b16 %v1205, %v1196
    %v1764 = vpack.c.b16 %v1206, %v1197
    %v1765 = vpack.c.b16 %v1216, %v1207
    %v1766 = vpack.c.b16 %v1217, %v1208
    %v1767 = vpack.c.b16 %v1218, %v1209
    %v1768 = vpack.c.b16 %v1219, %v1210
    %v1769 = vpack.c.b16 %v1220, %v1211
    %v1770 = vpack.c.b16 %v1221, %v1212
    %v1771 = vpack.c.b16 %v1222, %v1213
    %v1772 = vpack.c.b16 %v1223, %v1214
    %v1773 = vpack.c.b16 %v1224, %v1215
    %v1774 = vpack.c.b16 %v1234, %v1225
    %v1775 = vpack.c.b16 %v1235, %v1226
    %v1776 = vpack.c.b16 %v1236, %v1227
    %v1777 = vpack.c.b16 %v1237, %v1228
    %v1778 = vpack.c.b16 %v1238, %v1229
    %v1779 = vpack.c.b16 %v1239, %v1230
    %v1780 = vpack.c.b16 %v1240, %v1231
    %v1781 = vpack.c.b16 %v1241, %v1232
    %v1782 = vpack.c.b16 %v1242, %v1233
    %v1783 = vpack.c.b16 %v1252, %v1243
    %v1784 = vpack.c.b16 %v1253, %v1244
    %v1785 = vpack.c.b16 %v1254, %v1245
    %v1786 = vpack.c.b16 %v1255, %v1246
    %v1787 = vpack.c.b16 %v1256, %v1247
    %v1788 = vpack.c.b16 %v1257, %v1248
    %v1789 = vpack.c.b16 %v1258, %v1249
    %v1790 = vpack.c.b16 %v1259, %v1250
    %v1791 = vpack.c.b16 %v1260, %v1251
    %v1792 = vpack.c.b16 %v1270, %v1261
    %v1793 = vpack.c.b16 %v1271, %v1262
    %v1794 = vpack.c.b16 %v1272, %v1263
    %v1795 = vpack.c.b16 %v1273, %v1264
    %v1796 = vpack.c.b16 %v1274, %v1265
    %v1797 = vpack.c.b16 %v1275, %v1266
    %v1798 = vpack.c.b16 %v1276, %v1267
    %v1799 = vpack.c.b16 %v1277, %v1268
    %v1800 = vpack.c.b16 %v1278, %v1269
    %v1801 = vpack.c.b16 %v1288, %v1279
    %v1802 = vpack.c.b16 %v1289, %v1280
    %v1803 = vpack.c.b16 %v1290, %v1281
    %v1804 = vpack.c.b16 %v1291, %v1282
    %v1805 = vpack.c.b16 %v1292, %v1283
    %v1806 = vpack.c.b16 %v1293, %v1284
    %v1807 = vpack.c.b16 %v1294, %v1285
    %v1808 = vpack.c.b16 %v1295, %v1286
    %v1809 = vpack.c.b16 %v1296, %v1287
    %v1810 = vpack.c.b16 %v1306, %v1297
    %v1811 = vpack.c.b16 %v1307, %v1298
    %v1812 = vpack.c.b16 %v1308, %v1299
    %v1813 = vpack.c.b16 %v1309, %v1300
    %v1814 = vpack.c.b16 %v1310, %v1301
    %v1815 = vpack.c.b16 %v1311, %v1302
    %v1816 = vpack.c.b16 %v1312, %v1303
    %v1817 = vpack.c.b16 %v1313, %v1304
    %v1818 = vpack.c.b16 %v1314, %v1305
    %v1819 = vpack.c.b16 %v1324, %v1315
    %v1820 = vpack.c.b16 %v1325, %v1316
    %v1821 = vpack.c.b16 %v1326, %v1317
    %v1822 = vpack.c.b16 %v1327, %v1318
    %v1823 = vpack.c.b16 %v1328, %v1319
    %v1824 = vpack.c.b16 %v1329, %v1320
    %v1825 = vpack.c.b16 %v1330, %v1321
    %v1826 = vpack.c.b16 %v1331, %v1322
    %v1827 = vpack.c.b16 %v1332, %v1323
    %v1828 = vpack.c.b16 %v1342, %v1333
    %v1829 = vpack.c.b16 %v1343, %v1334
    %v1830 = vpack.c.b16 %v1344, %v1335
    %v1831 = vpack.c.b16 %v1345, %v1336
    %v1832 = vpack.c.b16 %v1346, %v1337
    %v1833 = vpack.c.b16 %v1347, %v1338
    %v1834 = vpack.c.b16 %v1348, %v1339
    %v1835 = vpack.c.b16 %v1349, %v1340
    %v1836 = vpack.c.b16 %v1350, %v1341
    %v1837 = vpack.c.b16 %v1360, %v1351
    %v1838 = vpack.c.b16 %v1361, %v1352
    %v1839 = vpack.c.b16 %v1362, %v1353
    %v1840 = vpack.c.b16 %v1363, %v1354
    %v1841 = vpack.c.b16 %v1364, %v1355
    %v1842 = vpack.c.b16 %v1365, %v1356
    %v1843 = vpack.c.b16 %v1366, %v1357
    %v1844 = vpack.c.b16 %v1367, %v1358
    %v1845 = vpack.c.b16 %v1368, %v1359
    %v1846 = vpack.c.b16 %v1378, %v1369
    %v1847 = vpack.c.b16 %v1379, %v1370
    %v1848 = vpack.c.b16 %v1380, %v1371
    %v1849 = vpack.c.b16 %v1381, %v1372
    %v1850 = vpack.c.b16 %v1382, %v1373
    %v1851 = vpack.c.b16 %v1383, %v1374
    %v1852 = vpack.c.b16 %v1384, %v1375
    %v1853 = vpack.c.b16 %v1385, %v1376
    %v1854 = vpack.c.b16 %v1386, %v1377
    %v1855 = vpack.c.b16 %v1396, %v1387
    %v1856 = vpack.c.b16 %v1397, %v1388
    %v1857 = vpack.c.b16 %v1398, %v1389
    %v1858 = vpack.c.b16 %v1399, %v1390
    %v1859 = vpack.c.b16 %v1400, %v1391
    %v1860 = vpack.c.b16 %v1401, %v1392
    %v1861 = vpack.c.b16 %v1402, %v1393
    %v1862 = vpack.c.b16 %v1403, %v1394
    %v1863 = vpack.c.b16 %v1404, %v1395
    %v1864 = vpack.c.b16 %v1414, %v1405
    %v1865 = vpack.c.b16 %v1415, %v1406
    %v1866 = vpack.c.b16 %v1416, %v1407
    %v1867 = vpack.c.b16 %v1417, %v1408
    %v1868 = vpack.c.b16 %v1418, %v1409
    %v1869 = vpack.c.b16 %v1419, %v1410
    %v1870 = vpack.c.b16 %v1420, %v1411
    %v1871 = vpack.c.b16 %v1421, %v1412
    %v1872 = vpack.c.b16 %v1422, %v1413
    %v1873 = vpack.c.b16 %v1432, %v1423
    %v1874 = vpack.c.b16 %v1433, %v1424
    %v1875 = vpack.c.b16 %v1434, %v1425
    %v1876 = vpack.c.b16 %v1435, %v1426
    %v1877 = vpack.c.b16 %v1436, %v1427
    %v1878 = vpack.c.b16 %v1437, %v1428
    %v1879 = vpack.c.b16 %v1438, %v1429
    %v1880 = vpack.c.b16 %v1439, %v1430
    %v1881 = vpack.c.b16 %v1440, %v1431
    %v1882 = vpack.c.b16 %v1450, %v1441
    %v1883 = vpack.c.b16 %v1451, %v1442
    %v1884 = vpack.c.b16 %v1452, %v1443
    %v1885 = vpack.c.b16 %v1453, %v1444
    %v1886 = vpack.c.b16 %v1454, %v1445
    %v1887 = vpack.c.b16 %v1455, %v1446
    %v1888 = vpack.c.b16 %v1456, %v1447
    %v1889 = vpack.c.b16 %v1457, %v1448
    %v1890 = vpack.c.b16 %v1458, %v1449
    %v1891 = vpack.c.b16 %v1468, %v1459
    %v1892 = vpack.c.b16 %v1469, %v1460
    %v1893 = vpack.c.b16 %v1470, %v1461
    %v1894 = vpack.c.b16 %v1471, %v1462
    %v1895 = vpack.c.b16 %v1472, %v1463
    %v1896 = vpack.c.b16 %v1473, %v1464
    %v1897 = vpack.c.b16 %v1474, %v1465
    %v1898 = vpack.c.b16 %v1475, %v1466
    %v1899 = vpack.c.b16 %v1476, %v1467
    %v1900 = vpack.c.b16 %v1486, %v1477
    %v1901 = vpack.c.b16 %v1487, %v1478
    %v1902 = vpack.c.b16 %v1488, %v1479
    %v1903 = vpack.c.b16 %v1489, %v1480
    %v1904 = vpack.c.b16 %v1490, %v1481
    %v1905 = vpack.c.b16 %v1491, %v1482
    %v1906 = vpack.c.b16 %v1492, %v1483
    %v1907 = vpack.c.b16 %v1493, %v1484
    %v1908 = vpack.c.b16 %v1494, %v1485
    %v1909 = vpack.c.b16 %v1504, %v1495
    %v1910 = vpack.c.b16 %v1505, %v1496
    %v1911 = vpack.c.b16 %v1506, %v1497
    %v1912 = vpack.c.b16 %v1507, %v1498
    %v1913 = vpack.c.b16 %v1508, %v1499
    %v1914 = vpack.c.b16 %v1509, %v1500
    %v1915 = vpack.c.b16 %v1510, %v1501
    %v1916 = vpack.c.b16 %v1511, %v1502
    %v1917 = vpack.c.b16 %v1512, %v1503
    %v1918 = vpack.c.b16 %v1522, %v1513
    %v1919 = vpack.c.b16 %v1523, %v1514
    %v1920 = vpack.c.b16 %v1524, %v1515
    %v1921 = vpack.c.b16 %v1525, %v1516
    %v1922 = vpack.c.b16 %v1526, %v1517
    %v1923 = vpack.c.b16 %v1527, %v1518
    %v1924 = vpack.c.b16 %v1528, %v1519
    %v1925 = vpack.c.b16 %v1529, %v1520
    %v1926 = vpack.c.b16 %v1530, %v1521
    %v1927 = vpack.c.b16 %v1540, %v1531
    %v1928 = vpack.c.b16 %v1541, %v1532
    %v1929 = vpack.c.b16 %v1542, %v1533
    %v1930 = vpack.c.b16 %v1543, %v1534
    %v1931 = vpack.c.b16 %v1544, %v1535
    %v1932 = vpack.c.b16 %v1545, %v1536
    %v1933 = vpack.c.b16 %v1546, %v1537
    %v1934 = vpack.c.b16 %v1547, %v1538
    %v1935 = vpack.c.b16 %v1548, %v1539
    %v1936 = vpack.c.b16 %v1558, %v1549
    %v1937 = vpack.c.b16 %v1559, %v1550
    %v1938 = vpack.c.b16 %v1560, %v1551
    %v1939 = vpack.c.b16 %v1561, %v1552
    %v1940 = vpack.c.b16 %v1562, %v1553
    %v1941 = vpack.c.b16 %v1563, %v1554
    %v1942 = vpack.c.b16 %v1564, %v1555
    %v1943 = vpack.c.b16 %v1565, %v1556
    %v1944 = vpack.c.b16 %v1566, %v1557
    %v1945 = vpack.c.b16 %v1576, %v1567
    %v1946 = vpack.c.b16 %v1577, %v1568
    %v1947 = vpack.c.b16 %v1578, %v1569
    %v1948 = vpack.c.b16 %v1579, %v1570
    %v1949 = vpack.c.b16 %v1580, %v1571
    %v1950 = vpack.c.b16 %v1581, %v1572
    %v1951 = vpack.c.b16 %v1582, %v1573
    %v1952 = vpack.c.b16 %v1583, %v1574
    %v1953 = vpack.c.b16 %v1584, %v1575
    %v1954 = vpack.c.b16 %v1594, %v1585
    %v1955 = vpack.c.b16 %v1595, %v1586
    %v1956 = vpack.c.b16 %v1596, %v1587
    %v1957 = vpack.c.b16 %v1597, %v1588
    %v1958 = vpack.c.b16 %v1598, %v1589
    %v1959 = vpack.c.b16 %v1599, %v1590
    %v1960 = vpack.c.b16 %v1600, %v1591
    %v1961 = vpack.c.b16 %v1601, %v1592
    %v1962 = vpack.c.b16 %v1602, %v1593
    %v1963 = vpack.c.b16 %v1612, %v1603
    %v1964 = vpack.c.b16 %v1613, %v1604
    %v1965 = vpack.c.b16 %v1614, %v1605
    %v1966 = vpack.c.b16 %v1615, %v1606
    %v1967 = vpack.c.b16 %v1616, %v1607
    %v1968 = vpack.c.b16 %v1617, %v1608
    %v1969 = vpack.c.b16 %v1618, %v1609
    %v1970 = vpack.c.b16 %v1619, %v1610
    %v1971 = vpack.c.b16 %v1620, %v1611
    %v1972 = vpack.c.b16 %v1630, %v1621
    %v1973 = vpack.c.b16 %v1631, %v1622
    %v1974 = vpack.c.b16 %v1632, %v1623
    %v1975 = vpack.c.b16 %v1633, %v1624
    %v1976 = vpack.c.b16 %v1634, %v1625
    %v1977 = vpack.c.b16 %v1635, %v1626
    %v1978 = vpack.c.b16 %v1636, %v1627
    %v1979 = vpack.c.b16 %v1637, %v1628
    %v1980 = vpack.c.b16 %v1638, %v1629
    %v1981 = vpack.c.b16 %v1648, %v1639
    %v1982 = vpack.c.b16 %v1649, %v1640
    %v1983 = vpack.c.b16 %v1650, %v1641
    %v1984 = vpack.c.b16 %v1651, %v1642
    %v1985 = vpack.c.b16 %v1652, %v1643
    %v1986 = vpack.c.b16 %v1653, %v1644
    %v1987 = vpack.c.b16 %v1654, %v1645
    %v1988 = vpack.c.b16 %v1655, %v1646
    %v1989 = vpack.c.b16 %v1656, %v1647
    %v1990 = vpack.c.b16 %v1666, %v1657
    %v1991 = vpack.c.b16 %v1667, %v1658
    %v1992 = vpack.c.b16 %v1668, %v1659
    %v1993 = vpack.c.b16 %v1669, %v1660
    %v1994 = vpack.c.b16 %v1670, %v1661
    %v1995 = vpack.c.b16 %v1671, %v1662
    %v1996 = vpack.c.b16 %v1672, %v1663
    %v1997 = vpack.c.b16 %v1673, %v1664
    %v1998 = vpack.c.b16 %v1674, %v1665
    %v1999 = vpack.c.b16 %v1684, %v1675
    %v2000 = vpack.c.b16 %v1685, %v1676
    %v2001 = vpack.c.b16 %v1686, %v1677
    %v2002 = vpack.c.b16 %v1687, %v1678
    %v2003 = vpack.c.b16 %v1688, %v1679
    %v2004 = vpack.c.b16 %v1689, %v1680
    %v2005 = vpack.c.b16 %v1690, %v1681
    %v2006 = vpack.c.b16 %v1691, %v1682
    %v2007 = vpack.c.b16 %v1692, %v1683
    %v2008 = vpack.c.b16 %v1702, %v1693
    %v2009 = vpack.c.b16 %v1703, %v1694
    %v2010 = vpack.c.b16 %v1704, %v1695
    %v2011 = vpack.c.b16 %v1705, %v1696
    %v2012 = vpack.c.b16 %v1706, %v1697
    %v2013 = vpack.c.b16 %v1707, %v1698
    %v2014 = vpack.c.b16 %v1708, %v1699
    %v2015 = vpack.c.b16 %v1709, %v1700
    %v2016 = vpack.c.b16 %v1710, %v1701
    %v2017 = vpack.c.b16 %v1720, %v1711
    %v2018 = vpack.c.b16 %v1721, %v1712
    %v2019 = vpack.c.b16 %v1722, %v1713
    %v2020 = vpack.c.b16 %v1723, %v1714
    %v2021 = vpack.c.b16 %v1724, %v1715
    %v2022 = vpack.c.b16 %v1725, %v1716
    %v2023 = vpack.c.b16 %v1726, %v1717
    %v2024 = vpack.c.b16 %v1727, %v1718
    %v2025 = vpack.c.b16 %v1728, %v1719
    %v2026 = vpack.c.b16 %v1738, %v1729
    %v2027 = vpack.c.b16 %v1739, %v1730
    %v2028 = vpack.c.b16 %v1740, %v1731
    %v2029 = vpack.c.b16 %v1741, %v1732
    %v2030 = vpack.c.b16 %v1742, %v1733
    %v2031 = vpack.c.b16 %v1743, %v1734
    %v2032 = vpack.c.b16 %v1744, %v1735
    %v2033 = vpack.c.b16 %v1745, %v1736
    %v2034 = vpack.c.b16 %v1746, %v1737
    %2323 = vmatpush.bf16.msra.mxu0 %v1810
    %2324 = vmatpush.bf16.msra.mxu0 %v1801
    %2325 = vmatpush.bf16.msra.mxu0 %v1792
    %2326 = vmatpush.bf16.msra.mxu0 %v1783
    %2327 = vmatpush.bf16.msra.mxu0 %v1774
    %2328 = vmatpush.bf16.msra.mxu0 %v1765
    %2329 = vmatpush.bf16.msra.mxu0 %v1756
    %2330 = vmatpush.bf16.msra.mxu0 %v1747
    %2331 = vmatmul.bf16.gmra.mxu0 %v505
    %v2332 = vpop.f32.mrf.mxu0
    %v2333 = vadd.f32 %v833, %v2332
    %v2334 = vpop.f32.mrf.mxu0
    %2335 = vdwg.mxu0
    %2336 = vmatpush.bf16.msra.mxu0 %v1882
    %2337 = vmatpush.bf16.msra.mxu0 %v1873
    %2338 = vmatpush.bf16.msra.mxu0 %v1864
    %2339 = vmatpush.bf16.msra.mxu0 %v1855
    %2340 = vmatpush.bf16.msra.mxu0 %v1846
    %2341 = vmatpush.bf16.msra.mxu0 %v1837
    %2342 = vmatpush.bf16.msra.mxu0 %v1828
    %2343 = vmatpush.bf16.msra.mxu0 %v1819
    %2344 = vmatmul.bf16.gmra.mxu0 %v506
    %v2345 = vpop.f32.mrf.mxu0
    %v2346 = vadd.f32 %v2333, %v2345
    %v2347 = vpop.f32.mrf.mxu0
    %2348 = vdwg.mxu0
    %2349 = vmatpush.bf16.msra.mxu0 %v1954
    %2350 = vmatpush.bf16.msra.mxu0 %v1945
    %2351 = vmatpush.bf16.msra.mxu0 %v1936
    %2352 = vmatpush.bf16.msra.mxu0 %v1927
    %2353 = vmatpush.bf16.msra.mxu0 %v1918
    %2354 = vmatpush.bf16.msra.mxu0 %v1909
    %2355 = vmatpush.bf16.msra.mxu0 %v1900
    %2356 = vmatpush.bf16.msra.mxu0 %v1891
    %2357 = vmatmul.bf16.gmra.mxu0 %v507
    %v2358 = vpop.f32.mrf.mxu0
    %v2359 = vadd.f32 %v2346, %v2358
    %v2360 = vpop.f32.mrf.mxu0
    %2361 = vdwg.mxu0
    %2362 = vmatpush.bf16.msra.mxu0 %v2026
    %2363 = vmatpush.bf16.msra.mxu0 %v2017
    %2364 = vmatpush.bf16.msra.mxu0 %v2008
    %2365 = vmatpush.bf16.msra.mxu0 %v1999
    %2366 = vmatpush.bf16.msra.mxu0 %v1990
    %2367 = vmatpush.bf16.msra.mxu0 %v1981
    %2368 = vmatpush.bf16.msra.mxu0 %v1972
    %2369 = vmatpush.bf16.msra.mxu0 %v1963
    %2370 = vmatmul.bf16.gmra.mxu0 %v508
    %v2371 = vpop.f32.mrf.mxu0
    %v2372 = vadd.f32 %v2359, %v2371
    %v2373 = vpop.f32.mrf.mxu0
    %2374 = vdwg.mxu0
    %2375 = vmatpush.bf16.msra.mxu0 %v1811
    %2376 = vmatpush.bf16.msra.mxu0 %v1802
    %2377 = vmatpush.bf16.msra.mxu0 %v1793
    %2378 = vmatpush.bf16.msra.mxu0 %v1784
    %2379 = vmatpush.bf16.msra.mxu0 %v1775
    %2380 = vmatpush.bf16.msra.mxu0 %v1766
    %2381 = vmatpush.bf16.msra.mxu0 %v1757
    %2382 = vmatpush.bf16.msra.mxu0 %v1748
    %2383 = vmatmul.bf16.gmra.mxu0 %v505
    %v2384 = vpop.f32.mrf.mxu0
    %v2385 = vadd.f32 %v834, %v2384
    %v2386 = vpop.f32.mrf.mxu0
    %2387 = vdwg.mxu0
    %2388 = vmatpush.bf16.msra.mxu0 %v1883
    %2389 = vmatpush.bf16.msra.mxu0 %v1874
    %2390 = vmatpush.bf16.msra.mxu0 %v1865
    %2391 = vmatpush.bf16.msra.mxu0 %v1856
    %2392 = vmatpush.bf16.msra.mxu0 %v1847
    %2393 = vmatpush.bf16.msra.mxu0 %v1838
    %2394 = vmatpush.bf16.msra.mxu0 %v1829
    %2395 = vmatpush.bf16.msra.mxu0 %v1820
    %2396 = vmatmul.bf16.gmra.mxu0 %v506
    %v2397 = vpop.f32.mrf.mxu0
    %v2398 = vadd.f32 %v2385, %v2397
    %v2399 = vpop.f32.mrf.mxu0
    %2400 = vdwg.mxu0
    %2401 = vmatpush.bf16.msra.mxu0 %v1955
    %2402 = vmatpush.bf16.msra.mxu0 %v1946
    %2403 = vmatpush.bf16.msra.mxu0 %v1937
    %2404 = vmatpush.bf16.msra.mxu0 %v1928
    %2405 = vmatpush.bf16.msra.mxu0 %v1919
    %2406 = vmatpush.bf16.msra.mxu0 %v1910
    %2407 = vmatpush.bf16.msra.mxu0 %v1901
    %2408 = vmatpush.bf16.msra.mxu0 %v1892
    %2409 = vmatmul.bf16.gmra.mxu0 %v507
    %v2410 = vpop.f32.mrf.mxu0
    %v2411 = vadd.f32 %v2398, %v2410
    %v2412 = vpop.f32.mrf.mxu0
    %2413 = vdwg.mxu0
    %2414 = vmatpush.bf16.msra.mxu0 %v2027
    %2415 = vmatpush.bf16.msra.mxu0 %v2018
    %2416 = vmatpush.bf16.msra.mxu0 %v2009
    %2417 = vmatpush.bf16.msra.mxu0 %v2000
    %2418 = vmatpush.bf16.msra.mxu0 %v1991
    %2419 = vmatpush.bf16.msra.mxu0 %v1982
    %2420 = vmatpush.bf16.msra.mxu0 %v1973
    %2421 = vmatpush.bf16.msra.mxu0 %v1964
    %2422 = vmatmul.bf16.gmra.mxu0 %v508
    %v2423 = vpop.f32.mrf.mxu0
    %v2424 = vadd.f32 %v2411, %v2423
    %v2425 = vpop.f32.mrf.mxu0
    %2426 = vdwg.mxu0
    %2427 = vmatpush.bf16.msra.mxu0 %v1812
    %2428 = vmatpush.bf16.msra.mxu0 %v1803
    %2429 = vmatpush.bf16.msra.mxu0 %v1794
    %2430 = vmatpush.bf16.msra.mxu0 %v1785
    %2431 = vmatpush.bf16.msra.mxu0 %v1776
    %2432 = vmatpush.bf16.msra.mxu0 %v1767
    %2433 = vmatpush.bf16.msra.mxu0 %v1758
    %2434 = vmatpush.bf16.msra.mxu0 %v1749
    %2435 = vmatmul.bf16.gmra.mxu0 %v505
    %v2436 = vpop.f32.mrf.mxu0
    %v2437 = vadd.f32 %v835, %v2436
    %v2438 = vpop.f32.mrf.mxu0
    %2439 = vdwg.mxu0
    %2440 = vmatpush.bf16.msra.mxu0 %v1884
    %2441 = vmatpush.bf16.msra.mxu0 %v1875
    %2442 = vmatpush.bf16.msra.mxu0 %v1866
    %2443 = vmatpush.bf16.msra.mxu0 %v1857
    %2444 = vmatpush.bf16.msra.mxu0 %v1848
    %2445 = vmatpush.bf16.msra.mxu0 %v1839
    %2446 = vmatpush.bf16.msra.mxu0 %v1830
    %2447 = vmatpush.bf16.msra.mxu0 %v1821
    %2448 = vmatmul.bf16.gmra.mxu0 %v506
    %v2449 = vpop.f32.mrf.mxu0
    %v2450 = vadd.f32 %v2437, %v2449
    %v2451 = vpop.f32.mrf.mxu0
    %2452 = vdwg.mxu0
    %2453 = vmatpush.bf16.msra.mxu0 %v1956
    %2454 = vmatpush.bf16.msra.mxu0 %v1947
    %2455 = vmatpush.bf16.msra.mxu0 %v1938
    %2456 = vmatpush.bf16.msra.mxu0 %v1929
    %2457 = vmatpush.bf16.msra.mxu0 %v1920
    %2458 = vmatpush.bf16.msra.mxu0 %v1911
    %2459 = vmatpush.bf16.msra.mxu0 %v1902
    %2460 = vmatpush.bf16.msra.mxu0 %v1893
    %2461 = vmatmul.bf16.gmra.mxu0 %v507
    %v2462 = vpop.f32.mrf.mxu0
    %v2463 = vadd.f32 %v2450, %v2462
    %v2464 = vpop.f32.mrf.mxu0
    %2465 = vdwg.mxu0
    %2466 = vmatpush.bf16.msra.mxu0 %v2028
    %2467 = vmatpush.bf16.msra.mxu0 %v2019
    %2468 = vmatpush.bf16.msra.mxu0 %v2010
    %2469 = vmatpush.bf16.msra.mxu0 %v2001
    %2470 = vmatpush.bf16.msra.mxu0 %v1992
    %2471 = vmatpush.bf16.msra.mxu0 %v1983
    %2472 = vmatpush.bf16.msra.mxu0 %v1974
    %2473 = vmatpush.bf16.msra.mxu0 %v1965
    %2474 = vmatmul.bf16.gmra.mxu0 %v508
    %v2475 = vpop.f32.mrf.mxu0
    %v2476 = vadd.f32 %v2463, %v2475
    %v2477 = vpop.f32.mrf.mxu0
    %2478 = vdwg.mxu0
    %2479 = vmatpush.bf16.msra.mxu0 %v1813
    %2480 = vmatpush.bf16.msra.mxu0 %v1804
    %2481 = vmatpush.bf16.msra.mxu0 %v1795
    %2482 = vmatpush.bf16.msra.mxu0 %v1786
    %2483 = vmatpush.bf16.msra.mxu0 %v1777
    %2484 = vmatpush.bf16.msra.mxu0 %v1768
    %2485 = vmatpush.bf16.msra.mxu0 %v1759
    %2486 = vmatpush.bf16.msra.mxu0 %v1750
    %2487 = vmatmul.bf16.gmra.mxu0 %v505
    %v2488 = vpop.f32.mrf.mxu0
    %v2489 = vadd.f32 %v836, %v2488
    %v2490 = vpop.f32.mrf.mxu0
    %2491 = vdwg.mxu0
    %2492 = vmatpush.bf16.msra.mxu0 %v1885
    %2493 = vmatpush.bf16.msra.mxu0 %v1876
    %2494 = vmatpush.bf16.msra.mxu0 %v1867
    %2495 = vmatpush.bf16.msra.mxu0 %v1858
    %2496 = vmatpush.bf16.msra.mxu0 %v1849
    %2497 = vmatpush.bf16.msra.mxu0 %v1840
    %2498 = vmatpush.bf16.msra.mxu0 %v1831
    %2499 = vmatpush.bf16.msra.mxu0 %v1822
    %2500 = vmatmul.bf16.gmra.mxu0 %v506
    %v2501 = vpop.f32.mrf.mxu0
    %v2502 = vadd.f32 %v2489, %v2501
    %v2503 = vpop.f32.mrf.mxu0
    %2504 = vdwg.mxu0
    %2505 = vmatpush.bf16.msra.mxu0 %v1957
    %2506 = vmatpush.bf16.msra.mxu0 %v1948
    %2507 = vmatpush.bf16.msra.mxu0 %v1939
    %2508 = vmatpush.bf16.msra.mxu0 %v1930
    %2509 = vmatpush.bf16.msra.mxu0 %v1921
    %2510 = vmatpush.bf16.msra.mxu0 %v1912
    %2511 = vmatpush.bf16.msra.mxu0 %v1903
    %2512 = vmatpush.bf16.msra.mxu0 %v1894
    %2513 = vmatmul.bf16.gmra.mxu0 %v507
    %v2514 = vpop.f32.mrf.mxu0
    %v2515 = vadd.f32 %v2502, %v2514
    %v2516 = vpop.f32.mrf.mxu0
    %2517 = vdwg.mxu0
    %2518 = vmatpush.bf16.msra.mxu0 %v2029
    %2519 = vmatpush.bf16.msra.mxu0 %v2020
    %2520 = vmatpush.bf16.msra.mxu0 %v2011
    %2521 = vmatpush.bf16.msra.mxu0 %v2002
    %2522 = vmatpush.bf16.msra.mxu0 %v1993
    %2523 = vmatpush.bf16.msra.mxu0 %v1984
    %2524 = vmatpush.bf16.msra.mxu0 %v1975
    %2525 = vmatpush.bf16.msra.mxu0 %v1966
    %2526 = vmatmul.bf16.gmra.mxu0 %v508
    %v2527 = vpop.f32.mrf.mxu0
    %v2528 = vadd.f32 %v2515, %v2527
    %v2529 = vpop.f32.mrf.mxu0
    %2530 = vdwg.mxu0
    %2531 = vmatpush.bf16.msra.mxu0 %v1814
    %2532 = vmatpush.bf16.msra.mxu0 %v1805
    %2533 = vmatpush.bf16.msra.mxu0 %v1796
    %2534 = vmatpush.bf16.msra.mxu0 %v1787
    %2535 = vmatpush.bf16.msra.mxu0 %v1778
    %2536 = vmatpush.bf16.msra.mxu0 %v1769
    %2537 = vmatpush.bf16.msra.mxu0 %v1760
    %2538 = vmatpush.bf16.msra.mxu0 %v1751
    %2539 = vmatmul.bf16.gmra.mxu0 %v505
    %v2540 = vpop.f32.mrf.mxu0
    %v2541 = vadd.f32 %v837, %v2540
    %v2542 = vpop.f32.mrf.mxu0
    %2543 = vdwg.mxu0
    %2544 = vmatpush.bf16.msra.mxu0 %v1886
    %2545 = vmatpush.bf16.msra.mxu0 %v1877
    %2546 = vmatpush.bf16.msra.mxu0 %v1868
    %2547 = vmatpush.bf16.msra.mxu0 %v1859
    %2548 = vmatpush.bf16.msra.mxu0 %v1850
    %2549 = vmatpush.bf16.msra.mxu0 %v1841
    %2550 = vmatpush.bf16.msra.mxu0 %v1832
    %2551 = vmatpush.bf16.msra.mxu0 %v1823
    %2552 = vmatmul.bf16.gmra.mxu0 %v506
    %v2553 = vpop.f32.mrf.mxu0
    %v2554 = vadd.f32 %v2541, %v2553
    %v2555 = vpop.f32.mrf.mxu0
    %2556 = vdwg.mxu0
    %2557 = vmatpush.bf16.msra.mxu0 %v1958
    %2558 = vmatpush.bf16.msra.mxu0 %v1949
    %2559 = vmatpush.bf16.msra.mxu0 %v1940
    %2560 = vmatpush.bf16.msra.mxu0 %v1931
    %2561 = vmatpush.bf16.msra.mxu0 %v1922
    %2562 = vmatpush.bf16.msra.mxu0 %v1913
    %2563 = vmatpush.bf16.msra.mxu0 %v1904
    %2564 = vmatpush.bf16.msra.mxu0 %v1895
    %2565 = vmatmul.bf16.gmra.mxu0 %v507
    %v2566 = vpop.f32.mrf.mxu0
    %v2567 = vadd.f32 %v2554, %v2566
    %v2568 = vpop.f32.mrf.mxu0
    %2569 = vdwg.mxu0
    %2570 = vmatpush.bf16.msra.mxu0 %v2030
    %2571 = vmatpush.bf16.msra.mxu0 %v2021
    %2572 = vmatpush.bf16.msra.mxu0 %v2012
    %2573 = vmatpush.bf16.msra.mxu0 %v2003
    %2574 = vmatpush.bf16.msra.mxu0 %v1994
    %2575 = vmatpush.bf16.msra.mxu0 %v1985
    %2576 = vmatpush.bf16.msra.mxu0 %v1976
    %2577 = vmatpush.bf16.msra.mxu0 %v1967
    %2578 = vmatmul.bf16.gmra.mxu0 %v508
    %v2579 = vpop.f32.mrf.mxu0
    %v2580 = vadd.f32 %v2567, %v2579
    %v2581 = vpop.f32.mrf.mxu0
    %2582 = vdwg.mxu0
    %2583 = vmatpush.bf16.msra.mxu0 %v1815
    %2584 = vmatpush.bf16.msra.mxu0 %v1806
    %2585 = vmatpush.bf16.msra.mxu0 %v1797
    %2586 = vmatpush.bf16.msra.mxu0 %v1788
    %2587 = vmatpush.bf16.msra.mxu0 %v1779
    %2588 = vmatpush.bf16.msra.mxu0 %v1770
    %2589 = vmatpush.bf16.msra.mxu0 %v1761
    %2590 = vmatpush.bf16.msra.mxu0 %v1752
    %2591 = vmatmul.bf16.gmra.mxu0 %v505
    %v2592 = vpop.f32.mrf.mxu0
    %v2593 = vadd.f32 %v838, %v2592
    %v2594 = vpop.f32.mrf.mxu0
    %2595 = vdwg.mxu0
    %2596 = vmatpush.bf16.msra.mxu0 %v1887
    %2597 = vmatpush.bf16.msra.mxu0 %v1878
    %2598 = vmatpush.bf16.msra.mxu0 %v1869
    %2599 = vmatpush.bf16.msra.mxu0 %v1860
    %2600 = vmatpush.bf16.msra.mxu0 %v1851
    %2601 = vmatpush.bf16.msra.mxu0 %v1842
    %2602 = vmatpush.bf16.msra.mxu0 %v1833
    %2603 = vmatpush.bf16.msra.mxu0 %v1824
    %2604 = vmatmul.bf16.gmra.mxu0 %v506
    %v2605 = vpop.f32.mrf.mxu0
    %v2606 = vadd.f32 %v2593, %v2605
    %v2607 = vpop.f32.mrf.mxu0
    %2608 = vdwg.mxu0
    %2609 = vmatpush.bf16.msra.mxu0 %v1959
    %2610 = vmatpush.bf16.msra.mxu0 %v1950
    %2611 = vmatpush.bf16.msra.mxu0 %v1941
    %2612 = vmatpush.bf16.msra.mxu0 %v1932
    %2613 = vmatpush.bf16.msra.mxu0 %v1923
    %2614 = vmatpush.bf16.msra.mxu0 %v1914
    %2615 = vmatpush.bf16.msra.mxu0 %v1905
    %2616 = vmatpush.bf16.msra.mxu0 %v1896
    %2617 = vmatmul.bf16.gmra.mxu0 %v507
    %v2618 = vpop.f32.mrf.mxu0
    %v2619 = vadd.f32 %v2606, %v2618
    %v2620 = vpop.f32.mrf.mxu0
    %2621 = vdwg.mxu0
    %2622 = vmatpush.bf16.msra.mxu0 %v2031
    %2623 = vmatpush.bf16.msra.mxu0 %v2022
    %2624 = vmatpush.bf16.msra.mxu0 %v2013
    %2625 = vmatpush.bf16.msra.mxu0 %v2004
    %2626 = vmatpush.bf16.msra.mxu0 %v1995
    %2627 = vmatpush.bf16.msra.mxu0 %v1986
    %2628 = vmatpush.bf16.msra.mxu0 %v1977
    %2629 = vmatpush.bf16.msra.mxu0 %v1968
    %2630 = vmatmul.bf16.gmra.mxu0 %v508
    %v2631 = vpop.f32.mrf.mxu0
    %v2632 = vadd.f32 %v2619, %v2631
    %v2633 = vpop.f32.mrf.mxu0
    %2634 = vdwg.mxu0
    %2635 = vmatpush.bf16.msra.mxu0 %v1816
    %2636 = vmatpush.bf16.msra.mxu0 %v1807
    %2637 = vmatpush.bf16.msra.mxu0 %v1798
    %2638 = vmatpush.bf16.msra.mxu0 %v1789
    %2639 = vmatpush.bf16.msra.mxu0 %v1780
    %2640 = vmatpush.bf16.msra.mxu0 %v1771
    %2641 = vmatpush.bf16.msra.mxu0 %v1762
    %2642 = vmatpush.bf16.msra.mxu0 %v1753
    %2643 = vmatmul.bf16.gmra.mxu0 %v505
    %v2644 = vpop.f32.mrf.mxu0
    %v2645 = vadd.f32 %v839, %v2644
    %v2646 = vpop.f32.mrf.mxu0
    %2647 = vdwg.mxu0
    %2648 = vmatpush.bf16.msra.mxu0 %v1888
    %2649 = vmatpush.bf16.msra.mxu0 %v1879
    %2650 = vmatpush.bf16.msra.mxu0 %v1870
    %2651 = vmatpush.bf16.msra.mxu0 %v1861
    %2652 = vmatpush.bf16.msra.mxu0 %v1852
    %2653 = vmatpush.bf16.msra.mxu0 %v1843
    %2654 = vmatpush.bf16.msra.mxu0 %v1834
    %2655 = vmatpush.bf16.msra.mxu0 %v1825
    %2656 = vmatmul.bf16.gmra.mxu0 %v506
    %v2657 = vpop.f32.mrf.mxu0
    %v2658 = vadd.f32 %v2645, %v2657
    %v2659 = vpop.f32.mrf.mxu0
    %2660 = vdwg.mxu0
    %2661 = vmatpush.bf16.msra.mxu0 %v1960
    %2662 = vmatpush.bf16.msra.mxu0 %v1951
    %2663 = vmatpush.bf16.msra.mxu0 %v1942
    %2664 = vmatpush.bf16.msra.mxu0 %v1933
    %2665 = vmatpush.bf16.msra.mxu0 %v1924
    %2666 = vmatpush.bf16.msra.mxu0 %v1915
    %2667 = vmatpush.bf16.msra.mxu0 %v1906
    %2668 = vmatpush.bf16.msra.mxu0 %v1897
    %2669 = vmatmul.bf16.gmra.mxu0 %v507
    %v2670 = vpop.f32.mrf.mxu0
    %v2671 = vadd.f32 %v2658, %v2670
    %v2672 = vpop.f32.mrf.mxu0
    %2673 = vdwg.mxu0
    %2674 = vmatpush.bf16.msra.mxu0 %v2032
    %2675 = vmatpush.bf16.msra.mxu0 %v2023
    %2676 = vmatpush.bf16.msra.mxu0 %v2014
    %2677 = vmatpush.bf16.msra.mxu0 %v2005
    %2678 = vmatpush.bf16.msra.mxu0 %v1996
    %2679 = vmatpush.bf16.msra.mxu0 %v1987
    %2680 = vmatpush.bf16.msra.mxu0 %v1978
    %2681 = vmatpush.bf16.msra.mxu0 %v1969
    %2682 = vmatmul.bf16.gmra.mxu0 %v508
    %v2683 = vpop.f32.mrf.mxu0
    %v2684 = vadd.f32 %v2671, %v2683
    %v2685 = vpop.f32.mrf.mxu0
    %2686 = vdwg.mxu0
    %2687 = vmatpush.bf16.msra.mxu0 %v1817
    %2688 = vmatpush.bf16.msra.mxu0 %v1808
    %2689 = vmatpush.bf16.msra.mxu0 %v1799
    %2690 = vmatpush.bf16.msra.mxu0 %v1790
    %2691 = vmatpush.bf16.msra.mxu0 %v1781
    %2692 = vmatpush.bf16.msra.mxu0 %v1772
    %2693 = vmatpush.bf16.msra.mxu0 %v1763
    %2694 = vmatpush.bf16.msra.mxu0 %v1754
    %2695 = vmatmul.bf16.gmra.mxu0 %v505
    %v2696 = vpop.f32.mrf.mxu0
    %v2697 = vadd.f32 %v840, %v2696
    %v2698 = vpop.f32.mrf.mxu0
    %2699 = vdwg.mxu0
    %2700 = vmatpush.bf16.msra.mxu0 %v1889
    %2701 = vmatpush.bf16.msra.mxu0 %v1880
    %2702 = vmatpush.bf16.msra.mxu0 %v1871
    %2703 = vmatpush.bf16.msra.mxu0 %v1862
    %2704 = vmatpush.bf16.msra.mxu0 %v1853
    %2705 = vmatpush.bf16.msra.mxu0 %v1844
    %2706 = vmatpush.bf16.msra.mxu0 %v1835
    %2707 = vmatpush.bf16.msra.mxu0 %v1826
    %2708 = vmatmul.bf16.gmra.mxu0 %v506
    %v2709 = vpop.f32.mrf.mxu0
    %v2710 = vadd.f32 %v2697, %v2709
    %v2711 = vpop.f32.mrf.mxu0
    %2712 = vdwg.mxu0
    %2713 = vmatpush.bf16.msra.mxu0 %v1961
    %2714 = vmatpush.bf16.msra.mxu0 %v1952
    %2715 = vmatpush.bf16.msra.mxu0 %v1943
    %2716 = vmatpush.bf16.msra.mxu0 %v1934
    %2717 = vmatpush.bf16.msra.mxu0 %v1925
    %2718 = vmatpush.bf16.msra.mxu0 %v1916
    %2719 = vmatpush.bf16.msra.mxu0 %v1907
    %2720 = vmatpush.bf16.msra.mxu0 %v1898
    %2721 = vmatmul.bf16.gmra.mxu0 %v507
    %v2722 = vpop.f32.mrf.mxu0
    %v2723 = vadd.f32 %v2710, %v2722
    %v2724 = vpop.f32.mrf.mxu0
    %2725 = vdwg.mxu0
    %2726 = vmatpush.bf16.msra.mxu0 %v2033
    %2727 = vmatpush.bf16.msra.mxu0 %v2024
    %2728 = vmatpush.bf16.msra.mxu0 %v2015
    %2729 = vmatpush.bf16.msra.mxu0 %v2006
    %2730 = vmatpush.bf16.msra.mxu0 %v1997
    %2731 = vmatpush.bf16.msra.mxu0 %v1988
    %2732 = vmatpush.bf16.msra.mxu0 %v1979
    %2733 = vmatpush.bf16.msra.mxu0 %v1970
    %2734 = vmatmul.bf16.gmra.mxu0 %v508
    %v2735 = vpop.f32.mrf.mxu0
    %v2736 = vadd.f32 %v2723, %v2735
    %v2737 = vpop.f32.mrf.mxu0
    %2738 = vdwg.mxu0
    %2739 = vmatpush.bf16.msra.mxu0 %v1818
    %2740 = vmatpush.bf16.msra.mxu0 %v1809
    %2741 = vmatpush.bf16.msra.mxu0 %v1800
    %2742 = vmatpush.bf16.msra.mxu0 %v1791
    %2743 = vmatpush.bf16.msra.mxu0 %v1782
    %2744 = vmatpush.bf16.msra.mxu0 %v1773
    %2745 = vmatpush.bf16.msra.mxu0 %v1764
    %2746 = vmatpush.bf16.msra.mxu0 %v1755
    %2747 = vmatmul.bf16.gmra.mxu0 %v505
    %v2748 = vpop.f32.mrf.mxu0
    %v2749 = vadd.f32 %v841, %v2748
    %v2750 = vpop.f32.mrf.mxu0
    %2751 = vdwg.mxu0
    %2752 = vmatpush.bf16.msra.mxu0 %v1890
    %2753 = vmatpush.bf16.msra.mxu0 %v1881
    %2754 = vmatpush.bf16.msra.mxu0 %v1872
    %2755 = vmatpush.bf16.msra.mxu0 %v1863
    %2756 = vmatpush.bf16.msra.mxu0 %v1854
    %2757 = vmatpush.bf16.msra.mxu0 %v1845
    %2758 = vmatpush.bf16.msra.mxu0 %v1836
    %2759 = vmatpush.bf16.msra.mxu0 %v1827
    %2760 = vmatmul.bf16.gmra.mxu0 %v506
    %v2761 = vpop.f32.mrf.mxu0
    %v2762 = vadd.f32 %v2749, %v2761
    %v2763 = vpop.f32.mrf.mxu0
    %2764 = vdwg.mxu0
    %2765 = vmatpush.bf16.msra.mxu0 %v1962
    %2766 = vmatpush.bf16.msra.mxu0 %v1953
    %2767 = vmatpush.bf16.msra.mxu0 %v1944
    %2768 = vmatpush.bf16.msra.mxu0 %v1935
    %2769 = vmatpush.bf16.msra.mxu0 %v1926
    %2770 = vmatpush.bf16.msra.mxu0 %v1917
    %2771 = vmatpush.bf16.msra.mxu0 %v1908
    %2772 = vmatpush.bf16.msra.mxu0 %v1899
    %2773 = vmatmul.bf16.gmra.mxu0 %v507
    %v2774 = vpop.f32.mrf.mxu0
    %v2775 = vadd.f32 %v2762, %v2774
    %v2776 = vpop.f32.mrf.mxu0
    %2777 = vdwg.mxu0
    %2778 = vmatpush.bf16.msra.mxu0 %v2034
    %2779 = vmatpush.bf16.msra.mxu0 %v2025
    %2780 = vmatpush.bf16.msra.mxu0 %v2016
    %2781 = vmatpush.bf16.msra.mxu0 %v2007
    %2782 = vmatpush.bf16.msra.mxu0 %v1998
    %2783 = vmatpush.bf16.msra.mxu0 %v1989
    %2784 = vmatpush.bf16.msra.mxu0 %v1980
    %2785 = vmatpush.bf16.msra.mxu0 %v1971
    %2786 = vmatmul.bf16.gmra.mxu0 %v508
    %v2787 = vpop.f32.mrf.mxu0
    %v2788 = vadd.f32 %v2775, %v2787
    %v2789 = vpop.f32.mrf.mxu0
    %2790 = vdwg.mxu0
    %v2791 = vmax.f32 %v2372, 0.0
    %v2792 = vmax.f32 %v2424, 0.0
    %v2793 = vmax.f32 %v2476, 0.0
    %v2794 = vmax.f32 %v2528, 0.0
    %v2795 = vmax.f32 %v2580, 0.0
    %v2796 = vmax.f32 %v2632, 0.0
    %v2797 = vmax.f32 %v2684, 0.0
    %v2798 = vmax.f32 %v2736, 0.0
    %v2799 = vmax.f32 %v2788, 0.0
    %v2800 = vpack.c.bf16 %v2791, %v2791
    %v2801 = vpack.c.bf16 %v2792, %v2792
    %v2802 = vpack.c.bf16 %v2793, %v2793
    %v2803 = vpack.c.bf16 %v2794, %v2794
    %v2804 = vpack.c.bf16 %v2795, %v2795
    %v2805 = vpack.c.bf16 %v2796, %v2796
    %v2806 = vpack.c.bf16 %v2797, %v2797
    %v2807 = vpack.c.bf16 %v2798, %v2798
    %v2808 = vpack.c.bf16 %v2799, %v2799
    %v2809 = vld [vmem:[#allocation15] sm:$0xff]
    %v2810 = vld [vmem:[#allocation15 + $0x8] sm:$0xff]
    %v2811 = vld [vmem:[#allocation15 + $0x10] sm:$0xf]
    %v2812 = vld [vmem:[#allocation15 + $0x14] sm:$0xff]
    %v2813 = vld [vmem:[#allocation15 + $0x1c] sm:$0xff]
    %v2814 = vld [vmem:[#allocation15 + $0x24] sm:$0xf]
    %v2815 = vld [vmem:[#allocation15 + $0x28] sm:$0xff]
    %v2816 = vld [vmem:[#allocation15 + $0x30] sm:$0xff]
    %v2817 = vld [vmem:[#allocation15 + $0x38] sm:$0xf]
    %v2818 = vld [vmem:[#allocation15 + $0x3c] sm:$0xff]
    %v2819 = vld [vmem:[#allocation15 + $0x44] sm:$0xff]
    %v2820 = vld [vmem:[#allocation15 + $0x4c] sm:$0xf]
    %v2821 = vld [vmem:[#allocation15 + $0x50] sm:$0xff]
    %v2822 = vld [vmem:[#allocation15 + $0x58] sm:$0xff]
    %v2823 = vld [vmem:[#allocation15 + $0x60] sm:$0xf]
    %v2824 = vld [vmem:[#allocation15 + $0x64] sm:$0xff]
    %v2825 = vld [vmem:[#allocation15 + $0x6c] sm:$0xff]
    %v2826 = vld [vmem:[#allocation15 + $0x74] sm:$0xf]
    %v2827 = vld [vmem:[#allocation15 + $0x78] sm:$0xff]
    %v2828 = vld [vmem:[#allocation15 + $0x80] sm:$0xff]
    %v2829 = vld [vmem:[#allocation15 + $0x88] sm:$0xf]
    %v2830 = vld [vmem:[#allocation15 + $0x8c] sm:$0xff]
    %v2831 = vld [vmem:[#allocation15 + $0x94] sm:$0xff]
    %v2832 = vld [vmem:[#allocation15 + $0x9c] sm:$0xf]
    %v2833 = vld [vmem:[#allocation15 + $0xa0] sm:$0xff]
    %v2834 = vld [vmem:[#allocation15 + $0xa8] sm:$0xff]
    %v2835 = vld [vmem:[#allocation15 + $0xb0] sm:$0xf]
    %v2836 = vld [vmem:[#allocation15 + $0xb4] sm:$0xff]
    %v2837 = vld [vmem:[#allocation15 + $0xbc] sm:$0xff]
    %v2838 = vld [vmem:[#allocation15 + $0xc4] sm:$0xf]
    %v2839 = vld [vmem:[#allocation15 + $0xc8] sm:$0xff]
    %v2840 = vld [vmem:[#allocation15 + $0xd0] sm:$0xff]
    %v2841 = vld [vmem:[#allocation15 + $0xd8] sm:$0xf]
    %v2842 = vld [vmem:[#allocation15 + $0xdc] sm:$0xff]
    %v2843 = vld [vmem:[#allocation15 + $0xe4] sm:$0xff]
    %v2844 = vld [vmem:[#allocation15 + $0xec] sm:$0xf]
    %v2845 = vld [vmem:[#allocation15 + $0xf0] sm:$0xff]
    %v2846 = vld [vmem:[#allocation15 + $0xf8] sm:$0xff]
    %v2847 = vld [vmem:[#allocation15 + $0x100] sm:$0xf]
    %v2848 = vld [vmem:[#allocation15 + $0x104] sm:$0xff]
    %v2849 = vld [vmem:[#allocation15 + $0x10c] sm:$0xff]
    %v2850 = vld [vmem:[#allocation15 + $0x114] sm:$0xf]
    %v2851 = vld [vmem:[#allocation15 + $0x118] sm:$0xff]
    %v2852 = vld [vmem:[#allocation15 + $0x120] sm:$0xff]
    %v2853 = vld [vmem:[#allocation15 + $0x128] sm:$0xf]
    %v2854 = vld [vmem:[#allocation15 + $0x12c] sm:$0xff]
    %v2855 = vld [vmem:[#allocation15 + $0x134] sm:$0xff]
    %v2856 = vld [vmem:[#allocation15 + $0x13c] sm:$0xf]
    %v2857 = vld [vmem:[#allocation15 + $0x140] sm:$0xff]
    %v2858 = vld [vmem:[#allocation15 + $0x148] sm:$0xff]
    %v2859 = vld [vmem:[#allocation15 + $0x150] sm:$0xf]
    %v2860 = vld [vmem:[#allocation15 + $0x154] sm:$0xff]
    %v2861 = vld [vmem:[#allocation15 + $0x15c] sm:$0xff]
    %v2862 = vld [vmem:[#allocation15 + $0x164] sm:$0xf]
    %v2863 = vld [vmem:[#allocation15 + $0x168] sm:$0xff]
    %v2864 = vld [vmem:[#allocation15 + $0x170] sm:$0xff]
    %v2865 = vld [vmem:[#allocation15 + $0x178] sm:$0xf]
    %v2866 = vld [vmem:[#allocation15 + $0x17c] sm:$0xff]
    %v2867 = vld [vmem:[#allocation15 + $0x184] sm:$0xff]
    %v2868 = vld [vmem:[#allocation15 + $0x18c] sm:$0xf]
    %v2869 = vld [vmem:[#allocation15 + $0x190] sm:$0xff]
    %v2870 = vld [vmem:[#allocation15 + $0x198] sm:$0xff]
    %v2871 = vld [vmem:[#allocation15 + $0x1a0] sm:$0xf]
    %v2872 = vld [vmem:[#allocation15 + $0x1a4] sm:$0xff]
    %v2873 = vld [vmem:[#allocation15 + $0x1ac] sm:$0xff]
    %v2874 = vld [vmem:[#allocation15 + $0x1b4] sm:$0xf]
    %v2875 = vld [vmem:[#allocation15 + $0x1b8] sm:$0xff]
    %v2876 = vld [vmem:[#allocation15 + $0x1c0] sm:$0xff]
    %v2877 = vld [vmem:[#allocation15 + $0x1c8] sm:$0xf]
    %v2878 = vld [vmem:[#allocation15 + $0x1cc] sm:$0xff]
    %v2879 = vld [vmem:[#allocation15 + $0x1d4] sm:$0xff]
    %v2880 = vld [vmem:[#allocation15 + $0x1dc] sm:$0xf]
    %v2881 = vld [vmem:[#allocation15 + $0x1e0] sm:$0xff]
    %v2882 = vld [vmem:[#allocation15 + $0x1e8] sm:$0xff]
    %v2883 = vld [vmem:[#allocation15 + $0x1f0] sm:$0xf]
    %v2884 = vld [vmem:[#allocation15 + $0x1f4] sm:$0xff]
    %v2885 = vld [vmem:[#allocation15 + $0x1fc] sm:$0xff]
    %v2886 = vld [vmem:[#allocation15 + $0x204] sm:$0xf]
    %v2887 = vld [vmem:[#allocation15 + $0x208] sm:$0xff]
    %v2888 = vld [vmem:[#allocation15 + $0x210] sm:$0xff]
    %v2889 = vld [vmem:[#allocation15 + $0x218] sm:$0xf]
    %v2890 = vld [vmem:[#allocation15 + $0x21c] sm:$0xff]
    %v2891 = vld [vmem:[#allocation15 + $0x224] sm:$0xff]
    %v2892 = vld [vmem:[#allocation15 + $0x22c] sm:$0xf]
    %v2893 = vld [vmem:[#allocation15 + $0x230] sm:$0xff]
    %v2894 = vld [vmem:[#allocation15 + $0x238] sm:$0xff]
    %v2895 = vld [vmem:[#allocation15 + $0x240] sm:$0xf]
    %v2896 = vld [vmem:[#allocation15 + $0x244] sm:$0xff]
    %v2897 = vld [vmem:[#allocation15 + $0x24c] sm:$0xff]
    %v2898 = vld [vmem:[#allocation15 + $0x254] sm:$0xf]
    %v2899 = vld [vmem:[#allocation15 + $0x258] sm:$0xff]
    %v2900 = vld [vmem:[#allocation15 + $0x260] sm:$0xff]
    %v2901 = vld [vmem:[#allocation15 + $0x268] sm:$0xf]
    %v2902 = vld [vmem:[#allocation15 + $0x26c] sm:$0xff]
    %v2903 = vld [vmem:[#allocation15 + $0x274] sm:$0xff]
    %v2904 = vld [vmem:[#allocation15 + $0x27c] sm:$0xf]
    %v2905 = vld [vmem:[#allocation15 + $0x280] sm:$0xff]
    %v2906 = vld [vmem:[#allocation15 + $0x288] sm:$0xff]
    %v2907 = vld [vmem:[#allocation15 + $0x290] sm:$0xf]
    %v2908 = vld [vmem:[#allocation15 + $0x294] sm:$0xff]
    %v2909 = vld [vmem:[#allocation15 + $0x29c] sm:$0xff]
    %v2910 = vld [vmem:[#allocation15 + $0x2a4] sm:$0xf]
    %v2911 = vld [vmem:[#allocation15 + $0x2a8] sm:$0xff]
    %v2912 = vld [vmem:[#allocation15 + $0x2b0] sm:$0xff]
    %v2913 = vld [vmem:[#allocation15 + $0x2b8] sm:$0xf]
    %v2914 = vld [vmem:[#allocation15 + $0x2bc] sm:$0xff]
    %v2915 = vld [vmem:[#allocation15 + $0x2c4] sm:$0xff]
    %v2916 = vld [vmem:[#allocation15 + $0x2cc] sm:$0xf]
    %v2917 = vld [vmem:[#allocation15 + $0x2d0] sm:$0xff]
    %v2918 = vld [vmem:[#allocation15 + $0x2d8] sm:$0xff]
    %v2919 = vld [vmem:[#allocation15 + $0x2e0] sm:$0xf]
    %v2920 = vld [vmem:[#allocation15 + $0x2e4] sm:$0xff]
    %v2921 = vld [vmem:[#allocation15 + $0x2ec] sm:$0xff]
    %v2922 = vld [vmem:[#allocation15 + $0x2f4] sm:$0xf]
    %v2923 = vld [vmem:[#allocation15 + $0x2f8] sm:$0xff]
    %v2924 = vld [vmem:[#allocation15 + $0x300] sm:$0xff]
    %v2925 = vld [vmem:[#allocation15 + $0x308] sm:$0xf]
    %v2926 = vld [vmem:[#allocation15 + $0x30c] sm:$0xff]
    %v2927 = vld [vmem:[#allocation15 + $0x314] sm:$0xff]
    %v2928 = vld [vmem:[#allocation15 + $0x31c] sm:$0xf]
    %v2929 = vld [vmem:[#allocation15 + $0x320] sm:$0xff]
    %v2930 = vld [vmem:[#allocation15 + $0x328] sm:$0xff]
    %v2931 = vld [vmem:[#allocation15 + $0x330] sm:$0xf]
    %v2932 = vld [vmem:[#allocation15 + $0x334] sm:$0xff]
    %v2933 = vld [vmem:[#allocation15 + $0x33c] sm:$0xff]
    %v2934 = vld [vmem:[#allocation15 + $0x344] sm:$0xf]
    %v2935 = vld [vmem:[#allocation15 + $0x348] sm:$0xff]
    %v2936 = vld [vmem:[#allocation15 + $0x350] sm:$0xff]
    %v2937 = vld [vmem:[#allocation15 + $0x358] sm:$0xf]
    %v2938 = vld [vmem:[#allocation15 + $0x35c] sm:$0xff]
    %v2939 = vld [vmem:[#allocation15 + $0x364] sm:$0xff]
    %v2940 = vld [vmem:[#allocation15 + $0x36c] sm:$0xf]
    %v2941 = vld [vmem:[#allocation15 + $0x370] sm:$0xff]
    %v2942 = vld [vmem:[#allocation15 + $0x378] sm:$0xff]
    %v2943 = vld [vmem:[#allocation15 + $0x380] sm:$0xf]
    %v2944 = vld [vmem:[#allocation15 + $0x384] sm:$0xff]
    %v2945 = vld [vmem:[#allocation15 + $0x38c] sm:$0xff]
    %v2946 = vld [vmem:[#allocation15 + $0x394] sm:$0xf]
    %v2947 = vld [vmem:[#allocation15 + $0x398] sm:$0xff]
    %v2948 = vld [vmem:[#allocation15 + $0x3a0] sm:$0xff]
    %v2949 = vld [vmem:[#allocation15 + $0x3a8] sm:$0xf]
    %v2950 = vld [vmem:[#allocation15 + $0x3ac] sm:$0xff]
    %v2951 = vld [vmem:[#allocation15 + $0x3b4] sm:$0xff]
    %v2952 = vld [vmem:[#allocation15 + $0x3bc] sm:$0xf]
    %v2953 = vld [vmem:[#allocation15 + $0x3c0] sm:$0xff]
    %v2954 = vld [vmem:[#allocation15 + $0x3c8] sm:$0xff]
    %v2955 = vld [vmem:[#allocation15 + $0x3d0] sm:$0xf]
    %v2956 = vld [vmem:[#allocation15 + $0x3d4] sm:$0xff]
    %v2957 = vld [vmem:[#allocation15 + $0x3dc] sm:$0xff]
    %v2958 = vld [vmem:[#allocation15 + $0x3e4] sm:$0xf]
    %v2959 = vld [vmem:[#allocation15 + $0x3e8] sm:$0xff]
    %v2960 = vld [vmem:[#allocation15 + $0x3f0] sm:$0xff]
    %v2961 = vld [vmem:[#allocation15 + $0x3f8] sm:$0xf]
    %v2962 = vld [vmem:[#allocation15 + $0x3fc] sm:$0xff]
    %v2963 = vld [vmem:[#allocation15 + $0x404] sm:$0xff]
    %v2964 = vld [vmem:[#allocation15 + $0x40c] sm:$0xf]
    %v2965 = vld [vmem:[#allocation15 + $0x410] sm:$0xff]
    %v2966 = vld [vmem:[#allocation15 + $0x418] sm:$0xff]
    %v2967 = vld [vmem:[#allocation15 + $0x420] sm:$0xf]
    %v2968 = vld [vmem:[#allocation15 + $0x424] sm:$0xff]
    %v2969 = vld [vmem:[#allocation15 + $0x42c] sm:$0xff]
    %v2970 = vld [vmem:[#allocation15 + $0x434] sm:$0xf]
    %v2971 = vld [vmem:[#allocation15 + $0x438] sm:$0xff]
    %v2972 = vld [vmem:[#allocation15 + $0x440] sm:$0xff]
    %v2973 = vld [vmem:[#allocation15 + $0x448] sm:$0xf]
    %v2974 = vld [vmem:[#allocation15 + $0x44c] sm:$0xff]
    %v2975 = vld [vmem:[#allocation15 + $0x454] sm:$0xff]
    %v2976 = vld [vmem:[#allocation15 + $0x45c] sm:$0xf]
    %v2977 = vld [vmem:[#allocation15 + $0x460] sm:$0xff]
    %v2978 = vld [vmem:[#allocation15 + $0x468] sm:$0xff]
    %v2979 = vld [vmem:[#allocation15 + $0x470] sm:$0xf]
    %v2980 = vld [vmem:[#allocation15 + $0x474] sm:$0xff]
    %v2981 = vld [vmem:[#allocation15 + $0x47c] sm:$0xff]
    %v2982 = vld [vmem:[#allocation15 + $0x484] sm:$0xf]
    %v2983 = vld [vmem:[#allocation15 + $0x488] sm:$0xff]
    %v2984 = vld [vmem:[#allocation15 + $0x490] sm:$0xff]
    %v2985 = vld [vmem:[#allocation15 + $0x498] sm:$0xf]
    %v2986 = vld [vmem:[#allocation15 + $0x49c] sm:$0xff]
    %v2987 = vld [vmem:[#allocation15 + $0x4a4] sm:$0xff]
    %v2988 = vld [vmem:[#allocation15 + $0x4ac] sm:$0xf]
    %v2989 = vld [vmem:[#allocation15 + $0x4b0] sm:$0xff]
    %v2990 = vld [vmem:[#allocation15 + $0x4b8] sm:$0xff]
    %v2991 = vld [vmem:[#allocation15 + $0x4c0] sm:$0xf]
    %v2992 = vld [vmem:[#allocation15 + $0x4c4] sm:$0xff]
    %v2993 = vld [vmem:[#allocation15 + $0x4cc] sm:$0xff]
    %v2994 = vld [vmem:[#allocation15 + $0x4d4] sm:$0xf]
    %v2995 = vld [vmem:[#allocation15 + $0x4d8] sm:$0xff]
    %v2996 = vld [vmem:[#allocation15 + $0x4e0] sm:$0xff]
    %v2997 = vld [vmem:[#allocation15 + $0x4e8] sm:$0xf]
    %v2998 = vld [vmem:[#allocation15 + $0x4ec] sm:$0xff]
    %v2999 = vld [vmem:[#allocation15 + $0x4f4] sm:$0xff]
    %v3000 = vld [vmem:[#allocation15 + $0x4fc] sm:$0xf]
    %v3001 = vld [vmem:[#allocation15 + $0x500] sm:$0xff]
    %v3002 = vld [vmem:[#allocation15 + $0x508] sm:$0xff]
    %v3003 = vld [vmem:[#allocation15 + $0x510] sm:$0xf]
    %v3004 = vld [vmem:[#allocation15 + $0x514] sm:$0xff]
    %v3005 = vld [vmem:[#allocation15 + $0x51c] sm:$0xff]
    %v3006 = vld [vmem:[#allocation15 + $0x524] sm:$0xf]
    %v3007 = vld [vmem:[#allocation15 + $0x528] sm:$0xff]
    %v3008 = vld [vmem:[#allocation15 + $0x530] sm:$0xff]
    %v3009 = vld [vmem:[#allocation15 + $0x538] sm:$0xf]
    %v3010 = vld [vmem:[#allocation15 + $0x53c] sm:$0xff]
    %v3011 = vld [vmem:[#allocation15 + $0x544] sm:$0xff]
    %v3012 = vld [vmem:[#allocation15 + $0x54c] sm:$0xf]
    %v3013 = vld [vmem:[#allocation15 + $0x550] sm:$0xff]
    %v3014 = vld [vmem:[#allocation15 + $0x558] sm:$0xff]
    %v3015 = vld [vmem:[#allocation15 + $0x560] sm:$0xf]
    %v3016 = vld [vmem:[#allocation15 + $0x564] sm:$0xff]
    %v3017 = vld [vmem:[#allocation15 + $0x56c] sm:$0xff]
    %v3018 = vld [vmem:[#allocation15 + $0x574] sm:$0xf]
    %v3019 = vld [vmem:[#allocation15 + $0x578] sm:$0xff]
    %v3020 = vld [vmem:[#allocation15 + $0x580] sm:$0xff]
    %v3021 = vld [vmem:[#allocation15 + $0x588] sm:$0xf]
    %v3022 = vld [vmem:[#allocation15 + $0x58c] sm:$0xff]
    %v3023 = vld [vmem:[#allocation15 + $0x594] sm:$0xff]
    %v3024 = vld [vmem:[#allocation15 + $0x59c] sm:$0xf]
    %v3025 = vld [vmem:[#allocation15 + $0x5a0] sm:$0xff]
    %v3026 = vld [vmem:[#allocation15 + $0x5a8] sm:$0xff]
    %v3027 = vld [vmem:[#allocation15 + $0x5b0] sm:$0xf]
    %v3028 = vld [vmem:[#allocation15 + $0x5b4] sm:$0xff]
    %v3029 = vld [vmem:[#allocation15 + $0x5bc] sm:$0xff]
    %v3030 = vld [vmem:[#allocation15 + $0x5c4] sm:$0xf]
    %v3031 = vld [vmem:[#allocation15 + $0x5c8] sm:$0xff]
    %v3032 = vld [vmem:[#allocation15 + $0x5d0] sm:$0xff]
    %v3033 = vld [vmem:[#allocation15 + $0x5d8] sm:$0xf]
    %v3034 = vld [vmem:[#allocation15 + $0x5dc] sm:$0xff]
    %v3035 = vld [vmem:[#allocation15 + $0x5e4] sm:$0xff]
    %v3036 = vld [vmem:[#allocation15 + $0x5ec] sm:$0xf]
    %v3037 = vld [vmem:[#allocation15 + $0x5f0] sm:$0xff]
    %v3038 = vld [vmem:[#allocation15 + $0x5f8] sm:$0xff]
    %v3039 = vld [vmem:[#allocation15 + $0x600] sm:$0xf]
    %v3040 = vld [vmem:[#allocation15 + $0x604] sm:$0xff]
    %v3041 = vld [vmem:[#allocation15 + $0x60c] sm:$0xff]
    %v3042 = vld [vmem:[#allocation15 + $0x614] sm:$0xf]
    %v3043 = vld [vmem:[#allocation15 + $0x618] sm:$0xff]
    %v3044 = vld [vmem:[#allocation15 + $0x620] sm:$0xff]
    %v3045 = vld [vmem:[#allocation15 + $0x628] sm:$0xf]
    %v3046 = vld [vmem:[#allocation15 + $0x62c] sm:$0xff]
    %v3047 = vld [vmem:[#allocation15 + $0x634] sm:$0xff]
    %v3048 = vld [vmem:[#allocation15 + $0x63c] sm:$0xf]
    %v3049 = vld [vmem:[#allocation15 + $0x640] sm:$0xff]
    %v3050 = vld [vmem:[#allocation15 + $0x648] sm:$0xff]
    %v3051 = vld [vmem:[#allocation15 + $0x650] sm:$0xf]
    %v3052 = vld [vmem:[#allocation15 + $0x654] sm:$0xff]
    %v3053 = vld [vmem:[#allocation15 + $0x65c] sm:$0xff]
    %v3054 = vld [vmem:[#allocation15 + $0x664] sm:$0xf]
    %v3055 = vld [vmem:[#allocation15 + $0x668] sm:$0xff]
    %v3056 = vld [vmem:[#allocation15 + $0x670] sm:$0xff]
    %v3057 = vld [vmem:[#allocation15 + $0x678] sm:$0xf]
    %v3058 = vld [vmem:[#allocation15 + $0x67c] sm:$0xff]
    %v3059 = vld [vmem:[#allocation15 + $0x684] sm:$0xff]
    %v3060 = vld [vmem:[#allocation15 + $0x68c] sm:$0xf]
    %v3061 = vld [vmem:[#allocation15 + $0x690] sm:$0xff]
    %v3062 = vld [vmem:[#allocation15 + $0x698] sm:$0xff]
    %v3063 = vld [vmem:[#allocation15 + $0x6a0] sm:$0xf]
    %v3064 = vld [vmem:[#allocation15 + $0x6a4] sm:$0xff]
    %v3065 = vld [vmem:[#allocation15 + $0x6ac] sm:$0xff]
    %v3066 = vld [vmem:[#allocation15 + $0x6b4] sm:$0xf]
    %v3067 = vld [vmem:[#allocation15 + $0x6b8] sm:$0xff]
    %v3068 = vld [vmem:[#allocation15 + $0x6c0] sm:$0xff]
    %v3069 = vld [vmem:[#allocation15 + $0x6c8] sm:$0xf]
    %v3070 = vld [vmem:[#allocation15 + $0x6cc] sm:$0xff]
    %v3071 = vld [vmem:[#allocation15 + $0x6d4] sm:$0xff]
    %v3072 = vld [vmem:[#allocation15 + $0x6dc] sm:$0xf]
    %v3073 = vld [vmem:[#allocation15 + $0x6e0] sm:$0xff]
    %v3074 = vld [vmem:[#allocation15 + $0x6e8] sm:$0xff]
    %v3075 = vld [vmem:[#allocation15 + $0x6f0] sm:$0xf]
    %v3076 = vld [vmem:[#allocation15 + $0x6f4] sm:$0xff]
    %v3077 = vld [vmem:[#allocation15 + $0x6fc] sm:$0xff]
    %v3078 = vld [vmem:[#allocation15 + $0x704] sm:$0xf]
    %v3079 = vld [vmem:[#allocation15 + $0x708] sm:$0xff]
    %v3080 = vld [vmem:[#allocation15 + $0x710] sm:$0xff]
    %v3081 = vld [vmem:[#allocation15 + $0x718] sm:$0xf]
    %v3082 = vld [vmem:[#allocation15 + $0x71c] sm:$0xff]
    %v3083 = vld [vmem:[#allocation15 + $0x724] sm:$0xff]
    %v3084 = vld [vmem:[#allocation15 + $0x72c] sm:$0xf]
    %v3085 = vld [vmem:[#allocation15 + $0x730] sm:$0xff]
    %v3086 = vld [vmem:[#allocation15 + $0x738] sm:$0xff]
    %v3087 = vld [vmem:[#allocation15 + $0x740] sm:$0xf]
    %v3088 = vld [vmem:[#allocation15 + $0x744] sm:$0xff]
    %v3089 = vld [vmem:[#allocation15 + $0x74c] sm:$0xff]
    %v3090 = vld [vmem:[#allocation15 + $0x754] sm:$0xf]
    %v3091 = vld [vmem:[#allocation15 + $0x758] sm:$0xff]
    %v3092 = vld [vmem:[#allocation15 + $0x760] sm:$0xff]
    %v3093 = vld [vmem:[#allocation15 + $0x768] sm:$0xf]
    %v3094 = vld [vmem:[#allocation15 + $0x76c] sm:$0xff]
    %v3095 = vld [vmem:[#allocation15 + $0x774] sm:$0xff]
    %v3096 = vld [vmem:[#allocation15 + $0x77c] sm:$0xf]
    %v3097 = vld [vmem:[#allocation15 + $0x780] sm:$0xff]
    %v3098 = vld [vmem:[#allocation15 + $0x788] sm:$0xff]
    %v3099 = vld [vmem:[#allocation15 + $0x790] sm:$0xf]
    %v3100 = vld [vmem:[#allocation15 + $0x794] sm:$0xff]
    %v3101 = vld [vmem:[#allocation15 + $0x79c] sm:$0xff]
    %v3102 = vld [vmem:[#allocation15 + $0x7a4] sm:$0xf]
    %v3103 = vld [vmem:[#allocation15 + $0x7a8] sm:$0xff]
    %v3104 = vld [vmem:[#allocation15 + $0x7b0] sm:$0xff]
    %v3105 = vld [vmem:[#allocation15 + $0x7b8] sm:$0xf]
    %v3106 = vld [vmem:[#allocation15 + $0x7bc] sm:$0xff]
    %v3107 = vld [vmem:[#allocation15 + $0x7c4] sm:$0xff]
    %v3108 = vld [vmem:[#allocation15 + $0x7cc] sm:$0xf]
    %v3109 = vld [vmem:[#allocation15 + $0x7d0] sm:$0xff]
    %v3110 = vld [vmem:[#allocation15 + $0x7d8] sm:$0xff]
    %v3111 = vld [vmem:[#allocation15 + $0x7e0] sm:$0xf]
    %v3112 = vld [vmem:[#allocation15 + $0x7e4] sm:$0xff]
    %v3113 = vld [vmem:[#allocation15 + $0x7ec] sm:$0xff]
    %v3114 = vld [vmem:[#allocation15 + $0x7f4] sm:$0xf]
    %v3115 = vld [vmem:[#allocation15 + $0x7f8] sm:$0xff]
    %v3116 = vld [vmem:[#allocation15 + $0x800] sm:$0xff]
    %v3117 = vld [vmem:[#allocation15 + $0x808] sm:$0xf]
    %v3118 = vld [vmem:[#allocation15 + $0x80c] sm:$0xff]
    %v3119 = vld [vmem:[#allocation15 + $0x814] sm:$0xff]
    %v3120 = vld [vmem:[#allocation15 + $0x81c] sm:$0xf]
    %v3121 = vld [vmem:[#allocation15 + $0x820] sm:$0xff]
    %v3122 = vld [vmem:[#allocation15 + $0x828] sm:$0xff]
    %v3123 = vld [vmem:[#allocation15 + $0x830] sm:$0xf]
    %v3124 = vld [vmem:[#allocation15 + $0x834] sm:$0xff]
    %v3125 = vld [vmem:[#allocation15 + $0x83c] sm:$0xff]
    %v3126 = vld [vmem:[#allocation15 + $0x844] sm:$0xf]
    %v3127 = vld [vmem:[#allocation15 + $0x848] sm:$0xff]
    %v3128 = vld [vmem:[#allocation15 + $0x850] sm:$0xff]
    %v3129 = vld [vmem:[#allocation15 + $0x858] sm:$0xf]
    %v3130 = vld [vmem:[#allocation15 + $0x85c] sm:$0xff]
    %v3131 = vld [vmem:[#allocation15 + $0x864] sm:$0xff]
    %v3132 = vld [vmem:[#allocation15 + $0x86c] sm:$0xf]
    %v3133 = vld [vmem:[#allocation15 + $0x870] sm:$0xff]
    %v3134 = vld [vmem:[#allocation15 + $0x878] sm:$0xff]
    %v3135 = vld [vmem:[#allocation15 + $0x880] sm:$0xf]
    %v3136 = vld [vmem:[#allocation15 + $0x884] sm:$0xff]
    %v3137 = vld [vmem:[#allocation15 + $0x88c] sm:$0xff]
    %v3138 = vld [vmem:[#allocation15 + $0x894] sm:$0xf]
    %v3139 = vld [vmem:[#allocation15 + $0x898] sm:$0xff]
    %v3140 = vld [vmem:[#allocation15 + $0x8a0] sm:$0xff]
    %v3141 = vld [vmem:[#allocation15 + $0x8a8] sm:$0xf]
    %v3142 = vld [vmem:[#allocation15 + $0x8ac] sm:$0xff]
    %v3143 = vld [vmem:[#allocation15 + $0x8b4] sm:$0xff]
    %v3144 = vld [vmem:[#allocation15 + $0x8bc] sm:$0xf]
    %v3145 = vld [vmem:[#allocation15 + $0x8c0] sm:$0xff]
    %v3146 = vld [vmem:[#allocation15 + $0x8c8] sm:$0xff]
    %v3147 = vld [vmem:[#allocation15 + $0x8d0] sm:$0xf]
    %v3148 = vld [vmem:[#allocation15 + $0x8d4] sm:$0xff]
    %v3149 = vld [vmem:[#allocation15 + $0x8dc] sm:$0xff]
    %v3150 = vld [vmem:[#allocation15 + $0x8e4] sm:$0xf]
    %v3151 = vld [vmem:[#allocation15 + $0x8e8] sm:$0xff]
    %v3152 = vld [vmem:[#allocation15 + $0x8f0] sm:$0xff]
    %v3153 = vld [vmem:[#allocation15 + $0x8f8] sm:$0xf]
    %v3154 = vld [vmem:[#allocation15 + $0x8fc] sm:$0xff]
    %v3155 = vld [vmem:[#allocation15 + $0x904] sm:$0xff]
    %v3156 = vld [vmem:[#allocation15 + $0x90c] sm:$0xf]
    %v3157 = vld [vmem:[#allocation15 + $0x910] sm:$0xff]
    %v3158 = vld [vmem:[#allocation15 + $0x918] sm:$0xff]
    %v3159 = vld [vmem:[#allocation15 + $0x920] sm:$0xf]
    %v3160 = vld [vmem:[#allocation15 + $0x924] sm:$0xff]
    %v3161 = vld [vmem:[#allocation15 + $0x92c] sm:$0xff]
    %v3162 = vld [vmem:[#allocation15 + $0x934] sm:$0xf]
    %v3163 = vld [vmem:[#allocation15 + $0x938] sm:$0xff]
    %v3164 = vld [vmem:[#allocation15 + $0x940] sm:$0xff]
    %v3165 = vld [vmem:[#allocation15 + $0x948] sm:$0xf]
    %v3166 = vld [vmem:[#allocation15 + $0x94c] sm:$0xff]
    %v3167 = vld [vmem:[#allocation15 + $0x954] sm:$0xff]
    %v3168 = vld [vmem:[#allocation15 + $0x95c] sm:$0xf]
    %v3169 = vld [vmem:[#allocation15 + $0x960] sm:$0xff]
    %v3170 = vld [vmem:[#allocation15 + $0x968] sm:$0xff]
    %v3171 = vld [vmem:[#allocation15 + $0x970] sm:$0xf]
    %v3172 = vld [vmem:[#allocation15 + $0x974] sm:$0xff]
    %v3173 = vld [vmem:[#allocation15 + $0x97c] sm:$0xff]
    %v3174 = vld [vmem:[#allocation15 + $0x984] sm:$0xf]
    %v3175 = vld [vmem:[#allocation15 + $0x988] sm:$0xff]
    %v3176 = vld [vmem:[#allocation15 + $0x990] sm:$0xff]
    %v3177 = vld [vmem:[#allocation15 + $0x998] sm:$0xf]
    %v3178 = vld [vmem:[#allocation15 + $0x99c] sm:$0xff]
    %v3179 = vld [vmem:[#allocation15 + $0x9a4] sm:$0xff]
    %v3180 = vld [vmem:[#allocation15 + $0x9ac] sm:$0xf]
    %v3181 = vld [vmem:[#allocation15 + $0x9b0] sm:$0xff]
    %v3182 = vld [vmem:[#allocation15 + $0x9b8] sm:$0xff]
    %v3183 = vld [vmem:[#allocation15 + $0x9c0] sm:$0xf]
    %v3184 = vld [vmem:[#allocation15 + $0x9c4] sm:$0xff]
    %v3185 = vld [vmem:[#allocation15 + $0x9cc] sm:$0xff]
    %v3186 = vld [vmem:[#allocation15 + $0x9d4] sm:$0xf]
    %v3187 = vld [vmem:[#allocation15 + $0x9d8] sm:$0xff]
    %v3188 = vld [vmem:[#allocation15 + $0x9e0] sm:$0xff]
    %v3189 = vld [vmem:[#allocation15 + $0x9e8] sm:$0xf]
    %v3190 = vld [vmem:[#allocation15 + $0x9ec] sm:$0xff]
    %v3191 = vld [vmem:[#allocation15 + $0x9f4] sm:$0xff]
    %v3192 = vld [vmem:[#allocation15 + $0x9fc] sm:$0xf]
    %v3193 = vld [vmem:[#allocation15 + $0xa00] sm:$0xff]
    %v3194 = vld [vmem:[#allocation15 + $0xa08] sm:$0xff]
    %v3195 = vld [vmem:[#allocation15 + $0xa10] sm:$0xf]
    %v3196 = vld [vmem:[#allocation15 + $0xa14] sm:$0xff]
    %v3197 = vld [vmem:[#allocation15 + $0xa1c] sm:$0xff]
    %v3198 = vld [vmem:[#allocation15 + $0xa24] sm:$0xf]
    %v3199 = vld [vmem:[#allocation15 + $0xa28] sm:$0xff]
    %v3200 = vld [vmem:[#allocation15 + $0xa30] sm:$0xff]
    %v3201 = vld [vmem:[#allocation15 + $0xa38] sm:$0xf]
    %v3202 = vld [vmem:[#allocation15 + $0xa3c] sm:$0xff]
    %v3203 = vld [vmem:[#allocation15 + $0xa44] sm:$0xff]
    %v3204 = vld [vmem:[#allocation15 + $0xa4c] sm:$0xf]
    %v3205 = vld [vmem:[#allocation15 + $0xa50] sm:$0xff]
    %v3206 = vld [vmem:[#allocation15 + $0xa58] sm:$0xff]
    %v3207 = vld [vmem:[#allocation15 + $0xa60] sm:$0xf]
    %v3208 = vld [vmem:[#allocation15 + $0xa64] sm:$0xff]
    %v3209 = vld [vmem:[#allocation15 + $0xa6c] sm:$0xff]
    %v3210 = vld [vmem:[#allocation15 + $0xa74] sm:$0xf]
    %v3211 = vld [vmem:[#allocation15 + $0xa78] sm:$0xff]
    %v3212 = vld [vmem:[#allocation15 + $0xa80] sm:$0xff]
    %v3213 = vld [vmem:[#allocation15 + $0xa88] sm:$0xf]
    %v3214 = vld [vmem:[#allocation15 + $0xa8c] sm:$0xff]
    %v3215 = vld [vmem:[#allocation15 + $0xa94] sm:$0xff]
    %v3216 = vld [vmem:[#allocation15 + $0xa9c] sm:$0xf]
    %v3217 = vld [vmem:[#allocation15 + $0xaa0] sm:$0xff]
    %v3218 = vld [vmem:[#allocation15 + $0xaa8] sm:$0xff]
    %v3219 = vld [vmem:[#allocation15 + $0xab0] sm:$0xf]
    %v3220 = vld [vmem:[#allocation15 + $0xab4] sm:$0xff]
    %v3221 = vld [vmem:[#allocation15 + $0xabc] sm:$0xff]
    %v3222 = vld [vmem:[#allocation15 + $0xac4] sm:$0xf]
    %v3223 = vld [vmem:[#allocation15 + $0xac8] sm:$0xff]
    %v3224 = vld [vmem:[#allocation15 + $0xad0] sm:$0xff]
    %v3225 = vld [vmem:[#allocation15 + $0xad8] sm:$0xf]
    %v3226 = vld [vmem:[#allocation15 + $0xadc] sm:$0xff]
    %v3227 = vld [vmem:[#allocation15 + $0xae4] sm:$0xff]
    %v3228 = vld [vmem:[#allocation15 + $0xaec] sm:$0xf]
    %v3229 = vld [vmem:[#allocation15 + $0xaf0] sm:$0xff]
    %v3230 = vld [vmem:[#allocation15 + $0xaf8] sm:$0xff]
    %v3231 = vld [vmem:[#allocation15 + $0xb00] sm:$0xf]
    %v3232 = vld [vmem:[#allocation15 + $0xb04] sm:$0xff]
    %v3233 = vld [vmem:[#allocation15 + $0xb0c] sm:$0xff]
    %v3234 = vld [vmem:[#allocation15 + $0xb14] sm:$0xf]
    %v3235 = vld [vmem:[#allocation15 + $0xb18] sm:$0xff]
    %v3236 = vld [vmem:[#allocation15 + $0xb20] sm:$0xff]
    %v3237 = vld [vmem:[#allocation15 + $0xb28] sm:$0xf]
    %v3238 = vld [vmem:[#allocation15 + $0xb2c] sm:$0xff]
    %v3239 = vld [vmem:[#allocation15 + $0xb34] sm:$0xff]
    %v3240 = vld [vmem:[#allocation15 + $0xb3c] sm:$0xf]
    %v3241 = vld [vmem:[#allocation16] sm:$0x1f]
    %v3243 = vperm.slane %v3241, 0
    %v3244 = vperm.slane %v3241, 1
    %v3245 = vperm.slane %v3241, 2
    %v3246 = vperm.slane %v3241, 3
    %v3247 = vperm.slane %v3241, 4
    %v3685 = vunpack.c.l.b16 %v2809
    %v3686 = vunpack.c.h.b16 %v2809
    %v3687 = vunpack.c.l.b16 %v2810
    %v3688 = vunpack.c.h.b16 %v2810
    %v3689 = vunpack.c.l.b16 %v2811
    %v3690 = vunpack.c.l.b16 %v2812
    %v3691 = vunpack.c.h.b16 %v2812
    %v3692 = vunpack.c.l.b16 %v2813
    %v3693 = vunpack.c.h.b16 %v2813
    %v3694 = vunpack.c.l.b16 %v2814
    %v3695 = vunpack.c.l.b16 %v2815
    %v3696 = vunpack.c.h.b16 %v2815
    %v3697 = vunpack.c.l.b16 %v2816
    %v3698 = vunpack.c.h.b16 %v2816
    %v3699 = vunpack.c.l.b16 %v2817
    %v3700 = vunpack.c.l.b16 %v2818
    %v3701 = vunpack.c.h.b16 %v2818
    %v3702 = vunpack.c.l.b16 %v2819
    %v3703 = vunpack.c.h.b16 %v2819
    %v3704 = vunpack.c.l.b16 %v2820
    %v3705 = vunpack.c.l.b16 %v2821
    %v3706 = vunpack.c.h.b16 %v2821
    %v3707 = vunpack.c.l.b16 %v2822
    %v3708 = vunpack.c.h.b16 %v2822
    %v3709 = vunpack.c.l.b16 %v2823
    %v3710 = vunpack.c.l.b16 %v2824
    %v3711 = vunpack.c.h.b16 %v2824
    %v3712 = vunpack.c.l.b16 %v2825
    %v3713 = vunpack.c.h.b16 %v2825
    %v3714 = vunpack.c.l.b16 %v2826
    %v3715 = vunpack.c.l.b16 %v2827
    %v3716 = vunpack.c.h.b16 %v2827
    %v3717 = vunpack.c.l.b16 %v2828
    %v3718 = vunpack.c.h.b16 %v2828
    %v3719 = vunpack.c.l.b16 %v2829
    %v3720 = vunpack.c.l.b16 %v2830
    %v3721 = vunpack.c.h.b16 %v2830
    %v3722 = vunpack.c.l.b16 %v2831
    %v3723 = vunpack.c.h.b16 %v2831
    %v3724 = vunpack.c.l.b16 %v2832
    %v3725 = vunpack.c.l.b16 %v2833
    %v3726 = vunpack.c.h.b16 %v2833
    %v3727 = vunpack.c.l.b16 %v2834
    %v3728 = vunpack.c.h.b16 %v2834
    %v3729 = vunpack.c.l.b16 %v2835
    %v3730 = vunpack.c.l.b16 %v2836
    %v3731 = vunpack.c.h.b16 %v2836
    %v3732 = vunpack.c.l.b16 %v2837
    %v3733 = vunpack.c.h.b16 %v2837
    %v3734 = vunpack.c.l.b16 %v2838
    %v3735 = vunpack.c.l.b16 %v2839
    %v3736 = vunpack.c.h.b16 %v2839
    %v3737 = vunpack.c.l.b16 %v2840
    %v3738 = vunpack.c.h.b16 %v2840
    %v3739 = vunpack.c.l.b16 %v2841
    %v3740 = vunpack.c.l.b16 %v2842
    %v3741 = vunpack.c.h.b16 %v2842
    %v3742 = vunpack.c.l.b16 %v2843
    %v3743 = vunpack.c.h.b16 %v2843
    %v3744 = vunpack.c.l.b16 %v2844
    %v3745 = vunpack.c.l.b16 %v2845
    %v3746 = vunpack.c.h.b16 %v2845
    %v3747 = vunpack.c.l.b16 %v2846
    %v3748 = vunpack.c.h.b16 %v2846
    %v3749 = vunpack.c.l.b16 %v2847
    %v3750 = vunpack.c.l.b16 %v2848
    %v3751 = vunpack.c.h.b16 %v2848
    %v3752 = vunpack.c.l.b16 %v2849
    %v3753 = vunpack.c.h.b16 %v2849
    %v3754 = vunpack.c.l.b16 %v2850
    %v3755 = vunpack.c.l.b16 %v2851
    %v3756 = vunpack.c.h.b16 %v2851
    %v3757 = vunpack.c.l.b16 %v2852
    %v3758 = vunpack.c.h.b16 %v2852
    %v3759 = vunpack.c.l.b16 %v2853
    %v3760 = vunpack.c.l.b16 %v2854
    %v3761 = vunpack.c.h.b16 %v2854
    %v3762 = vunpack.c.l.b16 %v2855
    %v3763 = vunpack.c.h.b16 %v2855
    %v3764 = vunpack.c.l.b16 %v2856
    %v3765 = vunpack.c.l.b16 %v2857
    %v3766 = vunpack.c.h.b16 %v2857
    %v3767 = vunpack.c.l.b16 %v2858
    %v3768 = vunpack.c.h.b16 %v2858
    %v3769 = vunpack.c.l.b16 %v2859
    %v3770 = vunpack.c.l.b16 %v2860
    %v3771 = vunpack.c.h.b16 %v2860
    %v3772 = vunpack.c.l.b16 %v2861
    %v3773 = vunpack.c.h.b16 %v2861
    %v3774 = vunpack.c.l.b16 %v2862
    %v3775 = vunpack.c.l.b16 %v2863
    %v3776 = vunpack.c.h.b16 %v2863
    %v3777 = vunpack.c.l.b16 %v2864
    %v3778 = vunpack.c.h.b16 %v2864
    %v3779 = vunpack.c.l.b16 %v2865
    %v3780 = vunpack.c.l.b16 %v2866
    %v3781 = vunpack.c.h.b16 %v2866
    %v3782 = vunpack.c.l.b16 %v2867
    %v3783 = vunpack.c.h.b16 %v2867
    %v3784 = vunpack.c.l.b16 %v2868
    %v3785 = vunpack.c.l.b16 %v2869
    %v3786 = vunpack.c.h.b16 %v2869
    %v3787 = vunpack.c.l.b16 %v2870
    %v3788 = vunpack.c.h.b16 %v2870
    %v3789 = vunpack.c.l.b16 %v2871
    %v3790 = vunpack.c.l.b16 %v2872
    %v3791 = vunpack.c.h.b16 %v2872
    %v3792 = vunpack.c.l.b16 %v2873
    %v3793 = vunpack.c.h.b16 %v2873
    %v3794 = vunpack.c.l.b16 %v2874
    %v3795 = vunpack.c.l.b16 %v2875
    %v3796 = vunpack.c.h.b16 %v2875
    %v3797 = vunpack.c.l.b16 %v2876
    %v3798 = vunpack.c.h.b16 %v2876
    %v3799 = vunpack.c.l.b16 %v2877
    %v3800 = vunpack.c.l.b16 %v2878
    %v3801 = vunpack.c.h.b16 %v2878
    %v3802 = vunpack.c.l.b16 %v2879
    %v3803 = vunpack.c.h.b16 %v2879
    %v3804 = vunpack.c.l.b16 %v2880
    %v3805 = vunpack.c.l.b16 %v2881
    %v3806 = vunpack.c.h.b16 %v2881
    %v3807 = vunpack.c.l.b16 %v2882
    %v3808 = vunpack.c.h.b16 %v2882
    %v3809 = vunpack.c.l.b16 %v2883
    %v3810 = vunpack.c.l.b16 %v2884
    %v3811 = vunpack.c.h.b16 %v2884
    %v3812 = vunpack.c.l.b16 %v2885
    %v3813 = vunpack.c.h.b16 %v2885
    %v3814 = vunpack.c.l.b16 %v2886
    %v3815 = vunpack.c.l.b16 %v2887
    %v3816 = vunpack.c.h.b16 %v2887
    %v3817 = vunpack.c.l.b16 %v2888
    %v3818 = vunpack.c.h.b16 %v2888
    %v3819 = vunpack.c.l.b16 %v2889
    %v3820 = vunpack.c.l.b16 %v2890
    %v3821 = vunpack.c.h.b16 %v2890
    %v3822 = vunpack.c.l.b16 %v2891
    %v3823 = vunpack.c.h.b16 %v2891
    %v3824 = vunpack.c.l.b16 %v2892
    %v3825 = vunpack.c.l.b16 %v2893
    %v3826 = vunpack.c.h.b16 %v2893
    %v3827 = vunpack.c.l.b16 %v2894
    %v3828 = vunpack.c.h.b16 %v2894
    %v3829 = vunpack.c.l.b16 %v2895
    %v3830 = vunpack.c.l.b16 %v2896
    %v3831 = vunpack.c.h.b16 %v2896
    %v3832 = vunpack.c.l.b16 %v2897
    %v3833 = vunpack.c.h.b16 %v2897
    %v3834 = vunpack.c.l.b16 %v2898
    %v3835 = vunpack.c.l.b16 %v2899
    %v3836 = vunpack.c.h.b16 %v2899
    %v3837 = vunpack.c.l.b16 %v2900
    %v3838 = vunpack.c.h.b16 %v2900
    %v3839 = vunpack.c.l.b16 %v2901
    %v3840 = vunpack.c.l.b16 %v2902
    %v3841 = vunpack.c.h.b16 %v2902
    %v3842 = vunpack.c.l.b16 %v2903
    %v3843 = vunpack.c.h.b16 %v2903
    %v3844 = vunpack.c.l.b16 %v2904
    %v3845 = vunpack.c.l.b16 %v2905
    %v3846 = vunpack.c.h.b16 %v2905
    %v3847 = vunpack.c.l.b16 %v2906
    %v3848 = vunpack.c.h.b16 %v2906
    %v3849 = vunpack.c.l.b16 %v2907
    %v3850 = vunpack.c.l.b16 %v2908
    %v3851 = vunpack.c.h.b16 %v2908
    %v3852 = vunpack.c.l.b16 %v2909
    %v3853 = vunpack.c.h.b16 %v2909
    %v3854 = vunpack.c.l.b16 %v2910
    %v3855 = vunpack.c.l.b16 %v2911
    %v3856 = vunpack.c.h.b16 %v2911
    %v3857 = vunpack.c.l.b16 %v2912
    %v3858 = vunpack.c.h.b16 %v2912
    %v3859 = vunpack.c.l.b16 %v2913
    %v3860 = vunpack.c.l.b16 %v2914
    %v3861 = vunpack.c.h.b16 %v2914
    %v3862 = vunpack.c.l.b16 %v2915
    %v3863 = vunpack.c.h.b16 %v2915
    %v3864 = vunpack.c.l.b16 %v2916
    %v3865 = vunpack.c.l.b16 %v2917
    %v3866 = vunpack.c.h.b16 %v2917
    %v3867 = vunpack.c.l.b16 %v2918
    %v3868 = vunpack.c.h.b16 %v2918
    %v3869 = vunpack.c.l.b16 %v2919
    %v3870 = vunpack.c.l.b16 %v2920
    %v3871 = vunpack.c.h.b16 %v2920
    %v3872 = vunpack.c.l.b16 %v2921
    %v3873 = vunpack.c.h.b16 %v2921
    %v3874 = vunpack.c.l.b16 %v2922
    %v3875 = vunpack.c.l.b16 %v2923
    %v3876 = vunpack.c.h.b16 %v2923
    %v3877 = vunpack.c.l.b16 %v2924
    %v3878 = vunpack.c.h.b16 %v2924
    %v3879 = vunpack.c.l.b16 %v2925
    %v3880 = vunpack.c.l.b16 %v2926
    %v3881 = vunpack.c.h.b16 %v2926
    %v3882 = vunpack.c.l.b16 %v2927
    %v3883 = vunpack.c.h.b16 %v2927
    %v3884 = vunpack.c.l.b16 %v2928
    %v3885 = vunpack.c.l.b16 %v2929
    %v3886 = vunpack.c.h.b16 %v2929
    %v3887 = vunpack.c.l.b16 %v2930
    %v3888 = vunpack.c.h.b16 %v2930
    %v3889 = vunpack.c.l.b16 %v2931
    %v3890 = vunpack.c.l.b16 %v2932
    %v3891 = vunpack.c.h.b16 %v2932
    %v3892 = vunpack.c.l.b16 %v2933
    %v3893 = vunpack.c.h.b16 %v2933
    %v3894 = vunpack.c.l.b16 %v2934
    %v3895 = vunpack.c.l.b16 %v2935
    %v3896 = vunpack.c.h.b16 %v2935
    %v3897 = vunpack.c.l.b16 %v2936
    %v3898 = vunpack.c.h.b16 %v2936
    %v3899 = vunpack.c.l.b16 %v2937
    %v3900 = vunpack.c.l.b16 %v2938
    %v3901 = vunpack.c.h.b16 %v2938
    %v3902 = vunpack.c.l.b16 %v2939
    %v3903 = vunpack.c.h.b16 %v2939
    %v3904 = vunpack.c.l.b16 %v2940
    %v3905 = vunpack.c.l.b16 %v2941
    %v3906 = vunpack.c.h.b16 %v2941
    %v3907 = vunpack.c.l.b16 %v2942
    %v3908 = vunpack.c.h.b16 %v2942
    %v3909 = vunpack.c.l.b16 %v2943
    %v3910 = vunpack.c.l.b16 %v2944
    %v3911 = vunpack.c.h.b16 %v2944
    %v3912 = vunpack.c.l.b16 %v2945
    %v3913 = vunpack.c.h.b16 %v2945
    %v3914 = vunpack.c.l.b16 %v2946
    %v3915 = vunpack.c.l.b16 %v2947
    %v3916 = vunpack.c.h.b16 %v2947
    %v3917 = vunpack.c.l.b16 %v2948
    %v3918 = vunpack.c.h.b16 %v2948
    %v3919 = vunpack.c.l.b16 %v2949
    %v3920 = vunpack.c.l.b16 %v2950
    %v3921 = vunpack.c.h.b16 %v2950
    %v3922 = vunpack.c.l.b16 %v2951
    %v3923 = vunpack.c.h.b16 %v2951
    %v3924 = vunpack.c.l.b16 %v2952
    %v3925 = vunpack.c.l.b16 %v2953
    %v3926 = vunpack.c.h.b16 %v2953
    %v3927 = vunpack.c.l.b16 %v2954
    %v3928 = vunpack.c.h.b16 %v2954
    %v3929 = vunpack.c.l.b16 %v2955
    %v3930 = vunpack.c.l.b16 %v2956
    %v3931 = vunpack.c.h.b16 %v2956
    %v3932 = vunpack.c.l.b16 %v2957
    %v3933 = vunpack.c.h.b16 %v2957
    %v3934 = vunpack.c.l.b16 %v2958
    %v3935 = vunpack.c.l.b16 %v2959
    %v3936 = vunpack.c.h.b16 %v2959
    %v3937 = vunpack.c.l.b16 %v2960
    %v3938 = vunpack.c.h.b16 %v2960
    %v3939 = vunpack.c.l.b16 %v2961
    %v3940 = vunpack.c.l.b16 %v2962
    %v3941 = vunpack.c.h.b16 %v2962
    %v3942 = vunpack.c.l.b16 %v2963
    %v3943 = vunpack.c.h.b16 %v2963
    %v3944 = vunpack.c.l.b16 %v2964
    %v3945 = vunpack.c.l.b16 %v2965
    %v3946 = vunpack.c.h.b16 %v2965
    %v3947 = vunpack.c.l.b16 %v2966
    %v3948 = vunpack.c.h.b16 %v2966
    %v3949 = vunpack.c.l.b16 %v2967
    %v3950 = vunpack.c.l.b16 %v2968
    %v3951 = vunpack.c.h.b16 %v2968
    %v3952 = vunpack.c.l.b16 %v2969
    %v3953 = vunpack.c.h.b16 %v2969
    %v3954 = vunpack.c.l.b16 %v2970
    %v3955 = vunpack.c.l.b16 %v2971
    %v3956 = vunpack.c.h.b16 %v2971
    %v3957 = vunpack.c.l.b16 %v2972
    %v3958 = vunpack.c.h.b16 %v2972
    %v3959 = vunpack.c.l.b16 %v2973
    %v3960 = vunpack.c.l.b16 %v2974
    %v3961 = vunpack.c.h.b16 %v2974
    %v3962 = vunpack.c.l.b16 %v2975
    %v3963 = vunpack.c.h.b16 %v2975
    %v3964 = vunpack.c.l.b16 %v2976
    %v3965 = vunpack.c.l.b16 %v2977
    %v3966 = vunpack.c.h.b16 %v2977
    %v3967 = vunpack.c.l.b16 %v2978
    %v3968 = vunpack.c.h.b16 %v2978
    %v3969 = vunpack.c.l.b16 %v2979
    %v3970 = vunpack.c.l.b16 %v2980
    %v3971 = vunpack.c.h.b16 %v2980
    %v3972 = vunpack.c.l.b16 %v2981
    %v3973 = vunpack.c.h.b16 %v2981
    %v3974 = vunpack.c.l.b16 %v2982
    %v3975 = vunpack.c.l.b16 %v2983
    %v3976 = vunpack.c.h.b16 %v2983
    %v3977 = vunpack.c.l.b16 %v2984
    %v3978 = vunpack.c.h.b16 %v2984
    %v3979 = vunpack.c.l.b16 %v2985
    %v3980 = vunpack.c.l.b16 %v2986
    %v3981 = vunpack.c.h.b16 %v2986
    %v3982 = vunpack.c.l.b16 %v2987
    %v3983 = vunpack.c.h.b16 %v2987
    %v3984 = vunpack.c.l.b16 %v2988
    %v3985 = vunpack.c.l.b16 %v2989
    %v3986 = vunpack.c.h.b16 %v2989
    %v3987 = vunpack.c.l.b16 %v2990
    %v3988 = vunpack.c.h.b16 %v2990
    %v3989 = vunpack.c.l.b16 %v2991
    %v3990 = vunpack.c.l.b16 %v2992
    %v3991 = vunpack.c.h.b16 %v2992
    %v3992 = vunpack.c.l.b16 %v2993
    %v3993 = vunpack.c.h.b16 %v2993
    %v3994 = vunpack.c.l.b16 %v2994
    %v3995 = vunpack.c.l.b16 %v2995
    %v3996 = vunpack.c.h.b16 %v2995
    %v3997 = vunpack.c.l.b16 %v2996
    %v3998 = vunpack.c.h.b16 %v2996
    %v3999 = vunpack.c.l.b16 %v2997
    %v4000 = vunpack.c.l.b16 %v2998
    %v4001 = vunpack.c.h.b16 %v2998
    %v4002 = vunpack.c.l.b16 %v2999
    %v4003 = vunpack.c.h.b16 %v2999
    %v4004 = vunpack.c.l.b16 %v3000
    %v4005 = vunpack.c.l.b16 %v3001
    %v4006 = vunpack.c.h.b16 %v3001
    %v4007 = vunpack.c.l.b16 %v3002
    %v4008 = vunpack.c.h.b16 %v3002
    %v4009 = vunpack.c.l.b16 %v3003
    %v4010 = vunpack.c.l.b16 %v3004
    %v4011 = vunpack.c.h.b16 %v3004
    %v4012 = vunpack.c.l.b16 %v3005
    %v4013 = vunpack.c.h.b16 %v3005
    %v4014 = vunpack.c.l.b16 %v3006
    %v4015 = vunpack.c.l.b16 %v3007
    %v4016 = vunpack.c.h.b16 %v3007
    %v4017 = vunpack.c.l.b16 %v3008
    %v4018 = vunpack.c.h.b16 %v3008
    %v4019 = vunpack.c.l.b16 %v3009
    %v4020 = vunpack.c.l.b16 %v3010
    %v4021 = vunpack.c.h.b16 %v3010
    %v4022 = vunpack.c.l.b16 %v3011
    %v4023 = vunpack.c.h.b16 %v3011
    %v4024 = vunpack.c.l.b16 %v3012
    %v4025 = vunpack.c.l.b16 %v3013
    %v4026 = vunpack.c.h.b16 %v3013
    %v4027 = vunpack.c.l.b16 %v3014
    %v4028 = vunpack.c.h.b16 %v3014
    %v4029 = vunpack.c.l.b16 %v3015
    %v4030 = vunpack.c.l.b16 %v3016
    %v4031 = vunpack.c.h.b16 %v3016
    %v4032 = vunpack.c.l.b16 %v3017
    %v4033 = vunpack.c.h.b16 %v3017
    %v4034 = vunpack.c.l.b16 %v3018
    %v4035 = vunpack.c.l.b16 %v3019
    %v4036 = vunpack.c.h.b16 %v3019
    %v4037 = vunpack.c.l.b16 %v3020
    %v4038 = vunpack.c.h.b16 %v3020
    %v4039 = vunpack.c.l.b16 %v3021
    %v4040 = vunpack.c.l.b16 %v3022
    %v4041 = vunpack.c.h.b16 %v3022
    %v4042 = vunpack.c.l.b16 %v3023
    %v4043 = vunpack.c.h.b16 %v3023
    %v4044 = vunpack.c.l.b16 %v3024
    %v4045 = vunpack.c.l.b16 %v3025
    %v4046 = vunpack.c.h.b16 %v3025
    %v4047 = vunpack.c.l.b16 %v3026
    %v4048 = vunpack.c.h.b16 %v3026
    %v4049 = vunpack.c.l.b16 %v3027
    %v4050 = vunpack.c.l.b16 %v3028
    %v4051 = vunpack.c.h.b16 %v3028
    %v4052 = vunpack.c.l.b16 %v3029
    %v4053 = vunpack.c.h.b16 %v3029
    %v4054 = vunpack.c.l.b16 %v3030
    %v4055 = vunpack.c.l.b16 %v3031
    %v4056 = vunpack.c.h.b16 %v3031
    %v4057 = vunpack.c.l.b16 %v3032
    %v4058 = vunpack.c.h.b16 %v3032
    %v4059 = vunpack.c.l.b16 %v3033
    %v4060 = vunpack.c.l.b16 %v3034
    %v4061 = vunpack.c.h.b16 %v3034
    %v4062 = vunpack.c.l.b16 %v3035
    %v4063 = vunpack.c.h.b16 %v3035
    %v4064 = vunpack.c.l.b16 %v3036
    %v4065 = vunpack.c.l.b16 %v3037
    %v4066 = vunpack.c.h.b16 %v3037
    %v4067 = vunpack.c.l.b16 %v3038
    %v4068 = vunpack.c.h.b16 %v3038
    %v4069 = vunpack.c.l.b16 %v3039
    %v4070 = vunpack.c.l.b16 %v3040
    %v4071 = vunpack.c.h.b16 %v3040
    %v4072 = vunpack.c.l.b16 %v3041
    %v4073 = vunpack.c.h.b16 %v3041
    %v4074 = vunpack.c.l.b16 %v3042
    %v4075 = vunpack.c.l.b16 %v3043
    %v4076 = vunpack.c.h.b16 %v3043
    %v4077 = vunpack.c.l.b16 %v3044
    %v4078 = vunpack.c.h.b16 %v3044
    %v4079 = vunpack.c.l.b16 %v3045
    %v4080 = vunpack.c.l.b16 %v3046
    %v4081 = vunpack.c.h.b16 %v3046
    %v4082 = vunpack.c.l.b16 %v3047
    %v4083 = vunpack.c.h.b16 %v3047
    %v4084 = vunpack.c.l.b16 %v3048
    %v4085 = vunpack.c.l.b16 %v3049
    %v4086 = vunpack.c.h.b16 %v3049
    %v4087 = vunpack.c.l.b16 %v3050
    %v4088 = vunpack.c.h.b16 %v3050
    %v4089 = vunpack.c.l.b16 %v3051
    %v4090 = vunpack.c.l.b16 %v3052
    %v4091 = vunpack.c.h.b16 %v3052
    %v4092 = vunpack.c.l.b16 %v3053
    %v4093 = vunpack.c.h.b16 %v3053
    %v4094 = vunpack.c.l.b16 %v3054
    %v4095 = vunpack.c.l.b16 %v3055
    %v4096 = vunpack.c.h.b16 %v3055
    %v4097 = vunpack.c.l.b16 %v3056
    %v4098 = vunpack.c.h.b16 %v3056
    %v4099 = vunpack.c.l.b16 %v3057
    %v4100 = vunpack.c.l.b16 %v3058
    %v4101 = vunpack.c.h.b16 %v3058
    %v4102 = vunpack.c.l.b16 %v3059
    %v4103 = vunpack.c.h.b16 %v3059
    %v4104 = vunpack.c.l.b16 %v3060
    %v4105 = vunpack.c.l.b16 %v3061
    %v4106 = vunpack.c.h.b16 %v3061
    %v4107 = vunpack.c.l.b16 %v3062
    %v4108 = vunpack.c.h.b16 %v3062
    %v4109 = vunpack.c.l.b16 %v3063
    %v4110 = vunpack.c.l.b16 %v3064
    %v4111 = vunpack.c.h.b16 %v3064
    %v4112 = vunpack.c.l.b16 %v3065
    %v4113 = vunpack.c.h.b16 %v3065
    %v4114 = vunpack.c.l.b16 %v3066
    %v4115 = vunpack.c.l.b16 %v3067
    %v4116 = vunpack.c.h.b16 %v3067
    %v4117 = vunpack.c.l.b16 %v3068
    %v4118 = vunpack.c.h.b16 %v3068
    %v4119 = vunpack.c.l.b16 %v3069
    %v4120 = vunpack.c.l.b16 %v3070
    %v4121 = vunpack.c.h.b16 %v3070
    %v4122 = vunpack.c.l.b16 %v3071
    %v4123 = vunpack.c.h.b16 %v3071
    %v4124 = vunpack.c.l.b16 %v3072
    %v4125 = vunpack.c.l.b16 %v3073
    %v4126 = vunpack.c.h.b16 %v3073
    %v4127 = vunpack.c.l.b16 %v3074
    %v4128 = vunpack.c.h.b16 %v3074
    %v4129 = vunpack.c.l.b16 %v3075
    %v4130 = vunpack.c.l.b16 %v3076
    %v4131 = vunpack.c.h.b16 %v3076
    %v4132 = vunpack.c.l.b16 %v3077
    %v4133 = vunpack.c.h.b16 %v3077
    %v4134 = vunpack.c.l.b16 %v3078
    %v4135 = vunpack.c.l.b16 %v3079
    %v4136 = vunpack.c.h.b16 %v3079
    %v4137 = vunpack.c.l.b16 %v3080
    %v4138 = vunpack.c.h.b16 %v3080
    %v4139 = vunpack.c.l.b16 %v3081
    %v4140 = vunpack.c.l.b16 %v3082
    %v4141 = vunpack.c.h.b16 %v3082
    %v4142 = vunpack.c.l.b16 %v3083
    %v4143 = vunpack.c.h.b16 %v3083
    %v4144 = vunpack.c.l.b16 %v3084
    %v4145 = vunpack.c.l.b16 %v3085
    %v4146 = vunpack.c.h.b16 %v3085
    %v4147 = vunpack.c.l.b16 %v3086
    %v4148 = vunpack.c.h.b16 %v3086
    %v4149 = vunpack.c.l.b16 %v3087
    %v4150 = vunpack.c.l.b16 %v3088
    %v4151 = vunpack.c.h.b16 %v3088
    %v4152 = vunpack.c.l.b16 %v3089
    %v4153 = vunpack.c.h.b16 %v3089
    %v4154 = vunpack.c.l.b16 %v3090
    %v4155 = vunpack.c.l.b16 %v3091
    %v4156 = vunpack.c.h.b16 %v3091
    %v4157 = vunpack.c.l.b16 %v3092
    %v4158 = vunpack.c.h.b16 %v3092
    %v4159 = vunpack.c.l.b16 %v3093
    %v4160 = vunpack.c.l.b16 %v3094
    %v4161 = vunpack.c.h.b16 %v3094
    %v4162 = vunpack.c.l.b16 %v3095
    %v4163 = vunpack.c.h.b16 %v3095
    %v4164 = vunpack.c.l.b16 %v3096
    %v4165 = vunpack.c.l.b16 %v3097
    %v4166 = vunpack.c.h.b16 %v3097
    %v4167 = vunpack.c.l.b16 %v3098
    %v4168 = vunpack.c.h.b16 %v3098
    %v4169 = vunpack.c.l.b16 %v3099
    %v4170 = vunpack.c.l.b16 %v3100
    %v4171 = vunpack.c.h.b16 %v3100
    %v4172 = vunpack.c.l.b16 %v3101
    %v4173 = vunpack.c.h.b16 %v3101
    %v4174 = vunpack.c.l.b16 %v3102
    %v4175 = vunpack.c.l.b16 %v3103
    %v4176 = vunpack.c.h.b16 %v3103
    %v4177 = vunpack.c.l.b16 %v3104
    %v4178 = vunpack.c.h.b16 %v3104
    %v4179 = vunpack.c.l.b16 %v3105
    %v4180 = vunpack.c.l.b16 %v3106
    %v4181 = vunpack.c.h.b16 %v3106
    %v4182 = vunpack.c.l.b16 %v3107
    %v4183 = vunpack.c.h.b16 %v3107
    %v4184 = vunpack.c.l.b16 %v3108
    %v4185 = vunpack.c.l.b16 %v3109
    %v4186 = vunpack.c.h.b16 %v3109
    %v4187 = vunpack.c.l.b16 %v3110
    %v4188 = vunpack.c.h.b16 %v3110
    %v4189 = vunpack.c.l.b16 %v3111
    %v4190 = vunpack.c.l.b16 %v3112
    %v4191 = vunpack.c.h.b16 %v3112
    %v4192 = vunpack.c.l.b16 %v3113
    %v4193 = vunpack.c.h.b16 %v3113
    %v4194 = vunpack.c.l.b16 %v3114
    %v4195 = vunpack.c.l.b16 %v3115
    %v4196 = vunpack.c.h.b16 %v3115
    %v4197 = vunpack.c.l.b16 %v3116
    %v4198 = vunpack.c.h.b16 %v3116
    %v4199 = vunpack.c.l.b16 %v3117
    %v4200 = vunpack.c.l.b16 %v3118
    %v4201 = vunpack.c.h.b16 %v3118
    %v4202 = vunpack.c.l.b16 %v3119
    %v4203 = vunpack.c.h.b16 %v3119
    %v4204 = vunpack.c.l.b16 %v3120
    %v4205 = vunpack.c.l.b16 %v3121
    %v4206 = vunpack.c.h.b16 %v3121
    %v4207 = vunpack.c.l.b16 %v3122
    %v4208 = vunpack.c.h.b16 %v3122
    %v4209 = vunpack.c.l.b16 %v3123
    %v4210 = vunpack.c.l.b16 %v3124
    %v4211 = vunpack.c.h.b16 %v3124
    %v4212 = vunpack.c.l.b16 %v3125
    %v4213 = vunpack.c.h.b16 %v3125
    %v4214 = vunpack.c.l.b16 %v3126
    %v4215 = vunpack.c.l.b16 %v3127
    %v4216 = vunpack.c.h.b16 %v3127
    %v4217 = vunpack.c.l.b16 %v3128
    %v4218 = vunpack.c.h.b16 %v3128
    %v4219 = vunpack.c.l.b16 %v3129
    %v4220 = vunpack.c.l.b16 %v3130
    %v4221 = vunpack.c.h.b16 %v3130
    %v4222 = vunpack.c.l.b16 %v3131
    %v4223 = vunpack.c.h.b16 %v3131
    %v4224 = vunpack.c.l.b16 %v3132
    %v4225 = vunpack.c.l.b16 %v3133
    %v4226 = vunpack.c.h.b16 %v3133
    %v4227 = vunpack.c.l.b16 %v3134
    %v4228 = vunpack.c.h.b16 %v3134
    %v4229 = vunpack.c.l.b16 %v3135
    %v4230 = vunpack.c.l.b16 %v3136
    %v4231 = vunpack.c.h.b16 %v3136
    %v4232 = vunpack.c.l.b16 %v3137
    %v4233 = vunpack.c.h.b16 %v3137
    %v4234 = vunpack.c.l.b16 %v3138
    %v4235 = vunpack.c.l.b16 %v3139
    %v4236 = vunpack.c.h.b16 %v3139
    %v4237 = vunpack.c.l.b16 %v3140
    %v4238 = vunpack.c.h.b16 %v3140
    %v4239 = vunpack.c.l.b16 %v3141
    %v4240 = vunpack.c.l.b16 %v3142
    %v4241 = vunpack.c.h.b16 %v3142
    %v4242 = vunpack.c.l.b16 %v3143
    %v4243 = vunpack.c.h.b16 %v3143
    %v4244 = vunpack.c.l.b16 %v3144
    %v4245 = vunpack.c.l.b16 %v3145
    %v4246 = vunpack.c.h.b16 %v3145
    %v4247 = vunpack.c.l.b16 %v3146
    %v4248 = vunpack.c.h.b16 %v3146
    %v4249 = vunpack.c.l.b16 %v3147
    %v4250 = vunpack.c.l.b16 %v3148
    %v4251 = vunpack.c.h.b16 %v3148
    %v4252 = vunpack.c.l.b16 %v3149
    %v4253 = vunpack.c.h.b16 %v3149
    %v4254 = vunpack.c.l.b16 %v3150
    %v4255 = vunpack.c.l.b16 %v3151
    %v4256 = vunpack.c.h.b16 %v3151
    %v4257 = vunpack.c.l.b16 %v3152
    %v4258 = vunpack.c.h.b16 %v3152
    %v4259 = vunpack.c.l.b16 %v3153
    %v4260 = vunpack.c.l.b16 %v3154
    %v4261 = vunpack.c.h.b16 %v3154
    %v4262 = vunpack.c.l.b16 %v3155
    %v4263 = vunpack.c.h.b16 %v3155
    %v4264 = vunpack.c.l.b16 %v3156
    %v4265 = vunpack.c.l.b16 %v3157
    %v4266 = vunpack.c.h.b16 %v3157
    %v4267 = vunpack.c.l.b16 %v3158
    %v4268 = vunpack.c.h.b16 %v3158
    %v4269 = vunpack.c.l.b16 %v3159
    %v4270 = vunpack.c.l.b16 %v3160
    %v4271 = vunpack.c.h.b16 %v3160
    %v4272 = vunpack.c.l.b16 %v3161
    %v4273 = vunpack.c.h.b16 %v3161
    %v4274 = vunpack.c.l.b16 %v3162
    %v4275 = vunpack.c.l.b16 %v3163
    %v4276 = vunpack.c.h.b16 %v3163
    %v4277 = vunpack.c.l.b16 %v3164
    %v4278 = vunpack.c.h.b16 %v3164
    %v4279 = vunpack.c.l.b16 %v3165
    %v4280 = vunpack.c.l.b16 %v3166
    %v4281 = vunpack.c.h.b16 %v3166
    %v4282 = vunpack.c.l.b16 %v3167
    %v4283 = vunpack.c.h.b16 %v3167
    %v4284 = vunpack.c.l.b16 %v3168
    %v4285 = vunpack.c.l.b16 %v3169
    %v4286 = vunpack.c.h.b16 %v3169
    %v4287 = vunpack.c.l.b16 %v3170
    %v4288 = vunpack.c.h.b16 %v3170
    %v4289 = vunpack.c.l.b16 %v3171
    %v4290 = vunpack.c.l.b16 %v3172
    %v4291 = vunpack.c.h.b16 %v3172
    %v4292 = vunpack.c.l.b16 %v3173
    %v4293 = vunpack.c.h.b16 %v3173
    %v4294 = vunpack.c.l.b16 %v3174
    %v4295 = vunpack.c.l.b16 %v3175
    %v4296 = vunpack.c.h.b16 %v3175
    %v4297 = vunpack.c.l.b16 %v3176
    %v4298 = vunpack.c.h.b16 %v3176
    %v4299 = vunpack.c.l.b16 %v3177
    %v4300 = vunpack.c.l.b16 %v3178
    %v4301 = vunpack.c.h.b16 %v3178
    %v4302 = vunpack.c.l.b16 %v3179
    %v4303 = vunpack.c.h.b16 %v3179
    %v4304 = vunpack.c.l.b16 %v3180
    %v4305 = vunpack.c.l.b16 %v3181
    %v4306 = vunpack.c.h.b16 %v3181
    %v4307 = vunpack.c.l.b16 %v3182
    %v4308 = vunpack.c.h.b16 %v3182
    %v4309 = vunpack.c.l.b16 %v3183
    %v4310 = vunpack.c.l.b16 %v3184
    %v4311 = vunpack.c.h.b16 %v3184
    %v4312 = vunpack.c.l.b16 %v3185
    %v4313 = vunpack.c.h.b16 %v3185
    %v4314 = vunpack.c.l.b16 %v3186
    %v4315 = vunpack.c.l.b16 %v3187
    %v4316 = vunpack.c.h.b16 %v3187
    %v4317 = vunpack.c.l.b16 %v3188
    %v4318 = vunpack.c.h.b16 %v3188
    %v4319 = vunpack.c.l.b16 %v3189
    %v4320 = vunpack.c.l.b16 %v3190
    %v4321 = vunpack.c.h.b16 %v3190
    %v4322 = vunpack.c.l.b16 %v3191
    %v4323 = vunpack.c.h.b16 %v3191
    %v4324 = vunpack.c.l.b16 %v3192
    %v4325 = vunpack.c.l.b16 %v3193
    %v4326 = vunpack.c.h.b16 %v3193
    %v4327 = vunpack.c.l.b16 %v3194
    %v4328 = vunpack.c.h.b16 %v3194
    %v4329 = vunpack.c.l.b16 %v3195
    %v4330 = vunpack.c.l.b16 %v3196
    %v4331 = vunpack.c.h.b16 %v3196
    %v4332 = vunpack.c.l.b16 %v3197
    %v4333 = vunpack.c.h.b16 %v3197
    %v4334 = vunpack.c.l.b16 %v3198
    %v4335 = vunpack.c.l.b16 %v3199
    %v4336 = vunpack.c.h.b16 %v3199
    %v4337 = vunpack.c.l.b16 %v3200
    %v4338 = vunpack.c.h.b16 %v3200
    %v4339 = vunpack.c.l.b16 %v3201
    %v4340 = vunpack.c.l.b16 %v3202
    %v4341 = vunpack.c.h.b16 %v3202
    %v4342 = vunpack.c.l.b16 %v3203
    %v4343 = vunpack.c.h.b16 %v3203
    %v4344 = vunpack.c.l.b16 %v3204
    %v4345 = vunpack.c.l.b16 %v3205
    %v4346 = vunpack.c.h.b16 %v3205
    %v4347 = vunpack.c.l.b16 %v3206
    %v4348 = vunpack.c.h.b16 %v3206
    %v4349 = vunpack.c.l.b16 %v3207
    %v4350 = vunpack.c.l.b16 %v3208
    %v4351 = vunpack.c.h.b16 %v3208
    %v4352 = vunpack.c.l.b16 %v3209
    %v4353 = vunpack.c.h.b16 %v3209
    %v4354 = vunpack.c.l.b16 %v3210
    %v4355 = vunpack.c.l.b16 %v3211
    %v4356 = vunpack.c.h.b16 %v3211
    %v4357 = vunpack.c.l.b16 %v3212
    %v4358 = vunpack.c.h.b16 %v3212
    %v4359 = vunpack.c.l.b16 %v3213
    %v4360 = vunpack.c.l.b16 %v3214
    %v4361 = vunpack.c.h.b16 %v3214
    %v4362 = vunpack.c.l.b16 %v3215
    %v4363 = vunpack.c.h.b16 %v3215
    %v4364 = vunpack.c.l.b16 %v3216
    %v4365 = vunpack.c.l.b16 %v3217
    %v4366 = vunpack.c.h.b16 %v3217
    %v4367 = vunpack.c.l.b16 %v3218
    %v4368 = vunpack.c.h.b16 %v3218
    %v4369 = vunpack.c.l.b16 %v3219
    %v4370 = vunpack.c.l.b16 %v3220
    %v4371 = vunpack.c.h.b16 %v3220
    %v4372 = vunpack.c.l.b16 %v3221
    %v4373 = vunpack.c.h.b16 %v3221
    %v4374 = vunpack.c.l.b16 %v3222
    %v4375 = vunpack.c.l.b16 %v3223
    %v4376 = vunpack.c.h.b16 %v3223
    %v4377 = vunpack.c.l.b16 %v3224
    %v4378 = vunpack.c.h.b16 %v3224
    %v4379 = vunpack.c.l.b16 %v3225
    %v4380 = vunpack.c.l.b16 %v3226
    %v4381 = vunpack.c.h.b16 %v3226
    %v4382 = vunpack.c.l.b16 %v3227
    %v4383 = vunpack.c.h.b16 %v3227
    %v4384 = vunpack.c.l.b16 %v3228
    %v4385 = vunpack.c.l.b16 %v3229
    %v4386 = vunpack.c.h.b16 %v3229
    %v4387 = vunpack.c.l.b16 %v3230
    %v4388 = vunpack.c.h.b16 %v3230
    %v4389 = vunpack.c.l.b16 %v3231
    %v4390 = vunpack.c.l.b16 %v3232
    %v4391 = vunpack.c.h.b16 %v3232
    %v4392 = vunpack.c.l.b16 %v3233
    %v4393 = vunpack.c.h.b16 %v3233
    %v4394 = vunpack.c.l.b16 %v3234
    %v4395 = vunpack.c.l.b16 %v3235
    %v4396 = vunpack.c.h.b16 %v3235
    %v4397 = vunpack.c.l.b16 %v3236
    %v4398 = vunpack.c.h.b16 %v3236
    %v4399 = vunpack.c.l.b16 %v3237
    %v4400 = vunpack.c.l.b16 %v3238
    %v4401 = vunpack.c.h.b16 %v3238
    %v4402 = vunpack.c.l.b16 %v3239
    %v4403 = vunpack.c.h.b16 %v3239
    %v4404 = vunpack.c.l.b16 %v3240
    %v4405 = vpack.c.b16 %v3690, %v3685
    %v4406 = vpack.c.b16 %v3691, %v3686
    %v4407 = vpack.c.b16 %v3692, %v3687
    %v4408 = vpack.c.b16 %v3693, %v3688
    %v4409 = vpack.c.b16 %v3694, %v3689
    %v4410 = vpack.c.b16 %v3700, %v3695
    %v4411 = vpack.c.b16 %v3701, %v3696
    %v4412 = vpack.c.b16 %v3702, %v3697
    %v4413 = vpack.c.b16 %v3703, %v3698
    %v4414 = vpack.c.b16 %v3704, %v3699
    %v4415 = vpack.c.b16 %v3710, %v3705
    %v4416 = vpack.c.b16 %v3711, %v3706
    %v4417 = vpack.c.b16 %v3712, %v3707
    %v4418 = vpack.c.b16 %v3713, %v3708
    %v4419 = vpack.c.b16 %v3714, %v3709
    %v4420 = vpack.c.b16 %v3720, %v3715
    %v4421 = vpack.c.b16 %v3721, %v3716
    %v4422 = vpack.c.b16 %v3722, %v3717
    %v4423 = vpack.c.b16 %v3723, %v3718
    %v4424 = vpack.c.b16 %v3724, %v3719
    %v4425 = vpack.c.b16 %v3730, %v3725
    %v4426 = vpack.c.b16 %v3731, %v3726
    %v4427 = vpack.c.b16 %v3732, %v3727
    %v4428 = vpack.c.b16 %v3733, %v3728
    %v4429 = vpack.c.b16 %v3734, %v3729
    %v4430 = vpack.c.b16 %v3740, %v3735
    %v4431 = vpack.c.b16 %v3741, %v3736
    %v4432 = vpack.c.b16 %v3742, %v3737
    %v4433 = vpack.c.b16 %v3743, %v3738
    %v4434 = vpack.c.b16 %v3744, %v3739
    %v4435 = vpack.c.b16 %v3750, %v3745
    %v4436 = vpack.c.b16 %v3751, %v3746
    %v4437 = vpack.c.b16 %v3752, %v3747
    %v4438 = vpack.c.b16 %v3753, %v3748
    %v4439 = vpack.c.b16 %v3754, %v3749
    %v4440 = vpack.c.b16 %v3760, %v3755
    %v4441 = vpack.c.b16 %v3761, %v3756
    %v4442 = vpack.c.b16 %v3762, %v3757
    %v4443 = vpack.c.b16 %v3763, %v3758
    %v4444 = vpack.c.b16 %v3764, %v3759
    %v4445 = vpack.c.b16 %v3770, %v3765
    %v4446 = vpack.c.b16 %v3771, %v3766
    %v4447 = vpack.c.b16 %v3772, %v3767
    %v4448 = vpack.c.b16 %v3773, %v3768
    %v4449 = vpack.c.b16 %v3774, %v3769
    %v4450 = vpack.c.b16 %v3780, %v3775
    %v4451 = vpack.c.b16 %v3781, %v3776
    %v4452 = vpack.c.b16 %v3782, %v3777
    %v4453 = vpack.c.b16 %v3783, %v3778
    %v4454 = vpack.c.b16 %v3784, %v3779
    %v4455 = vpack.c.b16 %v3790, %v3785
    %v4456 = vpack.c.b16 %v3791, %v3786
    %v4457 = vpack.c.b16 %v3792, %v3787
    %v4458 = vpack.c.b16 %v3793, %v3788
    %v4459 = vpack.c.b16 %v3794, %v3789
    %v4460 = vpack.c.b16 %v3800, %v3795
    %v4461 = vpack.c.b16 %v3801, %v3796
    %v4462 = vpack.c.b16 %v3802, %v3797
    %v4463 = vpack.c.b16 %v3803, %v3798
    %v4464 = vpack.c.b16 %v3804, %v3799
    %v4465 = vpack.c.b16 %v3810, %v3805
    %v4466 = vpack.c.b16 %v3811, %v3806
    %v4467 = vpack.c.b16 %v3812, %v3807
    %v4468 = vpack.c.b16 %v3813, %v3808
    %v4469 = vpack.c.b16 %v3814, %v3809
    %v4470 = vpack.c.b16 %v3820, %v3815
    %v4471 = vpack.c.b16 %v3821, %v3816
    %v4472 = vpack.c.b16 %v3822, %v3817
    %v4473 = vpack.c.b16 %v3823, %v3818
    %v4474 = vpack.c.b16 %v3824, %v3819
    %v4475 = vpack.c.b16 %v3830, %v3825
    %v4476 = vpack.c.b16 %v3831, %v3826
    %v4477 = vpack.c.b16 %v3832, %v3827
    %v4478 = vpack.c.b16 %v3833, %v3828
    %v4479 = vpack.c.b16 %v3834, %v3829
    %v4480 = vpack.c.b16 %v3840, %v3835
    %v4481 = vpack.c.b16 %v3841, %v3836
    %v4482 = vpack.c.b16 %v3842, %v3837
    %v4483 = vpack.c.b16 %v3843, %v3838
    %v4484 = vpack.c.b16 %v3844, %v3839
    %v4485 = vpack.c.b16 %v3850, %v3845
    %v4486 = vpack.c.b16 %v3851, %v3846
    %v4487 = vpack.c.b16 %v3852, %v3847
    %v4488 = vpack.c.b16 %v3853, %v3848
    %v4489 = vpack.c.b16 %v3854, %v3849
    %v4490 = vpack.c.b16 %v3860, %v3855
    %v4491 = vpack.c.b16 %v3861, %v3856
    %v4492 = vpack.c.b16 %v3862, %v3857
    %v4493 = vpack.c.b16 %v3863, %v3858
    %v4494 = vpack.c.b16 %v3864, %v3859
    %v4495 = vpack.c.b16 %v3870, %v3865
    %v4496 = vpack.c.b16 %v3871, %v3866
    %v4497 = vpack.c.b16 %v3872, %v3867
    %v4498 = vpack.c.b16 %v3873, %v3868
    %v4499 = vpack.c.b16 %v3874, %v3869
    %v4500 = vpack.c.b16 %v3880, %v3875
    %v4501 = vpack.c.b16 %v3881, %v3876
    %v4502 = vpack.c.b16 %v3882, %v3877
    %v4503 = vpack.c.b16 %v3883, %v3878
    %v4504 = vpack.c.b16 %v3884, %v3879
    %v4505 = vpack.c.b16 %v3890, %v3885
    %v4506 = vpack.c.b16 %v3891, %v3886
    %v4507 = vpack.c.b16 %v3892, %v3887
    %v4508 = vpack.c.b16 %v3893, %v3888
    %v4509 = vpack.c.b16 %v3894, %v3889
    %v4510 = vpack.c.b16 %v3900, %v3895
    %v4511 = vpack.c.b16 %v3901, %v3896
    %v4512 = vpack.c.b16 %v3902, %v3897
    %v4513 = vpack.c.b16 %v3903, %v3898
    %v4514 = vpack.c.b16 %v3904, %v3899
    %v4515 = vpack.c.b16 %v3910, %v3905
    %v4516 = vpack.c.b16 %v3911, %v3906
    %v4517 = vpack.c.b16 %v3912, %v3907
    %v4518 = vpack.c.b16 %v3913, %v3908
    %v4519 = vpack.c.b16 %v3914, %v3909
    %v4520 = vpack.c.b16 %v3920, %v3915
    %v4521 = vpack.c.b16 %v3921, %v3916
    %v4522 = vpack.c.b16 %v3922, %v3917
    %v4523 = vpack.c.b16 %v3923, %v3918
    %v4524 = vpack.c.b16 %v3924, %v3919
    %v4525 = vpack.c.b16 %v3930, %v3925
    %v4526 = vpack.c.b16 %v3931, %v3926
    %v4527 = vpack.c.b16 %v3932, %v3927
    %v4528 = vpack.c.b16 %v3933, %v3928
    %v4529 = vpack.c.b16 %v3934, %v3929
    %v4530 = vpack.c.b16 %v3940, %v3935
    %v4531 = vpack.c.b16 %v3941, %v3936
    %v4532 = vpack.c.b16 %v3942, %v3937
    %v4533 = vpack.c.b16 %v3943, %v3938
    %v4534 = vpack.c.b16 %v3944, %v3939
    %v4535 = vpack.c.b16 %v3950, %v3945
    %v4536 = vpack.c.b16 %v3951, %v3946
    %v4537 = vpack.c.b16 %v3952, %v3947
    %v4538 = vpack.c.b16 %v3953, %v3948
    %v4539 = vpack.c.b16 %v3954, %v3949
    %v4540 = vpack.c.b16 %v3960, %v3955
    %v4541 = vpack.c.b16 %v3961, %v3956
    %v4542 = vpack.c.b16 %v3962, %v3957
    %v4543 = vpack.c.b16 %v3963, %v3958
    %v4544 = vpack.c.b16 %v3964, %v3959
    %v4545 = vpack.c.b16 %v3970, %v3965
    %v4546 = vpack.c.b16 %v3971, %v3966
    %v4547 = vpack.c.b16 %v3972, %v3967
    %v4548 = vpack.c.b16 %v3973, %v3968
    %v4549 = vpack.c.b16 %v3974, %v3969
    %v4550 = vpack.c.b16 %v3980, %v3975
    %v4551 = vpack.c.b16 %v3981, %v3976
    %v4552 = vpack.c.b16 %v3982, %v3977
    %v4553 = vpack.c.b16 %v3983, %v3978
    %v4554 = vpack.c.b16 %v3984, %v3979
    %v4555 = vpack.c.b16 %v3990, %v3985
    %v4556 = vpack.c.b16 %v3991, %v3986
    %v4557 = vpack.c.b16 %v3992, %v3987
    %v4558 = vpack.c.b16 %v3993, %v3988
    %v4559 = vpack.c.b16 %v3994, %v3989
    %v4560 = vpack.c.b16 %v4000, %v3995
    %v4561 = vpack.c.b16 %v4001, %v3996
    %v4562 = vpack.c.b16 %v4002, %v3997
    %v4563 = vpack.c.b16 %v4003, %v3998
    %v4564 = vpack.c.b16 %v4004, %v3999
    %v4565 = vpack.c.b16 %v4010, %v4005
    %v4566 = vpack.c.b16 %v4011, %v4006
    %v4567 = vpack.c.b16 %v4012, %v4007
    %v4568 = vpack.c.b16 %v4013, %v4008
    %v4569 = vpack.c.b16 %v4014, %v4009
    %v4570 = vpack.c.b16 %v4020, %v4015
    %v4571 = vpack.c.b16 %v4021, %v4016
    %v4572 = vpack.c.b16 %v4022, %v4017
    %v4573 = vpack.c.b16 %v4023, %v4018
    %v4574 = vpack.c.b16 %v4024, %v4019
    %v4575 = vpack.c.b16 %v4030, %v4025
    %v4576 = vpack.c.b16 %v4031, %v4026
    %v4577 = vpack.c.b16 %v4032, %v4027
    %v4578 = vpack.c.b16 %v4033, %v4028
    %v4579 = vpack.c.b16 %v4034, %v4029
    %v4580 = vpack.c.b16 %v4040, %v4035
    %v4581 = vpack.c.b16 %v4041, %v4036
    %v4582 = vpack.c.b16 %v4042, %v4037
    %v4583 = vpack.c.b16 %v4043, %v4038
    %v4584 = vpack.c.b16 %v4044, %v4039
    %v4585 = vpack.c.b16 %v4050, %v4045
    %v4586 = vpack.c.b16 %v4051, %v4046
    %v4587 = vpack.c.b16 %v4052, %v4047
    %v4588 = vpack.c.b16 %v4053, %v4048
    %v4589 = vpack.c.b16 %v4054, %v4049
    %v4590 = vpack.c.b16 %v4060, %v4055
    %v4591 = vpack.c.b16 %v4061, %v4056
    %v4592 = vpack.c.b16 %v4062, %v4057
    %v4593 = vpack.c.b16 %v4063, %v4058
    %v4594 = vpack.c.b16 %v4064, %v4059
    %v4595 = vpack.c.b16 %v4070, %v4065
    %v4596 = vpack.c.b16 %v4071, %v4066
    %v4597 = vpack.c.b16 %v4072, %v4067
    %v4598 = vpack.c.b16 %v4073, %v4068
    %v4599 = vpack.c.b16 %v4074, %v4069
    %v4600 = vpack.c.b16 %v4080, %v4075
    %v4601 = vpack.c.b16 %v4081, %v4076
    %v4602 = vpack.c.b16 %v4082, %v4077
    %v4603 = vpack.c.b16 %v4083, %v4078
    %v4604 = vpack.c.b16 %v4084, %v4079
    %v4605 = vpack.c.b16 %v4090, %v4085
    %v4606 = vpack.c.b16 %v4091, %v4086
    %v4607 = vpack.c.b16 %v4092, %v4087
    %v4608 = vpack.c.b16 %v4093, %v4088
    %v4609 = vpack.c.b16 %v4094, %v4089
    %v4610 = vpack.c.b16 %v4100, %v4095
    %v4611 = vpack.c.b16 %v4101, %v4096
    %v4612 = vpack.c.b16 %v4102, %v4097
    %v4613 = vpack.c.b16 %v4103, %v4098
    %v4614 = vpack.c.b16 %v4104, %v4099
    %v4615 = vpack.c.b16 %v4110, %v4105
    %v4616 = vpack.c.b16 %v4111, %v4106
    %v4617 = vpack.c.b16 %v4112, %v4107
    %v4618 = vpack.c.b16 %v4113, %v4108
    %v4619 = vpack.c.b16 %v4114, %v4109
    %v4620 = vpack.c.b16 %v4120, %v4115
    %v4621 = vpack.c.b16 %v4121, %v4116
    %v4622 = vpack.c.b16 %v4122, %v4117
    %v4623 = vpack.c.b16 %v4123, %v4118
    %v4624 = vpack.c.b16 %v4124, %v4119
    %v4625 = vpack.c.b16 %v4130, %v4125
    %v4626 = vpack.c.b16 %v4131, %v4126
    %v4627 = vpack.c.b16 %v4132, %v4127
    %v4628 = vpack.c.b16 %v4133, %v4128
    %v4629 = vpack.c.b16 %v4134, %v4129
    %v4630 = vpack.c.b16 %v4140, %v4135
    %v4631 = vpack.c.b16 %v4141, %v4136
    %v4632 = vpack.c.b16 %v4142, %v4137
    %v4633 = vpack.c.b16 %v4143, %v4138
    %v4634 = vpack.c.b16 %v4144, %v4139
    %v4635 = vpack.c.b16 %v4150, %v4145
    %v4636 = vpack.c.b16 %v4151, %v4146
    %v4637 = vpack.c.b16 %v4152, %v4147
    %v4638 = vpack.c.b16 %v4153, %v4148
    %v4639 = vpack.c.b16 %v4154, %v4149
    %v4640 = vpack.c.b16 %v4160, %v4155
    %v4641 = vpack.c.b16 %v4161, %v4156
    %v4642 = vpack.c.b16 %v4162, %v4157
    %v4643 = vpack.c.b16 %v4163, %v4158
    %v4644 = vpack.c.b16 %v4164, %v4159
    %v4645 = vpack.c.b16 %v4170, %v4165
    %v4646 = vpack.c.b16 %v4171, %v4166
    %v4647 = vpack.c.b16 %v4172, %v4167
    %v4648 = vpack.c.b16 %v4173, %v4168
    %v4649 = vpack.c.b16 %v4174, %v4169
    %v4650 = vpack.c.b16 %v4180, %v4175
    %v4651 = vpack.c.b16 %v4181, %v4176
    %v4652 = vpack.c.b16 %v4182, %v4177
    %v4653 = vpack.c.b16 %v4183, %v4178
    %v4654 = vpack.c.b16 %v4184, %v4179
    %v4655 = vpack.c.b16 %v4190, %v4185
    %v4656 = vpack.c.b16 %v4191, %v4186
    %v4657 = vpack.c.b16 %v4192, %v4187
    %v4658 = vpack.c.b16 %v4193, %v4188
    %v4659 = vpack.c.b16 %v4194, %v4189
    %v4660 = vpack.c.b16 %v4200, %v4195
    %v4661 = vpack.c.b16 %v4201, %v4196
    %v4662 = vpack.c.b16 %v4202, %v4197
    %v4663 = vpack.c.b16 %v4203, %v4198
    %v4664 = vpack.c.b16 %v4204, %v4199
    %v4665 = vpack.c.b16 %v4210, %v4205
    %v4666 = vpack.c.b16 %v4211, %v4206
    %v4667 = vpack.c.b16 %v4212, %v4207
    %v4668 = vpack.c.b16 %v4213, %v4208
    %v4669 = vpack.c.b16 %v4214, %v4209
    %v4670 = vpack.c.b16 %v4220, %v4215
    %v4671 = vpack.c.b16 %v4221, %v4216
    %v4672 = vpack.c.b16 %v4222, %v4217
    %v4673 = vpack.c.b16 %v4223, %v4218
    %v4674 = vpack.c.b16 %v4224, %v4219
    %v4675 = vpack.c.b16 %v4230, %v4225
    %v4676 = vpack.c.b16 %v4231, %v4226
    %v4677 = vpack.c.b16 %v4232, %v4227
    %v4678 = vpack.c.b16 %v4233, %v4228
    %v4679 = vpack.c.b16 %v4234, %v4229
    %v4680 = vpack.c.b16 %v4240, %v4235
    %v4681 = vpack.c.b16 %v4241, %v4236
    %v4682 = vpack.c.b16 %v4242, %v4237
    %v4683 = vpack.c.b16 %v4243, %v4238
    %v4684 = vpack.c.b16 %v4244, %v4239
    %v4685 = vpack.c.b16 %v4250, %v4245
    %v4686 = vpack.c.b16 %v4251, %v4246
    %v4687 = vpack.c.b16 %v4252, %v4247
    %v4688 = vpack.c.b16 %v4253, %v4248
    %v4689 = vpack.c.b16 %v4254, %v4249
    %v4690 = vpack.c.b16 %v4260, %v4255
    %v4691 = vpack.c.b16 %v4261, %v4256
    %v4692 = vpack.c.b16 %v4262, %v4257
    %v4693 = vpack.c.b16 %v4263, %v4258
    %v4694 = vpack.c.b16 %v4264, %v4259
    %v4695 = vpack.c.b16 %v4270, %v4265
    %v4696 = vpack.c.b16 %v4271, %v4266
    %v4697 = vpack.c.b16 %v4272, %v4267
    %v4698 = vpack.c.b16 %v4273, %v4268
    %v4699 = vpack.c.b16 %v4274, %v4269
    %v4700 = vpack.c.b16 %v4280, %v4275
    %v4701 = vpack.c.b16 %v4281, %v4276
    %v4702 = vpack.c.b16 %v4282, %v4277
    %v4703 = vpack.c.b16 %v4283, %v4278
    %v4704 = vpack.c.b16 %v4284, %v4279
    %v4705 = vpack.c.b16 %v4290, %v4285
    %v4706 = vpack.c.b16 %v4291, %v4286
    %v4707 = vpack.c.b16 %v4292, %v4287
    %v4708 = vpack.c.b16 %v4293, %v4288
    %v4709 = vpack.c.b16 %v4294, %v4289
    %v4710 = vpack.c.b16 %v4300, %v4295
    %v4711 = vpack.c.b16 %v4301, %v4296
    %v4712 = vpack.c.b16 %v4302, %v4297
    %v4713 = vpack.c.b16 %v4303, %v4298
    %v4714 = vpack.c.b16 %v4304, %v4299
    %v4715 = vpack.c.b16 %v4310, %v4305
    %v4716 = vpack.c.b16 %v4311, %v4306
    %v4717 = vpack.c.b16 %v4312, %v4307
    %v4718 = vpack.c.b16 %v4313, %v4308
    %v4719 = vpack.c.b16 %v4314, %v4309
    %v4720 = vpack.c.b16 %v4320, %v4315
    %v4721 = vpack.c.b16 %v4321, %v4316
    %v4722 = vpack.c.b16 %v4322, %v4317
    %v4723 = vpack.c.b16 %v4323, %v4318
    %v4724 = vpack.c.b16 %v4324, %v4319
    %v4725 = vpack.c.b16 %v4330, %v4325
    %v4726 = vpack.c.b16 %v4331, %v4326
    %v4727 = vpack.c.b16 %v4332, %v4327
    %v4728 = vpack.c.b16 %v4333, %v4328
    %v4729 = vpack.c.b16 %v4334, %v4329
    %v4730 = vpack.c.b16 %v4340, %v4335
    %v4731 = vpack.c.b16 %v4341, %v4336
    %v4732 = vpack.c.b16 %v4342, %v4337
    %v4733 = vpack.c.b16 %v4343, %v4338
    %v4734 = vpack.c.b16 %v4344, %v4339
    %v4735 = vpack.c.b16 %v4350, %v4345
    %v4736 = vpack.c.b16 %v4351, %v4346
    %v4737 = vpack.c.b16 %v4352, %v4347
    %v4738 = vpack.c.b16 %v4353, %v4348
    %v4739 = vpack.c.b16 %v4354, %v4349
    %v4740 = vpack.c.b16 %v4360, %v4355
    %v4741 = vpack.c.b16 %v4361, %v4356
    %v4742 = vpack.c.b16 %v4362, %v4357
    %v4743 = vpack.c.b16 %v4363, %v4358
    %v4744 = vpack.c.b16 %v4364, %v4359
    %v4745 = vpack.c.b16 %v4370, %v4365
    %v4746 = vpack.c.b16 %v4371, %v4366
    %v4747 = vpack.c.b16 %v4372, %v4367
    %v4748 = vpack.c.b16 %v4373, %v4368
    %v4749 = vpack.c.b16 %v4374, %v4369
    %v4750 = vpack.c.b16 %v4380, %v4375
    %v4751 = vpack.c.b16 %v4381, %v4376
    %v4752 = vpack.c.b16 %v4382, %v4377
    %v4753 = vpack.c.b16 %v4383, %v4378
    %v4754 = vpack.c.b16 %v4384, %v4379
    %v4755 = vpack.c.b16 %v4390, %v4385
    %v4756 = vpack.c.b16 %v4391, %v4386
    %v4757 = vpack.c.b16 %v4392, %v4387
    %v4758 = vpack.c.b16 %v4393, %v4388
    %v4759 = vpack.c.b16 %v4394, %v4389
    %v4760 = vpack.c.b16 %v4400, %v4395
    %v4761 = vpack.c.b16 %v4401, %v4396
    %v4762 = vpack.c.b16 %v4402, %v4397
    %v4763 = vpack.c.b16 %v4403, %v4398
    %v4764 = vpack.c.b16 %v4404, %v4399
    %5125 = vmatpush.bf16.msra.mxu0 %v4440
    %5126 = vmatpush.bf16.msra.mxu0 %v4435
    %5127 = vmatpush.bf16.msra.mxu0 %v4430
    %5128 = vmatpush.bf16.msra.mxu0 %v4425
    %5129 = vmatpush.bf16.msra.mxu0 %v4420
    %5130 = vmatpush.bf16.msra.mxu0 %v4415
    %5131 = vmatpush.bf16.msra.mxu0 %v4410
    %5132 = vmatpush.bf16.msra.mxu0 %v4405
    %5133 = vmatmul.bf16.gmra.mxu0 %v2800
    %v5134 = vpop.f32.mrf.mxu0
    %v5135 = vadd.f32 %v3243, %v5134
    %v5136 = vpop.f32.mrf.mxu0
    %5137 = vdwg.mxu0
    %5138 = vmatpush.bf16.msra.mxu0 %v4480
    %5139 = vmatpush.bf16.msra.mxu0 %v4475
    %5140 = vmatpush.bf16.msra.mxu0 %v4470
    %5141 = vmatpush.bf16.msra.mxu0 %v4465
    %5142 = vmatpush.bf16.msra.mxu0 %v4460
    %5143 = vmatpush.bf16.msra.mxu0 %v4455
    %5144 = vmatpush.bf16.msra.mxu0 %v4450
    %5145 = vmatpush.bf16.msra.mxu0 %v4445
    %5146 = vmatmul.bf16.gmra.mxu0 %v2801
    %v5147 = vpop.f32.mrf.mxu0
    %v5148 = vadd.f32 %v5135, %v5147
    %v5149 = vpop.f32.mrf.mxu0
    %5150 = vdwg.mxu0
    %5151 = vmatpush.bf16.msra.mxu0 %v4520
    %5152 = vmatpush.bf16.msra.mxu0 %v4515
    %5153 = vmatpush.bf16.msra.mxu0 %v4510
    %5154 = vmatpush.bf16.msra.mxu0 %v4505
    %5155 = vmatpush.bf16.msra.mxu0 %v4500
    %5156 = vmatpush.bf16.msra.mxu0 %v4495
    %5157 = vmatpush.bf16.msra.mxu0 %v4490
    %5158 = vmatpush.bf16.msra.mxu0 %v4485
    %5159 = vmatmul.bf16.gmra.mxu0 %v2802
    %v5160 = vpop.f32.mrf.mxu0
    %v5161 = vadd.f32 %v5148, %v5160
    %v5162 = vpop.f32.mrf.mxu0
    %5163 = vdwg.mxu0
    %5164 = vmatpush.bf16.msra.mxu0 %v4560
    %5165 = vmatpush.bf16.msra.mxu0 %v4555
    %5166 = vmatpush.bf16.msra.mxu0 %v4550
    %5167 = vmatpush.bf16.msra.mxu0 %v4545
    %5168 = vmatpush.bf16.msra.mxu0 %v4540
    %5169 = vmatpush.bf16.msra.mxu0 %v4535
    %5170 = vmatpush.bf16.msra.mxu0 %v4530
    %5171 = vmatpush.bf16.msra.mxu0 %v4525
    %5172 = vmatmul.bf16.gmra.mxu0 %v2803
    %v5173 = vpop.f32.mrf.mxu0
    %v5174 = vadd.f32 %v5161, %v5173
    %v5175 = vpop.f32.mrf.mxu0
    %5176 = vdwg.mxu0
    %5177 = vmatpush.bf16.msra.mxu0 %v4600
    %5178 = vmatpush.bf16.msra.mxu0 %v4595
    %5179 = vmatpush.bf16.msra.mxu0 %v4590
    %5180 = vmatpush.bf16.msra.mxu0 %v4585
    %5181 = vmatpush.bf16.msra.mxu0 %v4580
    %5182 = vmatpush.bf16.msra.mxu0 %v4575
    %5183 = vmatpush.bf16.msra.mxu0 %v4570
    %5184 = vmatpush.bf16.msra.mxu0 %v4565
    %5185 = vmatmul.bf16.gmra.mxu0 %v2804
    %v5186 = vpop.f32.mrf.mxu0
    %v5187 = vadd.f32 %v5174, %v5186
    %v5188 = vpop.f32.mrf.mxu0
    %5189 = vdwg.mxu0
    %5190 = vmatpush.bf16.msra.mxu0 %v4640
    %5191 = vmatpush.bf16.msra.mxu0 %v4635
    %5192 = vmatpush.bf16.msra.mxu0 %v4630
    %5193 = vmatpush.bf16.msra.mxu0 %v4625
    %5194 = vmatpush.bf16.msra.mxu0 %v4620
    %5195 = vmatpush.bf16.msra.mxu0 %v4615
    %5196 = vmatpush.bf16.msra.mxu0 %v4610
    %5197 = vmatpush.bf16.msra.mxu0 %v4605
    %5198 = vmatmul.bf16.gmra.mxu0 %v2805
    %v5199 = vpop.f32.mrf.mxu0
    %v5200 = vadd.f32 %v5187, %v5199
    %v5201 = vpop.f32.mrf.mxu0
    %5202 = vdwg.mxu0
    %5203 = vmatpush.bf16.msra.mxu0 %v4680
    %5204 = vmatpush.bf16.msra.mxu0 %v4675
    %5205 = vmatpush.bf16.msra.mxu0 %v4670
    %5206 = vmatpush.bf16.msra.mxu0 %v4665
    %5207 = vmatpush.bf16.msra.mxu0 %v4660
    %5208 = vmatpush.bf16.msra.mxu0 %v4655
    %5209 = vmatpush.bf16.msra.mxu0 %v4650
    %5210 = vmatpush.bf16.msra.mxu0 %v4645
    %5211 = vmatmul.bf16.gmra.mxu0 %v2806
    %v5212 = vpop.f32.mrf.mxu0
    %v5213 = vadd.f32 %v5200, %v5212
    %v5214 = vpop.f32.mrf.mxu0
    %5215 = vdwg.mxu0
    %5216 = vmatpush.bf16.msra.mxu0 %v4720
    %5217 = vmatpush.bf16.msra.mxu0 %v4715
    %5218 = vmatpush.bf16.msra.mxu0 %v4710
    %5219 = vmatpush.bf16.msra.mxu0 %v4705
    %5220 = vmatpush.bf16.msra.mxu0 %v4700
    %5221 = vmatpush.bf16.msra.mxu0 %v4695
    %5222 = vmatpush.bf16.msra.mxu0 %v4690
    %5223 = vmatpush.bf16.msra.mxu0 %v4685
    %5224 = vmatmul.bf16.gmra.mxu0 %v2807
    %v5225 = vpop.f32.mrf.mxu0
    %v5226 = vadd.f32 %v5213, %v5225
    %v5227 = vpop.f32.mrf.mxu0
    %5228 = vdwg.mxu0
    %5229 = vmatpush.bf16.msra.mxu0 %v4760
    %5230 = vmatpush.bf16.msra.mxu0 %v4755
    %5231 = vmatpush.bf16.msra.mxu0 %v4750
    %5232 = vmatpush.bf16.msra.mxu0 %v4745
    %5233 = vmatpush.bf16.msra.mxu0 %v4740
    %5234 = vmatpush.bf16.msra.mxu0 %v4735
    %5235 = vmatpush.bf16.msra.mxu0 %v4730
    %5236 = vmatpush.bf16.msra.mxu0 %v4725
    %5237 = vmatmul.bf16.gmra.mxu0 %v2808
    %v5238 = vpop.f32.mrf.mxu0
    %v5239 = vadd.f32 %v5226, %v5238
    %v5240 = vpop.f32.mrf.mxu0
    %5241 = vdwg.mxu0
    %5242 = vmatpush.bf16.msra.mxu0 %v4441
    %5243 = vmatpush.bf16.msra.mxu0 %v4436
    %5244 = vmatpush.bf16.msra.mxu0 %v4431
    %5245 = vmatpush.bf16.msra.mxu0 %v4426
    %5246 = vmatpush.bf16.msra.mxu0 %v4421
    %5247 = vmatpush.bf16.msra.mxu0 %v4416
    %5248 = vmatpush.bf16.msra.mxu0 %v4411
    %5249 = vmatpush.bf16.msra.mxu0 %v4406
    %5250 = vmatmul.bf16.gmra.mxu0 %v2800
    %v5251 = vpop.f32.mrf.mxu0
    %v5252 = vadd.f32 %v3244, %v5251
    %v5253 = vpop.f32.mrf.mxu0
    %5254 = vdwg.mxu0
    %5255 = vmatpush.bf16.msra.mxu0 %v4481
    %5256 = vmatpush.bf16.msra.mxu0 %v4476
    %5257 = vmatpush.bf16.msra.mxu0 %v4471
    %5258 = vmatpush.bf16.msra.mxu0 %v4466
    %5259 = vmatpush.bf16.msra.mxu0 %v4461
    %5260 = vmatpush.bf16.msra.mxu0 %v4456
    %5261 = vmatpush.bf16.msra.mxu0 %v4451
    %5262 = vmatpush.bf16.msra.mxu0 %v4446
    %5263 = vmatmul.bf16.gmra.mxu0 %v2801
    %v5264 = vpop.f32.mrf.mxu0
    %v5265 = vadd.f32 %v5252, %v5264
    %v5266 = vpop.f32.mrf.mxu0
    %5267 = vdwg.mxu0
    %5268 = vmatpush.bf16.msra.mxu0 %v4521
    %5269 = vmatpush.bf16.msra.mxu0 %v4516
    %5270 = vmatpush.bf16.msra.mxu0 %v4511
    %5271 = vmatpush.bf16.msra.mxu0 %v4506
    %5272 = vmatpush.bf16.msra.mxu0 %v4501
    %5273 = vmatpush.bf16.msra.mxu0 %v4496
    %5274 = vmatpush.bf16.msra.mxu0 %v4491
    %5275 = vmatpush.bf16.msra.mxu0 %v4486
    %5276 = vmatmul.bf16.gmra.mxu0 %v2802
    %v5277 = vpop.f32.mrf.mxu0
    %v5278 = vadd.f32 %v5265, %v5277
    %v5279 = vpop.f32.mrf.mxu0
    %5280 = vdwg.mxu0
    %5281 = vmatpush.bf16.msra.mxu0 %v4561
    %5282 = vmatpush.bf16.msra.mxu0 %v4556
    %5283 = vmatpush.bf16.msra.mxu0 %v4551
    %5284 = vmatpush.bf16.msra.mxu0 %v4546
    %5285 = vmatpush.bf16.msra.mxu0 %v4541
    %5286 = vmatpush.bf16.msra.mxu0 %v4536
    %5287 = vmatpush.bf16.msra.mxu0 %v4531
    %5288 = vmatpush.bf16.msra.mxu0 %v4526
    %5289 = vmatmul.bf16.gmra.mxu0 %v2803
    %v5290 = vpop.f32.mrf.mxu0
    %v5291 = vadd.f32 %v5278, %v5290
    %v5292 = vpop.f32.mrf.mxu0
    %5293 = vdwg.mxu0
    %5294 = vmatpush.bf16.msra.mxu0 %v4601
    %5295 = vmatpush.bf16.msra.mxu0 %v4596
    %5296 = vmatpush.bf16.msra.mxu0 %v4591
    %5297 = vmatpush.bf16.msra.mxu0 %v4586
    %5298 = vmatpush.bf16.msra.mxu0 %v4581
    %5299 = vmatpush.bf16.msra.mxu0 %v4576
    %5300 = vmatpush.bf16.msra.mxu0 %v4571
    %5301 = vmatpush.bf16.msra.mxu0 %v4566
    %5302 = vmatmul.bf16.gmra.mxu0 %v2804
    %v5303 = vpop.f32.mrf.mxu0
    %v5304 = vadd.f32 %v5291, %v5303
    %v5305 = vpop.f32.mrf.mxu0
    %5306 = vdwg.mxu0
    %5307 = vmatpush.bf16.msra.mxu0 %v4641
    %5308 = vmatpush.bf16.msra.mxu0 %v4636
    %5309 = vmatpush.bf16.msra.mxu0 %v4631
    %5310 = vmatpush.bf16.msra.mxu0 %v4626
    %5311 = vmatpush.bf16.msra.mxu0 %v4621
    %5312 = vmatpush.bf16.msra.mxu0 %v4616
    %5313 = vmatpush.bf16.msra.mxu0 %v4611
    %5314 = vmatpush.bf16.msra.mxu0 %v4606
    %5315 = vmatmul.bf16.gmra.mxu0 %v2805
    %v5316 = vpop.f32.mrf.mxu0
    %v5317 = vadd.f32 %v5304, %v5316
    %v5318 = vpop.f32.mrf.mxu0
    %5319 = vdwg.mxu0
    %5320 = vmatpush.bf16.msra.mxu0 %v4681
    %5321 = vmatpush.bf16.msra.mxu0 %v4676
    %5322 = vmatpush.bf16.msra.mxu0 %v4671
    %5323 = vmatpush.bf16.msra.mxu0 %v4666
    %5324 = vmatpush.bf16.msra.mxu0 %v4661
    %5325 = vmatpush.bf16.msra.mxu0 %v4656
    %5326 = vmatpush.bf16.msra.mxu0 %v4651
    %5327 = vmatpush.bf16.msra.mxu0 %v4646
    %5328 = vmatmul.bf16.gmra.mxu0 %v2806
    %v5329 = vpop.f32.mrf.mxu0
    %v5330 = vadd.f32 %v5317, %v5329
    %v5331 = vpop.f32.mrf.mxu0
    %5332 = vdwg.mxu0
    %5333 = vmatpush.bf16.msra.mxu0 %v4721
    %5334 = vmatpush.bf16.msra.mxu0 %v4716
    %5335 = vmatpush.bf16.msra.mxu0 %v4711
    %5336 = vmatpush.bf16.msra.mxu0 %v4706
    %5337 = vmatpush.bf16.msra.mxu0 %v4701
    %5338 = vmatpush.bf16.msra.mxu0 %v4696
    %5339 = vmatpush.bf16.msra.mxu0 %v4691
    %5340 = vmatpush.bf16.msra.mxu0 %v4686
    %5341 = vmatmul.bf16.gmra.mxu0 %v2807
    %v5342 = vpop.f32.mrf.mxu0
    %v5343 = vadd.f32 %v5330, %v5342
    %v5344 = vpop.f32.mrf.mxu0
    %5345 = vdwg.mxu0
    %5346 = vmatpush.bf16.msra.mxu0 %v4761
    %5347 = vmatpush.bf16.msra.mxu0 %v4756
    %5348 = vmatpush.bf16.msra.mxu0 %v4751
    %5349 = vmatpush.bf16.msra.mxu0 %v4746
    %5350 = vmatpush.bf16.msra.mxu0 %v4741
    %5351 = vmatpush.bf16.msra.mxu0 %v4736
    %5352 = vmatpush.bf16.msra.mxu0 %v4731
    %5353 = vmatpush.bf16.msra.mxu0 %v4726
    %5354 = vmatmul.bf16.gmra.mxu0 %v2808
    %v5355 = vpop.f32.mrf.mxu0
    %v5356 = vadd.f32 %v5343, %v5355
    %v5357 = vpop.f32.mrf.mxu0
    %5358 = vdwg.mxu0
    %5359 = vmatpush.bf16.msra.mxu0 %v4442
    %5360 = vmatpush.bf16.msra.mxu0 %v4437
    %5361 = vmatpush.bf16.msra.mxu0 %v4432
    %5362 = vmatpush.bf16.msra.mxu0 %v4427
    %5363 = vmatpush.bf16.msra.mxu0 %v4422
    %5364 = vmatpush.bf16.msra.mxu0 %v4417
    %5365 = vmatpush.bf16.msra.mxu0 %v4412
    %5366 = vmatpush.bf16.msra.mxu0 %v4407
    %5367 = vmatmul.bf16.gmra.mxu0 %v2800
    %v5368 = vpop.f32.mrf.mxu0
    %v5369 = vadd.f32 %v3245, %v5368
    %v5370 = vpop.f32.mrf.mxu0
    %5371 = vdwg.mxu0
    %5372 = vmatpush.bf16.msra.mxu0 %v4482
    %5373 = vmatpush.bf16.msra.mxu0 %v4477
    %5374 = vmatpush.bf16.msra.mxu0 %v4472
    %5375 = vmatpush.bf16.msra.mxu0 %v4467
    %5376 = vmatpush.bf16.msra.mxu0 %v4462
    %5377 = vmatpush.bf16.msra.mxu0 %v4457
    %5378 = vmatpush.bf16.msra.mxu0 %v4452
    %5379 = vmatpush.bf16.msra.mxu0 %v4447
    %5380 = vmatmul.bf16.gmra.mxu0 %v2801
    %v5381 = vpop.f32.mrf.mxu0
    %v5382 = vadd.f32 %v5369, %v5381
    %v5383 = vpop.f32.mrf.mxu0
    %5384 = vdwg.mxu0
    %5385 = vmatpush.bf16.msra.mxu0 %v4522
    %5386 = vmatpush.bf16.msra.mxu0 %v4517
    %5387 = vmatpush.bf16.msra.mxu0 %v4512
    %5388 = vmatpush.bf16.msra.mxu0 %v4507
    %5389 = vmatpush.bf16.msra.mxu0 %v4502
    %5390 = vmatpush.bf16.msra.mxu0 %v4497
    %5391 = vmatpush.bf16.msra.mxu0 %v4492
    %5392 = vmatpush.bf16.msra.mxu0 %v4487
    %5393 = vmatmul.bf16.gmra.mxu0 %v2802
    %v5394 = vpop.f32.mrf.mxu0
    %v5395 = vadd.f32 %v5382, %v5394
    %v5396 = vpop.f32.mrf.mxu0
    %5397 = vdwg.mxu0
    %5398 = vmatpush.bf16.msra.mxu0 %v4562
    %5399 = vmatpush.bf16.msra.mxu0 %v4557
    %5400 = vmatpush.bf16.msra.mxu0 %v4552
    %5401 = vmatpush.bf16.msra.mxu0 %v4547
    %5402 = vmatpush.bf16.msra.mxu0 %v4542
    %5403 = vmatpush.bf16.msra.mxu0 %v4537
    %5404 = vmatpush.bf16.msra.mxu0 %v4532
    %5405 = vmatpush.bf16.msra.mxu0 %v4527
    %5406 = vmatmul.bf16.gmra.mxu0 %v2803
    %v5407 = vpop.f32.mrf.mxu0
    %v5408 = vadd.f32 %v5395, %v5407
    %v5409 = vpop.f32.mrf.mxu0
    %5410 = vdwg.mxu0
    %5411 = vmatpush.bf16.msra.mxu0 %v4602
    %5412 = vmatpush.bf16.msra.mxu0 %v4597
    %5413 = vmatpush.bf16.msra.mxu0 %v4592
    %5414 = vmatpush.bf16.msra.mxu0 %v4587
    %5415 = vmatpush.bf16.msra.mxu0 %v4582
    %5416 = vmatpush.bf16.msra.mxu0 %v4577
    %5417 = vmatpush.bf16.msra.mxu0 %v4572
    %5418 = vmatpush.bf16.msra.mxu0 %v4567
    %5419 = vmatmul.bf16.gmra.mxu0 %v2804
    %v5420 = vpop.f32.mrf.mxu0
    %v5421 = vadd.f32 %v5408, %v5420
    %v5422 = vpop.f32.mrf.mxu0
    %5423 = vdwg.mxu0
    %5424 = vmatpush.bf16.msra.mxu0 %v4642
    %5425 = vmatpush.bf16.msra.mxu0 %v4637
    %5426 = vmatpush.bf16.msra.mxu0 %v4632
    %5427 = vmatpush.bf16.msra.mxu0 %v4627
    %5428 = vmatpush.bf16.msra.mxu0 %v4622
    %5429 = vmatpush.bf16.msra.mxu0 %v4617
    %5430 = vmatpush.bf16.msra.mxu0 %v4612
    %5431 = vmatpush.bf16.msra.mxu0 %v4607
    %5432 = vmatmul.bf16.gmra.mxu0 %v2805
    %v5433 = vpop.f32.mrf.mxu0
    %v5434 = vadd.f32 %v5421, %v5433
    %v5435 = vpop.f32.mrf.mxu0
    %5436 = vdwg.mxu0
    %5437 = vmatpush.bf16.msra.mxu0 %v4682
    %5438 = vmatpush.bf16.msra.mxu0 %v4677
    %5439 = vmatpush.bf16.msra.mxu0 %v4672
    %5440 = vmatpush.bf16.msra.mxu0 %v4667
    %5441 = vmatpush.bf16.msra.mxu0 %v4662
    %5442 = vmatpush.bf16.msra.mxu0 %v4657
    %5443 = vmatpush.bf16.msra.mxu0 %v4652
    %5444 = vmatpush.bf16.msra.mxu0 %v4647
    %5445 = vmatmul.bf16.gmra.mxu0 %v2806
    %v5446 = vpop.f32.mrf.mxu0
    %v5447 = vadd.f32 %v5434, %v5446
    %v5448 = vpop.f32.mrf.mxu0
    %5449 = vdwg.mxu0
    %5450 = vmatpush.bf16.msra.mxu0 %v4722
    %5451 = vmatpush.bf16.msra.mxu0 %v4717
    %5452 = vmatpush.bf16.msra.mxu0 %v4712
    %5453 = vmatpush.bf16.msra.mxu0 %v4707
    %5454 = vmatpush.bf16.msra.mxu0 %v4702
    %5455 = vmatpush.bf16.msra.mxu0 %v4697
    %5456 = vmatpush.bf16.msra.mxu0 %v4692
    %5457 = vmatpush.bf16.msra.mxu0 %v4687
    %5458 = vmatmul.bf16.gmra.mxu0 %v2807
    %v5459 = vpop.f32.mrf.mxu0
    %v5460 = vadd.f32 %v5447, %v5459
    %v5461 = vpop.f32.mrf.mxu0
    %5462 = vdwg.mxu0
    %5463 = vmatpush.bf16.msra.mxu0 %v4762
    %5464 = vmatpush.bf16.msra.mxu0 %v4757
    %5465 = vmatpush.bf16.msra.mxu0 %v4752
    %5466 = vmatpush.bf16.msra.mxu0 %v4747
    %5467 = vmatpush.bf16.msra.mxu0 %v4742
    %5468 = vmatpush.bf16.msra.mxu0 %v4737
    %5469 = vmatpush.bf16.msra.mxu0 %v4732
    %5470 = vmatpush.bf16.msra.mxu0 %v4727
    %5471 = vmatmul.bf16.gmra.mxu0 %v2808
    %v5472 = vpop.f32.mrf.mxu0
    %v5473 = vadd.f32 %v5460, %v5472
    %v5474 = vpop.f32.mrf.mxu0
    %5475 = vdwg.mxu0
    %5476 = vmatpush.bf16.msra.mxu0 %v4443
    %5477 = vmatpush.bf16.msra.mxu0 %v4438
    %5478 = vmatpush.bf16.msra.mxu0 %v4433
    %5479 = vmatpush.bf16.msra.mxu0 %v4428
    %5480 = vmatpush.bf16.msra.mxu0 %v4423
    %5481 = vmatpush.bf16.msra.mxu0 %v4418
    %5482 = vmatpush.bf16.msra.mxu0 %v4413
    %5483 = vmatpush.bf16.msra.mxu0 %v4408
    %5484 = vmatmul.bf16.gmra.mxu0 %v2800
    %v5485 = vpop.f32.mrf.mxu0
    %v5486 = vadd.f32 %v3246, %v5485
    %v5487 = vpop.f32.mrf.mxu0
    %5488 = vdwg.mxu0
    %5489 = vmatpush.bf16.msra.mxu0 %v4483
    %5490 = vmatpush.bf16.msra.mxu0 %v4478
    %5491 = vmatpush.bf16.msra.mxu0 %v4473
    %5492 = vmatpush.bf16.msra.mxu0 %v4468
    %5493 = vmatpush.bf16.msra.mxu0 %v4463
    %5494 = vmatpush.bf16.msra.mxu0 %v4458
    %5495 = vmatpush.bf16.msra.mxu0 %v4453
    %5496 = vmatpush.bf16.msra.mxu0 %v4448
    %5497 = vmatmul.bf16.gmra.mxu0 %v2801
    %v5498 = vpop.f32.mrf.mxu0
    %v5499 = vadd.f32 %v5486, %v5498
    %v5500 = vpop.f32.mrf.mxu0
    %5501 = vdwg.mxu0
    %5502 = vmatpush.bf16.msra.mxu0 %v4523
    %5503 = vmatpush.bf16.msra.mxu0 %v4518
    %5504 = vmatpush.bf16.msra.mxu0 %v4513
    %5505 = vmatpush.bf16.msra.mxu0 %v4508
    %5506 = vmatpush.bf16.msra.mxu0 %v4503
    %5507 = vmatpush.bf16.msra.mxu0 %v4498
    %5508 = vmatpush.bf16.msra.mxu0 %v4493
    %5509 = vmatpush.bf16.msra.mxu0 %v4488
    %5510 = vmatmul.bf16.gmra.mxu0 %v2802
    %v5511 = vpop.f32.mrf.mxu0
    %v5512 = vadd.f32 %v5499, %v5511
    %v5513 = vpop.f32.mrf.mxu0
    %5514 = vdwg.mxu0
    %5515 = vmatpush.bf16.msra.mxu0 %v4563
    %5516 = vmatpush.bf16.msra.mxu0 %v4558
    %5517 = vmatpush.bf16.msra.mxu0 %v4553
    %5518 = vmatpush.bf16.msra.mxu0 %v4548
    %5519 = vmatpush.bf16.msra.mxu0 %v4543
    %5520 = vmatpush.bf16.msra.mxu0 %v4538
    %5521 = vmatpush.bf16.msra.mxu0 %v4533
    %5522 = vmatpush.bf16.msra.mxu0 %v4528
    %5523 = vmatmul.bf16.gmra.mxu0 %v2803
    %v5524 = vpop.f32.mrf.mxu0
    %v5525 = vadd.f32 %v5512, %v5524
    %v5526 = vpop.f32.mrf.mxu0
    %5527 = vdwg.mxu0
    %5528 = vmatpush.bf16.msra.mxu0 %v4603
    %5529 = vmatpush.bf16.msra.mxu0 %v4598
    %5530 = vmatpush.bf16.msra.mxu0 %v4593
    %5531 = vmatpush.bf16.msra.mxu0 %v4588
    %5532 = vmatpush.bf16.msra.mxu0 %v4583
    %5533 = vmatpush.bf16.msra.mxu0 %v4578
    %5534 = vmatpush.bf16.msra.mxu0 %v4573
    %5535 = vmatpush.bf16.msra.mxu0 %v4568
    %5536 = vmatmul.bf16.gmra.mxu0 %v2804
    %v5537 = vpop.f32.mrf.mxu0
    %v5538 = vadd.f32 %v5525, %v5537
    %v5539 = vpop.f32.mrf.mxu0
    %5540 = vdwg.mxu0
    %5541 = vmatpush.bf16.msra.mxu0 %v4643
    %5542 = vmatpush.bf16.msra.mxu0 %v4638
    %5543 = vmatpush.bf16.msra.mxu0 %v4633
    %5544 = vmatpush.bf16.msra.mxu0 %v4628
    %5545 = vmatpush.bf16.msra.mxu0 %v4623
    %5546 = vmatpush.bf16.msra.mxu0 %v4618
    %5547 = vmatpush.bf16.msra.mxu0 %v4613
    %5548 = vmatpush.bf16.msra.mxu0 %v4608
    %5549 = vmatmul.bf16.gmra.mxu0 %v2805
    %v5550 = vpop.f32.mrf.mxu0
    %v5551 = vadd.f32 %v5538, %v5550
    %v5552 = vpop.f32.mrf.mxu0
    %5553 = vdwg.mxu0
    %5554 = vmatpush.bf16.msra.mxu0 %v4683
    %5555 = vmatpush.bf16.msra.mxu0 %v4678
    %5556 = vmatpush.bf16.msra.mxu0 %v4673
    %5557 = vmatpush.bf16.msra.mxu0 %v4668
    %5558 = vmatpush.bf16.msra.mxu0 %v4663
    %5559 = vmatpush.bf16.msra.mxu0 %v4658
    %5560 = vmatpush.bf16.msra.mxu0 %v4653
    %5561 = vmatpush.bf16.msra.mxu0 %v4648
    %5562 = vmatmul.bf16.gmra.mxu0 %v2806
    %v5563 = vpop.f32.mrf.mxu0
    %v5564 = vadd.f32 %v5551, %v5563
    %v5565 = vpop.f32.mrf.mxu0
    %5566 = vdwg.mxu0
    %5567 = vmatpush.bf16.msra.mxu0 %v4723
    %5568 = vmatpush.bf16.msra.mxu0 %v4718
    %5569 = vmatpush.bf16.msra.mxu0 %v4713
    %5570 = vmatpush.bf16.msra.mxu0 %v4708
    %5571 = vmatpush.bf16.msra.mxu0 %v4703
    %5572 = vmatpush.bf16.msra.mxu0 %v4698
    %5573 = vmatpush.bf16.msra.mxu0 %v4693
    %5574 = vmatpush.bf16.msra.mxu0 %v4688
    %5575 = vmatmul.bf16.gmra.mxu0 %v2807
    %v5576 = vpop.f32.mrf.mxu0
    %v5577 = vadd.f32 %v5564, %v5576
    %v5578 = vpop.f32.mrf.mxu0
    %5579 = vdwg.mxu0
    %5580 = vmatpush.bf16.msra.mxu0 %v4763
    %5581 = vmatpush.bf16.msra.mxu0 %v4758
    %5582 = vmatpush.bf16.msra.mxu0 %v4753
    %5583 = vmatpush.bf16.msra.mxu0 %v4748
    %5584 = vmatpush.bf16.msra.mxu0 %v4743
    %5585 = vmatpush.bf16.msra.mxu0 %v4738
    %5586 = vmatpush.bf16.msra.mxu0 %v4733
    %5587 = vmatpush.bf16.msra.mxu0 %v4728
    %5588 = vmatmul.bf16.gmra.mxu0 %v2808
    %v5589 = vpop.f32.mrf.mxu0
    %v5590 = vadd.f32 %v5577, %v5589
    %v5591 = vpop.f32.mrf.mxu0
    %5592 = vdwg.mxu0
    %5593 = vmatpush.bf16.msra.mxu0 %v4444
    %5594 = vmatpush.bf16.msra.mxu0 %v4439
    %5595 = vmatpush.bf16.msra.mxu0 %v4434
    %5596 = vmatpush.bf16.msra.mxu0 %v4429
    %5597 = vmatpush.bf16.msra.mxu0 %v4424
    %5598 = vmatpush.bf16.msra.mxu0 %v4419
    %5599 = vmatpush.bf16.msra.mxu0 %v4414
    %5600 = vmatpush.bf16.msra.mxu0 %v4409
    %5601 = vmatmul.bf16.gmra.mxu0 %v2800
    %v5602 = vpop.f32.mrf.mxu0
    %v5603 = vadd.f32 %v3247, %v5602
    %v5604 = vpop.f32.mrf.mxu0
    %5605 = vdwg.mxu0
    %5606 = vmatpush.bf16.msra.mxu0 %v4484
    %5607 = vmatpush.bf16.msra.mxu0 %v4479
    %5608 = vmatpush.bf16.msra.mxu0 %v4474
    %5609 = vmatpush.bf16.msra.mxu0 %v4469
    %5610 = vmatpush.bf16.msra.mxu0 %v4464
    %5611 = vmatpush.bf16.msra.mxu0 %v4459
    %5612 = vmatpush.bf16.msra.mxu0 %v4454
    %5613 = vmatpush.bf16.msra.mxu0 %v4449
    %5614 = vmatmul.bf16.gmra.mxu0 %v2801
    %v5615 = vpop.f32.mrf.mxu0
    %v5616 = vadd.f32 %v5603, %v5615
    %v5617 = vpop.f32.mrf.mxu0
    %5618 = vdwg.mxu0
    %5619 = vmatpush.bf16.msra.mxu0 %v4524
    %5620 = vmatpush.bf16.msra.mxu0 %v4519
    %5621 = vmatpush.bf16.msra.mxu0 %v4514
    %5622 = vmatpush.bf16.msra.mxu0 %v4509
    %5623 = vmatpush.bf16.msra.mxu0 %v4504
    %5624 = vmatpush.bf16.msra.mxu0 %v4499
    %5625 = vmatpush.bf16.msra.mxu0 %v4494
    %5626 = vmatpush.bf16.msra.mxu0 %v4489
    %5627 = vmatmul.bf16.gmra.mxu0 %v2802
    %v5628 = vpop.f32.mrf.mxu0
    %v5629 = vadd.f32 %v5616, %v5628
    %v5630 = vpop.f32.mrf.mxu0
    %5631 = vdwg.mxu0
    %5632 = vmatpush.bf16.msra.mxu0 %v4564
    %5633 = vmatpush.bf16.msra.mxu0 %v4559
    %5634 = vmatpush.bf16.msra.mxu0 %v4554
    %5635 = vmatpush.bf16.msra.mxu0 %v4549
    %5636 = vmatpush.bf16.msra.mxu0 %v4544
    %5637 = vmatpush.bf16.msra.mxu0 %v4539
    %5638 = vmatpush.bf16.msra.mxu0 %v4534
    %5639 = vmatpush.bf16.msra.mxu0 %v4529
    %5640 = vmatmul.bf16.gmra.mxu0 %v2803
    %v5641 = vpop.f32.mrf.mxu0
    %v5642 = vadd.f32 %v5629, %v5641
    %v5643 = vpop.f32.mrf.mxu0
    %5644 = vdwg.mxu0
    %5645 = vmatpush.bf16.msra.mxu0 %v4604
    %5646 = vmatpush.bf16.msra.mxu0 %v4599
    %5647 = vmatpush.bf16.msra.mxu0 %v4594
    %5648 = vmatpush.bf16.msra.mxu0 %v4589
    %5649 = vmatpush.bf16.msra.mxu0 %v4584
    %5650 = vmatpush.bf16.msra.mxu0 %v4579
    %5651 = vmatpush.bf16.msra.mxu0 %v4574
    %5652 = vmatpush.bf16.msra.mxu0 %v4569
    %5653 = vmatmul.bf16.gmra.mxu0 %v2804
    %v5654 = vpop.f32.mrf.mxu0
    %v5655 = vadd.f32 %v5642, %v5654
    %v5656 = vpop.f32.mrf.mxu0
    %5657 = vdwg.mxu0
    %5658 = vmatpush.bf16.msra.mxu0 %v4644
    %5659 = vmatpush.bf16.msra.mxu0 %v4639
    %5660 = vmatpush.bf16.msra.mxu0 %v4634
    %5661 = vmatpush.bf16.msra.mxu0 %v4629
    %5662 = vmatpush.bf16.msra.mxu0 %v4624
    %5663 = vmatpush.bf16.msra.mxu0 %v4619
    %5664 = vmatpush.bf16.msra.mxu0 %v4614
    %5665 = vmatpush.bf16.msra.mxu0 %v4609
    %5666 = vmatmul.bf16.gmra.mxu0 %v2805
    %v5667 = vpop.f32.mrf.mxu0
    %v5668 = vadd.f32 %v5655, %v5667
    %v5669 = vpop.f32.mrf.mxu0
    %5670 = vdwg.mxu0
    %5671 = vmatpush.bf16.msra.mxu0 %v4684
    %5672 = vmatpush.bf16.msra.mxu0 %v4679
    %5673 = vmatpush.bf16.msra.mxu0 %v4674
    %5674 = vmatpush.bf16.msra.mxu0 %v4669
    %5675 = vmatpush.bf16.msra.mxu0 %v4664
    %5676 = vmatpush.bf16.msra.mxu0 %v4659
    %5677 = vmatpush.bf16.msra.mxu0 %v4654
    %5678 = vmatpush.bf16.msra.mxu0 %v4649
    %5679 = vmatmul.bf16.gmra.mxu0 %v2806
    %v5680 = vpop.f32.mrf.mxu0
    %v5681 = vadd.f32 %v5668, %v5680
    %v5682 = vpop.f32.mrf.mxu0
    %5683 = vdwg.mxu0
    %5684 = vmatpush.bf16.msra.mxu0 %v4724
    %5685 = vmatpush.bf16.msra.mxu0 %v4719
    %5686 = vmatpush.bf16.msra.mxu0 %v4714
    %5687 = vmatpush.bf16.msra.mxu0 %v4709
    %5688 = vmatpush.bf16.msra.mxu0 %v4704
    %5689 = vmatpush.bf16.msra.mxu0 %v4699
    %5690 = vmatpush.bf16.msra.mxu0 %v4694
    %5691 = vmatpush.bf16.msra.mxu0 %v4689
    %5692 = vmatmul.bf16.gmra.mxu0 %v2807
    %v5693 = vpop.f32.mrf.mxu0
    %v5694 = vadd.f32 %v5681, %v5693
    %v5695 = vpop.f32.mrf.mxu0
    %5696 = vdwg.mxu0
    %5697 = vmatpush.bf16.msra.mxu0 %v4764
    %5698 = vmatpush.bf16.msra.mxu0 %v4759
    %5699 = vmatpush.bf16.msra.mxu0 %v4754
    %5700 = vmatpush.bf16.msra.mxu0 %v4749
    %5701 = vmatpush.bf16.msra.mxu0 %v4744
    %5702 = vmatpush.bf16.msra.mxu0 %v4739
    %5703 = vmatpush.bf16.msra.mxu0 %v4734
    %5704 = vmatpush.bf16.msra.mxu0 %v4729
    %5705 = vmatmul.bf16.gmra.mxu0 %v2808
    %v5706 = vpop.f32.mrf.mxu0
    %v5707 = vadd.f32 %v5694, %v5706
    %v5708 = vpop.f32.mrf.mxu0
    %5709 = vdwg.mxu0
    %5710 = vst [vmem:[%s11] sm:$0xff] %v5239
    %5711 = vst [vmem:[%s11 + $0x8] sm:$0xff] %v5356
    %5712 = vst [vmem:[%s11 + $0x10] sm:$0xff] %v5473
    %5713 = vst [vmem:[%s11 + $0x18] sm:$0xff] %v5590
    %5714 = vst [vmem:[%s11 + $0x20] sm:$0xff] %v5707
    // Predicated region
    $region86: #{decoder_conv_forward.1} parent=1 // pred_check
      _
    $region87: #{decoder_conv_forward.1} parent=1 // pred_check_branch
      %5716 = sbr.rel (0) target = $region89
    $region88: #{decoder_conv_forward.1} parent=1 // pred_region
      _
    $region89: #{decoder_conv_forward.1} parent=1 // pred_fallthru
      _
    // Predicated region
    $region90: #{decoder_conv_forward.1} parent=1 // pred_check
      _
    $region91: #{decoder_conv_forward.1} parent=1 // pred_check_branch
      %5718 = sbr.rel (0) target = $region93
    $region92: #{decoder_conv_forward.1} parent=1 // pred_region
      _
    $region93: #{decoder_conv_forward.1} parent=1 // pred_fallthru
      _
    %5719 = vsyncpa [#allocation3], 1
    %5720 = vsyncpa [#allocation5], 1
    %5721 = vsyncpa [#allocation8], 1
    %5722 = vsyncpa [#allocation11], 1
    %5723 = vsyncpa [#allocation14], 1
    %5724 = vsyncpa [#allocation17], 1

</llo_original>
